<compile_context>
chip_gen: v5e
topology: v5e:2x2
jax: 0.10.0
libtpu: 0.0.40
codegen_flags: <defaults>
</compile_context>

<pallas_src>
import functools

import jax
import jax.numpy as jnp
from jax.experimental import pallas as pl
from jax.experimental.pallas import tpu as pltpu


# ----------------------------------------------------------------------------
# Small helpers
# ----------------------------------------------------------------------------
def _round8(c):
    return max(8, -(-c // 8) * 8)


def _mod(a, m):
    if m & (m - 1) == 0:
        return jnp.bitwise_and(a, m - 1)
    return a % m   # TODO(synk): non-power-of-two H/W (and HW % 128 != 0) untested.


# ----------------------------------------------------------------------------
# Fused whole-network Pallas kernel
# ----------------------------------------------------------------------------
def _resnet_kernel(x_ref, w_ref, b_ref, out_ref, *, H, W, n_stages, layer_dims):
    """Whole-network forward for one batch block.

    x_ref:   (1, C0_pad, HW_blk) f32, HW_blk = B_TILE*H*W, lane-dense.
    w_ref:   (R_w, K_max) bf16 packed weights; per conv three stacked kw-tap
             blocks of shape (Cout_p, 3*Cin_p), K ordered (kh, cin).
    b_ref:   (R_b, 1) f32 packed biases.
    out_ref: (1, 8, HW_blk) f32 (final Cout padded 3 -> 8).
    """
    HW_blk = x_ref.shape[-1]
    hw = H * W

    # Per-image boundary masks, hoisted and shared by all 22 convs.
    lane = jax.lax.broadcasted_iota(jnp.int32, (1, HW_blk), 1)
    pos = _mod(lane, hw)                       # position within each image
    col = _mod(pos, W)
    first_row = pos < W
    last_row = pos >= hw - W
    first_col = col == 0
    last_col = col == W - 1

    mask_cache = {}

    def masks(cin_p):
        # Built once per distinct channel width and reused (no re-broadcasts
        # inside the 22 unrolled convs).
        if cin_p not in mask_cache:
            mask_cache[cin_p] = (
                jnp.broadcast_to(first_row, (cin_p, HW_blk)),
                jnp.broadcast_to(last_row, (cin_p, HW_blk)),
                jnp.broadcast_to(first_col, (3 * cin_p, HW_blk)),
                jnp.broadcast_to(last_col, (3 * cin_p, HW_blk)),
            )
        return mask_cache[cin_p]

    layer_it = iter(layer_dims)

    def conv(x2, *, relu, residual=None):
        """3x3 stride-1 reflect-pad conv on a (Cin_p, HW_blk) f32 activation."""
        w_off, b_off, cin_p, cout_p = next(layer_it)
        fr, lr, fc, lc = masks(cin_p)
        K = 3 * cin_p

        wl = w_ref[w_off:w_off + cout_p, :K]                      # kw = -1
        wc = w_ref[w_off + cout_p:w_off + 2 * cout_p, :K]         # kw =  0
        wrgt = w_ref[w_off + 2 * cout_p:w_off + 3 * cout_p, :K]   # kw = +1
        b = b_ref[b_off:b_off + cout_p, :]                        # (Cout_p, 1)

        # Row taps via XLU lane rotation; reflect fix at h==0 / h==H-1.
        r_up = pltpu.roll(x2, W, 1)                 # value at (h-1, w), wraps
        r_dn = pltpu.roll(x2, HW_blk - W, 1)        # value at (h+1, w), wraps
        x_up = jnp.where(fr, r_dn, r_up)            # h-1 with reflect (-1 -> 1)
        x_dn = jnp.where(lr, r_up, r_dn)            # h+1 with reflect (H -> H-2)
        rows3 = jnp.concatenate([x_up, x2, x_dn], axis=0)   # (3*Cin_p, HW_blk)

        # Three accumulating MXU dots, bf16 operands, f32 accumulation.
        acc = jnp.dot(wc, rows3.astype(jnp.bfloat16),
                      preferred_element_type=jnp.float32)

        # Column taps via XLU lane rotation; reflect fix at w==0 / w==W-1.
        col_l = pltpu.roll(rows3, 1, 1)             # value at (h', w-1), wraps
        col_r = pltpu.roll(rows3, HW_blk - 1, 1)    # value at (h', w+1), wraps
        tap_l = jnp.where(fc, col_r, col_l)
        tap_r = jnp.where(lc, col_l, col_r)

        acc = acc + jnp.dot(wl, tap_l.astype(jnp.bfloat16),
                            preferred_element_type=jnp.float32)
        acc = acc + jnp.dot(wrgt, tap_r.astype(jnp.bfloat16),
                            preferred_element_type=jnp.float32)

        acc = acc + b
        if residual is not None:
            acc = acc + residual
        if relu:
            acc = jnp.maximum(acc, 0.0)
        return acc

    x2 = x_ref[0].astype(jnp.float32)                   # (C0_pad, HW_blk)

    x2 = conv(x2, relu=True)                            # first: Conv(4->16)+ReLU
    for _ in range(n_stages):
        h = conv(x2, relu=True)                         # ResBlock conv1 + ReLU
        x2 = conv(h, relu=True, residual=x2)            # conv2 + skip, outer ReLU
        x2 = conv(x2, relu=True)                        # Conv(ci->co) + ReLU
        h = conv(x2, relu=True)                         # ResBlock conv1 + ReLU
        x2 = conv(h, relu=True, residual=x2)            # conv2 + skip, outer ReLU
    x2 = conv(x2, relu=False)                           # last: Conv(->3), no act

    out_ref[0] = x2.astype(out_ref.dtype)


# ----------------------------------------------------------------------------
# Parameter plan / init / packing (plain JAX, done once outside the kernel)
# ----------------------------------------------------------------------------
def _conv_channel_plan(n_blocks=5):
    chans = [16]
    for i in range(1, n_blocks):
        chans.append(chans[i - 1] * 2 if i < n_blocks // 2 else chans[i - 1] // 2)
    convs = [(4, int(chans[0]))]
    for i in range(n_blocks - 1):
        ci, co = int(chans[i]), int(chans[i + 1])
        convs += [(ci, ci), (ci, ci), (ci, co), (co, co), (co, co)]
    convs.append((int(chans[-1]), 3))
    return convs


def init_params(key, n_blocks=5):
    """PyTorch-layout params: list of (w (Cout,Cin,3,3), b (Cout,)) per conv."""
    convs = _conv_channel_plan(n_blocks)
    keys = jax.random.split(key, 2 * len(convs))
    params = []
    for i, (cin, cout) in enumerate(convs):
        bound = 1.0 / (cin * 9) ** 0.5           # nn.Conv2d default init bound
        w = jax.random.uniform(keys[2 * i], (cout, cin, 3, 3), jnp.float32,
                               -bound, bound)
        b = jax.random.uniform(keys[2 * i + 1], (cout,), jnp.float32,
                               -bound, bound)
        params.append((w, b))
    return params


def pack_params(params):
    """Pack every conv into ONE bf16 weight buffer + ONE f32 bias buffer.

    Per conv, three kw-tap blocks (Cout_p, 3*Cin_p) are stacked along rows
    (kw = -1, 0, +1), K ordered (kh, cin) to match the in-kernel
    rows3 = [x_up; x; x_dn] stacking.  Channel dims are zero-padded to
    multiples of 8 (incl. the final Cout=3 -> 8); padded rows/cols carry zero
    weight and bias, so results are unchanged.
    """
    metas = []
    k_max = 0
    for w, _ in params:
        cout, cin = w.shape[0], w.shape[1]
        cin_p, cout_p = _round8(cin), _round8(cout)
        metas.append((cin, cout, cin_p, cout_p))
        k_max = max(k_max, 3 * cin_p)

    w_rows, b_rows, layer_dims = [], [], []
    w_off = b_off = 0
    for (w, b), (cin, cout, cin_p, cout_p) in zip(params, metas):
        wp = jnp.zeros((cout_p, cin_p, 3, 3), jnp.float32)
        wp = wp.at[:cout, :cin].set(w.astype(jnp.float32))
        bp = jnp.zeros((cout_p, 1), jnp.float32).at[:cout, 0].set(
            b.astype(jnp.float32))
        for kw in range(3):
            wk = wp[:, :, :, kw].transpose(0, 2, 1).reshape(cout_p, 3 * cin_p)
            w_rows.append(jnp.pad(wk, ((0, 0), (0, k_max - 3 * cin_p))))
        b_rows.append(bp)
        layer_dims.append((w_off, b_off, cin_p, cout_p))
        w_off += 3 * cout_p
        b_off += cout_p

    w_all = jnp.concatenate(w_rows, axis=0).astype(jnp.bfloat16)
    b_all = jnp.concatenate(b_rows, axis=0)
    return w_all, b_all, tuple(layer_dims)


# ----------------------------------------------------------------------------
# Forward pass (matches SimpleResNet.forward), single pallas_call
# ----------------------------------------------------------------------------
def _pick_batch_tile(n):
    """Largest divisor of n that is <= 8 and keeps grid >= 2 (two TCs on v7x)."""
    limit = min(8, max(1, n // 2))
    for cand in range(limit, 0, -1):
        if n % cand == 0:
            return cand
    return 1


def simple_resnet_forward(params, x_nchw, *, n_blocks=5, b_tile=None):
    N, C0, H, W = x_nchw.shape
    if H < 2 or W < 2:
        raise ValueError("reflect padding requires H, W >= 2")
    HW = H * W
    n_stages = n_blocks - 1
    assert len(params) == 2 + 5 * n_stages

    w_all, b_all, layer_dims = pack_params(params)
    c0_pad = layer_dims[0][2]
    cout_last = layer_dims[-1][3]            # 8 (final Cout padded 3 -> 8)

    if b_tile is None:
        b_tile = _pick_batch_tile(N)
    assert N % b_tile == 0
    nb = N // b_tile
    HW_blk = b_tile * HW

    # Fold the batch tile into the lane axis: (nb, C0_pad, B_TILE*H*W) f32.
    x_flat = (x_nchw.reshape(nb, b_tile, C0, HW)
              .transpose(0, 2, 1, 3)
              .reshape(nb, C0, HW_blk)
              .astype(jnp.float32))
    if c0_pad > C0:
        x_flat = jnp.concatenate(
            [x_flat, jnp.zeros((nb, c0_pad - C0, HW_blk), jnp.float32)], axis=1)

    out = pl.pallas_call(
        functools.partial(_resnet_kernel, H=H, W=W, n_stages=n_stages,
                          layer_dims=layer_dims),
        out_shape=jax.ShapeDtypeStruct((nb, cout_last, HW_blk), jnp.float32),
        grid=(nb,),
        in_specs=[
            pl.BlockSpec((1, c0_pad, HW_blk), lambda n: (n, 0, 0)),
            # Constant index maps -> weights/biases stay VMEM-resident.
            pl.BlockSpec(w_all.shape, lambda n: (0, 0)),
            pl.BlockSpec(b_all.shape, lambda n: (0, 0)),
        ],
        out_specs=pl.BlockSpec((1, cout_last, HW_blk), lambda n: (n, 0, 0)),
        compiler_params=pltpu.CompilerParams(
            dimension_semantics=("parallel",),
            vmem_limit_bytes=32 * 1024 * 1024),
    )(x_flat, w_all, b_all)

    out = (out[:, :3, :]
           .reshape(nb, 3, b_tile, HW)
           .transpose(0, 2, 1, 3)
           .reshape(N, 3, H, W))
    return out.astype(x_nchw.dtype)


# ----------------------------------------------------------------------------
# Pure-JAX reference (same numerics: bf16 operands, f32 accumulation)
# ----------------------------------------------------------------------------
def _reference_forward(params, x_nchw, *, n_blocks=5):
    n_stages = n_blocks - 1
    it = iter(params)

    def conv(x, *, relu, residual=None):
        w, b = next(it)
        xp = jnp.pad(x, ((0, 0), (0, 0), (1, 1), (1, 1)), mode="reflect")
        y = jax.lax.conv_general_dilated(
            xp.astype(jnp.bfloat16), w.astype(jnp.bfloat16),
            window_strides=(1, 1), padding="VALID",
            dimension_numbers=("NCHW", "OIHW", "NCHW"),
            preferred_element_type=jnp.float32)
        y = y + b.reshape(1, -1, 1, 1).astype(jnp.float32)
        if residual is not None:
            y = y + residual
        return jnp.maximum(y, 0.0) if relu else y

    x = x_nchw.astype(jnp.float32)
    x = conv(x, relu=True)
    for _ in range(n_stages):
        h = conv(x, relu=True)
        x = conv(h, relu=True, residual=x)
        x = conv(x, relu=True)
        h = conv(x, relu=True)
        x = conv(h, relu=True, residual=x)
    return conv(x, relu=False)


# TODO(synk): SimpleResNet.denoise (variance-map concat + 0.5 shifts) is plain
# host-side glue around forward(); only forward() is implemented as a kernel.

if __name__ == "__main__":
    key = jax.random.PRNGKey(0)
    pkey, xkey = jax.random.split(key)

    params = init_params(pkey, n_blocks=5)
    x = jax.random.normal(xkey, (2, 4, 16, 16), dtype=jnp.float32)  # NCHW

    out = jax.block_until_ready(simple_resnet_forward(params, x))
    assert out.shape == (2, 3, 16, 16), out.shape
    assert bool(jnp.isfinite(out).all())

    ref = jax.block_until_ready(_reference_forward(params, x))
    max_err = float(jnp.max(jnp.abs(out - ref)))
    assert max_err < 2e-3, f"kernel/reference mismatch: max |err| = {max_err}"

    print("KERNEL_OK")
</pallas_src>

<mosaic_0001>
module attributes {stable_mosaic.version = 11 : i64} {
  func.func @_resnet_kernel(%arg0: i32, %arg1: memref<1x8x256xf32, #tpu.memory_space<vmem>>, %arg2: memref<1080x96xbf16, #tpu.memory_space<vmem>>, %arg3: memref<360x1xf32, #tpu.memory_space<vmem>>, %arg4: memref<1x8x256xf32, #tpu.memory_space<vmem>>) attributes {dimension_semantics = [#tpu.dimension_semantics<parallel>], iteration_bounds = array<i64: 2>, scalar_prefetch = 0 : i64, scratch_operands = 0 : i64, tpu.core_type = #tpu.core_type<tc>, window_params = [{transform_indices = @transform_0, window_bounds = array<i64: 1, 8, 256>}, {pipeline_mode = #tpu.pipeline_mode<synchronous>, transform_indices = @transform_1, window_bounds = array<i64: 1080, 96>}, {pipeline_mode = #tpu.pipeline_mode<synchronous>, transform_indices = @transform_2, window_bounds = array<i64: 360, 1>}, {transform_indices = @transform_3, window_bounds = array<i64: 1, 8, 256>}]} {
    %0 = tpu.iota {dimensions = array<i32: 1>} : vector<1x256xi32>
    %c255_i32 = arith.constant 255 : i32
    %1 = vector.broadcast %c255_i32 : i32 to vector<1x256xi32>
    %2 = arith.andi %0, %1 : vector<1x256xi32>
    %c15_i32 = arith.constant 15 : i32
    %3 = vector.broadcast %c15_i32 : i32 to vector<1x256xi32>
    %4 = arith.andi %2, %3 : vector<1x256xi32>
    %c16_i32 = arith.constant 16 : i32
    %5 = vector.broadcast %c16_i32 : i32 to vector<1x256xi32>
    %6 = arith.cmpi slt, %2, %5 : vector<1x256xi32>
    %c240_i32 = arith.constant 240 : i32
    %7 = vector.broadcast %c240_i32 : i32 to vector<1x256xi32>
    %8 = arith.cmpi sge, %2, %7 : vector<1x256xi32>
    %c0_i32 = arith.constant 0 : i32
    %9 = vector.broadcast %c0_i32 : i32 to vector<1x256xi32>
    %10 = arith.cmpi eq, %4, %9 : vector<1x256xi32>
    %c15_i32_0 = arith.constant 15 : i32
    %11 = vector.broadcast %c15_i32_0 : i32 to vector<1x256xi32>
    %12 = arith.cmpi eq, %4, %11 : vector<1x256xi32>
    %c0 = arith.constant 0 : index
    %c0_1 = arith.constant 0 : index
    %c0_2 = arith.constant 0 : index
    %13 = vector.load %arg1[%c0, %c0_1, %c0_2] : memref<1x8x256xf32, #tpu.memory_space<vmem>>, vector<1x8x256xf32>
    %14 = vector.shape_cast %13 : vector<1x8x256xf32> to vector<8x256xf32>
    %15 = vector.shape_cast %6 : vector<1x256xi1> to vector<1x256xi1>
    %16 = vector.broadcast %15 : vector<1x256xi1> to vector<8x256xi1>
    %17 = vector.shape_cast %8 : vector<1x256xi1> to vector<1x256xi1>
    %18 = vector.broadcast %17 : vector<1x256xi1> to vector<8x256xi1>
    %19 = vector.shape_cast %10 : vector<1x256xi1> to vector<1x256xi1>
    %20 = vector.broadcast %19 : vector<1x256xi1> to vector<24x256xi1>
    %21 = vector.shape_cast %12 : vector<1x256xi1> to vector<1x256xi1>
    %22 = vector.broadcast %21 : vector<1x256xi1> to vector<24x256xi1>
    %c0_3 = arith.constant 0 : index
    %c0_4 = arith.constant 0 : index
    %23 = vector.load %arg2[%c0_3, %c0_4] : memref<1080x96xbf16, #tpu.memory_space<vmem>>, vector<16x24xbf16>
    %c16 = arith.constant 16 : index
    %c0_5 = arith.constant 0 : index
    %24 = vector.load %arg2[%c16, %c0_5] : memref<1080x96xbf16, #tpu.memory_space<vmem>>, vector<16x24xbf16>
    %c32 = arith.constant 32 : index
    %c0_6 = arith.constant 0 : index
    %25 = vector.load %arg2[%c32, %c0_6] : memref<1080x96xbf16, #tpu.memory_space<vmem>>, vector<16x24xbf16>
    %c0_7 = arith.constant 0 : index
    %c0_8 = arith.constant 0 : index
    %26 = vector.load %arg3[%c0_7, %c0_8] : memref<360x1xf32, #tpu.memory_space<vmem>>, vector<16x1xf32>
    %c16_i32_9 = arith.constant 16 : i32
    %27 = tpu.dynamic_rotate %14 by %c16_i32_9 dim 1 : vector<8x256xf32>, i32 -> vector<8x256xf32>
    %c240_i32_10 = arith.constant 240 : i32
    %28 = tpu.dynamic_rotate %14 by %c240_i32_10 dim 1 : vector<8x256xf32>, i32 -> vector<8x256xf32>
    %29 = arith.select %16, %28, %27 : vector<8x256xi1>, vector<8x256xf32>
    %30 = arith.select %18, %27, %28 : vector<8x256xi1>, vector<8x256xf32>
    %31 = tpu.concatenate %29, %14, %30 in 0 : vector<8x256xf32>, vector<8x256xf32>, vector<8x256xf32> -> vector<24x256xf32>
    %32 = arith.truncf %31 : vector<24x256xf32> to vector<24x256xbf16>
    %cst = arith.constant dense<0.000000e+00> : vector<16x256xf32>
    %33 = tpu.matmul %24, %32, %cst {dimension_numbers = #tpu.dot_dimension_numbers<[1], [0], [0], [1], [0, 0, 1, 1], [], []>} : vector<16x24xbf16>, vector<24x256xbf16>, vector<16x256xf32> -> vector<16x256xf32>
    %c1_i32 = arith.constant 1 : i32
    %34 = tpu.dynamic_rotate %31 by %c1_i32 dim 1 : vector<24x256xf32>, i32 -> vector<24x256xf32>
    %c255_i32_11 = arith.constant 255 : i32
    %35 = tpu.dynamic_rotate %31 by %c255_i32_11 dim 1 : vector<24x256xf32>, i32 -> vector<24x256xf32>
    %36 = arith.select %20, %35, %34 : vector<24x256xi1>, vector<24x256xf32>
    %37 = arith.select %22, %34, %35 : vector<24x256xi1>, vector<24x256xf32>
    %38 = arith.truncf %36 : vector<24x256xf32> to vector<24x256xbf16>
    %cst_12 = arith.constant dense<0.000000e+00> : vector<16x256xf32>
    %39 = tpu.matmul %23, %38, %cst_12 {dimension_numbers = #tpu.dot_dimension_numbers<[1], [0], [0], [1], [0, 0, 1, 1], [], []>} : vector<16x24xbf16>, vector<24x256xbf16>, vector<16x256xf32> -> vector<16x256xf32>
    %40 = arith.addf %33, %39 : vector<16x256xf32>
    %41 = arith.truncf %37 : vector<24x256xf32> to vector<24x256xbf16>
    %cst_13 = arith.constant dense<0.000000e+00> : vector<16x256xf32>
    %42 = tpu.matmul %25, %41, %cst_13 {dimension_numbers = #tpu.dot_dimension_numbers<[1], [0], [0], [1], [0, 0, 1, 1], [], []>} : vector<16x24xbf16>, vector<24x256xbf16>, vector<16x256xf32> -> vector<16x256xf32>
    %43 = arith.addf %40, %42 : vector<16x256xf32>
    %44 = vector.broadcast %26 : vector<16x1xf32> to vector<16x256xf32>
    %45 = arith.addf %43, %44 : vector<16x256xf32>
    %cst_14 = arith.constant 0.000000e+00 : f32
    %46 = vector.broadcast %cst_14 : f32 to vector<16x256xf32>
    %47 = arith.maximumf %45, %46 : vector<16x256xf32>
    %48 = vector.shape_cast %6 : vector<1x256xi1> to vector<1x256xi1>
    %49 = vector.broadcast %48 : vector<1x256xi1> to vector<16x256xi1>
    %50 = vector.shape_cast %8 : vector<1x256xi1> to vector<1x256xi1>
    %51 = vector.broadcast %50 : vector<1x256xi1> to vector<16x256xi1>
    %52 = vector.shape_cast %10 : vector<1x256xi1> to vector<1x256xi1>
    %53 = vector.broadcast %52 : vector<1x256xi1> to vector<48x256xi1>
    %54 = vector.shape_cast %12 : vector<1x256xi1> to vector<1x256xi1>
    %55 = vector.broadcast %54 : vector<1x256xi1> to vector<48x256xi1>
    %c48 = arith.constant 48 : index
    %c0_15 = arith.constant 0 : index
    %56 = vector.load %arg2[%c48, %c0_15] : memref<1080x96xbf16, #tpu.memory_space<vmem>>, vector<16x48xbf16>
    %c64 = arith.constant 64 : index
    %c0_16 = arith.constant 0 : index
    %57 = vector.load %arg2[%c64, %c0_16] : memref<1080x96xbf16, #tpu.memory_space<vmem>>, vector<16x48xbf16>
    %c80 = arith.constant 80 : index
    %c0_17 = arith.constant 0 : index
    %58 = vector.load %arg2[%c80, %c0_17] : memref<1080x96xbf16, #tpu.memory_space<vmem>>, vector<16x48xbf16>
    %c16_18 = arith.constant 16 : index
    %c0_19 = arith.constant 0 : index
    %59 = vector.load %arg3[%c16_18, %c0_19] : memref<360x1xf32, #tpu.memory_space<vmem>>, vector<16x1xf32>
    %c16_i32_20 = arith.constant 16 : i32
    %60 = tpu.dynamic_rotate %47 by %c16_i32_20 dim 1 : vector<16x256xf32>, i32 -> vector<16x256xf32>
    %c240_i32_21 = arith.constant 240 : i32
    %61 = tpu.dynamic_rotate %47 by %c240_i32_21 dim 1 : vector<16x256xf32>, i32 -> vector<16x256xf32>
    %62 = arith.select %49, %61, %60 : vector<16x256xi1>, vector<16x256xf32>
    %63 = arith.select %51, %60, %61 : vector<16x256xi1>, vector<16x256xf32>
    %64 = tpu.concatenate %62, %47, %63 in 0 : vector<16x256xf32>, vector<16x256xf32>, vector<16x256xf32> -> vector<48x256xf32>
    %65 = arith.truncf %64 : vector<48x256xf32> to vector<48x256xbf16>
    %cst_22 = arith.constant dense<0.000000e+00> : vector<16x256xf32>
    %66 = tpu.matmul %57, %65, %cst_22 {dimension_numbers = #tpu.dot_dimension_numbers<[1], [0], [0], [1], [0, 0, 1, 1], [], []>} : vector<16x48xbf16>, vector<48x256xbf16>, vector<16x256xf32> -> vector<16x256xf32>
    %c1_i32_23 = arith.constant 1 : i32
    %67 = tpu.dynamic_rotate %64 by %c1_i32_23 dim 1 : vector<48x256xf32>, i32 -> vector<48x256xf32>
    %c255_i32_24 = arith.constant 255 : i32
    %68 = tpu.dynamic_rotate %64 by %c255_i32_24 dim 1 : vector<48x256xf32>, i32 -> vector<48x256xf32>
    %69 = arith.select %53, %68, %67 : vector<48x256xi1>, vector<48x256xf32>
    %70 = arith.select %55, %67, %68 : vector<48x256xi1>, vector<48x256xf32>
    %71 = arith.truncf %69 : vector<48x256xf32> to vector<48x256xbf16>
    %cst_25 = arith.constant dense<0.000000e+00> : vector<16x256xf32>
    %72 = tpu.matmul %56, %71, %cst_25 {dimension_numbers = #tpu.dot_dimension_numbers<[1], [0], [0], [1], [0, 0, 1, 1], [], []>} : vector<16x48xbf16>, vector<48x256xbf16>, vector<16x256xf32> -> vector<16x256xf32>
    %73 = arith.addf %66, %72 : vector<16x256xf32>
    %74 = arith.truncf %70 : vector<48x256xf32> to vector<48x256xbf16>
    %cst_26 = arith.constant dense<0.000000e+00> : vector<16x256xf32>
    %75 = tpu.matmul %58, %74, %cst_26 {dimension_numbers = #tpu.dot_dimension_numbers<[1], [0], [0], [1], [0, 0, 1, 1], [], []>} : vector<16x48xbf16>, vector<48x256xbf16>, vector<16x256xf32> -> vector<16x256xf32>
    %76 = arith.addf %73, %75 : vector<16x256xf32>
    %77 = vector.broadcast %59 : vector<16x1xf32> to vector<16x256xf32>
    %78 = arith.addf %76, %77 : vector<16x256xf32>
    %cst_27 = arith.constant 0.000000e+00 : f32
    %79 = vector.broadcast %cst_27 : f32 to vector<16x256xf32>
    %80 = arith.maximumf %78, %79 : vector<16x256xf32>
    %c96 = arith.constant 96 : index
    %c0_28 = arith.constant 0 : index
    %81 = vector.load %arg2[%c96, %c0_28] : memref<1080x96xbf16, #tpu.memory_space<vmem>>, vector<16x48xbf16>
    %c112 = arith.constant 112 : index
    %c0_29 = arith.constant 0 : index
    %82 = vector.load %arg2[%c112, %c0_29] : memref<1080x96xbf16, #tpu.memory_space<vmem>>, vector<16x48xbf16>
    %c128 = arith.constant 128 : index
    %c0_30 = arith.constant 0 : index
    %83 = vector.load %arg2[%c128, %c0_30] : memref<1080x96xbf16, #tpu.memory_space<vmem>>, vector<16x48xbf16>
    %c32_31 = arith.constant 32 : index
    %c0_32 = arith.constant 0 : index
    %84 = vector.load %arg3[%c32_31, %c0_32] : memref<360x1xf32, #tpu.memory_space<vmem>>, vector<16x1xf32>
    %c16_i32_33 = arith.constant 16 : i32
    %85 = tpu.dynamic_rotate %80 by %c16_i32_33 dim 1 : vector<16x256xf32>, i32 -> vector<16x256xf32>
    %c240_i32_34 = arith.constant 240 : i32
    %86 = tpu.dynamic_rotate %80 by %c240_i32_34 dim 1 : vector<16x256xf32>, i32 -> vector<16x256xf32>
    %87 = arith.select %49, %86, %85 : vector<16x256xi1>, vector<16x256xf32>
    %88 = arith.select %51, %85, %86 : vector<16x256xi1>, vector<16x256xf32>
    %89 = tpu.concatenate %87, %80, %88 in 0 : vector<16x256xf32>, vector<16x256xf32>, vector<16x256xf32> -> vector<48x256xf32>
    %90 = arith.truncf %89 : vector<48x256xf32> to vector<48x256xbf16>
    %cst_35 = arith.constant dense<0.000000e+00> : vector<16x256xf32>
    %91 = tpu.matmul %82, %90, %cst_35 {dimension_numbers = #tpu.dot_dimension_numbers<[1], [0], [0], [1], [0, 0, 1, 1], [], []>} : vector<16x48xbf16>, vector<48x256xbf16>, vector<16x256xf32> -> vector<16x256xf32>
    %c1_i32_36 = arith.constant 1 : i32
    %92 = tpu.dynamic_rotate %89 by %c1_i32_36 dim 1 : vector<48x256xf32>, i32 -> vector<48x256xf32>
    %c255_i32_37 = arith.constant 255 : i32
    %93 = tpu.dynamic_rotate %89 by %c255_i32_37 dim 1 : vector<48x256xf32>, i32 -> vector<48x256xf32>
    %94 = arith.select %53, %93, %92 : vector<48x256xi1>, vector<48x256xf32>
    %95 = arith.select %55, %92, %93 : vector<48x256xi1>, vector<48x256xf32>
    %96 = arith.truncf %94 : vector<48x256xf32> to vector<48x256xbf16>
    %cst_38 = arith.constant dense<0.000000e+00> : vector<16x256xf32>
    %97 = tpu.matmul %81, %96, %cst_38 {dimension_numbers = #tpu.dot_dimension_numbers<[1], [0], [0], [1], [0, 0, 1, 1], [], []>} : vector<16x48xbf16>, vector<48x256xbf16>, vector<16x256xf32> -> vector<16x256xf32>
    %98 = arith.addf %91, %97 : vector<16x256xf32>
    %99 = arith.truncf %95 : vector<48x256xf32> to vector<48x256xbf16>
    %cst_39 = arith.constant dense<0.000000e+00> : vector<16x256xf32>
    %100 = tpu.matmul %83, %99, %cst_39 {dimension_numbers = #tpu.dot_dimension_numbers<[1], [0], [0], [1], [0, 0, 1, 1], [], []>} : vector<16x48xbf16>, vector<48x256xbf16>, vector<16x256xf32> -> vector<16x256xf32>
    %101 = arith.addf %98, %100 : vector<16x256xf32>
    %102 = vector.broadcast %84 : vector<16x1xf32> to vector<16x256xf32>
    %103 = arith.addf %101, %102 : vector<16x256xf32>
    %104 = arith.addf %103, %47 : vector<16x256xf32>
    %cst_40 = arith.constant 0.000000e+00 : f32
    %105 = vector.broadcast %cst_40 : f32 to vector<16x256xf32>
    %106 = arith.maximumf %104, %105 : vector<16x256xf32>
    %c144 = arith.constant 144 : index
    %c0_41 = arith.constant 0 : index
    %107 = vector.load %arg2[%c144, %c0_41] : memref<1080x96xbf16, #tpu.memory_space<vmem>>, vector<32x48xbf16>
    %c176 = arith.constant 176 : index
    %c0_42 = arith.constant 0 : index
    %108 = vector.load %arg2[%c176, %c0_42] : memref<1080x96xbf16, #tpu.memory_space<vmem>>, vector<32x48xbf16>
    %c208 = arith.constant 208 : index
    %c0_43 = arith.constant 0 : index
    %109 = vector.load %arg2[%c208, %c0_43] : memref<1080x96xbf16, #tpu.memory_space<vmem>>, vector<32x48xbf16>
    %c48_44 = arith.constant 48 : index
    %c0_45 = arith.constant 0 : index
    %110 = vector.load %arg3[%c48_44, %c0_45] : memref<360x1xf32, #tpu.memory_space<vmem>>, vector<32x1xf32>
    %c16_i32_46 = arith.constant 16 : i32
    %111 = tpu.dynamic_rotate %106 by %c16_i32_46 dim 1 : vector<16x256xf32>, i32 -> vector<16x256xf32>
    %c240_i32_47 = arith.constant 240 : i32
    %112 = tpu.dynamic_rotate %106 by %c240_i32_47 dim 1 : vector<16x256xf32>, i32 -> vector<16x256xf32>
    %113 = arith.select %49, %112, %111 : vector<16x256xi1>, vector<16x256xf32>
    %114 = arith.select %51, %111, %112 : vector<16x256xi1>, vector<16x256xf32>
    %115 = tpu.concatenate %113, %106, %114 in 0 : vector<16x256xf32>, vector<16x256xf32>, vector<16x256xf32> -> vector<48x256xf32>
    %116 = arith.truncf %115 : vector<48x256xf32> to vector<48x256xbf16>
    %cst_48 = arith.constant dense<0.000000e+00> : vector<32x256xf32>
    %117 = tpu.matmul %108, %116, %cst_48 {dimension_numbers = #tpu.dot_dimension_numbers<[1], [0], [0], [1], [0, 0, 1, 1], [], []>} : vector<32x48xbf16>, vector<48x256xbf16>, vector<32x256xf32> -> vector<32x256xf32>
    %c1_i32_49 = arith.constant 1 : i32
    %118 = tpu.dynamic_rotate %115 by %c1_i32_49 dim 1 : vector<48x256xf32>, i32 -> vector<48x256xf32>
    %c255_i32_50 = arith.constant 255 : i32
    %119 = tpu.dynamic_rotate %115 by %c255_i32_50 dim 1 : vector<48x256xf32>, i32 -> vector<48x256xf32>
    %120 = arith.select %53, %119, %118 : vector<48x256xi1>, vector<48x256xf32>
    %121 = arith.select %55, %118, %119 : vector<48x256xi1>, vector<48x256xf32>
    %122 = arith.truncf %120 : vector<48x256xf32> to vector<48x256xbf16>
    %cst_51 = arith.constant dense<0.000000e+00> : vector<32x256xf32>
    %123 = tpu.matmul %107, %122, %cst_51 {dimension_numbers = #tpu.dot_dimension_numbers<[1], [0], [0], [1], [0, 0, 1, 1], [], []>} : vector<32x48xbf16>, vector<48x256xbf16>, vector<32x256xf32> -> vector<32x256xf32>
    %124 = arith.addf %117, %123 : vector<32x256xf32>
    %125 = arith.truncf %121 : vector<48x256xf32> to vector<48x256xbf16>
    %cst_52 = arith.constant dense<0.000000e+00> : vector<32x256xf32>
    %126 = tpu.matmul %109, %125, %cst_52 {dimension_numbers = #tpu.dot_dimension_numbers<[1], [0], [0], [1], [0, 0, 1, 1], [], []>} : vector<32x48xbf16>, vector<48x256xbf16>, vector<32x256xf32> -> vector<32x256xf32>
    %127 = arith.addf %124, %126 : vector<32x256xf32>
    %128 = vector.broadcast %110 : vector<32x1xf32> to vector<32x256xf32>
    %129 = arith.addf %127, %128 : vector<32x256xf32>
    %cst_53 = arith.constant 0.000000e+00 : f32
    %130 = vector.broadcast %cst_53 : f32 to vector<32x256xf32>
    %131 = arith.maximumf %129, %130 : vector<32x256xf32>
    %132 = vector.shape_cast %6 : vector<1x256xi1> to vector<1x256xi1>
    %133 = vector.broadcast %132 : vector<1x256xi1> to vector<32x256xi1>
    %134 = vector.shape_cast %8 : vector<1x256xi1> to vector<1x256xi1>
    %135 = vector.broadcast %134 : vector<1x256xi1> to vector<32x256xi1>
    %136 = vector.shape_cast %10 : vector<1x256xi1> to vector<1x256xi1>
    %137 = vector.broadcast %136 : vector<1x256xi1> to vector<96x256xi1>
    %138 = vector.shape_cast %12 : vector<1x256xi1> to vector<1x256xi1>
    %139 = vector.broadcast %138 : vector<1x256xi1> to vector<96x256xi1>
    %c240 = arith.constant 240 : index
    %c0_54 = arith.constant 0 : index
    %140 = vector.load %arg2[%c240, %c0_54] : memref<1080x96xbf16, #tpu.memory_space<vmem>>, vector<32x96xbf16>
    %c272 = arith.constant 272 : index
    %c0_55 = arith.constant 0 : index
    %141 = vector.load %arg2[%c272, %c0_55] : memref<1080x96xbf16, #tpu.memory_space<vmem>>, vector<32x96xbf16>
    %c304 = arith.constant 304 : index
    %c0_56 = arith.constant 0 : index
    %142 = vector.load %arg2[%c304, %c0_56] : memref<1080x96xbf16, #tpu.memory_space<vmem>>, vector<32x96xbf16>
    %c80_57 = arith.constant 80 : index
    %c0_58 = arith.constant 0 : index
    %143 = vector.load %arg3[%c80_57, %c0_58] : memref<360x1xf32, #tpu.memory_space<vmem>>, vector<32x1xf32>
    %c16_i32_59 = arith.constant 16 : i32
    %144 = tpu.dynamic_rotate %131 by %c16_i32_59 dim 1 : vector<32x256xf32>, i32 -> vector<32x256xf32>
    %c240_i32_60 = arith.constant 240 : i32
    %145 = tpu.dynamic_rotate %131 by %c240_i32_60 dim 1 : vector<32x256xf32>, i32 -> vector<32x256xf32>
    %146 = arith.select %133, %145, %144 : vector<32x256xi1>, vector<32x256xf32>
    %147 = arith.select %135, %144, %145 : vector<32x256xi1>, vector<32x256xf32>
    %148 = tpu.concatenate %146, %131, %147 in 0 : vector<32x256xf32>, vector<32x256xf32>, vector<32x256xf32> -> vector<96x256xf32>
    %149 = arith.truncf %148 : vector<96x256xf32> to vector<96x256xbf16>
    %cst_61 = arith.constant dense<0.000000e+00> : vector<32x256xf32>
    %150 = tpu.matmul %141, %149, %cst_61 {dimension_numbers = #tpu.dot_dimension_numbers<[1], [0], [0], [1], [0, 0, 1, 1], [], []>} : vector<32x96xbf16>, vector<96x256xbf16>, vector<32x256xf32> -> vector<32x256xf32>
    %c1_i32_62 = arith.constant 1 : i32
    %151 = tpu.dynamic_rotate %148 by %c1_i32_62 dim 1 : vector<96x256xf32>, i32 -> vector<96x256xf32>
    %c255_i32_63 = arith.constant 255 : i32
    %152 = tpu.dynamic_rotate %148 by %c255_i32_63 dim 1 : vector<96x256xf32>, i32 -> vector<96x256xf32>
    %153 = arith.select %137, %152, %151 : vector<96x256xi1>, vector<96x256xf32>
    %154 = arith.select %139, %151, %152 : vector<96x256xi1>, vector<96x256xf32>
    %155 = arith.truncf %153 : vector<96x256xf32> to vector<96x256xbf16>
    %cst_64 = arith.constant dense<0.000000e+00> : vector<32x256xf32>
    %156 = tpu.matmul %140, %155, %cst_64 {dimension_numbers = #tpu.dot_dimension_numbers<[1], [0], [0], [1], [0, 0, 1, 1], [], []>} : vector<32x96xbf16>, vector<96x256xbf16>, vector<32x256xf32> -> vector<32x256xf32>
    %157 = arith.addf %150, %156 : vector<32x256xf32>
    %158 = arith.truncf %154 : vector<96x256xf32> to vector<96x256xbf16>
    %cst_65 = arith.constant dense<0.000000e+00> : vector<32x256xf32>
    %159 = tpu.matmul %142, %158, %cst_65 {dimension_numbers = #tpu.dot_dimension_numbers<[1], [0], [0], [1], [0, 0, 1, 1], [], []>} : vector<32x96xbf16>, vector<96x256xbf16>, vector<32x256xf32> -> vector<32x256xf32>
    %160 = arith.addf %157, %159 : vector<32x256xf32>
    %161 = vector.broadcast %143 : vector<32x1xf32> to vector<32x256xf32>
    %162 = arith.addf %160, %161 : vector<32x256xf32>
    %cst_66 = arith.constant 0.000000e+00 : f32
    %163 = vector.broadcast %cst_66 : f32 to vector<32x256xf32>
    %164 = arith.maximumf %162, %163 : vector<32x256xf32>
    %c336 = arith.constant 336 : index
    %c0_67 = arith.constant 0 : index
    %165 = vector.load %arg2[%c336, %c0_67] : memref<1080x96xbf16, #tpu.memory_space<vmem>>, vector<32x96xbf16>
    %c368 = arith.constant 368 : index
    %c0_68 = arith.constant 0 : index
    %166 = vector.load %arg2[%c368, %c0_68] : memref<1080x96xbf16, #tpu.memory_space<vmem>>, vector<32x96xbf16>
    %c400 = arith.constant 400 : index
    %c0_69 = arith.constant 0 : index
    %167 = vector.load %arg2[%c400, %c0_69] : memref<1080x96xbf16, #tpu.memory_space<vmem>>, vector<32x96xbf16>
    %c112_70 = arith.constant 112 : index
    %c0_71 = arith.constant 0 : index
    %168 = vector.load %arg3[%c112_70, %c0_71] : memref<360x1xf32, #tpu.memory_space<vmem>>, vector<32x1xf32>
    %c16_i32_72 = arith.constant 16 : i32
    %169 = tpu.dynamic_rotate %164 by %c16_i32_72 dim 1 : vector<32x256xf32>, i32 -> vector<32x256xf32>
    %c240_i32_73 = arith.constant 240 : i32
    %170 = tpu.dynamic_rotate %164 by %c240_i32_73 dim 1 : vector<32x256xf32>, i32 -> vector<32x256xf32>
    %171 = arith.select %133, %170, %169 : vector<32x256xi1>, vector<32x256xf32>
    %172 = arith.select %135, %169, %170 : vector<32x256xi1>, vector<32x256xf32>
    %173 = tpu.concatenate %171, %164, %172 in 0 : vector<32x256xf32>, vector<32x256xf32>, vector<32x256xf32> -> vector<96x256xf32>
    %174 = arith.truncf %173 : vector<96x256xf32> to vector<96x256xbf16>
    %cst_74 = arith.constant dense<0.000000e+00> : vector<32x256xf32>
    %175 = tpu.matmul %166, %174, %cst_74 {dimension_numbers = #tpu.dot_dimension_numbers<[1], [0], [0], [1], [0, 0, 1, 1], [], []>} : vector<32x96xbf16>, vector<96x256xbf16>, vector<32x256xf32> -> vector<32x256xf32>
    %c1_i32_75 = arith.constant 1 : i32
    %176 = tpu.dynamic_rotate %173 by %c1_i32_75 dim 1 : vector<96x256xf32>, i32 -> vector<96x256xf32>
    %c255_i32_76 = arith.constant 255 : i32
    %177 = tpu.dynamic_rotate %173 by %c255_i32_76 dim 1 : vector<96x256xf32>, i32 -> vector<96x256xf32>
    %178 = arith.select %137, %177, %176 : vector<96x256xi1>, vector<96x256xf32>
    %179 = arith.select %139, %176, %177 : vector<96x256xi1>, vector<96x256xf32>
    %180 = arith.truncf %178 : vector<96x256xf32> to vector<96x256xbf16>
    %cst_77 = arith.constant dense<0.000000e+00> : vector<32x256xf32>
    %181 = tpu.matmul %165, %180, %cst_77 {dimension_numbers = #tpu.dot_dimension_numbers<[1], [0], [0], [1], [0, 0, 1, 1], [], []>} : vector<32x96xbf16>, vector<96x256xbf16>, vector<32x256xf32> -> vector<32x256xf32>
    %182 = arith.addf %175, %181 : vector<32x256xf32>
    %183 = arith.truncf %179 : vector<96x256xf32> to vector<96x256xbf16>
    %cst_78 = arith.constant dense<0.000000e+00> : vector<32x256xf32>
    %184 = tpu.matmul %167, %183, %cst_78 {dimension_numbers = #tpu.dot_dimension_numbers<[1], [0], [0], [1], [0, 0, 1, 1], [], []>} : vector<32x96xbf16>, vector<96x256xbf16>, vector<32x256xf32> -> vector<32x256xf32>
    %185 = arith.addf %182, %184 : vector<32x256xf32>
    %186 = vector.broadcast %168 : vector<32x1xf32> to vector<32x256xf32>
    %187 = arith.addf %185, %186 : vector<32x256xf32>
    %188 = arith.addf %187, %131 : vector<32x256xf32>
    %cst_79 = arith.constant 0.000000e+00 : f32
    %189 = vector.broadcast %cst_79 : f32 to vector<32x256xf32>
    %190 = arith.maximumf %188, %189 : vector<32x256xf32>
    %c432 = arith.constant 432 : index
    %c0_80 = arith.constant 0 : index
    %191 = vector.load %arg2[%c432, %c0_80] : memref<1080x96xbf16, #tpu.memory_space<vmem>>, vector<32x96xbf16>
    %c464 = arith.constant 464 : index
    %c0_81 = arith.constant 0 : index
    %192 = vector.load %arg2[%c464, %c0_81] : memref<1080x96xbf16, #tpu.memory_space<vmem>>, vector<32x96xbf16>
    %c496 = arith.constant 496 : index
    %c0_82 = arith.constant 0 : index
    %193 = vector.load %arg2[%c496, %c0_82] : memref<1080x96xbf16, #tpu.memory_space<vmem>>, vector<32x96xbf16>
    %c144_83 = arith.constant 144 : index
    %c0_84 = arith.constant 0 : index
    %194 = vector.load %arg3[%c144_83, %c0_84] : memref<360x1xf32, #tpu.memory_space<vmem>>, vector<32x1xf32>
    %c16_i32_85 = arith.constant 16 : i32
    %195 = tpu.dynamic_rotate %190 by %c16_i32_85 dim 1 : vector<32x256xf32>, i32 -> vector<32x256xf32>
    %c240_i32_86 = arith.constant 240 : i32
    %196 = tpu.dynamic_rotate %190 by %c240_i32_86 dim 1 : vector<32x256xf32>, i32 -> vector<32x256xf32>
    %197 = arith.select %133, %196, %195 : vector<32x256xi1>, vector<32x256xf32>
    %198 = arith.select %135, %195, %196 : vector<32x256xi1>, vector<32x256xf32>
    %199 = tpu.concatenate %197, %190, %198 in 0 : vector<32x256xf32>, vector<32x256xf32>, vector<32x256xf32> -> vector<96x256xf32>
    %200 = arith.truncf %199 : vector<96x256xf32> to vector<96x256xbf16>
    %cst_87 = arith.constant dense<0.000000e+00> : vector<32x256xf32>
    %201 = tpu.matmul %192, %200, %cst_87 {dimension_numbers = #tpu.dot_dimension_numbers<[1], [0], [0], [1], [0, 0, 1, 1], [], []>} : vector<32x96xbf16>, vector<96x256xbf16>, vector<32x256xf32> -> vector<32x256xf32>
    %c1_i32_88 = arith.constant 1 : i32
    %202 = tpu.dynamic_rotate %199 by %c1_i32_88 dim 1 : vector<96x256xf32>, i32 -> vector<96x256xf32>
    %c255_i32_89 = arith.constant 255 : i32
    %203 = tpu.dynamic_rotate %199 by %c255_i32_89 dim 1 : vector<96x256xf32>, i32 -> vector<96x256xf32>
    %204 = arith.select %137, %203, %202 : vector<96x256xi1>, vector<96x256xf32>
    %205 = arith.select %139, %202, %203 : vector<96x256xi1>, vector<96x256xf32>
    %206 = arith.truncf %204 : vector<96x256xf32> to vector<96x256xbf16>
    %cst_90 = arith.constant dense<0.000000e+00> : vector<32x256xf32>
    %207 = tpu.matmul %191, %206, %cst_90 {dimension_numbers = #tpu.dot_dimension_numbers<[1], [0], [0], [1], [0, 0, 1, 1], [], []>} : vector<32x96xbf16>, vector<96x256xbf16>, vector<32x256xf32> -> vector<32x256xf32>
    %208 = arith.addf %201, %207 : vector<32x256xf32>
    %209 = arith.truncf %205 : vector<96x256xf32> to vector<96x256xbf16>
    %cst_91 = arith.constant dense<0.000000e+00> : vector<32x256xf32>
    %210 = tpu.matmul %193, %209, %cst_91 {dimension_numbers = #tpu.dot_dimension_numbers<[1], [0], [0], [1], [0, 0, 1, 1], [], []>} : vector<32x96xbf16>, vector<96x256xbf16>, vector<32x256xf32> -> vector<32x256xf32>
    %211 = arith.addf %208, %210 : vector<32x256xf32>
    %212 = vector.broadcast %194 : vector<32x1xf32> to vector<32x256xf32>
    %213 = arith.addf %211, %212 : vector<32x256xf32>
    %cst_92 = arith.constant 0.000000e+00 : f32
    %214 = vector.broadcast %cst_92 : f32 to vector<32x256xf32>
    %215 = arith.maximumf %213, %214 : vector<32x256xf32>
    %c528 = arith.constant 528 : index
    %c0_93 = arith.constant 0 : index
    %216 = vector.load %arg2[%c528, %c0_93] : memref<1080x96xbf16, #tpu.memory_space<vmem>>, vector<32x96xbf16>
    %c560 = arith.constant 560 : index
    %c0_94 = arith.constant 0 : index
    %217 = vector.load %arg2[%c560, %c0_94] : memref<1080x96xbf16, #tpu.memory_space<vmem>>, vector<32x96xbf16>
    %c592 = arith.constant 592 : index
    %c0_95 = arith.constant 0 : index
    %218 = vector.load %arg2[%c592, %c0_95] : memref<1080x96xbf16, #tpu.memory_space<vmem>>, vector<32x96xbf16>
    %c176_96 = arith.constant 176 : index
    %c0_97 = arith.constant 0 : index
    %219 = vector.load %arg3[%c176_96, %c0_97] : memref<360x1xf32, #tpu.memory_space<vmem>>, vector<32x1xf32>
    %c16_i32_98 = arith.constant 16 : i32
    %220 = tpu.dynamic_rotate %215 by %c16_i32_98 dim 1 : vector<32x256xf32>, i32 -> vector<32x256xf32>
    %c240_i32_99 = arith.constant 240 : i32
    %221 = tpu.dynamic_rotate %215 by %c240_i32_99 dim 1 : vector<32x256xf32>, i32 -> vector<32x256xf32>
    %222 = arith.select %133, %221, %220 : vector<32x256xi1>, vector<32x256xf32>
    %223 = arith.select %135, %220, %221 : vector<32x256xi1>, vector<32x256xf32>
    %224 = tpu.concatenate %222, %215, %223 in 0 : vector<32x256xf32>, vector<32x256xf32>, vector<32x256xf32> -> vector<96x256xf32>
    %225 = arith.truncf %224 : vector<96x256xf32> to vector<96x256xbf16>
    %cst_100 = arith.constant dense<0.000000e+00> : vector<32x256xf32>
    %226 = tpu.matmul %217, %225, %cst_100 {dimension_numbers = #tpu.dot_dimension_numbers<[1], [0], [0], [1], [0, 0, 1, 1], [], []>} : vector<32x96xbf16>, vector<96x256xbf16>, vector<32x256xf32> -> vector<32x256xf32>
    %c1_i32_101 = arith.constant 1 : i32
    %227 = tpu.dynamic_rotate %224 by %c1_i32_101 dim 1 : vector<96x256xf32>, i32 -> vector<96x256xf32>
    %c255_i32_102 = arith.constant 255 : i32
    %228 = tpu.dynamic_rotate %224 by %c255_i32_102 dim 1 : vector<96x256xf32>, i32 -> vector<96x256xf32>
    %229 = arith.select %137, %228, %227 : vector<96x256xi1>, vector<96x256xf32>
    %230 = arith.select %139, %227, %228 : vector<96x256xi1>, vector<96x256xf32>
    %231 = arith.truncf %229 : vector<96x256xf32> to vector<96x256xbf16>
    %cst_103 = arith.constant dense<0.000000e+00> : vector<32x256xf32>
    %232 = tpu.matmul %216, %231, %cst_103 {dimension_numbers = #tpu.dot_dimension_numbers<[1], [0], [0], [1], [0, 0, 1, 1], [], []>} : vector<32x96xbf16>, vector<96x256xbf16>, vector<32x256xf32> -> vector<32x256xf32>
    %233 = arith.addf %226, %232 : vector<32x256xf32>
    %234 = arith.truncf %230 : vector<96x256xf32> to vector<96x256xbf16>
    %cst_104 = arith.constant dense<0.000000e+00> : vector<32x256xf32>
    %235 = tpu.matmul %218, %234, %cst_104 {dimension_numbers = #tpu.dot_dimension_numbers<[1], [0], [0], [1], [0, 0, 1, 1], [], []>} : vector<32x96xbf16>, vector<96x256xbf16>, vector<32x256xf32> -> vector<32x256xf32>
    %236 = arith.addf %233, %235 : vector<32x256xf32>
    %237 = vector.broadcast %219 : vector<32x1xf32> to vector<32x256xf32>
    %238 = arith.addf %236, %237 : vector<32x256xf32>
    %239 = arith.addf %238, %190 : vector<32x256xf32>
    %cst_105 = arith.constant 0.000000e+00 : f32
    %240 = vector.broadcast %cst_105 : f32 to vector<32x256xf32>
    %241 = arith.maximumf %239, %240 : vector<32x256xf32>
    %c624 = arith.constant 624 : index
    %c0_106 = arith.constant 0 : index
    %242 = vector.load %arg2[%c624, %c0_106] : memref<1080x96xbf16, #tpu.memory_space<vmem>>, vector<16x96xbf16>
    %c640 = arith.constant 640 : index
    %c0_107 = arith.constant 0 : index
    %243 = vector.load %arg2[%c640, %c0_107] : memref<1080x96xbf16, #tpu.memory_space<vmem>>, vector<16x96xbf16>
    %c656 = arith.constant 656 : index
    %c0_108 = arith.constant 0 : index
    %244 = vector.load %arg2[%c656, %c0_108] : memref<1080x96xbf16, #tpu.memory_space<vmem>>, vector<16x96xbf16>
    %c208_109 = arith.constant 208 : index
    %c0_110 = arith.constant 0 : index
    %245 = vector.load %arg3[%c208_109, %c0_110] : memref<360x1xf32, #tpu.memory_space<vmem>>, vector<16x1xf32>
    %c16_i32_111 = arith.constant 16 : i32
    %246 = tpu.dynamic_rotate %241 by %c16_i32_111 dim 1 : vector<32x256xf32>, i32 -> vector<32x256xf32>
    %c240_i32_112 = arith.constant 240 : i32
    %247 = tpu.dynamic_rotate %241 by %c240_i32_112 dim 1 : vector<32x256xf32>, i32 -> vector<32x256xf32>
    %248 = arith.select %133, %247, %246 : vector<32x256xi1>, vector<32x256xf32>
    %249 = arith.select %135, %246, %247 : vector<32x256xi1>, vector<32x256xf32>
    %250 = tpu.concatenate %248, %241, %249 in 0 : vector<32x256xf32>, vector<32x256xf32>, vector<32x256xf32> -> vector<96x256xf32>
    %251 = arith.truncf %250 : vector<96x256xf32> to vector<96x256xbf16>
    %cst_113 = arith.constant dense<0.000000e+00> : vector<16x256xf32>
    %252 = tpu.matmul %243, %251, %cst_113 {dimension_numbers = #tpu.dot_dimension_numbers<[1], [0], [0], [1], [0, 0, 1, 1], [], []>} : vector<16x96xbf16>, vector<96x256xbf16>, vector<16x256xf32> -> vector<16x256xf32>
    %c1_i32_114 = arith.constant 1 : i32
    %253 = tpu.dynamic_rotate %250 by %c1_i32_114 dim 1 : vector<96x256xf32>, i32 -> vector<96x256xf32>
    %c255_i32_115 = arith.constant 255 : i32
    %254 = tpu.dynamic_rotate %250 by %c255_i32_115 dim 1 : vector<96x256xf32>, i32 -> vector<96x256xf32>
    %255 = arith.select %137, %254, %253 : vector<96x256xi1>, vector<96x256xf32>
    %256 = arith.select %139, %253, %254 : vector<96x256xi1>, vector<96x256xf32>
    %257 = arith.truncf %255 : vector<96x256xf32> to vector<96x256xbf16>
    %cst_116 = arith.constant dense<0.000000e+00> : vector<16x256xf32>
    %258 = tpu.matmul %242, %257, %cst_116 {dimension_numbers = #tpu.dot_dimension_numbers<[1], [0], [0], [1], [0, 0, 1, 1], [], []>} : vector<16x96xbf16>, vector<96x256xbf16>, vector<16x256xf32> -> vector<16x256xf32>
    %259 = arith.addf %252, %258 : vector<16x256xf32>
    %260 = arith.truncf %256 : vector<96x256xf32> to vector<96x256xbf16>
    %cst_117 = arith.constant dense<0.000000e+00> : vector<16x256xf32>
    %261 = tpu.matmul %244, %260, %cst_117 {dimension_numbers = #tpu.dot_dimension_numbers<[1], [0], [0], [1], [0, 0, 1, 1], [], []>} : vector<16x96xbf16>, vector<96x256xbf16>, vector<16x256xf32> -> vector<16x256xf32>
    %262 = arith.addf %259, %261 : vector<16x256xf32>
    %263 = vector.broadcast %245 : vector<16x1xf32> to vector<16x256xf32>
    %264 = arith.addf %262, %263 : vector<16x256xf32>
    %cst_118 = arith.constant 0.000000e+00 : f32
    %265 = vector.broadcast %cst_118 : f32 to vector<16x256xf32>
    %266 = arith.maximumf %264, %265 : vector<16x256xf32>
    %c672 = arith.constant 672 : index
    %c0_119 = arith.constant 0 : index
    %267 = vector.load %arg2[%c672, %c0_119] : memref<1080x96xbf16, #tpu.memory_space<vmem>>, vector<16x48xbf16>
    %c688 = arith.constant 688 : index
    %c0_120 = arith.constant 0 : index
    %268 = vector.load %arg2[%c688, %c0_120] : memref<1080x96xbf16, #tpu.memory_space<vmem>>, vector<16x48xbf16>
    %c704 = arith.constant 704 : index
    %c0_121 = arith.constant 0 : index
    %269 = vector.load %arg2[%c704, %c0_121] : memref<1080x96xbf16, #tpu.memory_space<vmem>>, vector<16x48xbf16>
    %c224 = arith.constant 224 : index
    %c0_122 = arith.constant 0 : index
    %270 = vector.load %arg3[%c224, %c0_122] : memref<360x1xf32, #tpu.memory_space<vmem>>, vector<16x1xf32>
    %c16_i32_123 = arith.constant 16 : i32
    %271 = tpu.dynamic_rotate %266 by %c16_i32_123 dim 1 : vector<16x256xf32>, i32 -> vector<16x256xf32>
    %c240_i32_124 = arith.constant 240 : i32
    %272 = tpu.dynamic_rotate %266 by %c240_i32_124 dim 1 : vector<16x256xf32>, i32 -> vector<16x256xf32>
    %273 = arith.select %49, %272, %271 : vector<16x256xi1>, vector<16x256xf32>
    %274 = arith.select %51, %271, %272 : vector<16x256xi1>, vector<16x256xf32>
    %275 = tpu.concatenate %273, %266, %274 in 0 : vector<16x256xf32>, vector<16x256xf32>, vector<16x256xf32> -> vector<48x256xf32>
    %276 = arith.truncf %275 : vector<48x256xf32> to vector<48x256xbf16>
    %cst_125 = arith.constant dense<0.000000e+00> : vector<16x256xf32>
    %277 = tpu.matmul %268, %276, %cst_125 {dimension_numbers = #tpu.dot_dimension_numbers<[1], [0], [0], [1], [0, 0, 1, 1], [], []>} : vector<16x48xbf16>, vector<48x256xbf16>, vector<16x256xf32> -> vector<16x256xf32>
    %c1_i32_126 = arith.constant 1 : i32
    %278 = tpu.dynamic_rotate %275 by %c1_i32_126 dim 1 : vector<48x256xf32>, i32 -> vector<48x256xf32>
    %c255_i32_127 = arith.constant 255 : i32
    %279 = tpu.dynamic_rotate %275 by %c255_i32_127 dim 1 : vector<48x256xf32>, i32 -> vector<48x256xf32>
    %280 = arith.select %53, %279, %278 : vector<48x256xi1>, vector<48x256xf32>
    %281 = arith.select %55, %278, %279 : vector<48x256xi1>, vector<48x256xf32>
    %282 = arith.truncf %280 : vector<48x256xf32> to vector<48x256xbf16>
    %cst_128 = arith.constant dense<0.000000e+00> : vector<16x256xf32>
    %283 = tpu.matmul %267, %282, %cst_128 {dimension_numbers = #tpu.dot_dimension_numbers<[1], [0], [0], [1], [0, 0, 1, 1], [], []>} : vector<16x48xbf16>, vector<48x256xbf16>, vector<16x256xf32> -> vector<16x256xf32>
    %284 = arith.addf %277, %283 : vector<16x256xf32>
    %285 = arith.truncf %281 : vector<48x256xf32> to vector<48x256xbf16>
    %cst_129 = arith.constant dense<0.000000e+00> : vector<16x256xf32>
    %286 = tpu.matmul %269, %285, %cst_129 {dimension_numbers = #tpu.dot_dimension_numbers<[1], [0], [0], [1], [0, 0, 1, 1], [], []>} : vector<16x48xbf16>, vector<48x256xbf16>, vector<16x256xf32> -> vector<16x256xf32>
    %287 = arith.addf %284, %286 : vector<16x256xf32>
    %288 = vector.broadcast %270 : vector<16x1xf32> to vector<16x256xf32>
    %289 = arith.addf %287, %288 : vector<16x256xf32>
    %cst_130 = arith.constant 0.000000e+00 : f32
    %290 = vector.broadcast %cst_130 : f32 to vector<16x256xf32>
    %291 = arith.maximumf %289, %290 : vector<16x256xf32>
    %c720 = arith.constant 720 : index
    %c0_131 = arith.constant 0 : index
    %292 = vector.load %arg2[%c720, %c0_131] : memref<1080x96xbf16, #tpu.memory_space<vmem>>, vector<16x48xbf16>
    %c736 = arith.constant 736 : index
    %c0_132 = arith.constant 0 : index
    %293 = vector.load %arg2[%c736, %c0_132] : memref<1080x96xbf16, #tpu.memory_space<vmem>>, vector<16x48xbf16>
    %c752 = arith.constant 752 : index
    %c0_133 = arith.constant 0 : index
    %294 = vector.load %arg2[%c752, %c0_133] : memref<1080x96xbf16, #tpu.memory_space<vmem>>, vector<16x48xbf16>
    %c240_134 = arith.constant 240 : index
    %c0_135 = arith.constant 0 : index
    %295 = vector.load %arg3[%c240_134, %c0_135] : memref<360x1xf32, #tpu.memory_space<vmem>>, vector<16x1xf32>
    %c16_i32_136 = arith.constant 16 : i32
    %296 = tpu.dynamic_rotate %291 by %c16_i32_136 dim 1 : vector<16x256xf32>, i32 -> vector<16x256xf32>
    %c240_i32_137 = arith.constant 240 : i32
    %297 = tpu.dynamic_rotate %291 by %c240_i32_137 dim 1 : vector<16x256xf32>, i32 -> vector<16x256xf32>
    %298 = arith.select %49, %297, %296 : vector<16x256xi1>, vector<16x256xf32>
    %299 = arith.select %51, %296, %297 : vector<16x256xi1>, vector<16x256xf32>
    %300 = tpu.concatenate %298, %291, %299 in 0 : vector<16x256xf32>, vector<16x256xf32>, vector<16x256xf32> -> vector<48x256xf32>
    %301 = arith.truncf %300 : vector<48x256xf32> to vector<48x256xbf16>
    %cst_138 = arith.constant dense<0.000000e+00> : vector<16x256xf32>
    %302 = tpu.matmul %293, %301, %cst_138 {dimension_numbers = #tpu.dot_dimension_numbers<[1], [0], [0], [1], [0, 0, 1, 1], [], []>} : vector<16x48xbf16>, vector<48x256xbf16>, vector<16x256xf32> -> vector<16x256xf32>
    %c1_i32_139 = arith.constant 1 : i32
    %303 = tpu.dynamic_rotate %300 by %c1_i32_139 dim 1 : vector<48x256xf32>, i32 -> vector<48x256xf32>
    %c255_i32_140 = arith.constant 255 : i32
    %304 = tpu.dynamic_rotate %300 by %c255_i32_140 dim 1 : vector<48x256xf32>, i32 -> vector<48x256xf32>
    %305 = arith.select %53, %304, %303 : vector<48x256xi1>, vector<48x256xf32>
    %306 = arith.select %55, %303, %304 : vector<48x256xi1>, vector<48x256xf32>
    %307 = arith.truncf %305 : vector<48x256xf32> to vector<48x256xbf16>
    %cst_141 = arith.constant dense<0.000000e+00> : vector<16x256xf32>
    %308 = tpu.matmul %292, %307, %cst_141 {dimension_numbers = #tpu.dot_dimension_numbers<[1], [0], [0], [1], [0, 0, 1, 1], [], []>} : vector<16x48xbf16>, vector<48x256xbf16>, vector<16x256xf32> -> vector<16x256xf32>
    %309 = arith.addf %302, %308 : vector<16x256xf32>
    %310 = arith.truncf %306 : vector<48x256xf32> to vector<48x256xbf16>
    %cst_142 = arith.constant dense<0.000000e+00> : vector<16x256xf32>
    %311 = tpu.matmul %294, %310, %cst_142 {dimension_numbers = #tpu.dot_dimension_numbers<[1], [0], [0], [1], [0, 0, 1, 1], [], []>} : vector<16x48xbf16>, vector<48x256xbf16>, vector<16x256xf32> -> vector<16x256xf32>
    %312 = arith.addf %309, %311 : vector<16x256xf32>
    %313 = vector.broadcast %295 : vector<16x1xf32> to vector<16x256xf32>
    %314 = arith.addf %312, %313 : vector<16x256xf32>
    %315 = arith.addf %314, %266 : vector<16x256xf32>
    %cst_143 = arith.constant 0.000000e+00 : f32
    %316 = vector.broadcast %cst_143 : f32 to vector<16x256xf32>
    %317 = arith.maximumf %315, %316 : vector<16x256xf32>
    %c768 = arith.constant 768 : index
    %c0_144 = arith.constant 0 : index
    %318 = vector.load %arg2[%c768, %c0_144] : memref<1080x96xbf16, #tpu.memory_space<vmem>>, vector<16x48xbf16>
    %c784 = arith.constant 784 : index
    %c0_145 = arith.constant 0 : index
    %319 = vector.load %arg2[%c784, %c0_145] : memref<1080x96xbf16, #tpu.memory_space<vmem>>, vector<16x48xbf16>
    %c800 = arith.constant 800 : index
    %c0_146 = arith.constant 0 : index
    %320 = vector.load %arg2[%c800, %c0_146] : memref<1080x96xbf16, #tpu.memory_space<vmem>>, vector<16x48xbf16>
    %c256 = arith.constant 256 : index
    %c0_147 = arith.constant 0 : index
    %321 = vector.load %arg3[%c256, %c0_147] : memref<360x1xf32, #tpu.memory_space<vmem>>, vector<16x1xf32>
    %c16_i32_148 = arith.constant 16 : i32
    %322 = tpu.dynamic_rotate %317 by %c16_i32_148 dim 1 : vector<16x256xf32>, i32 -> vector<16x256xf32>
    %c240_i32_149 = arith.constant 240 : i32
    %323 = tpu.dynamic_rotate %317 by %c240_i32_149 dim 1 : vector<16x256xf32>, i32 -> vector<16x256xf32>
    %324 = arith.select %49, %323, %322 : vector<16x256xi1>, vector<16x256xf32>
    %325 = arith.select %51, %322, %323 : vector<16x256xi1>, vector<16x256xf32>
    %326 = tpu.concatenate %324, %317, %325 in 0 : vector<16x256xf32>, vector<16x256xf32>, vector<16x256xf32> -> vector<48x256xf32>
    %327 = arith.truncf %326 : vector<48x256xf32> to vector<48x256xbf16>
    %cst_150 = arith.constant dense<0.000000e+00> : vector<16x256xf32>
    %328 = tpu.matmul %319, %327, %cst_150 {dimension_numbers = #tpu.dot_dimension_numbers<[1], [0], [0], [1], [0, 0, 1, 1], [], []>} : vector<16x48xbf16>, vector<48x256xbf16>, vector<16x256xf32> -> vector<16x256xf32>
    %c1_i32_151 = arith.constant 1 : i32
    %329 = tpu.dynamic_rotate %326 by %c1_i32_151 dim 1 : vector<48x256xf32>, i32 -> vector<48x256xf32>
    %c255_i32_152 = arith.constant 255 : i32
    %330 = tpu.dynamic_rotate %326 by %c255_i32_152 dim 1 : vector<48x256xf32>, i32 -> vector<48x256xf32>
    %331 = arith.select %53, %330, %329 : vector<48x256xi1>, vector<48x256xf32>
    %332 = arith.select %55, %329, %330 : vector<48x256xi1>, vector<48x256xf32>
    %333 = arith.truncf %331 : vector<48x256xf32> to vector<48x256xbf16>
    %cst_153 = arith.constant dense<0.000000e+00> : vector<16x256xf32>
    %334 = tpu.matmul %318, %333, %cst_153 {dimension_numbers = #tpu.dot_dimension_numbers<[1], [0], [0], [1], [0, 0, 1, 1], [], []>} : vector<16x48xbf16>, vector<48x256xbf16>, vector<16x256xf32> -> vector<16x256xf32>
    %335 = arith.addf %328, %334 : vector<16x256xf32>
    %336 = arith.truncf %332 : vector<48x256xf32> to vector<48x256xbf16>
    %cst_154 = arith.constant dense<0.000000e+00> : vector<16x256xf32>
    %337 = tpu.matmul %320, %336, %cst_154 {dimension_numbers = #tpu.dot_dimension_numbers<[1], [0], [0], [1], [0, 0, 1, 1], [], []>} : vector<16x48xbf16>, vector<48x256xbf16>, vector<16x256xf32> -> vector<16x256xf32>
    %338 = arith.addf %335, %337 : vector<16x256xf32>
    %339 = vector.broadcast %321 : vector<16x1xf32> to vector<16x256xf32>
    %340 = arith.addf %338, %339 : vector<16x256xf32>
    %cst_155 = arith.constant 0.000000e+00 : f32
    %341 = vector.broadcast %cst_155 : f32 to vector<16x256xf32>
    %342 = arith.maximumf %340, %341 : vector<16x256xf32>
    %c816 = arith.constant 816 : index
    %c0_156 = arith.constant 0 : index
    %343 = vector.load %arg2[%c816, %c0_156] : memref<1080x96xbf16, #tpu.memory_space<vmem>>, vector<16x48xbf16>
    %c832 = arith.constant 832 : index
    %c0_157 = arith.constant 0 : index
    %344 = vector.load %arg2[%c832, %c0_157] : memref<1080x96xbf16, #tpu.memory_space<vmem>>, vector<16x48xbf16>
    %c848 = arith.constant 848 : index
    %c0_158 = arith.constant 0 : index
    %345 = vector.load %arg2[%c848, %c0_158] : memref<1080x96xbf16, #tpu.memory_space<vmem>>, vector<16x48xbf16>
    %c272_159 = arith.constant 272 : index
    %c0_160 = arith.constant 0 : index
    %346 = vector.load %arg3[%c272_159, %c0_160] : memref<360x1xf32, #tpu.memory_space<vmem>>, vector<16x1xf32>
    %c16_i32_161 = arith.constant 16 : i32
    %347 = tpu.dynamic_rotate %342 by %c16_i32_161 dim 1 : vector<16x256xf32>, i32 -> vector<16x256xf32>
    %c240_i32_162 = arith.constant 240 : i32
    %348 = tpu.dynamic_rotate %342 by %c240_i32_162 dim 1 : vector<16x256xf32>, i32 -> vector<16x256xf32>
    %349 = arith.select %49, %348, %347 : vector<16x256xi1>, vector<16x256xf32>
    %350 = arith.select %51, %347, %348 : vector<16x256xi1>, vector<16x256xf32>
    %351 = tpu.concatenate %349, %342, %350 in 0 : vector<16x256xf32>, vector<16x256xf32>, vector<16x256xf32> -> vector<48x256xf32>
    %352 = arith.truncf %351 : vector<48x256xf32> to vector<48x256xbf16>
    %cst_163 = arith.constant dense<0.000000e+00> : vector<16x256xf32>
    %353 = tpu.matmul %344, %352, %cst_163 {dimension_numbers = #tpu.dot_dimension_numbers<[1], [0], [0], [1], [0, 0, 1, 1], [], []>} : vector<16x48xbf16>, vector<48x256xbf16>, vector<16x256xf32> -> vector<16x256xf32>
    %c1_i32_164 = arith.constant 1 : i32
    %354 = tpu.dynamic_rotate %351 by %c1_i32_164 dim 1 : vector<48x256xf32>, i32 -> vector<48x256xf32>
    %c255_i32_165 = arith.constant 255 : i32
    %355 = tpu.dynamic_rotate %351 by %c255_i32_165 dim 1 : vector<48x256xf32>, i32 -> vector<48x256xf32>
    %356 = arith.select %53, %355, %354 : vector<48x256xi1>, vector<48x256xf32>
    %357 = arith.select %55, %354, %355 : vector<48x256xi1>, vector<48x256xf32>
    %358 = arith.truncf %356 : vector<48x256xf32> to vector<48x256xbf16>
    %cst_166 = arith.constant dense<0.000000e+00> : vector<16x256xf32>
    %359 = tpu.matmul %343, %358, %cst_166 {dimension_numbers = #tpu.dot_dimension_numbers<[1], [0], [0], [1], [0, 0, 1, 1], [], []>} : vector<16x48xbf16>, vector<48x256xbf16>, vector<16x256xf32> -> vector<16x256xf32>
    %360 = arith.addf %353, %359 : vector<16x256xf32>
    %361 = arith.truncf %357 : vector<48x256xf32> to vector<48x256xbf16>
    %cst_167 = arith.constant dense<0.000000e+00> : vector<16x256xf32>
    %362 = tpu.matmul %345, %361, %cst_167 {dimension_numbers = #tpu.dot_dimension_numbers<[1], [0], [0], [1], [0, 0, 1, 1], [], []>} : vector<16x48xbf16>, vector<48x256xbf16>, vector<16x256xf32> -> vector<16x256xf32>
    %363 = arith.addf %360, %362 : vector<16x256xf32>
    %364 = vector.broadcast %346 : vector<16x1xf32> to vector<16x256xf32>
    %365 = arith.addf %363, %364 : vector<16x256xf32>
    %366 = arith.addf %365, %317 : vector<16x256xf32>
    %cst_168 = arith.constant 0.000000e+00 : f32
    %367 = vector.broadcast %cst_168 : f32 to vector<16x256xf32>
    %368 = arith.maximumf %366, %367 : vector<16x256xf32>
    %c864 = arith.constant 864 : index
    %c0_169 = arith.constant 0 : index
    %369 = vector.load %arg2[%c864, %c0_169] : memref<1080x96xbf16, #tpu.memory_space<vmem>>, vector<8x48xbf16>
    %c872 = arith.constant 872 : index
    %c0_170 = arith.constant 0 : index
    %370 = vector.load %arg2[%c872, %c0_170] : memref<1080x96xbf16, #tpu.memory_space<vmem>>, vector<8x48xbf16>
    %c880 = arith.constant 880 : index
    %c0_171 = arith.constant 0 : index
    %371 = vector.load %arg2[%c880, %c0_171] : memref<1080x96xbf16, #tpu.memory_space<vmem>>, vector<8x48xbf16>
    %c288 = arith.constant 288 : index
    %c0_172 = arith.constant 0 : index
    %372 = vector.load %arg3[%c288, %c0_172] : memref<360x1xf32, #tpu.memory_space<vmem>>, vector<8x1xf32>
    %c16_i32_173 = arith.constant 16 : i32
    %373 = tpu.dynamic_rotate %368 by %c16_i32_173 dim 1 : vector<16x256xf32>, i32 -> vector<16x256xf32>
    %c240_i32_174 = arith.constant 240 : i32
    %374 = tpu.dynamic_rotate %368 by %c240_i32_174 dim 1 : vector<16x256xf32>, i32 -> vector<16x256xf32>
    %375 = arith.select %49, %374, %373 : vector<16x256xi1>, vector<16x256xf32>
    %376 = arith.select %51, %373, %374 : vector<16x256xi1>, vector<16x256xf32>
    %377 = tpu.concatenate %375, %368, %376 in 0 : vector<16x256xf32>, vector<16x256xf32>, vector<16x256xf32> -> vector<48x256xf32>
    %378 = arith.truncf %377 : vector<48x256xf32> to vector<48x256xbf16>
    %cst_175 = arith.constant dense<0.000000e+00> : vector<8x256xf32>
    %379 = tpu.matmul %370, %378, %cst_175 {dimension_numbers = #tpu.dot_dimension_numbers<[1], [0], [0], [1], [0, 0, 1, 1], [], []>} : vector<8x48xbf16>, vector<48x256xbf16>, vector<8x256xf32> -> vector<8x256xf32>
    %c1_i32_176 = arith.constant 1 : i32
    %380 = tpu.dynamic_rotate %377 by %c1_i32_176 dim 1 : vector<48x256xf32>, i32 -> vector<48x256xf32>
    %c255_i32_177 = arith.constant 255 : i32
    %381 = tpu.dynamic_rotate %377 by %c255_i32_177 dim 1 : vector<48x256xf32>, i32 -> vector<48x256xf32>
    %382 = arith.select %53, %381, %380 : vector<48x256xi1>, vector<48x256xf32>
    %383 = arith.select %55, %380, %381 : vector<48x256xi1>, vector<48x256xf32>
    %384 = arith.truncf %382 : vector<48x256xf32> to vector<48x256xbf16>
    %cst_178 = arith.constant dense<0.000000e+00> : vector<8x256xf32>
    %385 = tpu.matmul %369, %384, %cst_178 {dimension_numbers = #tpu.dot_dimension_numbers<[1], [0], [0], [1], [0, 0, 1, 1], [], []>} : vector<8x48xbf16>, vector<48x256xbf16>, vector<8x256xf32> -> vector<8x256xf32>
    %386 = arith.addf %379, %385 : vector<8x256xf32>
    %387 = arith.truncf %383 : vector<48x256xf32> to vector<48x256xbf16>
    %cst_179 = arith.constant dense<0.000000e+00> : vector<8x256xf32>
    %388 = tpu.matmul %371, %387, %cst_179 {dimension_numbers = #tpu.dot_dimension_numbers<[1], [0], [0], [1], [0, 0, 1, 1], [], []>} : vector<8x48xbf16>, vector<48x256xbf16>, vector<8x256xf32> -> vector<8x256xf32>
    %389 = arith.addf %386, %388 : vector<8x256xf32>
    %390 = vector.broadcast %372 : vector<8x1xf32> to vector<8x256xf32>
    %391 = arith.addf %389, %390 : vector<8x256xf32>
    %cst_180 = arith.constant 0.000000e+00 : f32
    %392 = vector.broadcast %cst_180 : f32 to vector<8x256xf32>
    %393 = arith.maximumf %391, %392 : vector<8x256xf32>
    %c888 = arith.constant 888 : index
    %c0_181 = arith.constant 0 : index
    %394 = vector.load %arg2[%c888, %c0_181] : memref<1080x96xbf16, #tpu.memory_space<vmem>>, vector<8x24xbf16>
    %c896 = arith.constant 896 : index
    %c0_182 = arith.constant 0 : index
    %395 = vector.load %arg2[%c896, %c0_182] : memref<1080x96xbf16, #tpu.memory_space<vmem>>, vector<8x24xbf16>
    %c904 = arith.constant 904 : index
    %c0_183 = arith.constant 0 : index
    %396 = vector.load %arg2[%c904, %c0_183] : memref<1080x96xbf16, #tpu.memory_space<vmem>>, vector<8x24xbf16>
    %c296 = arith.constant 296 : index
    %c0_184 = arith.constant 0 : index
    %397 = vector.load %arg3[%c296, %c0_184] : memref<360x1xf32, #tpu.memory_space<vmem>>, vector<8x1xf32>
    %c16_i32_185 = arith.constant 16 : i32
    %398 = tpu.dynamic_rotate %393 by %c16_i32_185 dim 1 : vector<8x256xf32>, i32 -> vector<8x256xf32>
    %c240_i32_186 = arith.constant 240 : i32
    %399 = tpu.dynamic_rotate %393 by %c240_i32_186 dim 1 : vector<8x256xf32>, i32 -> vector<8x256xf32>
    %400 = arith.select %16, %399, %398 : vector<8x256xi1>, vector<8x256xf32>
    %401 = arith.select %18, %398, %399 : vector<8x256xi1>, vector<8x256xf32>
    %402 = tpu.concatenate %400, %393, %401 in 0 : vector<8x256xf32>, vector<8x256xf32>, vector<8x256xf32> -> vector<24x256xf32>
    %403 = arith.truncf %402 : vector<24x256xf32> to vector<24x256xbf16>
    %cst_187 = arith.constant dense<0.000000e+00> : vector<8x256xf32>
    %404 = tpu.matmul %395, %403, %cst_187 {dimension_numbers = #tpu.dot_dimension_numbers<[1], [0], [0], [1], [0, 0, 1, 1], [], []>} : vector<8x24xbf16>, vector<24x256xbf16>, vector<8x256xf32> -> vector<8x256xf32>
    %c1_i32_188 = arith.constant 1 : i32
    %405 = tpu.dynamic_rotate %402 by %c1_i32_188 dim 1 : vector<24x256xf32>, i32 -> vector<24x256xf32>
    %c255_i32_189 = arith.constant 255 : i32
    %406 = tpu.dynamic_rotate %402 by %c255_i32_189 dim 1 : vector<24x256xf32>, i32 -> vector<24x256xf32>
    %407 = arith.select %20, %406, %405 : vector<24x256xi1>, vector<24x256xf32>
    %408 = arith.select %22, %405, %406 : vector<24x256xi1>, vector<24x256xf32>
    %409 = arith.truncf %407 : vector<24x256xf32> to vector<24x256xbf16>
    %cst_190 = arith.constant dense<0.000000e+00> : vector<8x256xf32>
    %410 = tpu.matmul %394, %409, %cst_190 {dimension_numbers = #tpu.dot_dimension_numbers<[1], [0], [0], [1], [0, 0, 1, 1], [], []>} : vector<8x24xbf16>, vector<24x256xbf16>, vector<8x256xf32> -> vector<8x256xf32>
    %411 = arith.addf %404, %410 : vector<8x256xf32>
    %412 = arith.truncf %408 : vector<24x256xf32> to vector<24x256xbf16>
    %cst_191 = arith.constant dense<0.000000e+00> : vector<8x256xf32>
    %413 = tpu.matmul %396, %412, %cst_191 {dimension_numbers = #tpu.dot_dimension_numbers<[1], [0], [0], [1], [0, 0, 1, 1], [], []>} : vector<8x24xbf16>, vector<24x256xbf16>, vector<8x256xf32> -> vector<8x256xf32>
    %414 = arith.addf %411, %413 : vector<8x256xf32>
    %415 = vector.broadcast %397 : vector<8x1xf32> to vector<8x256xf32>
    %416 = arith.addf %414, %415 : vector<8x256xf32>
    %cst_192 = arith.constant 0.000000e+00 : f32
    %417 = vector.broadcast %cst_192 : f32 to vector<8x256xf32>
    %418 = arith.maximumf %416, %417 : vector<8x256xf32>
    %c912 = arith.constant 912 : index
    %c0_193 = arith.constant 0 : index
    %419 = vector.load %arg2[%c912, %c0_193] : memref<1080x96xbf16, #tpu.memory_space<vmem>>, vector<8x24xbf16>
    %c920 = arith.constant 920 : index
    %c0_194 = arith.constant 0 : index
    %420 = vector.load %arg2[%c920, %c0_194] : memref<1080x96xbf16, #tpu.memory_space<vmem>>, vector<8x24xbf16>
    %c928 = arith.constant 928 : index
    %c0_195 = arith.constant 0 : index
    %421 = vector.load %arg2[%c928, %c0_195] : memref<1080x96xbf16, #tpu.memory_space<vmem>>, vector<8x24xbf16>
    %c304_196 = arith.constant 304 : index
    %c0_197 = arith.constant 0 : index
    %422 = vector.load %arg3[%c304_196, %c0_197] : memref<360x1xf32, #tpu.memory_space<vmem>>, vector<8x1xf32>
    %c16_i32_198 = arith.constant 16 : i32
    %423 = tpu.dynamic_rotate %418 by %c16_i32_198 dim 1 : vector<8x256xf32>, i32 -> vector<8x256xf32>
    %c240_i32_199 = arith.constant 240 : i32
    %424 = tpu.dynamic_rotate %418 by %c240_i32_199 dim 1 : vector<8x256xf32>, i32 -> vector<8x256xf32>
    %425 = arith.select %16, %424, %423 : vector<8x256xi1>, vector<8x256xf32>
    %426 = arith.select %18, %423, %424 : vector<8x256xi1>, vector<8x256xf32>
    %427 = tpu.concatenate %425, %418, %426 in 0 : vector<8x256xf32>, vector<8x256xf32>, vector<8x256xf32> -> vector<24x256xf32>
    %428 = arith.truncf %427 : vector<24x256xf32> to vector<24x256xbf16>
    %cst_200 = arith.constant dense<0.000000e+00> : vector<8x256xf32>
    %429 = tpu.matmul %420, %428, %cst_200 {dimension_numbers = #tpu.dot_dimension_numbers<[1], [0], [0], [1], [0, 0, 1, 1], [], []>} : vector<8x24xbf16>, vector<24x256xbf16>, vector<8x256xf32> -> vector<8x256xf32>
    %c1_i32_201 = arith.constant 1 : i32
    %430 = tpu.dynamic_rotate %427 by %c1_i32_201 dim 1 : vector<24x256xf32>, i32 -> vector<24x256xf32>
    %c255_i32_202 = arith.constant 255 : i32
    %431 = tpu.dynamic_rotate %427 by %c255_i32_202 dim 1 : vector<24x256xf32>, i32 -> vector<24x256xf32>
    %432 = arith.select %20, %431, %430 : vector<24x256xi1>, vector<24x256xf32>
    %433 = arith.select %22, %430, %431 : vector<24x256xi1>, vector<24x256xf32>
    %434 = arith.truncf %432 : vector<24x256xf32> to vector<24x256xbf16>
    %cst_203 = arith.constant dense<0.000000e+00> : vector<8x256xf32>
    %435 = tpu.matmul %419, %434, %cst_203 {dimension_numbers = #tpu.dot_dimension_numbers<[1], [0], [0], [1], [0, 0, 1, 1], [], []>} : vector<8x24xbf16>, vector<24x256xbf16>, vector<8x256xf32> -> vector<8x256xf32>
    %436 = arith.addf %429, %435 : vector<8x256xf32>
    %437 = arith.truncf %433 : vector<24x256xf32> to vector<24x256xbf16>
    %cst_204 = arith.constant dense<0.000000e+00> : vector<8x256xf32>
    %438 = tpu.matmul %421, %437, %cst_204 {dimension_numbers = #tpu.dot_dimension_numbers<[1], [0], [0], [1], [0, 0, 1, 1], [], []>} : vector<8x24xbf16>, vector<24x256xbf16>, vector<8x256xf32> -> vector<8x256xf32>
    %439 = arith.addf %436, %438 : vector<8x256xf32>
    %440 = vector.broadcast %422 : vector<8x1xf32> to vector<8x256xf32>
    %441 = arith.addf %439, %440 : vector<8x256xf32>
    %442 = arith.addf %441, %393 : vector<8x256xf32>
    %cst_205 = arith.constant 0.000000e+00 : f32
    %443 = vector.broadcast %cst_205 : f32 to vector<8x256xf32>
    %444 = arith.maximumf %442, %443 : vector<8x256xf32>
    %c936 = arith.constant 936 : index
    %c0_206 = arith.constant 0 : index
    %445 = vector.load %arg2[%c936, %c0_206] : memref<1080x96xbf16, #tpu.memory_space<vmem>>, vector<8x24xbf16>
    %c944 = arith.constant 944 : index
    %c0_207 = arith.constant 0 : index
    %446 = vector.load %arg2[%c944, %c0_207] : memref<1080x96xbf16, #tpu.memory_space<vmem>>, vector<8x24xbf16>
    %c952 = arith.constant 952 : index
    %c0_208 = arith.constant 0 : index
    %447 = vector.load %arg2[%c952, %c0_208] : memref<1080x96xbf16, #tpu.memory_space<vmem>>, vector<8x24xbf16>
    %c312 = arith.constant 312 : index
    %c0_209 = arith.constant 0 : index
    %448 = vector.load %arg3[%c312, %c0_209] : memref<360x1xf32, #tpu.memory_space<vmem>>, vector<8x1xf32>
    %c16_i32_210 = arith.constant 16 : i32
    %449 = tpu.dynamic_rotate %444 by %c16_i32_210 dim 1 : vector<8x256xf32>, i32 -> vector<8x256xf32>
    %c240_i32_211 = arith.constant 240 : i32
    %450 = tpu.dynamic_rotate %444 by %c240_i32_211 dim 1 : vector<8x256xf32>, i32 -> vector<8x256xf32>
    %451 = arith.select %16, %450, %449 : vector<8x256xi1>, vector<8x256xf32>
    %452 = arith.select %18, %449, %450 : vector<8x256xi1>, vector<8x256xf32>
    %453 = tpu.concatenate %451, %444, %452 in 0 : vector<8x256xf32>, vector<8x256xf32>, vector<8x256xf32> -> vector<24x256xf32>
    %454 = arith.truncf %453 : vector<24x256xf32> to vector<24x256xbf16>
    %cst_212 = arith.constant dense<0.000000e+00> : vector<8x256xf32>
    %455 = tpu.matmul %446, %454, %cst_212 {dimension_numbers = #tpu.dot_dimension_numbers<[1], [0], [0], [1], [0, 0, 1, 1], [], []>} : vector<8x24xbf16>, vector<24x256xbf16>, vector<8x256xf32> -> vector<8x256xf32>
    %c1_i32_213 = arith.constant 1 : i32
    %456 = tpu.dynamic_rotate %453 by %c1_i32_213 dim 1 : vector<24x256xf32>, i32 -> vector<24x256xf32>
    %c255_i32_214 = arith.constant 255 : i32
    %457 = tpu.dynamic_rotate %453 by %c255_i32_214 dim 1 : vector<24x256xf32>, i32 -> vector<24x256xf32>
    %458 = arith.select %20, %457, %456 : vector<24x256xi1>, vector<24x256xf32>
    %459 = arith.select %22, %456, %457 : vector<24x256xi1>, vector<24x256xf32>
    %460 = arith.truncf %458 : vector<24x256xf32> to vector<24x256xbf16>
    %cst_215 = arith.constant dense<0.000000e+00> : vector<8x256xf32>
    %461 = tpu.matmul %445, %460, %cst_215 {dimension_numbers = #tpu.dot_dimension_numbers<[1], [0], [0], [1], [0, 0, 1, 1], [], []>} : vector<8x24xbf16>, vector<24x256xbf16>, vector<8x256xf32> -> vector<8x256xf32>
    %462 = arith.addf %455, %461 : vector<8x256xf32>
    %463 = arith.truncf %459 : vector<24x256xf32> to vector<24x256xbf16>
    %cst_216 = arith.constant dense<0.000000e+00> : vector<8x256xf32>
    %464 = tpu.matmul %447, %463, %cst_216 {dimension_numbers = #tpu.dot_dimension_numbers<[1], [0], [0], [1], [0, 0, 1, 1], [], []>} : vector<8x24xbf16>, vector<24x256xbf16>, vector<8x256xf32> -> vector<8x256xf32>
    %465 = arith.addf %462, %464 : vector<8x256xf32>
    %466 = vector.broadcast %448 : vector<8x1xf32> to vector<8x256xf32>
    %467 = arith.addf %465, %466 : vector<8x256xf32>
    %cst_217 = arith.constant 0.000000e+00 : f32
    %468 = vector.broadcast %cst_217 : f32 to vector<8x256xf32>
    %469 = arith.maximumf %467, %468 : vector<8x256xf32>
    %c960 = arith.constant 960 : index
    %c0_218 = arith.constant 0 : index
    %470 = vector.load %arg2[%c960, %c0_218] : memref<1080x96xbf16, #tpu.memory_space<vmem>>, vector<8x24xbf16>
    %c968 = arith.constant 968 : index
    %c0_219 = arith.constant 0 : index
    %471 = vector.load %arg2[%c968, %c0_219] : memref<1080x96xbf16, #tpu.memory_space<vmem>>, vector<8x24xbf16>
    %c976 = arith.constant 976 : index
    %c0_220 = arith.constant 0 : index
    %472 = vector.load %arg2[%c976, %c0_220] : memref<1080x96xbf16, #tpu.memory_space<vmem>>, vector<8x24xbf16>
    %c320 = arith.constant 320 : index
    %c0_221 = arith.constant 0 : index
    %473 = vector.load %arg3[%c320, %c0_221] : memref<360x1xf32, #tpu.memory_space<vmem>>, vector<8x1xf32>
    %c16_i32_222 = arith.constant 16 : i32
    %474 = tpu.dynamic_rotate %469 by %c16_i32_222 dim 1 : vector<8x256xf32>, i32 -> vector<8x256xf32>
    %c240_i32_223 = arith.constant 240 : i32
    %475 = tpu.dynamic_rotate %469 by %c240_i32_223 dim 1 : vector<8x256xf32>, i32 -> vector<8x256xf32>
    %476 = arith.select %16, %475, %474 : vector<8x256xi1>, vector<8x256xf32>
    %477 = arith.select %18, %474, %475 : vector<8x256xi1>, vector<8x256xf32>
    %478 = tpu.concatenate %476, %469, %477 in 0 : vector<8x256xf32>, vector<8x256xf32>, vector<8x256xf32> -> vector<24x256xf32>
    %479 = arith.truncf %478 : vector<24x256xf32> to vector<24x256xbf16>
    %cst_224 = arith.constant dense<0.000000e+00> : vector<8x256xf32>
    %480 = tpu.matmul %471, %479, %cst_224 {dimension_numbers = #tpu.dot_dimension_numbers<[1], [0], [0], [1], [0, 0, 1, 1], [], []>} : vector<8x24xbf16>, vector<24x256xbf16>, vector<8x256xf32> -> vector<8x256xf32>
    %c1_i32_225 = arith.constant 1 : i32
    %481 = tpu.dynamic_rotate %478 by %c1_i32_225 dim 1 : vector<24x256xf32>, i32 -> vector<24x256xf32>
    %c255_i32_226 = arith.constant 255 : i32
    %482 = tpu.dynamic_rotate %478 by %c255_i32_226 dim 1 : vector<24x256xf32>, i32 -> vector<24x256xf32>
    %483 = arith.select %20, %482, %481 : vector<24x256xi1>, vector<24x256xf32>
    %484 = arith.select %22, %481, %482 : vector<24x256xi1>, vector<24x256xf32>
    %485 = arith.truncf %483 : vector<24x256xf32> to vector<24x256xbf16>
    %cst_227 = arith.constant dense<0.000000e+00> : vector<8x256xf32>
    %486 = tpu.matmul %470, %485, %cst_227 {dimension_numbers = #tpu.dot_dimension_numbers<[1], [0], [0], [1], [0, 0, 1, 1], [], []>} : vector<8x24xbf16>, vector<24x256xbf16>, vector<8x256xf32> -> vector<8x256xf32>
    %487 = arith.addf %480, %486 : vector<8x256xf32>
    %488 = arith.truncf %484 : vector<24x256xf32> to vector<24x256xbf16>
    %cst_228 = arith.constant dense<0.000000e+00> : vector<8x256xf32>
    %489 = tpu.matmul %472, %488, %cst_228 {dimension_numbers = #tpu.dot_dimension_numbers<[1], [0], [0], [1], [0, 0, 1, 1], [], []>} : vector<8x24xbf16>, vector<24x256xbf16>, vector<8x256xf32> -> vector<8x256xf32>
    %490 = arith.addf %487, %489 : vector<8x256xf32>
    %491 = vector.broadcast %473 : vector<8x1xf32> to vector<8x256xf32>
    %492 = arith.addf %490, %491 : vector<8x256xf32>
    %493 = arith.addf %492, %444 : vector<8x256xf32>
    %cst_229 = arith.constant 0.000000e+00 : f32
    %494 = vector.broadcast %cst_229 : f32 to vector<8x256xf32>
    %495 = arith.maximumf %493, %494 : vector<8x256xf32>
    %c984 = arith.constant 984 : index
    %c0_230 = arith.constant 0 : index
    %496 = vector.load %arg2[%c984, %c0_230] : memref<1080x96xbf16, #tpu.memory_space<vmem>>, vector<8x24xbf16>
    %c992 = arith.constant 992 : index
    %c0_231 = arith.constant 0 : index
    %497 = vector.load %arg2[%c992, %c0_231] : memref<1080x96xbf16, #tpu.memory_space<vmem>>, vector<8x24xbf16>
    %c1000 = arith.constant 1000 : index
    %c0_232 = arith.constant 0 : index
    %498 = vector.load %arg2[%c1000, %c0_232] : memref<1080x96xbf16, #tpu.memory_space<vmem>>, vector<8x24xbf16>
    %c328 = arith.constant 328 : index
    %c0_233 = arith.constant 0 : index
    %499 = vector.load %arg3[%c328, %c0_233] : memref<360x1xf32, #tpu.memory_space<vmem>>, vector<8x1xf32>
    %c16_i32_234 = arith.constant 16 : i32
    %500 = tpu.dynamic_rotate %495 by %c16_i32_234 dim 1 : vector<8x256xf32>, i32 -> vector<8x256xf32>
    %c240_i32_235 = arith.constant 240 : i32
    %501 = tpu.dynamic_rotate %495 by %c240_i32_235 dim 1 : vector<8x256xf32>, i32 -> vector<8x256xf32>
    %502 = arith.select %16, %501, %500 : vector<8x256xi1>, vector<8x256xf32>
    %503 = arith.select %18, %500, %501 : vector<8x256xi1>, vector<8x256xf32>
    %504 = tpu.concatenate %502, %495, %503 in 0 : vector<8x256xf32>, vector<8x256xf32>, vector<8x256xf32> -> vector<24x256xf32>
    %505 = arith.truncf %504 : vector<24x256xf32> to vector<24x256xbf16>
    %cst_236 = arith.constant dense<0.000000e+00> : vector<8x256xf32>
    %506 = tpu.matmul %497, %505, %cst_236 {dimension_numbers = #tpu.dot_dimension_numbers<[1], [0], [0], [1], [0, 0, 1, 1], [], []>} : vector<8x24xbf16>, vector<24x256xbf16>, vector<8x256xf32> -> vector<8x256xf32>
    %c1_i32_237 = arith.constant 1 : i32
    %507 = tpu.dynamic_rotate %504 by %c1_i32_237 dim 1 : vector<24x256xf32>, i32 -> vector<24x256xf32>
    %c255_i32_238 = arith.constant 255 : i32
    %508 = tpu.dynamic_rotate %504 by %c255_i32_238 dim 1 : vector<24x256xf32>, i32 -> vector<24x256xf32>
    %509 = arith.select %20, %508, %507 : vector<24x256xi1>, vector<24x256xf32>
    %510 = arith.select %22, %507, %508 : vector<24x256xi1>, vector<24x256xf32>
    %511 = arith.truncf %509 : vector<24x256xf32> to vector<24x256xbf16>
    %cst_239 = arith.constant dense<0.000000e+00> : vector<8x256xf32>
    %512 = tpu.matmul %496, %511, %cst_239 {dimension_numbers = #tpu.dot_dimension_numbers<[1], [0], [0], [1], [0, 0, 1, 1], [], []>} : vector<8x24xbf16>, vector<24x256xbf16>, vector<8x256xf32> -> vector<8x256xf32>
    %513 = arith.addf %506, %512 : vector<8x256xf32>
    %514 = arith.truncf %510 : vector<24x256xf32> to vector<24x256xbf16>
    %cst_240 = arith.constant dense<0.000000e+00> : vector<8x256xf32>
    %515 = tpu.matmul %498, %514, %cst_240 {dimension_numbers = #tpu.dot_dimension_numbers<[1], [0], [0], [1], [0, 0, 1, 1], [], []>} : vector<8x24xbf16>, vector<24x256xbf16>, vector<8x256xf32> -> vector<8x256xf32>
    %516 = arith.addf %513, %515 : vector<8x256xf32>
    %517 = vector.broadcast %499 : vector<8x1xf32> to vector<8x256xf32>
    %518 = arith.addf %516, %517 : vector<8x256xf32>
    %cst_241 = arith.constant 0.000000e+00 : f32
    %519 = vector.broadcast %cst_241 : f32 to vector<8x256xf32>
    %520 = arith.maximumf %518, %519 : vector<8x256xf32>
    %c1008 = arith.constant 1008 : index
    %c0_242 = arith.constant 0 : index
    %521 = vector.load %arg2[%c1008, %c0_242] : memref<1080x96xbf16, #tpu.memory_space<vmem>>, vector<8x24xbf16>
    %c1016 = arith.constant 1016 : index
    %c0_243 = arith.constant 0 : index
    %522 = vector.load %arg2[%c1016, %c0_243] : memref<1080x96xbf16, #tpu.memory_space<vmem>>, vector<8x24xbf16>
    %c1024 = arith.constant 1024 : index
    %c0_244 = arith.constant 0 : index
    %523 = vector.load %arg2[%c1024, %c0_244] : memref<1080x96xbf16, #tpu.memory_space<vmem>>, vector<8x24xbf16>
    %c336_245 = arith.constant 336 : index
    %c0_246 = arith.constant 0 : index
    %524 = vector.load %arg3[%c336_245, %c0_246] : memref<360x1xf32, #tpu.memory_space<vmem>>, vector<8x1xf32>
    %c16_i32_247 = arith.constant 16 : i32
    %525 = tpu.dynamic_rotate %520 by %c16_i32_247 dim 1 : vector<8x256xf32>, i32 -> vector<8x256xf32>
    %c240_i32_248 = arith.constant 240 : i32
    %526 = tpu.dynamic_rotate %520 by %c240_i32_248 dim 1 : vector<8x256xf32>, i32 -> vector<8x256xf32>
    %527 = arith.select %16, %526, %525 : vector<8x256xi1>, vector<8x256xf32>
    %528 = arith.select %18, %525, %526 : vector<8x256xi1>, vector<8x256xf32>
    %529 = tpu.concatenate %527, %520, %528 in 0 : vector<8x256xf32>, vector<8x256xf32>, vector<8x256xf32> -> vector<24x256xf32>
    %530 = arith.truncf %529 : vector<24x256xf32> to vector<24x256xbf16>
    %cst_249 = arith.constant dense<0.000000e+00> : vector<8x256xf32>
    %531 = tpu.matmul %522, %530, %cst_249 {dimension_numbers = #tpu.dot_dimension_numbers<[1], [0], [0], [1], [0, 0, 1, 1], [], []>} : vector<8x24xbf16>, vector<24x256xbf16>, vector<8x256xf32> -> vector<8x256xf32>
    %c1_i32_250 = arith.constant 1 : i32
    %532 = tpu.dynamic_rotate %529 by %c1_i32_250 dim 1 : vector<24x256xf32>, i32 -> vector<24x256xf32>
    %c255_i32_251 = arith.constant 255 : i32
    %533 = tpu.dynamic_rotate %529 by %c255_i32_251 dim 1 : vector<24x256xf32>, i32 -> vector<24x256xf32>
    %534 = arith.select %20, %533, %532 : vector<24x256xi1>, vector<24x256xf32>
    %535 = arith.select %22, %532, %533 : vector<24x256xi1>, vector<24x256xf32>
    %536 = arith.truncf %534 : vector<24x256xf32> to vector<24x256xbf16>
    %cst_252 = arith.constant dense<0.000000e+00> : vector<8x256xf32>
    %537 = tpu.matmul %521, %536, %cst_252 {dimension_numbers = #tpu.dot_dimension_numbers<[1], [0], [0], [1], [0, 0, 1, 1], [], []>} : vector<8x24xbf16>, vector<24x256xbf16>, vector<8x256xf32> -> vector<8x256xf32>
    %538 = arith.addf %531, %537 : vector<8x256xf32>
    %539 = arith.truncf %535 : vector<24x256xf32> to vector<24x256xbf16>
    %cst_253 = arith.constant dense<0.000000e+00> : vector<8x256xf32>
    %540 = tpu.matmul %523, %539, %cst_253 {dimension_numbers = #tpu.dot_dimension_numbers<[1], [0], [0], [1], [0, 0, 1, 1], [], []>} : vector<8x24xbf16>, vector<24x256xbf16>, vector<8x256xf32> -> vector<8x256xf32>
    %541 = arith.addf %538, %540 : vector<8x256xf32>
    %542 = vector.broadcast %524 : vector<8x1xf32> to vector<8x256xf32>
    %543 = arith.addf %541, %542 : vector<8x256xf32>
    %cst_254 = arith.constant 0.000000e+00 : f32
    %544 = vector.broadcast %cst_254 : f32 to vector<8x256xf32>
    %545 = arith.maximumf %543, %544 : vector<8x256xf32>
    %c1032 = arith.constant 1032 : index
    %c0_255 = arith.constant 0 : index
    %546 = vector.load %arg2[%c1032, %c0_255] : memref<1080x96xbf16, #tpu.memory_space<vmem>>, vector<8x24xbf16>
    %c1040 = arith.constant 1040 : index
    %c0_256 = arith.constant 0 : index
    %547 = vector.load %arg2[%c1040, %c0_256] : memref<1080x96xbf16, #tpu.memory_space<vmem>>, vector<8x24xbf16>
    %c1048 = arith.constant 1048 : index
    %c0_257 = arith.constant 0 : index
    %548 = vector.load %arg2[%c1048, %c0_257] : memref<1080x96xbf16, #tpu.memory_space<vmem>>, vector<8x24xbf16>
    %c344 = arith.constant 344 : index
    %c0_258 = arith.constant 0 : index
    %549 = vector.load %arg3[%c344, %c0_258] : memref<360x1xf32, #tpu.memory_space<vmem>>, vector<8x1xf32>
    %c16_i32_259 = arith.constant 16 : i32
    %550 = tpu.dynamic_rotate %545 by %c16_i32_259 dim 1 : vector<8x256xf32>, i32 -> vector<8x256xf32>
    %c240_i32_260 = arith.constant 240 : i32
    %551 = tpu.dynamic_rotate %545 by %c240_i32_260 dim 1 : vector<8x256xf32>, i32 -> vector<8x256xf32>
    %552 = arith.select %16, %551, %550 : vector<8x256xi1>, vector<8x256xf32>
    %553 = arith.select %18, %550, %551 : vector<8x256xi1>, vector<8x256xf32>
    %554 = tpu.concatenate %552, %545, %553 in 0 : vector<8x256xf32>, vector<8x256xf32>, vector<8x256xf32> -> vector<24x256xf32>
    %555 = arith.truncf %554 : vector<24x256xf32> to vector<24x256xbf16>
    %cst_261 = arith.constant dense<0.000000e+00> : vector<8x256xf32>
    %556 = tpu.matmul %547, %555, %cst_261 {dimension_numbers = #tpu.dot_dimension_numbers<[1], [0], [0], [1], [0, 0, 1, 1], [], []>} : vector<8x24xbf16>, vector<24x256xbf16>, vector<8x256xf32> -> vector<8x256xf32>
    %c1_i32_262 = arith.constant 1 : i32
    %557 = tpu.dynamic_rotate %554 by %c1_i32_262 dim 1 : vector<24x256xf32>, i32 -> vector<24x256xf32>
    %c255_i32_263 = arith.constant 255 : i32
    %558 = tpu.dynamic_rotate %554 by %c255_i32_263 dim 1 : vector<24x256xf32>, i32 -> vector<24x256xf32>
    %559 = arith.select %20, %558, %557 : vector<24x256xi1>, vector<24x256xf32>
    %560 = arith.select %22, %557, %558 : vector<24x256xi1>, vector<24x256xf32>
    %561 = arith.truncf %559 : vector<24x256xf32> to vector<24x256xbf16>
    %cst_264 = arith.constant dense<0.000000e+00> : vector<8x256xf32>
    %562 = tpu.matmul %546, %561, %cst_264 {dimension_numbers = #tpu.dot_dimension_numbers<[1], [0], [0], [1], [0, 0, 1, 1], [], []>} : vector<8x24xbf16>, vector<24x256xbf16>, vector<8x256xf32> -> vector<8x256xf32>
    %563 = arith.addf %556, %562 : vector<8x256xf32>
    %564 = arith.truncf %560 : vector<24x256xf32> to vector<24x256xbf16>
    %cst_265 = arith.constant dense<0.000000e+00> : vector<8x256xf32>
    %565 = tpu.matmul %548, %564, %cst_265 {dimension_numbers = #tpu.dot_dimension_numbers<[1], [0], [0], [1], [0, 0, 1, 1], [], []>} : vector<8x24xbf16>, vector<24x256xbf16>, vector<8x256xf32> -> vector<8x256xf32>
    %566 = arith.addf %563, %565 : vector<8x256xf32>
    %567 = vector.broadcast %549 : vector<8x1xf32> to vector<8x256xf32>
    %568 = arith.addf %566, %567 : vector<8x256xf32>
    %569 = arith.addf %568, %520 : vector<8x256xf32>
    %cst_266 = arith.constant 0.000000e+00 : f32
    %570 = vector.broadcast %cst_266 : f32 to vector<8x256xf32>
    %571 = arith.maximumf %569, %570 : vector<8x256xf32>
    %c1056 = arith.constant 1056 : index
    %c0_267 = arith.constant 0 : index
    %572 = vector.load %arg2[%c1056, %c0_267] : memref<1080x96xbf16, #tpu.memory_space<vmem>>, vector<8x24xbf16>
    %c1064 = arith.constant 1064 : index
    %c0_268 = arith.constant 0 : index
    %573 = vector.load %arg2[%c1064, %c0_268] : memref<1080x96xbf16, #tpu.memory_space<vmem>>, vector<8x24xbf16>
    %c1072 = arith.constant 1072 : index
    %c0_269 = arith.constant 0 : index
    %574 = vector.load %arg2[%c1072, %c0_269] : memref<1080x96xbf16, #tpu.memory_space<vmem>>, vector<8x24xbf16>
    %c352 = arith.constant 352 : index
    %c0_270 = arith.constant 0 : index
    %575 = vector.load %arg3[%c352, %c0_270] : memref<360x1xf32, #tpu.memory_space<vmem>>, vector<8x1xf32>
    %c16_i32_271 = arith.constant 16 : i32
    %576 = tpu.dynamic_rotate %571 by %c16_i32_271 dim 1 : vector<8x256xf32>, i32 -> vector<8x256xf32>
    %c240_i32_272 = arith.constant 240 : i32
    %577 = tpu.dynamic_rotate %571 by %c240_i32_272 dim 1 : vector<8x256xf32>, i32 -> vector<8x256xf32>
    %578 = arith.select %16, %577, %576 : vector<8x256xi1>, vector<8x256xf32>
    %579 = arith.select %18, %576, %577 : vector<8x256xi1>, vector<8x256xf32>
    %580 = tpu.concatenate %578, %571, %579 in 0 : vector<8x256xf32>, vector<8x256xf32>, vector<8x256xf32> -> vector<24x256xf32>
    %581 = arith.truncf %580 : vector<24x256xf32> to vector<24x256xbf16>
    %cst_273 = arith.constant dense<0.000000e+00> : vector<8x256xf32>
    %582 = tpu.matmul %573, %581, %cst_273 {dimension_numbers = #tpu.dot_dimension_numbers<[1], [0], [0], [1], [0, 0, 1, 1], [], []>} : vector<8x24xbf16>, vector<24x256xbf16>, vector<8x256xf32> -> vector<8x256xf32>
    %c1_i32_274 = arith.constant 1 : i32
    %583 = tpu.dynamic_rotate %580 by %c1_i32_274 dim 1 : vector<24x256xf32>, i32 -> vector<24x256xf32>
    %c255_i32_275 = arith.constant 255 : i32
    %584 = tpu.dynamic_rotate %580 by %c255_i32_275 dim 1 : vector<24x256xf32>, i32 -> vector<24x256xf32>
    %585 = arith.select %20, %584, %583 : vector<24x256xi1>, vector<24x256xf32>
    %586 = arith.select %22, %583, %584 : vector<24x256xi1>, vector<24x256xf32>
    %587 = arith.truncf %585 : vector<24x256xf32> to vector<24x256xbf16>
    %cst_276 = arith.constant dense<0.000000e+00> : vector<8x256xf32>
    %588 = tpu.matmul %572, %587, %cst_276 {dimension_numbers = #tpu.dot_dimension_numbers<[1], [0], [0], [1], [0, 0, 1, 1], [], []>} : vector<8x24xbf16>, vector<24x256xbf16>, vector<8x256xf32> -> vector<8x256xf32>
    %589 = arith.addf %582, %588 : vector<8x256xf32>
    %590 = arith.truncf %586 : vector<24x256xf32> to vector<24x256xbf16>
    %cst_277 = arith.constant dense<0.000000e+00> : vector<8x256xf32>
    %591 = tpu.matmul %574, %590, %cst_277 {dimension_numbers = #tpu.dot_dimension_numbers<[1], [0], [0], [1], [0, 0, 1, 1], [], []>} : vector<8x24xbf16>, vector<24x256xbf16>, vector<8x256xf32> -> vector<8x256xf32>
    %592 = arith.addf %589, %591 : vector<8x256xf32>
    %593 = vector.broadcast %575 : vector<8x1xf32> to vector<8x256xf32>
    %594 = arith.addf %592, %593 : vector<8x256xf32>
    %c0_278 = arith.constant 0 : index
    %c0_279 = arith.constant 0 : index
    %c0_280 = arith.constant 0 : index
    %595 = vector.load %arg4[%c0_278, %c0_279, %c0_280] : memref<1x8x256xf32, #tpu.memory_space<vmem>>, vector<1x8x256xf32>
    %596 = vector.shape_cast %595 : vector<1x8x256xf32> to vector<8x256xf32>
    %597 = vector.shape_cast %594 : vector<8x256xf32> to vector<1x8x256xf32>
    tpu.vector_store %arg4[%c0_278, %c0_279, %c0_280], %597 {strides = array<i32>} : memref<1x8x256xf32, #tpu.memory_space<vmem>>, vector<1x8x256xf32>,
    return
  }
  func.func @transform_0(%arg0: i32) -> (i32, i32, i32) {
    %c0_i32 = arith.constant 0 : i32
    %c0_i32_0 = arith.constant 0 : i32
    %c0_i32_1 = arith.constant 0 : i32
    return %arg0, %c0_i32, %c0_i32_0 : i32, i32, i32
  }
  func.func @transform_1(%arg0: i32) -> (i32, i32) {
    %c0_i32 = arith.constant 0 : i32
    %c0_i32_0 = arith.constant 0 : i32
    %c0_i32_1 = arith.constant 0 : i32
    return %c0_i32, %c0_i32_0 : i32, i32
  }
  func.func @transform_2(%arg0: i32) -> (i32, i32) {
    %c0_i32 = arith.constant 0 : i32
    %c0_i32_0 = arith.constant 0 : i32
    %c0_i32_1 = arith.constant 0 : i32
    return %c0_i32, %c0_i32_0 : i32, i32
  }
  func.func @transform_3(%arg0: i32) -> (i32, i32, i32) {
    %c0_i32 = arith.constant 0 : i32
    %c0_i32_0 = arith.constant 0 : i32
    %c0_i32_1 = arith.constant 0 : i32
    return %arg0, %c0_i32, %c0_i32_0 : i32, i32, i32
  }
}

</mosaic_0001>

<llo_original>
// kernel: tpu_custom_call.1
$region0: #{tpu_custom_call.1}
  #allocation0 [shape = 'u32[]', space=smem, size = 0x4, offset = 0x4, fixed_abs, tag = 'smem constant byte address 0x4 - core index']
  #allocation1 [shape = 'u32[72,128]{1,0:T(1,128)}', space=vmem, size = 0x9000, scoped, tag = 'internal scratch']
  %s0 = inlined_call_operand.vmem [shape: f32[2,8,256], index: 0, kind: input, shape index: {}]
  %s1 = inlined_call_operand.vmem [shape: bf16[1080,96], index: 1, kind: input, shape index: {}]
  %s2 = inlined_call_operand.vmem [shape: f32[360,1], index: 2, kind: input, shape index: {}]
  %s3 = inlined_call_operand.hbm [shape: f32[2,8,256], index: 3, kind: output, shape index: {}]
  %s4 = sld [smem:[#allocation0]]
  $region45: #{tpu_custom_call.1} parent=0
    _
  %s6 = ssub.s32 1, %s4
  %s7 = scalar_select 0, %s6, %s4
  $region1: #{tpu_custom_call.1} parent=0
    #allocation2 [shape = 'u8[16384]{0}', space=vmem, size = 0x4000, scoped, tag = 'output window, operand 0']
    #allocation3 [shape = 's32[2]{0}', space=sflag, size = 0x8, scoped, tag = 'scoped memory for tpu_custom_call.1']
    %8 = vsyncpa [#allocation3], 0
    %s9 = scalar_lea.sflag [#allocation3], 1
    %10 = vsyncpa %s9, 0
    loop: start=0, step=1, limit=4
    $region2: #{tpu_custom_call.1} parent=1 // loop_pre_header
      _
    $region3: #{tpu_custom_call.1} parent=1 // loop_header
      %s12 = sphi 0, %s16
      %p13 = scmp.ge.s32.totalorder %s12, 4
      %s22 = sphi 0, %s24
      %s25 = sphi 0, %s22
      %s26 = sphi 0, %s25
      %s42 = sphi 0, %s26
      %s46 = sphi 0, %s46
      %s48 = sphi 0, %s46
      %s49 = sphi 0, %s48
      %s63 = sphi 0, %s49
      %s67 = sphi 0, %s67
      %s69 = sphi 0, %s67
      %s70 = sphi 0, %s69
      %s84 = sphi 0, %s70
      %s90 = sphi 0, %s92
      %s93 = sphi 0, %s90
      %s94 = sphi 0, %s93
      %s110 = sphi 0, %s94
    $region4: #{tpu_custom_call.1} parent=1 // loop_header_branch
      %15 = sbr.rel (%p13) target = $region8
    $region5: #{tpu_custom_call.1} parent=1 // loop_body
      %s17 = ssub.s32 %s12, 1
      %s18 = ssub.s32 %s12, 2
      %s19 = sadd.s32 %s12, 1
      %s20 = ssub.s32 %s12, %s19
      %p21 = scmp.eq.s32.totalorder %s20, 0
      %s23 = sadd.s32 %s22, 1
      %s24 = scalar_select %p21, %s22, %s23
      %p27 = pneg %p21
      %p28 = scmp.eq.s32.totalorder %s12, 1
      %p29 = por %p27, %p28
      %p30 = scmp.ne.s32.totalorder %s22, %s25
      %p31 = scmp.eq.s32.totalorder %s12, 0
      %p32 = por %p30, %p31
      %p33 = scmp.ne.s32.totalorder %s22, %s25
      %p34 = scmp.eq.s32.totalorder %s17, 1
      %p35 = por %p33, %p34
      %p36 = scmp.ne.s32.totalorder %s25, %s26
      %p37 = scmp.eq.s32.totalorder %s17, 0
      %p38 = por %p36, %p37
      %p39 = scmp.ne.s32.totalorder %s25, %s26
      %p40 = scmp.eq.s32.totalorder %s18, 1
      %p41 = por %p39, %p40
      %p43 = scmp.ne.s32.totalorder %s26, %s42
      %p44 = scmp.eq.s32.totalorder %s18, 0
      %p45 = por %p43, %p44
      %s47 = sadd.s32 %s46, 1
      %p50 = scmp.eq.s32.totalorder %s12, 1
      %p51 = scmp.ne.s32.totalorder %s46, %s48
      %p52 = scmp.eq.s32.totalorder %s12, 0
      %p53 = por %p51, %p52
      %p54 = scmp.ne.s32.totalorder %s46, %s48
      %p55 = scmp.eq.s32.totalorder %s17, 1
      %p56 = por %p54, %p55
      %p57 = scmp.ne.s32.totalorder %s48, %s49
      %p58 = scmp.eq.s32.totalorder %s17, 0
      %p59 = por %p57, %p58
      %p60 = scmp.ne.s32.totalorder %s48, %s49
      %p61 = scmp.eq.s32.totalorder %s18, 1
      %p62 = por %p60, %p61
      %p64 = scmp.ne.s32.totalorder %s49, %s63
      %p65 = scmp.eq.s32.totalorder %s18, 0
      %p66 = por %p64, %p65
      %s68 = sadd.s32 %s67, 1
      %p71 = scmp.eq.s32.totalorder %s12, 1
      %p72 = scmp.ne.s32.totalorder %s67, %s69
      %p73 = scmp.eq.s32.totalorder %s12, 0
      %p74 = por %p72, %p73
      %p75 = scmp.ne.s32.totalorder %s67, %s69
      %p76 = scmp.eq.s32.totalorder %s17, 1
      %p77 = por %p75, %p76
      %p78 = scmp.ne.s32.totalorder %s69, %s70
      %p79 = scmp.eq.s32.totalorder %s17, 0
      %p80 = por %p78, %p79
      %p81 = scmp.ne.s32.totalorder %s69, %s70
      %p82 = scmp.eq.s32.totalorder %s18, 1
      %p83 = por %p81, %p82
      %p85 = scmp.ne.s32.totalorder %s70, %s84
      %p86 = scmp.eq.s32.totalorder %s18, 0
      %p87 = por %p85, %p86
      %s88 = ssub.s32 %s12, %s19
      %p89 = scmp.eq.s32.totalorder %s88, 0
      %s91 = sadd.s32 %s90, 1
      %s92 = scalar_select %p89, %s90, %s91
      %p95 = pneg %p89
      %p96 = scmp.eq.s32.totalorder %s12, 1
      %p97 = por %p95, %p96
      %p98 = scmp.ne.s32.totalorder %s90, %s93
      %p99 = scmp.eq.s32.totalorder %s12, 0
      %p100 = por %p98, %p99
      %p101 = scmp.ne.s32.totalorder %s90, %s93
      %p102 = scmp.eq.s32.totalorder %s17, 1
      %p103 = por %p101, %p102
      %p104 = scmp.ne.s32.totalorder %s93, %s94
      %p105 = scmp.eq.s32.totalorder %s17, 0
      %p106 = por %p104, %p105
      %p107 = scmp.ne.s32.totalorder %s93, %s94
      %p108 = scmp.eq.s32.totalorder %s18, 1
      %p109 = por %p107, %p108
      %p111 = scmp.ne.s32.totalorder %s94, %s110
      %p112 = scmp.eq.s32.totalorder %s18, 0
      %p113 = por %p111, %p112
      %p114 = scmp.le.s32.totalorder 1, %s12
      %p115 = scmp.lt.s32.totalorder %s12, 3
      %p116 = pnand %p114, %p115
      %p117 = pneg %p116
      // Predicated region
      $region9: #{tpu_custom_call.1} parent=5 // pred_check
        _
      $region10: #{tpu_custom_call.1} parent=5 // pred_check_branch
        %119 = sbr.rel (%p116) target = $region12
      $region11: #{tpu_custom_call.1} parent=5 // pred_region
        %s120 = ssub.s32 %s12, 1
        // Predicated region
        $region13: #{tpu_custom_call.1} parent=11 // pred_check
          %p121 = pneg %p59
        $region14: #{tpu_custom_call.1} parent=11 // pred_check_branch
          %123 = sbr.rel (%p121) target = $region16
        $region15: #{tpu_custom_call.1} parent=11 // pred_region
          _
        $region16: #{tpu_custom_call.1} parent=11 // pred_fallthru
          _
        // Predicated region
        $region17: #{tpu_custom_call.1} parent=11 // pred_check
          %p124 = pneg %p80
        $region18: #{tpu_custom_call.1} parent=11 // pred_check_branch
          %126 = sbr.rel (%p124) target = $region20
        $region19: #{tpu_custom_call.1} parent=11 // pred_region
          _
        $region20: #{tpu_custom_call.1} parent=11 // pred_fallthru
          _
      $region12: #{tpu_custom_call.1} parent=5 // pred_fallthru
        _
      %p127 = scmp.lt.s32.totalorder %s12, 2
      // Predicated region
      $region21: #{tpu_custom_call.1} parent=5 // pred_check
        %p128 = pneg %p127
      $region22: #{tpu_custom_call.1} parent=5 // pred_check_branch
        %130 = sbr.rel (%p128) target = $region24
      $region23: #{tpu_custom_call.1} parent=5 // pred_region
        // Predicated region
        $region25: #{tpu_custom_call.1} parent=23 // pred_check
          %p131 = pneg %p32
        $region26: #{tpu_custom_call.1} parent=23 // pred_check_branch
          %133 = sbr.rel (%p131) target = $region28
        $region27: #{tpu_custom_call.1} parent=23 // pred_region
          %p134 = scmp.lt.s32.totalorder %s12, 1
          %s135 = scalar_select %p134, %s12, 1
          %s136 = smul.addr %s135, 2
          %s137 = smul.addr %s136, 8
          %s138 = scalar_lea.vmem %s0, %s137
        $region28: #{tpu_custom_call.1} parent=23 // pred_fallthru
          _
      $region24: #{tpu_custom_call.1} parent=5 // pred_fallthru
        _
      %p139 = scmp.le.s32.totalorder 1, %s12
      %p140 = scmp.lt.s32.totalorder %s12, 3
      %p141 = pnand %p139, %p140
      %p142 = pneg %p141
      // Predicated region
      $region29: #{tpu_custom_call.1} parent=5 // pred_check
        _
      $region30: #{tpu_custom_call.1} parent=5 // pred_check_branch
        %144 = sbr.rel (%p141) target = $region32
      $region31: #{tpu_custom_call.1} parent=5 // pred_region
        %s145 = ssub.s32 %s12, 1
        %p146 = scmp.lt.s32.totalorder %s17, 1
        %s147 = scalar_select %p146, %s17, 1
        %s148 = smul.addr %s147, 2
        %s149 = smul.addr %s148, 8
        %s150 = scalar_lea.vmem %s0, %s149
        %p151 = pneg %p38
        %p152 = pneg %p35
        %p153 = pneg %p59
        %p154 = pneg %p56
        %p155 = pneg %p80
        %p156 = pneg %p77
        %p157 = pneg %p106
        %p158 = pneg %p103
        %s159 = sand.u32 %s93, 1
        %s160 = scalar_lea.sflag [#allocation3], %s159
        %s161 = sand.u32 %s93, 1
        %s162 = smul.addr %s161, 16
        %s163 = scalar_lea.vmem [#allocation2], %s162
        %p164 = scmp.lt.s32.totalorder %s17, 1
        %s165 = scalar_select %p164, %s17, 1
        %s166 = smul.addr %s165, 2
        %s167 = smul.addr %s166, 8
        %s168 = scalar_lea.vmem %s0, %s167
        %v170 = vlaneseq
        %v171 = vand.u32 %v170, 127
        %v172 = vadd.s32 %v171, 128
        %v173 = vand.u32 %v171, 255
        %v174 = vand.u32 %v172, 255
        %v175 = vand.u32 %v173, 15
        %v176 = vand.u32 %v174, 15
        %vm177 = vcmp.lt.s32.totalorder %v173, 16
        %vm178 = vcmp.lt.s32.totalorder %v174, 16
        %vm179 = vcmp.ge.s32.totalorder %v173, 240
        %vm180 = vcmp.ge.s32.totalorder %v174, 240
        %vm181 = vcmp.eq.s32.totalorder %v175, 0
        %vm182 = vcmp.eq.s32.totalorder %v176, 0
        %vm183 = vcmp.eq.s32.totalorder %v175, 15
        %vm184 = vcmp.eq.s32.totalorder %v176, 15
        %v185 = vld [vmem:[%s168] sm:$0xff]
        %v186 = vld [vmem:[%s168 + $0x8] sm:$0xff]
        %v187 = vsel %vm177, 1, 0
        %v188 = vsel %vm178, 1, 0
        %vm189 = vcmp.eq.s32.totalorder %v187, 1
        %vm190 = vcmp.eq.s32.totalorder %v188, 1
        %v191 = vsel %vm179, 1, 0
        %v192 = vsel %vm180, 1, 0
        %vm193 = vcmp.eq.s32.totalorder %v191, 1
        %vm194 = vcmp.eq.s32.totalorder %v192, 1
        %v195 = vsel %vm181, 1, 0
        %v196 = vsel %vm182, 1, 0
        %vm197 = vcmp.eq.s32.totalorder %v195, 1
        %vm198 = vcmp.eq.s32.totalorder %v196, 1
        %v199 = vsel %vm183, 1, 0
        %v200 = vsel %vm184, 1, 0
        %vm201 = vcmp.eq.s32.totalorder %v199, 1
        %vm202 = vcmp.eq.s32.totalorder %v200, 1
        %v203 = vld [vmem:[%s1] sm:$0xf]
        %v204 = vld [vmem:[%s1 + $0x4] sm:$0xf]
        %v205 = vld [vmem:[%s1 + $0x8] sm:$0xf]
        %v206 = vld [vmem:[%s1 + $0xc] sm:$0xf]
        %v207 = vld [vmem:[%s1 + $0x10] sm:$0xf]
        %v208 = vld [vmem:[%s1 + $0x14] sm:$0xf]
        %v209 = vld [vmem:[%s2] sm:$0xff]
        %v210 = vld [vmem:[%s2 + $0x8] sm:$0xff]
        %211 = vrot.lane.b32.xlu0 %v185, 16
        %v212 = vpop.permute.xlu0 %211
        %213 = vrot.lane.b32.xlu0 %v186, 16
        %v214 = vpop.permute.xlu0 %213
        %vm215 = vcmp.lt.s32.totalorder %v171, 16
        %v216 = vsel %vm215, %v212, %v214
        %v217 = vsel %vm215, %v214, %v212
        %218 = vrot.lane.b32.xlu0 %v185, 112
        %v219 = vpop.permute.xlu0 %218
        %220 = vrot.lane.b32.xlu0 %v186, 112
        %v221 = vpop.permute.xlu0 %220
        %vm222 = vcmp.lt.s32.totalorder %v171, 112
        %v223 = vsel %vm222, %v219, %v221
        %v224 = vsel %vm222, %v221, %v219
        %v225 = vsel %vm189, %v223, %v217
        %v226 = vsel %vm190, %v224, %v216
        %v227 = vsel %vm193, %v217, %v223
        %v228 = vsel %vm194, %v216, %v224
        %v229 = vpack.c.bf16 %v185, %v225
        %v230 = vpack.c.bf16 %v186, %v226
        %v231 = vpack.c.bf16 %v227, %v227
        %v232 = vpack.c.bf16 %v228, %v228
        %233 = vrot.lane.b32.xlu0 %v225, 1
        %v234 = vpop.permute.xlu0 %233
        %235 = vrot.lane.b32.xlu0 %v185, 1
        %v236 = vpop.permute.xlu0 %235
        %237 = vrot.lane.b32.xlu0 %v227, 1
        %v238 = vpop.permute.xlu0 %237
        %239 = vrot.lane.b32.xlu0 %v226, 1
        %v240 = vpop.permute.xlu0 %239
        %241 = vrot.lane.b32.xlu0 %v186, 1
        %v242 = vpop.permute.xlu0 %241
        %243 = vrot.lane.b32.xlu0 %v228, 1
        %v244 = vpop.permute.xlu0 %243
        %vm245 = vcmp.lt.s32.totalorder %v171, 1
        %v246 = vsel %vm245, %v234, %v240
        %v247 = vsel %vm245, %v236, %v242
        %v248 = vsel %vm245, %v238, %v244
        %v249 = vsel %vm245, %v240, %v234
        %v250 = vsel %vm245, %v242, %v236
        %v251 = vsel %vm245, %v244, %v238
        %252 = vrot.lane.b32.xlu0 %v225, 127
        %v253 = vpop.permute.xlu0 %252
        %254 = vrot.lane.b32.xlu0 %v185, 127
        %v255 = vpop.permute.xlu0 %254
        %256 = vrot.lane.b32.xlu0 %v227, 127
        %v257 = vpop.permute.xlu0 %256
        %258 = vrot.lane.b32.xlu0 %v226, 127
        %v259 = vpop.permute.xlu0 %258
        %260 = vrot.lane.b32.xlu0 %v186, 127
        %v261 = vpop.permute.xlu0 %260
        %262 = vrot.lane.b32.xlu0 %v228, 127
        %v263 = vpop.permute.xlu0 %262
        %vm264 = vcmp.lt.s32.totalorder %v171, 127
        %v265 = vsel %vm264, %v253, %v259
        %v266 = vsel %vm264, %v255, %v261
        %v267 = vsel %vm264, %v257, %v263
        %v268 = vsel %vm264, %v259, %v253
        %v269 = vsel %vm264, %v261, %v255
        %v270 = vsel %vm264, %v263, %v257
        %v271 = vsel %vm197, %v265, %v249
        %v272 = vsel %vm198, %v268, %v246
        %v273 = vsel %vm197, %v266, %v250
        %v274 = vsel %vm198, %v269, %v247
        %v275 = vsel %vm197, %v267, %v251
        %v276 = vsel %vm198, %v270, %v248
        %v277 = vsel %vm201, %v249, %v265
        %v278 = vsel %vm202, %v246, %v268
        %v279 = vsel %vm201, %v250, %v266
        %v280 = vsel %vm202, %v247, %v269
        %v281 = vsel %vm201, %v251, %v267
        %v282 = vsel %vm202, %v248, %v270
        %v283 = vpack.c.bf16 %v273, %v271
        %v284 = vpack.c.bf16 %v274, %v272
        %v285 = vpack.c.bf16 %v275, %v275
        %v286 = vpack.c.bf16 %v276, %v276
        %v289 = vunpack.c.l.b16 %v203
        %v290 = vunpack.c.l.b16 %v204
        %v291 = vpack.c.b16 %v290, %v289
        %vm292 = vcmask 195584
        %v294 = vsel %vm292, %v291, 0
        %vm296 = vcmask 1043456
        %v298 = vsel %vm296, %v285, 0
        %v301 = vsel %vm296, %v286, 0
        %303 = vmatpush.bf16.msra.mxu0 0
        %304 = vmatpush.bf16.msra.mxu0 0
        %305 = vmatpush.bf16.msra.mxu0 0
        %306 = vmatpush.bf16.msra.mxu0 0
        %307 = vmatpush.bf16.msra.mxu0 0
        %308 = vmatpush.bf16.msra.mxu0 0
        %309 = vmatpush.bf16.msra.mxu0 %v298
        %310 = vmatpush.bf16.msra.mxu0 %v283
        %311 = vmatmul.bf16.gmra.mxu0 %v294
        %v312 = vpop.f32.mrf.mxu0
        %v313 = vadd.f32 0.0, %v312
        %v314 = vpop.f32.mrf.mxu0
        %v315 = vadd.f32 0.0, %v314
        %316 = vdwg.mxu0
        %317 = vmatpush.bf16.msra.mxu0 0
        %318 = vmatpush.bf16.msra.mxu0 0
        %319 = vmatpush.bf16.msra.mxu0 0
        %320 = vmatpush.bf16.msra.mxu0 0
        %321 = vmatpush.bf16.msra.mxu0 0
        %322 = vmatpush.bf16.msra.mxu0 0
        %323 = vmatpush.bf16.msra.mxu0 %v301
        %324 = vmatpush.bf16.msra.mxu0 %v284
        %325 = vmatmul.bf16.gmra.mxu0 %v294
        %v326 = vpop.f32.mrf.mxu0
        %v327 = vadd.f32 0.0, %v326
        %v328 = vpop.f32.mrf.mxu0
        %v329 = vadd.f32 0.0, %v328
        %330 = vdwg.mxu0
        %v333 = vunpack.c.l.b16 %v205
        %v334 = vunpack.c.l.b16 %v206
        %v335 = vpack.c.b16 %v334, %v333
        %v337 = vsel %vm292, %v335, 0
        %v340 = vsel %vm296, %v231, 0
        %v343 = vsel %vm296, %v232, 0
        %345 = vmatpush.bf16.msra.mxu0 0
        %346 = vmatpush.bf16.msra.mxu0 0
        %347 = vmatpush.bf16.msra.mxu0 0
        %348 = vmatpush.bf16.msra.mxu0 0
        %349 = vmatpush.bf16.msra.mxu0 0
        %350 = vmatpush.bf16.msra.mxu0 0
        %351 = vmatpush.bf16.msra.mxu0 %v340
        %352 = vmatpush.bf16.msra.mxu0 %v229
        %353 = vmatmul.bf16.gmra.mxu0 %v337
        %v354 = vpop.f32.mrf.mxu0
        %v355 = vadd.f32 %v313, %v354
        %v356 = vpop.f32.mrf.mxu0
        %v357 = vadd.f32 %v315, %v356
        %358 = vdwg.mxu0
        %359 = vmatpush.bf16.msra.mxu0 0
        %360 = vmatpush.bf16.msra.mxu0 0
        %361 = vmatpush.bf16.msra.mxu0 0
        %362 = vmatpush.bf16.msra.mxu0 0
        %363 = vmatpush.bf16.msra.mxu0 0
        %364 = vmatpush.bf16.msra.mxu0 0
        %365 = vmatpush.bf16.msra.mxu0 %v343
        %366 = vmatpush.bf16.msra.mxu0 %v230
        %367 = vmatmul.bf16.gmra.mxu0 %v337
        %v368 = vpop.f32.mrf.mxu0
        %v369 = vadd.f32 %v327, %v368
        %v370 = vpop.f32.mrf.mxu0
        %v371 = vadd.f32 %v329, %v370
        %372 = vdwg.mxu0
        %v373 = vpack.c.bf16 %v279, %v277
        %v374 = vpack.c.bf16 %v280, %v278
        %v375 = vpack.c.bf16 %v281, %v281
        %v376 = vpack.c.bf16 %v282, %v282
        %v379 = vunpack.c.l.b16 %v207
        %v380 = vunpack.c.l.b16 %v208
        %v381 = vpack.c.b16 %v380, %v379
        %v383 = vsel %vm292, %v381, 0
        %v386 = vsel %vm296, %v375, 0
        %v389 = vsel %vm296, %v376, 0
        %391 = vmatpush.bf16.msra.mxu0 0
        %392 = vmatpush.bf16.msra.mxu0 0
        %393 = vmatpush.bf16.msra.mxu0 0
        %394 = vmatpush.bf16.msra.mxu0 0
        %395 = vmatpush.bf16.msra.mxu0 0
        %396 = vmatpush.bf16.msra.mxu0 0
        %397 = vmatpush.bf16.msra.mxu0 %v386
        %398 = vmatpush.bf16.msra.mxu0 %v373
        %399 = vmatmul.bf16.gmra.mxu0 %v383
        %v400 = vpop.f32.mrf.mxu0
        %v401 = vadd.f32 0.0, %v400
        %v402 = vpop.f32.mrf.mxu0
        %v403 = vadd.f32 0.0, %v402
        %404 = vdwg.mxu0
        %405 = vmatpush.bf16.msra.mxu0 0
        %406 = vmatpush.bf16.msra.mxu0 0
        %407 = vmatpush.bf16.msra.mxu0 0
        %408 = vmatpush.bf16.msra.mxu0 0
        %409 = vmatpush.bf16.msra.mxu0 0
        %410 = vmatpush.bf16.msra.mxu0 0
        %411 = vmatpush.bf16.msra.mxu0 %v389
        %412 = vmatpush.bf16.msra.mxu0 %v374
        %413 = vmatmul.bf16.gmra.mxu0 %v383
        %v414 = vpop.f32.mrf.mxu0
        %v415 = vadd.f32 0.0, %v414
        %v416 = vpop.f32.mrf.mxu0
        %v417 = vadd.f32 0.0, %v416
        %418 = vdwg.mxu0
        %v419 = vadd.f32 %v355, %v401
        %v420 = vadd.f32 %v369, %v415
        %v421 = vadd.f32 %v357, %v403
        %v422 = vadd.f32 %v371, %v417
        %424 = vset.pattern.permute.xlu0 0
        %425 = vperm.xlu0 %424, %v209
        %v426 = vpop.permute.xlu0 %425
        %429 = vset.pattern.permute.xlu0 0
        %430 = vperm.xlu0 %429, %v210
        %v431 = vpop.permute.xlu0 %430
        %v433 = vadd.f32 %v419, %v426
        %v434 = vadd.f32 %v420, %v426
        %v435 = vadd.f32 %v421, %v431
        %v436 = vadd.f32 %v422, %v431
        %v437 = vmax.f32 %v433, 0.0
        %v438 = vmax.f32 %v434, 0.0
        %v439 = vmax.f32 %v435, 0.0
        %v440 = vmax.f32 %v436, 0.0
        %v441 = vld [vmem:[%s1 + $0x18] sm:$0xf]
        %v442 = vld [vmem:[%s1 + $0x1c] sm:$0xf]
        %v443 = vld [vmem:[%s1 + $0x20] sm:$0xf]
        %v444 = vld [vmem:[%s1 + $0x24] sm:$0xf]
        %v445 = vld [vmem:[%s1 + $0x28] sm:$0xf]
        %v446 = vld [vmem:[%s1 + $0x2c] sm:$0xf]
        %v447 = vld [vmem:[%s2 + $0x10] sm:$0xff]
        %v448 = vld [vmem:[%s2 + $0x18] sm:$0xff]
        %449 = vrot.lane.b32.xlu0 %v437, 16
        %v450 = vpop.permute.xlu0 %449
        %451 = vrot.lane.b32.xlu0 %v439, 16
        %v452 = vpop.permute.xlu0 %451
        %453 = vrot.lane.b32.xlu0 %v438, 16
        %v454 = vpop.permute.xlu0 %453
        %455 = vrot.lane.b32.xlu0 %v440, 16
        %v456 = vpop.permute.xlu0 %455
        %v457 = vsel %vm215, %v450, %v454
        %v458 = vsel %vm215, %v452, %v456
        %v459 = vsel %vm215, %v454, %v450
        %v460 = vsel %vm215, %v456, %v452
        %461 = vrot.lane.b32.xlu0 %v437, 112
        %v462 = vpop.permute.xlu0 %461
        %463 = vrot.lane.b32.xlu0 %v439, 112
        %v464 = vpop.permute.xlu0 %463
        %465 = vrot.lane.b32.xlu0 %v438, 112
        %v466 = vpop.permute.xlu0 %465
        %467 = vrot.lane.b32.xlu0 %v440, 112
        %v468 = vpop.permute.xlu0 %467
        %v469 = vsel %vm222, %v462, %v466
        %v470 = vsel %vm222, %v464, %v468
        %v471 = vsel %vm222, %v466, %v462
        %v472 = vsel %vm222, %v468, %v464
        %v473 = vsel %vm189, %v469, %v459
        %v474 = vsel %vm190, %v471, %v457
        %v475 = vsel %vm189, %v470, %v460
        %v476 = vsel %vm190, %v472, %v458
        %v477 = vsel %vm193, %v459, %v469
        %v478 = vsel %vm194, %v457, %v471
        %v479 = vsel %vm193, %v460, %v470
        %v480 = vsel %vm194, %v458, %v472
        %v481 = vpack.c.bf16 %v475, %v473
        %v482 = vpack.c.bf16 %v476, %v474
        %v483 = vpack.c.bf16 %v439, %v437
        %v484 = vpack.c.bf16 %v440, %v438
        %v485 = vpack.c.bf16 %v479, %v477
        %v486 = vpack.c.bf16 %v480, %v478
        %487 = vrot.lane.b32.xlu0 %v473, 1
        %v488 = vpop.permute.xlu0 %487
        %489 = vrot.lane.b32.xlu0 %v475, 1
        %v490 = vpop.permute.xlu0 %489
        %491 = vrot.lane.b32.xlu0 %v437, 1
        %v492 = vpop.permute.xlu0 %491
        %493 = vrot.lane.b32.xlu0 %v439, 1
        %v494 = vpop.permute.xlu0 %493
        %495 = vrot.lane.b32.xlu0 %v477, 1
        %v496 = vpop.permute.xlu0 %495
        %497 = vrot.lane.b32.xlu0 %v479, 1
        %v498 = vpop.permute.xlu0 %497
        %499 = vrot.lane.b32.xlu0 %v474, 1
        %v500 = vpop.permute.xlu0 %499
        %501 = vrot.lane.b32.xlu0 %v476, 1
        %v502 = vpop.permute.xlu0 %501
        %503 = vrot.lane.b32.xlu0 %v438, 1
        %v504 = vpop.permute.xlu0 %503
        %505 = vrot.lane.b32.xlu0 %v440, 1
        %v506 = vpop.permute.xlu0 %505
        %507 = vrot.lane.b32.xlu0 %v478, 1
        %v508 = vpop.permute.xlu0 %507
        %509 = vrot.lane.b32.xlu0 %v480, 1
        %v510 = vpop.permute.xlu0 %509
        %v511 = vsel %vm245, %v488, %v500
        %v512 = vsel %vm245, %v490, %v502
        %v513 = vsel %vm245, %v492, %v504
        %v514 = vsel %vm245, %v494, %v506
        %v515 = vsel %vm245, %v496, %v508
        %v516 = vsel %vm245, %v498, %v510
        %v517 = vsel %vm245, %v500, %v488
        %v518 = vsel %vm245, %v502, %v490
        %v519 = vsel %vm245, %v504, %v492
        %v520 = vsel %vm245, %v506, %v494
        %v521 = vsel %vm245, %v508, %v496
        %v522 = vsel %vm245, %v510, %v498
        %523 = vrot.lane.b32.xlu0 %v473, 127
        %v524 = vpop.permute.xlu0 %523
        %525 = vrot.lane.b32.xlu0 %v475, 127
        %v526 = vpop.permute.xlu0 %525
        %527 = vrot.lane.b32.xlu0 %v437, 127
        %v528 = vpop.permute.xlu0 %527
        %529 = vrot.lane.b32.xlu0 %v439, 127
        %v530 = vpop.permute.xlu0 %529
        %531 = vrot.lane.b32.xlu0 %v477, 127
        %v532 = vpop.permute.xlu0 %531
        %533 = vrot.lane.b32.xlu0 %v479, 127
        %v534 = vpop.permute.xlu0 %533
        %535 = vrot.lane.b32.xlu0 %v474, 127
        %v536 = vpop.permute.xlu0 %535
        %537 = vrot.lane.b32.xlu0 %v476, 127
        %v538 = vpop.permute.xlu0 %537
        %539 = vrot.lane.b32.xlu0 %v438, 127
        %v540 = vpop.permute.xlu0 %539
        %541 = vrot.lane.b32.xlu0 %v440, 127
        %v542 = vpop.permute.xlu0 %541
        %543 = vrot.lane.b32.xlu0 %v478, 127
        %v544 = vpop.permute.xlu0 %543
        %545 = vrot.lane.b32.xlu0 %v480, 127
        %v546 = vpop.permute.xlu0 %545
        %v547 = vsel %vm264, %v524, %v536
        %v548 = vsel %vm264, %v526, %v538
        %v549 = vsel %vm264, %v528, %v540
        %v550 = vsel %vm264, %v530, %v542
        %v551 = vsel %vm264, %v532, %v544
        %v552 = vsel %vm264, %v534, %v546
        %v553 = vsel %vm264, %v536, %v524
        %v554 = vsel %vm264, %v538, %v526
        %v555 = vsel %vm264, %v540, %v528
        %v556 = vsel %vm264, %v542, %v530
        %v557 = vsel %vm264, %v544, %v532
        %v558 = vsel %vm264, %v546, %v534
        %v559 = vsel %vm197, %v547, %v517
        %v560 = vsel %vm198, %v553, %v511
        %v561 = vsel %vm197, %v548, %v518
        %v562 = vsel %vm198, %v554, %v512
        %v563 = vsel %vm197, %v549, %v519
        %v564 = vsel %vm198, %v555, %v513
        %v565 = vsel %vm197, %v550, %v520
        %v566 = vsel %vm198, %v556, %v514
        %v567 = vsel %vm197, %v551, %v521
        %v568 = vsel %vm198, %v557, %v515
        %v569 = vsel %vm197, %v552, %v522
        %v570 = vsel %vm198, %v558, %v516
        %v571 = vsel %vm201, %v517, %v547
        %v572 = vsel %vm202, %v511, %v553
        %v573 = vsel %vm201, %v518, %v548
        %v574 = vsel %vm202, %v512, %v554
        %v575 = vsel %vm201, %v519, %v549
        %v576 = vsel %vm202, %v513, %v555
        %v577 = vsel %vm201, %v520, %v550
        %v578 = vsel %vm202, %v514, %v556
        %v579 = vsel %vm201, %v521, %v551
        %v580 = vsel %vm202, %v515, %v557
        %v581 = vsel %vm201, %v522, %v552
        %v582 = vsel %vm202, %v516, %v558
        %v583 = vpack.c.bf16 %v561, %v559
        %v584 = vpack.c.bf16 %v562, %v560
        %v585 = vpack.c.bf16 %v565, %v563
        %v586 = vpack.c.bf16 %v566, %v564
        %v587 = vpack.c.bf16 %v569, %v567
        %v588 = vpack.c.bf16 %v570, %v568
        %v591 = vunpack.c.l.b16 %v441
        %v592 = vunpack.c.l.b16 %v442
        %v593 = vpack.c.b16 %v592, %v591
        %vm594 = vcmask 392192
        %v596 = vsel %vm594, %v593, 0
        %598 = vmatpush.bf16.msra.mxu0 0
        %599 = vmatpush.bf16.msra.mxu0 0
        %600 = vmatpush.bf16.msra.mxu0 0
        %601 = vmatpush.bf16.msra.mxu0 0
        %602 = vmatpush.bf16.msra.mxu0 0
        %603 = vmatpush.bf16.msra.mxu0 %v587
        %604 = vmatpush.bf16.msra.mxu0 %v585
        %605 = vmatpush.bf16.msra.mxu0 %v583
        %606 = vmatmul.bf16.gmra.mxu0 %v596
        %v607 = vpop.f32.mrf.mxu0
        %v608 = vadd.f32 0.0, %v607
        %v609 = vpop.f32.mrf.mxu0
        %v610 = vadd.f32 0.0, %v609
        %611 = vdwg.mxu0
        %612 = vmatpush.bf16.msra.mxu0 0
        %613 = vmatpush.bf16.msra.mxu0 0
        %614 = vmatpush.bf16.msra.mxu0 0
        %615 = vmatpush.bf16.msra.mxu0 0
        %616 = vmatpush.bf16.msra.mxu0 0
        %617 = vmatpush.bf16.msra.mxu0 %v588
        %618 = vmatpush.bf16.msra.mxu0 %v586
        %619 = vmatpush.bf16.msra.mxu0 %v584
        %620 = vmatmul.bf16.gmra.mxu0 %v596
        %v621 = vpop.f32.mrf.mxu0
        %v622 = vadd.f32 0.0, %v621
        %v623 = vpop.f32.mrf.mxu0
        %v624 = vadd.f32 0.0, %v623
        %625 = vdwg.mxu0
        %v628 = vunpack.c.l.b16 %v443
        %v629 = vunpack.c.l.b16 %v444
        %v630 = vpack.c.b16 %v629, %v628
        %v632 = vsel %vm594, %v630, 0
        %634 = vmatpush.bf16.msra.mxu0 0
        %635 = vmatpush.bf16.msra.mxu0 0
        %636 = vmatpush.bf16.msra.mxu0 0
        %637 = vmatpush.bf16.msra.mxu0 0
        %638 = vmatpush.bf16.msra.mxu0 0
        %639 = vmatpush.bf16.msra.mxu0 %v485
        %640 = vmatpush.bf16.msra.mxu0 %v483
        %641 = vmatpush.bf16.msra.mxu0 %v481
        %642 = vmatmul.bf16.gmra.mxu0 %v632
        %v643 = vpop.f32.mrf.mxu0
        %v644 = vadd.f32 %v608, %v643
        %v645 = vpop.f32.mrf.mxu0
        %v646 = vadd.f32 %v610, %v645
        %647 = vdwg.mxu0
        %648 = vmatpush.bf16.msra.mxu0 0
        %649 = vmatpush.bf16.msra.mxu0 0
        %650 = vmatpush.bf16.msra.mxu0 0
        %651 = vmatpush.bf16.msra.mxu0 0
        %652 = vmatpush.bf16.msra.mxu0 0
        %653 = vmatpush.bf16.msra.mxu0 %v486
        %654 = vmatpush.bf16.msra.mxu0 %v484
        %655 = vmatpush.bf16.msra.mxu0 %v482
        %656 = vmatmul.bf16.gmra.mxu0 %v632
        %v657 = vpop.f32.mrf.mxu0
        %v658 = vadd.f32 %v622, %v657
        %v659 = vpop.f32.mrf.mxu0
        %v660 = vadd.f32 %v624, %v659
        %661 = vdwg.mxu0
        %v662 = vpack.c.bf16 %v573, %v571
        %v663 = vpack.c.bf16 %v574, %v572
        %v664 = vpack.c.bf16 %v577, %v575
        %v665 = vpack.c.bf16 %v578, %v576
        %v666 = vpack.c.bf16 %v581, %v579
        %v667 = vpack.c.bf16 %v582, %v580
        %v670 = vunpack.c.l.b16 %v445
        %v671 = vunpack.c.l.b16 %v446
        %v672 = vpack.c.b16 %v671, %v670
        %v674 = vsel %vm594, %v672, 0
        %676 = vmatpush.bf16.msra.mxu0 0
        %677 = vmatpush.bf16.msra.mxu0 0
        %678 = vmatpush.bf16.msra.mxu0 0
        %679 = vmatpush.bf16.msra.mxu0 0
        %680 = vmatpush.bf16.msra.mxu0 0
        %681 = vmatpush.bf16.msra.mxu0 %v666
        %682 = vmatpush.bf16.msra.mxu0 %v664
        %683 = vmatpush.bf16.msra.mxu0 %v662
        %684 = vmatmul.bf16.gmra.mxu0 %v674
        %v685 = vpop.f32.mrf.mxu0
        %v686 = vadd.f32 0.0, %v685
        %v687 = vpop.f32.mrf.mxu0
        %v688 = vadd.f32 0.0, %v687
        %689 = vdwg.mxu0
        %690 = vmatpush.bf16.msra.mxu0 0
        %691 = vmatpush.bf16.msra.mxu0 0
        %692 = vmatpush.bf16.msra.mxu0 0
        %693 = vmatpush.bf16.msra.mxu0 0
        %694 = vmatpush.bf16.msra.mxu0 0
        %695 = vmatpush.bf16.msra.mxu0 %v667
        %696 = vmatpush.bf16.msra.mxu0 %v665
        %697 = vmatpush.bf16.msra.mxu0 %v663
        %698 = vmatmul.bf16.gmra.mxu0 %v674
        %v699 = vpop.f32.mrf.mxu0
        %v700 = vadd.f32 0.0, %v699
        %v701 = vpop.f32.mrf.mxu0
        %v702 = vadd.f32 0.0, %v701
        %703 = vdwg.mxu0
        %v704 = vadd.f32 %v644, %v686
        %v705 = vadd.f32 %v658, %v700
        %v706 = vadd.f32 %v646, %v688
        %v707 = vadd.f32 %v660, %v702
        %709 = vset.pattern.permute.xlu0 0
        %710 = vperm.xlu0 %709, %v447
        %v711 = vpop.permute.xlu0 %710
        %714 = vset.pattern.permute.xlu0 0
        %715 = vperm.xlu0 %714, %v448
        %v716 = vpop.permute.xlu0 %715
        %v718 = vadd.f32 %v704, %v711
        %v719 = vadd.f32 %v705, %v711
        %v720 = vadd.f32 %v706, %v716
        %v721 = vadd.f32 %v707, %v716
        %v722 = vmax.f32 %v718, 0.0
        %v723 = vmax.f32 %v719, 0.0
        %v724 = vmax.f32 %v720, 0.0
        %v725 = vmax.f32 %v721, 0.0
        %v726 = vld [vmem:[%s1 + $0x30] sm:$0xf]
        %v727 = vld [vmem:[%s1 + $0x34] sm:$0xf]
        %v728 = vld [vmem:[%s1 + $0x38] sm:$0xf]
        %v729 = vld [vmem:[%s1 + $0x3c] sm:$0xf]
        %v730 = vld [vmem:[%s1 + $0x40] sm:$0xf]
        %v731 = vld [vmem:[%s1 + $0x44] sm:$0xf]
        %v732 = vld [vmem:[%s2 + $0x20] sm:$0xff]
        %v733 = vld [vmem:[%s2 + $0x28] sm:$0xff]
        %734 = vrot.lane.b32.xlu0 %v722, 16
        %v735 = vpop.permute.xlu0 %734
        %736 = vrot.lane.b32.xlu0 %v724, 16
        %v737 = vpop.permute.xlu0 %736
        %738 = vrot.lane.b32.xlu0 %v723, 16
        %v739 = vpop.permute.xlu0 %738
        %740 = vrot.lane.b32.xlu0 %v725, 16
        %v741 = vpop.permute.xlu0 %740
        %v742 = vsel %vm215, %v735, %v739
        %v743 = vsel %vm215, %v737, %v741
        %v744 = vsel %vm215, %v739, %v735
        %v745 = vsel %vm215, %v741, %v737
        %746 = vrot.lane.b32.xlu0 %v722, 112
        %v747 = vpop.permute.xlu0 %746
        %748 = vrot.lane.b32.xlu0 %v724, 112
        %v749 = vpop.permute.xlu0 %748
        %750 = vrot.lane.b32.xlu0 %v723, 112
        %v751 = vpop.permute.xlu0 %750
        %752 = vrot.lane.b32.xlu0 %v725, 112
        %v753 = vpop.permute.xlu0 %752
        %v754 = vsel %vm222, %v747, %v751
        %v755 = vsel %vm222, %v749, %v753
        %v756 = vsel %vm222, %v751, %v747
        %v757 = vsel %vm222, %v753, %v749
        %v758 = vsel %vm189, %v754, %v744
        %v759 = vsel %vm190, %v756, %v742
        %v760 = vsel %vm189, %v755, %v745
        %v761 = vsel %vm190, %v757, %v743
        %v762 = vsel %vm193, %v744, %v754
        %v763 = vsel %vm194, %v742, %v756
        %v764 = vsel %vm193, %v745, %v755
        %v765 = vsel %vm194, %v743, %v757
        %v766 = vpack.c.bf16 %v760, %v758
        %v767 = vpack.c.bf16 %v761, %v759
        %v768 = vpack.c.bf16 %v724, %v722
        %v769 = vpack.c.bf16 %v725, %v723
        %v770 = vpack.c.bf16 %v764, %v762
        %v771 = vpack.c.bf16 %v765, %v763
        %772 = vrot.lane.b32.xlu0 %v758, 1
        %v773 = vpop.permute.xlu0 %772
        %774 = vrot.lane.b32.xlu0 %v760, 1
        %v775 = vpop.permute.xlu0 %774
        %776 = vrot.lane.b32.xlu0 %v722, 1
        %v777 = vpop.permute.xlu0 %776
        %778 = vrot.lane.b32.xlu0 %v724, 1
        %v779 = vpop.permute.xlu0 %778
        %780 = vrot.lane.b32.xlu0 %v762, 1
        %v781 = vpop.permute.xlu0 %780
        %782 = vrot.lane.b32.xlu0 %v764, 1
        %v783 = vpop.permute.xlu0 %782
        %784 = vrot.lane.b32.xlu0 %v759, 1
        %v785 = vpop.permute.xlu0 %784
        %786 = vrot.lane.b32.xlu0 %v761, 1
        %v787 = vpop.permute.xlu0 %786
        %788 = vrot.lane.b32.xlu0 %v723, 1
        %v789 = vpop.permute.xlu0 %788
        %790 = vrot.lane.b32.xlu0 %v725, 1
        %v791 = vpop.permute.xlu0 %790
        %792 = vrot.lane.b32.xlu0 %v763, 1
        %v793 = vpop.permute.xlu0 %792
        %794 = vrot.lane.b32.xlu0 %v765, 1
        %v795 = vpop.permute.xlu0 %794
        %v796 = vsel %vm245, %v773, %v785
        %v797 = vsel %vm245, %v775, %v787
        %v798 = vsel %vm245, %v777, %v789
        %v799 = vsel %vm245, %v779, %v791
        %v800 = vsel %vm245, %v781, %v793
        %v801 = vsel %vm245, %v783, %v795
        %v802 = vsel %vm245, %v785, %v773
        %v803 = vsel %vm245, %v787, %v775
        %v804 = vsel %vm245, %v789, %v777
        %v805 = vsel %vm245, %v791, %v779
        %v806 = vsel %vm245, %v793, %v781
        %v807 = vsel %vm245, %v795, %v783
        %808 = vrot.lane.b32.xlu0 %v758, 127
        %v809 = vpop.permute.xlu0 %808
        %810 = vrot.lane.b32.xlu0 %v760, 127
        %v811 = vpop.permute.xlu0 %810
        %812 = vrot.lane.b32.xlu0 %v722, 127
        %v813 = vpop.permute.xlu0 %812
        %814 = vrot.lane.b32.xlu0 %v724, 127
        %v815 = vpop.permute.xlu0 %814
        %816 = vrot.lane.b32.xlu0 %v762, 127
        %v817 = vpop.permute.xlu0 %816
        %818 = vrot.lane.b32.xlu0 %v764, 127
        %v819 = vpop.permute.xlu0 %818
        %820 = vrot.lane.b32.xlu0 %v759, 127
        %v821 = vpop.permute.xlu0 %820
        %822 = vrot.lane.b32.xlu0 %v761, 127
        %v823 = vpop.permute.xlu0 %822
        %824 = vrot.lane.b32.xlu0 %v723, 127
        %v825 = vpop.permute.xlu0 %824
        %826 = vrot.lane.b32.xlu0 %v725, 127
        %v827 = vpop.permute.xlu0 %826
        %828 = vrot.lane.b32.xlu0 %v763, 127
        %v829 = vpop.permute.xlu0 %828
        %830 = vrot.lane.b32.xlu0 %v765, 127
        %v831 = vpop.permute.xlu0 %830
        %v832 = vsel %vm264, %v809, %v821
        %v833 = vsel %vm264, %v811, %v823
        %v834 = vsel %vm264, %v813, %v825
        %v835 = vsel %vm264, %v815, %v827
        %v836 = vsel %vm264, %v817, %v829
        %v837 = vsel %vm264, %v819, %v831
        %v838 = vsel %vm264, %v821, %v809
        %v839 = vsel %vm264, %v823, %v811
        %v840 = vsel %vm264, %v825, %v813
        %v841 = vsel %vm264, %v827, %v815
        %v842 = vsel %vm264, %v829, %v817
        %v843 = vsel %vm264, %v831, %v819
        %v844 = vsel %vm197, %v832, %v802
        %v845 = vsel %vm198, %v838, %v796
        %v846 = vsel %vm197, %v833, %v803
        %v847 = vsel %vm198, %v839, %v797
        %v848 = vsel %vm197, %v834, %v804
        %v849 = vsel %vm198, %v840, %v798
        %v850 = vsel %vm197, %v835, %v805
        %v851 = vsel %vm198, %v841, %v799
        %v852 = vsel %vm197, %v836, %v806
        %v853 = vsel %vm198, %v842, %v800
        %v854 = vsel %vm197, %v837, %v807
        %v855 = vsel %vm198, %v843, %v801
        %v856 = vsel %vm201, %v802, %v832
        %v857 = vsel %vm202, %v796, %v838
        %v858 = vsel %vm201, %v803, %v833
        %v859 = vsel %vm202, %v797, %v839
        %v860 = vsel %vm201, %v804, %v834
        %v861 = vsel %vm202, %v798, %v840
        %v862 = vsel %vm201, %v805, %v835
        %v863 = vsel %vm202, %v799, %v841
        %v864 = vsel %vm201, %v806, %v836
        %v865 = vsel %vm202, %v800, %v842
        %v866 = vsel %vm201, %v807, %v837
        %v867 = vsel %vm202, %v801, %v843
        %v868 = vpack.c.bf16 %v846, %v844
        %v869 = vpack.c.bf16 %v847, %v845
        %v870 = vpack.c.bf16 %v850, %v848
        %v871 = vpack.c.bf16 %v851, %v849
        %v872 = vpack.c.bf16 %v854, %v852
        %v873 = vpack.c.bf16 %v855, %v853
        %v876 = vunpack.c.l.b16 %v726
        %v877 = vunpack.c.l.b16 %v727
        %v878 = vpack.c.b16 %v877, %v876
        %v880 = vsel %vm594, %v878, 0
        %882 = vmatpush.bf16.msra.mxu0 0
        %883 = vmatpush.bf16.msra.mxu0 0
        %884 = vmatpush.bf16.msra.mxu0 0
        %885 = vmatpush.bf16.msra.mxu0 0
        %886 = vmatpush.bf16.msra.mxu0 0
        %887 = vmatpush.bf16.msra.mxu0 %v872
        %888 = vmatpush.bf16.msra.mxu0 %v870
        %889 = vmatpush.bf16.msra.mxu0 %v868
        %890 = vmatmul.bf16.gmra.mxu0 %v880
        %v891 = vpop.f32.mrf.mxu0
        %v892 = vadd.f32 0.0, %v891
        %v893 = vpop.f32.mrf.mxu0
        %v894 = vadd.f32 0.0, %v893
        %895 = vdwg.mxu0
        %896 = vmatpush.bf16.msra.mxu0 0
        %897 = vmatpush.bf16.msra.mxu0 0
        %898 = vmatpush.bf16.msra.mxu0 0
        %899 = vmatpush.bf16.msra.mxu0 0
        %900 = vmatpush.bf16.msra.mxu0 0
        %901 = vmatpush.bf16.msra.mxu0 %v873
        %902 = vmatpush.bf16.msra.mxu0 %v871
        %903 = vmatpush.bf16.msra.mxu0 %v869
        %904 = vmatmul.bf16.gmra.mxu0 %v880
        %v905 = vpop.f32.mrf.mxu0
        %v906 = vadd.f32 0.0, %v905
        %v907 = vpop.f32.mrf.mxu0
        %v908 = vadd.f32 0.0, %v907
        %909 = vdwg.mxu0
        %v912 = vunpack.c.l.b16 %v728
        %v913 = vunpack.c.l.b16 %v729
        %v914 = vpack.c.b16 %v913, %v912
        %v916 = vsel %vm594, %v914, 0
        %918 = vmatpush.bf16.msra.mxu0 0
        %919 = vmatpush.bf16.msra.mxu0 0
        %920 = vmatpush.bf16.msra.mxu0 0
        %921 = vmatpush.bf16.msra.mxu0 0
        %922 = vmatpush.bf16.msra.mxu0 0
        %923 = vmatpush.bf16.msra.mxu0 %v770
        %924 = vmatpush.bf16.msra.mxu0 %v768
        %925 = vmatpush.bf16.msra.mxu0 %v766
        %926 = vmatmul.bf16.gmra.mxu0 %v916
        %v927 = vpop.f32.mrf.mxu0
        %v928 = vadd.f32 %v892, %v927
        %v929 = vpop.f32.mrf.mxu0
        %v930 = vadd.f32 %v894, %v929
        %931 = vdwg.mxu0
        %932 = vmatpush.bf16.msra.mxu0 0
        %933 = vmatpush.bf16.msra.mxu0 0
        %934 = vmatpush.bf16.msra.mxu0 0
        %935 = vmatpush.bf16.msra.mxu0 0
        %936 = vmatpush.bf16.msra.mxu0 0
        %937 = vmatpush.bf16.msra.mxu0 %v771
        %938 = vmatpush.bf16.msra.mxu0 %v769
        %939 = vmatpush.bf16.msra.mxu0 %v767
        %940 = vmatmul.bf16.gmra.mxu0 %v916
        %v941 = vpop.f32.mrf.mxu0
        %v942 = vadd.f32 %v906, %v941
        %v943 = vpop.f32.mrf.mxu0
        %v944 = vadd.f32 %v908, %v943
        %945 = vdwg.mxu0
        %v946 = vpack.c.bf16 %v858, %v856
        %v947 = vpack.c.bf16 %v859, %v857
        %v948 = vpack.c.bf16 %v862, %v860
        %v949 = vpack.c.bf16 %v863, %v861
        %v950 = vpack.c.bf16 %v866, %v864
        %v951 = vpack.c.bf16 %v867, %v865
        %v954 = vunpack.c.l.b16 %v730
        %v955 = vunpack.c.l.b16 %v731
        %v956 = vpack.c.b16 %v955, %v954
        %v958 = vsel %vm594, %v956, 0
        %960 = vmatpush.bf16.msra.mxu0 0
        %961 = vmatpush.bf16.msra.mxu0 0
        %962 = vmatpush.bf16.msra.mxu0 0
        %963 = vmatpush.bf16.msra.mxu0 0
        %964 = vmatpush.bf16.msra.mxu0 0
        %965 = vmatpush.bf16.msra.mxu0 %v950
        %966 = vmatpush.bf16.msra.mxu0 %v948
        %967 = vmatpush.bf16.msra.mxu0 %v946
        %968 = vmatmul.bf16.gmra.mxu0 %v958
        %v969 = vpop.f32.mrf.mxu0
        %v970 = vadd.f32 0.0, %v969
        %v971 = vpop.f32.mrf.mxu0
        %v972 = vadd.f32 0.0, %v971
        %973 = vdwg.mxu0
        %974 = vmatpush.bf16.msra.mxu0 0
        %975 = vmatpush.bf16.msra.mxu0 0
        %976 = vmatpush.bf16.msra.mxu0 0
        %977 = vmatpush.bf16.msra.mxu0 0
        %978 = vmatpush.bf16.msra.mxu0 0
        %979 = vmatpush.bf16.msra.mxu0 %v951
        %980 = vmatpush.bf16.msra.mxu0 %v949
        %981 = vmatpush.bf16.msra.mxu0 %v947
        %982 = vmatmul.bf16.gmra.mxu0 %v958
        %v983 = vpop.f32.mrf.mxu0
        %v984 = vadd.f32 0.0, %v983
        %v985 = vpop.f32.mrf.mxu0
        %v986 = vadd.f32 0.0, %v985
        %987 = vdwg.mxu0
        %v988 = vadd.f32 %v928, %v970
        %v989 = vadd.f32 %v942, %v984
        %v990 = vadd.f32 %v930, %v972
        %v991 = vadd.f32 %v944, %v986
        %993 = vset.pattern.permute.xlu0 0
        %994 = vperm.xlu0 %993, %v732
        %v995 = vpop.permute.xlu0 %994
        %998 = vset.pattern.permute.xlu0 0
        %999 = vperm.xlu0 %998, %v733
        %v1000 = vpop.permute.xlu0 %999
        %v1002 = vadd.f32 %v988, %v995
        %v1003 = vadd.f32 %v989, %v995
        %v1004 = vadd.f32 %v990, %v1000
        %v1005 = vadd.f32 %v991, %v1000
        %v1006 = vadd.f32 %v1002, %v437
        %v1007 = vadd.f32 %v1003, %v438
        %v1008 = vadd.f32 %v1004, %v439
        %v1009 = vadd.f32 %v1005, %v440
        %v1010 = vmax.f32 %v1006, 0.0
        %v1011 = vmax.f32 %v1007, 0.0
        %v1012 = vmax.f32 %v1008, 0.0
        %v1013 = vmax.f32 %v1009, 0.0
        %v1014 = vld [vmem:[%s1 + $0x48] sm:$0xf]
        %v1015 = vld [vmem:[%s1 + $0x4c] sm:$0xf]
        %v1016 = vld [vmem:[%s1 + $0x50] sm:$0xf]
        %v1017 = vld [vmem:[%s1 + $0x54] sm:$0xf]
        %v1018 = vld [vmem:[%s1 + $0x58] sm:$0xf]
        %v1019 = vld [vmem:[%s1 + $0x5c] sm:$0xf]
        %v1020 = vld [vmem:[%s1 + $0x60] sm:$0xf]
        %v1021 = vld [vmem:[%s1 + $0x64] sm:$0xf]
        %v1022 = vld [vmem:[%s1 + $0x68] sm:$0xf]
        %v1023 = vld [vmem:[%s1 + $0x6c] sm:$0xf]
        %v1024 = vld [vmem:[%s1 + $0x70] sm:$0xf]
        %v1025 = vld [vmem:[%s1 + $0x74] sm:$0xf]
        %v1026 = vld [vmem:[%s2 + $0x30] sm:$0xff]
        %v1027 = vld [vmem:[%s2 + $0x38] sm:$0xff]
        %v1028 = vld [vmem:[%s2 + $0x40] sm:$0xff]
        %v1029 = vld [vmem:[%s2 + $0x48] sm:$0xff]
        %1030 = vrot.lane.b32.xlu0 %v1010, 16
        %v1031 = vpop.permute.xlu0 %1030
        %1032 = vrot.lane.b32.xlu0 %v1012, 16
        %v1033 = vpop.permute.xlu0 %1032
        %1034 = vrot.lane.b32.xlu0 %v1011, 16
        %v1035 = vpop.permute.xlu0 %1034
        %1036 = vrot.lane.b32.xlu0 %v1013, 16
        %v1037 = vpop.permute.xlu0 %1036
        %v1038 = vsel %vm215, %v1031, %v1035
        %v1039 = vsel %vm215, %v1033, %v1037
        %v1040 = vsel %vm215, %v1035, %v1031
        %v1041 = vsel %vm215, %v1037, %v1033
        %1042 = vrot.lane.b32.xlu0 %v1010, 112
        %v1043 = vpop.permute.xlu0 %1042
        %1044 = vrot.lane.b32.xlu0 %v1012, 112
        %v1045 = vpop.permute.xlu0 %1044
        %1046 = vrot.lane.b32.xlu0 %v1011, 112
        %v1047 = vpop.permute.xlu0 %1046
        %1048 = vrot.lane.b32.xlu0 %v1013, 112
        %v1049 = vpop.permute.xlu0 %1048
        %v1050 = vsel %vm222, %v1043, %v1047
        %v1051 = vsel %vm222, %v1045, %v1049
        %v1052 = vsel %vm222, %v1047, %v1043
        %v1053 = vsel %vm222, %v1049, %v1045
        %v1054 = vsel %vm189, %v1050, %v1040
        %v1055 = vsel %vm190, %v1052, %v1038
        %v1056 = vsel %vm189, %v1051, %v1041
        %v1057 = vsel %vm190, %v1053, %v1039
        %v1058 = vsel %vm193, %v1040, %v1050
        %v1059 = vsel %vm194, %v1038, %v1052
        %v1060 = vsel %vm193, %v1041, %v1051
        %v1061 = vsel %vm194, %v1039, %v1053
        %v1062 = vpack.c.bf16 %v1056, %v1054
        %v1063 = vpack.c.bf16 %v1057, %v1055
        %v1064 = vpack.c.bf16 %v1012, %v1010
        %v1065 = vpack.c.bf16 %v1013, %v1011
        %v1066 = vpack.c.bf16 %v1060, %v1058
        %v1067 = vpack.c.bf16 %v1061, %v1059
        %1068 = vrot.lane.b32.xlu0 %v1054, 1
        %v1069 = vpop.permute.xlu0 %1068
        %1070 = vrot.lane.b32.xlu0 %v1056, 1
        %v1071 = vpop.permute.xlu0 %1070
        %1072 = vrot.lane.b32.xlu0 %v1010, 1
        %v1073 = vpop.permute.xlu0 %1072
        %1074 = vrot.lane.b32.xlu0 %v1012, 1
        %v1075 = vpop.permute.xlu0 %1074
        %1076 = vrot.lane.b32.xlu0 %v1058, 1
        %v1077 = vpop.permute.xlu0 %1076
        %1078 = vrot.lane.b32.xlu0 %v1060, 1
        %v1079 = vpop.permute.xlu0 %1078
        %1080 = vrot.lane.b32.xlu0 %v1055, 1
        %v1081 = vpop.permute.xlu0 %1080
        %1082 = vrot.lane.b32.xlu0 %v1057, 1
        %v1083 = vpop.permute.xlu0 %1082
        %1084 = vrot.lane.b32.xlu0 %v1011, 1
        %v1085 = vpop.permute.xlu0 %1084
        %1086 = vrot.lane.b32.xlu0 %v1013, 1
        %v1087 = vpop.permute.xlu0 %1086
        %1088 = vrot.lane.b32.xlu0 %v1059, 1
        %v1089 = vpop.permute.xlu0 %1088
        %1090 = vrot.lane.b32.xlu0 %v1061, 1
        %v1091 = vpop.permute.xlu0 %1090
        %v1092 = vsel %vm245, %v1069, %v1081
        %v1093 = vsel %vm245, %v1071, %v1083
        %v1094 = vsel %vm245, %v1073, %v1085
        %v1095 = vsel %vm245, %v1075, %v1087
        %v1096 = vsel %vm245, %v1077, %v1089
        %v1097 = vsel %vm245, %v1079, %v1091
        %v1098 = vsel %vm245, %v1081, %v1069
        %v1099 = vsel %vm245, %v1083, %v1071
        %v1100 = vsel %vm245, %v1085, %v1073
        %v1101 = vsel %vm245, %v1087, %v1075
        %v1102 = vsel %vm245, %v1089, %v1077
        %v1103 = vsel %vm245, %v1091, %v1079
        %1104 = vrot.lane.b32.xlu0 %v1054, 127
        %v1105 = vpop.permute.xlu0 %1104
        %1106 = vrot.lane.b32.xlu0 %v1056, 127
        %v1107 = vpop.permute.xlu0 %1106
        %1108 = vrot.lane.b32.xlu0 %v1010, 127
        %v1109 = vpop.permute.xlu0 %1108
        %1110 = vrot.lane.b32.xlu0 %v1012, 127
        %v1111 = vpop.permute.xlu0 %1110
        %1112 = vrot.lane.b32.xlu0 %v1058, 127
        %v1113 = vpop.permute.xlu0 %1112
        %1114 = vrot.lane.b32.xlu0 %v1060, 127
        %v1115 = vpop.permute.xlu0 %1114
        %1116 = vrot.lane.b32.xlu0 %v1055, 127
        %v1117 = vpop.permute.xlu0 %1116
        %1118 = vrot.lane.b32.xlu0 %v1057, 127
        %v1119 = vpop.permute.xlu0 %1118
        %1120 = vrot.lane.b32.xlu0 %v1011, 127
        %v1121 = vpop.permute.xlu0 %1120
        %1122 = vrot.lane.b32.xlu0 %v1013, 127
        %v1123 = vpop.permute.xlu0 %1122
        %1124 = vrot.lane.b32.xlu0 %v1059, 127
        %v1125 = vpop.permute.xlu0 %1124
        %1126 = vrot.lane.b32.xlu0 %v1061, 127
        %v1127 = vpop.permute.xlu0 %1126
        %v1128 = vsel %vm264, %v1105, %v1117
        %v1129 = vsel %vm264, %v1107, %v1119
        %v1130 = vsel %vm264, %v1109, %v1121
        %v1131 = vsel %vm264, %v1111, %v1123
        %v1132 = vsel %vm264, %v1113, %v1125
        %v1133 = vsel %vm264, %v1115, %v1127
        %v1134 = vsel %vm264, %v1117, %v1105
        %v1135 = vsel %vm264, %v1119, %v1107
        %v1136 = vsel %vm264, %v1121, %v1109
        %v1137 = vsel %vm264, %v1123, %v1111
        %v1138 = vsel %vm264, %v1125, %v1113
        %v1139 = vsel %vm264, %v1127, %v1115
        %v1140 = vsel %vm197, %v1128, %v1098
        %v1141 = vsel %vm198, %v1134, %v1092
        %v1142 = vsel %vm197, %v1129, %v1099
        %v1143 = vsel %vm198, %v1135, %v1093
        %v1144 = vsel %vm197, %v1130, %v1100
        %v1145 = vsel %vm198, %v1136, %v1094
        %v1146 = vsel %vm197, %v1131, %v1101
        %v1147 = vsel %vm198, %v1137, %v1095
        %v1148 = vsel %vm197, %v1132, %v1102
        %v1149 = vsel %vm198, %v1138, %v1096
        %v1150 = vsel %vm197, %v1133, %v1103
        %v1151 = vsel %vm198, %v1139, %v1097
        %v1152 = vsel %vm201, %v1098, %v1128
        %v1153 = vsel %vm202, %v1092, %v1134
        %v1154 = vsel %vm201, %v1099, %v1129
        %v1155 = vsel %vm202, %v1093, %v1135
        %v1156 = vsel %vm201, %v1100, %v1130
        %v1157 = vsel %vm202, %v1094, %v1136
        %v1158 = vsel %vm201, %v1101, %v1131
        %v1159 = vsel %vm202, %v1095, %v1137
        %v1160 = vsel %vm201, %v1102, %v1132
        %v1161 = vsel %vm202, %v1096, %v1138
        %v1162 = vsel %vm201, %v1103, %v1133
        %v1163 = vsel %vm202, %v1097, %v1139
        %v1164 = vpack.c.bf16 %v1142, %v1140
        %v1165 = vpack.c.bf16 %v1143, %v1141
        %v1166 = vpack.c.bf16 %v1146, %v1144
        %v1167 = vpack.c.bf16 %v1147, %v1145
        %v1168 = vpack.c.bf16 %v1150, %v1148
        %v1169 = vpack.c.bf16 %v1151, %v1149
        %v1174 = vunpack.c.l.b16 %v1014
        %v1175 = vunpack.c.l.b16 %v1015
        %v1176 = vunpack.c.l.b16 %v1016
        %v1177 = vunpack.c.l.b16 %v1017
        %v1178 = vpack.c.b16 %v1175, %v1174
        %v1179 = vpack.c.b16 %v1177, %v1176
        %v1181 = vsel %vm594, %v1178, 0
        %v1184 = vsel %vm594, %v1179, 0
        %1186 = vmatpush.bf16.msra.mxu0 0
        %1187 = vmatpush.bf16.msra.mxu0 0
        %1188 = vmatpush.bf16.msra.mxu0 0
        %1189 = vmatpush.bf16.msra.mxu0 0
        %1190 = vmatpush.bf16.msra.mxu0 0
        %1191 = vmatpush.bf16.msra.mxu0 %v1168
        %1192 = vmatpush.bf16.msra.mxu0 %v1166
        %1193 = vmatpush.bf16.msra.mxu0 %v1164
        %1194 = vmatmul.bf16.gmra.mxu0 %v1181
        %v1195 = vpop.f32.mrf.mxu0
        %v1196 = vadd.f32 0.0, %v1195
        %v1197 = vpop.f32.mrf.mxu0
        %v1198 = vadd.f32 0.0, %v1197
        %1199 = vmatmul.bf16.gmra.mxu0 %v1184
        %v1200 = vpop.f32.mrf.mxu0
        %v1201 = vadd.f32 0.0, %v1200
        %v1202 = vpop.f32.mrf.mxu0
        %v1203 = vadd.f32 0.0, %v1202
        %1204 = vdwg.mxu0
        %1205 = vmatpush.bf16.msra.mxu0 0
        %1206 = vmatpush.bf16.msra.mxu0 0
        %1207 = vmatpush.bf16.msra.mxu0 0
        %1208 = vmatpush.bf16.msra.mxu0 0
        %1209 = vmatpush.bf16.msra.mxu0 0
        %1210 = vmatpush.bf16.msra.mxu0 %v1169
        %1211 = vmatpush.bf16.msra.mxu0 %v1167
        %1212 = vmatpush.bf16.msra.mxu0 %v1165
        %1213 = vmatmul.bf16.gmra.mxu0 %v1181
        %v1214 = vpop.f32.mrf.mxu0
        %v1215 = vadd.f32 0.0, %v1214
        %v1216 = vpop.f32.mrf.mxu0
        %v1217 = vadd.f32 0.0, %v1216
        %1218 = vmatmul.bf16.gmra.mxu0 %v1184
        %v1219 = vpop.f32.mrf.mxu0
        %v1220 = vadd.f32 0.0, %v1219
        %v1221 = vpop.f32.mrf.mxu0
        %v1222 = vadd.f32 0.0, %v1221
        %1223 = vdwg.mxu0
        %v1228 = vunpack.c.l.b16 %v1018
        %v1229 = vunpack.c.l.b16 %v1019
        %v1230 = vunpack.c.l.b16 %v1020
        %v1231 = vunpack.c.l.b16 %v1021
        %v1232 = vpack.c.b16 %v1229, %v1228
        %v1233 = vpack.c.b16 %v1231, %v1230
        %v1235 = vsel %vm594, %v1232, 0
        %v1238 = vsel %vm594, %v1233, 0
        %1240 = vmatpush.bf16.msra.mxu0 0
        %1241 = vmatpush.bf16.msra.mxu0 0
        %1242 = vmatpush.bf16.msra.mxu0 0
        %1243 = vmatpush.bf16.msra.mxu0 0
        %1244 = vmatpush.bf16.msra.mxu0 0
        %1245 = vmatpush.bf16.msra.mxu0 %v1066
        %1246 = vmatpush.bf16.msra.mxu0 %v1064
        %1247 = vmatpush.bf16.msra.mxu0 %v1062
        %1248 = vmatmul.bf16.gmra.mxu0 %v1235
        %v1249 = vpop.f32.mrf.mxu0
        %v1250 = vadd.f32 %v1196, %v1249
        %v1251 = vpop.f32.mrf.mxu0
        %v1252 = vadd.f32 %v1198, %v1251
        %1253 = vmatmul.bf16.gmra.mxu0 %v1238
        %v1254 = vpop.f32.mrf.mxu0
        %v1255 = vadd.f32 %v1201, %v1254
        %v1256 = vpop.f32.mrf.mxu0
        %v1257 = vadd.f32 %v1203, %v1256
        %1258 = vdwg.mxu0
        %1259 = vmatpush.bf16.msra.mxu0 0
        %1260 = vmatpush.bf16.msra.mxu0 0
        %1261 = vmatpush.bf16.msra.mxu0 0
        %1262 = vmatpush.bf16.msra.mxu0 0
        %1263 = vmatpush.bf16.msra.mxu0 0
        %1264 = vmatpush.bf16.msra.mxu0 %v1067
        %1265 = vmatpush.bf16.msra.mxu0 %v1065
        %1266 = vmatpush.bf16.msra.mxu0 %v1063
        %1267 = vmatmul.bf16.gmra.mxu0 %v1235
        %v1268 = vpop.f32.mrf.mxu0
        %v1269 = vadd.f32 %v1215, %v1268
        %v1270 = vpop.f32.mrf.mxu0
        %v1271 = vadd.f32 %v1217, %v1270
        %1272 = vmatmul.bf16.gmra.mxu0 %v1238
        %v1273 = vpop.f32.mrf.mxu0
        %v1274 = vadd.f32 %v1220, %v1273
        %v1275 = vpop.f32.mrf.mxu0
        %v1276 = vadd.f32 %v1222, %v1275
        %1277 = vdwg.mxu0
        %v1278 = vpack.c.bf16 %v1154, %v1152
        %v1279 = vpack.c.bf16 %v1155, %v1153
        %v1280 = vpack.c.bf16 %v1158, %v1156
        %v1281 = vpack.c.bf16 %v1159, %v1157
        %v1282 = vpack.c.bf16 %v1162, %v1160
        %v1283 = vpack.c.bf16 %v1163, %v1161
        %v1288 = vunpack.c.l.b16 %v1022
        %v1289 = vunpack.c.l.b16 %v1023
        %v1290 = vunpack.c.l.b16 %v1024
        %v1291 = vunpack.c.l.b16 %v1025
        %v1292 = vpack.c.b16 %v1289, %v1288
        %v1293 = vpack.c.b16 %v1291, %v1290
        %v1295 = vsel %vm594, %v1292, 0
        %v1298 = vsel %vm594, %v1293, 0
        %1300 = vmatpush.bf16.msra.mxu0 0
        %1301 = vmatpush.bf16.msra.mxu0 0
        %1302 = vmatpush.bf16.msra.mxu0 0
        %1303 = vmatpush.bf16.msra.mxu0 0
        %1304 = vmatpush.bf16.msra.mxu0 0
        %1305 = vmatpush.bf16.msra.mxu0 %v1282
        %1306 = vmatpush.bf16.msra.mxu0 %v1280
        %1307 = vmatpush.bf16.msra.mxu0 %v1278
        %1308 = vmatmul.bf16.gmra.mxu0 %v1295
        %v1309 = vpop.f32.mrf.mxu0
        %v1310 = vadd.f32 0.0, %v1309
        %v1311 = vpop.f32.mrf.mxu0
        %v1312 = vadd.f32 0.0, %v1311
        %1313 = vmatmul.bf16.gmra.mxu0 %v1298
        %v1314 = vpop.f32.mrf.mxu0
        %v1315 = vadd.f32 0.0, %v1314
        %v1316 = vpop.f32.mrf.mxu0
        %v1317 = vadd.f32 0.0, %v1316
        %1318 = vdwg.mxu0
        %1319 = vmatpush.bf16.msra.mxu0 0
        %1320 = vmatpush.bf16.msra.mxu0 0
        %1321 = vmatpush.bf16.msra.mxu0 0
        %1322 = vmatpush.bf16.msra.mxu0 0
        %1323 = vmatpush.bf16.msra.mxu0 0
        %1324 = vmatpush.bf16.msra.mxu0 %v1283
        %1325 = vmatpush.bf16.msra.mxu0 %v1281
        %1326 = vmatpush.bf16.msra.mxu0 %v1279
        %1327 = vmatmul.bf16.gmra.mxu0 %v1295
        %v1328 = vpop.f32.mrf.mxu0
        %v1329 = vadd.f32 0.0, %v1328
        %v1330 = vpop.f32.mrf.mxu0
        %v1331 = vadd.f32 0.0, %v1330
        %1332 = vmatmul.bf16.gmra.mxu0 %v1298
        %v1333 = vpop.f32.mrf.mxu0
        %v1334 = vadd.f32 0.0, %v1333
        %v1335 = vpop.f32.mrf.mxu0
        %v1336 = vadd.f32 0.0, %v1335
        %1337 = vdwg.mxu0
        %v1338 = vadd.f32 %v1250, %v1310
        %v1339 = vadd.f32 %v1269, %v1329
        %v1340 = vadd.f32 %v1252, %v1312
        %v1341 = vadd.f32 %v1271, %v1331
        %v1342 = vadd.f32 %v1255, %v1315
        %v1343 = vadd.f32 %v1274, %v1334
        %v1344 = vadd.f32 %v1257, %v1317
        %v1345 = vadd.f32 %v1276, %v1336
        %1347 = vset.pattern.permute.xlu0 0
        %1348 = vperm.xlu0 %1347, %v1026
        %v1349 = vpop.permute.xlu0 %1348
        %1352 = vset.pattern.permute.xlu0 0
        %1353 = vperm.xlu0 %1352, %v1027
        %v1354 = vpop.permute.xlu0 %1353
        %1357 = vset.pattern.permute.xlu0 0
        %1358 = vperm.xlu0 %1357, %v1028
        %v1359 = vpop.permute.xlu0 %1358
        %1362 = vset.pattern.permute.xlu0 0
        %1363 = vperm.xlu0 %1362, %v1029
        %v1364 = vpop.permute.xlu0 %1363
        %v1366 = vadd.f32 %v1338, %v1349
        %v1367 = vadd.f32 %v1339, %v1349
        %v1368 = vadd.f32 %v1340, %v1354
        %v1369 = vadd.f32 %v1341, %v1354
        %v1370 = vadd.f32 %v1342, %v1359
        %v1371 = vadd.f32 %v1343, %v1359
        %v1372 = vadd.f32 %v1344, %v1364
        %v1373 = vadd.f32 %v1345, %v1364
        %v1374 = vmax.f32 %v1366, 0.0
        %v1375 = vmax.f32 %v1367, 0.0
        %v1376 = vmax.f32 %v1368, 0.0
        %v1377 = vmax.f32 %v1369, 0.0
        %v1378 = vmax.f32 %v1370, 0.0
        %v1379 = vmax.f32 %v1371, 0.0
        %v1380 = vmax.f32 %v1372, 0.0
        %v1381 = vmax.f32 %v1373, 0.0
        %v1382 = vld [vmem:[%s1 + $0x78] sm:$0xf]
        %v1383 = vld [vmem:[%s1 + $0x7c] sm:$0xf]
        %v1384 = vld [vmem:[%s1 + $0x80] sm:$0xf]
        %v1385 = vld [vmem:[%s1 + $0x84] sm:$0xf]
        %v1386 = vld [vmem:[%s1 + $0x88] sm:$0xf]
        %v1387 = vld [vmem:[%s1 + $0x8c] sm:$0xf]
        %v1388 = vld [vmem:[%s1 + $0x90] sm:$0xf]
        %v1389 = vld [vmem:[%s1 + $0x94] sm:$0xf]
        %v1390 = vld [vmem:[%s1 + $0x98] sm:$0xf]
        %v1391 = vld [vmem:[%s1 + $0x9c] sm:$0xf]
        %v1392 = vld [vmem:[%s1 + $0xa0] sm:$0xf]
        %v1393 = vld [vmem:[%s1 + $0xa4] sm:$0xf]
        %v1394 = vld [vmem:[%s2 + $0x50] sm:$0xff]
        %v1395 = vld [vmem:[%s2 + $0x58] sm:$0xff]
        %v1396 = vld [vmem:[%s2 + $0x60] sm:$0xff]
        %v1397 = vld [vmem:[%s2 + $0x68] sm:$0xff]
        %1398 = vrot.lane.b32.xlu0 %v1374, 16
        %v1399 = vpop.permute.xlu0 %1398
        %1400 = vrot.lane.b32.xlu0 %v1376, 16
        %v1401 = vpop.permute.xlu0 %1400
        %1402 = vrot.lane.b32.xlu0 %v1378, 16
        %v1403 = vpop.permute.xlu0 %1402
        %1404 = vrot.lane.b32.xlu0 %v1380, 16
        %v1405 = vpop.permute.xlu0 %1404
        %1406 = vrot.lane.b32.xlu0 %v1375, 16
        %v1407 = vpop.permute.xlu0 %1406
        %1408 = vrot.lane.b32.xlu0 %v1377, 16
        %v1409 = vpop.permute.xlu0 %1408
        %1410 = vrot.lane.b32.xlu0 %v1379, 16
        %v1411 = vpop.permute.xlu0 %1410
        %1412 = vrot.lane.b32.xlu0 %v1381, 16
        %v1413 = vpop.permute.xlu0 %1412
        %v1414 = vsel %vm215, %v1399, %v1407
        %v1415 = vsel %vm215, %v1401, %v1409
        %v1416 = vsel %vm215, %v1403, %v1411
        %v1417 = vsel %vm215, %v1405, %v1413
        %v1418 = vsel %vm215, %v1407, %v1399
        %v1419 = vsel %vm215, %v1409, %v1401
        %v1420 = vsel %vm215, %v1411, %v1403
        %v1421 = vsel %vm215, %v1413, %v1405
        %1422 = vrot.lane.b32.xlu0 %v1374, 112
        %v1423 = vpop.permute.xlu0 %1422
        %1424 = vrot.lane.b32.xlu0 %v1376, 112
        %v1425 = vpop.permute.xlu0 %1424
        %1426 = vrot.lane.b32.xlu0 %v1378, 112
        %v1427 = vpop.permute.xlu0 %1426
        %1428 = vrot.lane.b32.xlu0 %v1380, 112
        %v1429 = vpop.permute.xlu0 %1428
        %1430 = vrot.lane.b32.xlu0 %v1375, 112
        %v1431 = vpop.permute.xlu0 %1430
        %1432 = vrot.lane.b32.xlu0 %v1377, 112
        %v1433 = vpop.permute.xlu0 %1432
        %1434 = vrot.lane.b32.xlu0 %v1379, 112
        %v1435 = vpop.permute.xlu0 %1434
        %1436 = vrot.lane.b32.xlu0 %v1381, 112
        %v1437 = vpop.permute.xlu0 %1436
        %v1438 = vsel %vm222, %v1423, %v1431
        %v1439 = vsel %vm222, %v1425, %v1433
        %v1440 = vsel %vm222, %v1427, %v1435
        %v1441 = vsel %vm222, %v1429, %v1437
        %v1442 = vsel %vm222, %v1431, %v1423
        %v1443 = vsel %vm222, %v1433, %v1425
        %v1444 = vsel %vm222, %v1435, %v1427
        %v1445 = vsel %vm222, %v1437, %v1429
        %v1446 = vsel %vm189, %v1438, %v1418
        %v1447 = vsel %vm190, %v1442, %v1414
        %v1448 = vsel %vm189, %v1439, %v1419
        %v1449 = vsel %vm190, %v1443, %v1415
        %v1450 = vsel %vm189, %v1440, %v1420
        %v1451 = vsel %vm190, %v1444, %v1416
        %v1452 = vsel %vm189, %v1441, %v1421
        %v1453 = vsel %vm190, %v1445, %v1417
        %v1454 = vsel %vm193, %v1418, %v1438
        %v1455 = vsel %vm194, %v1414, %v1442
        %v1456 = vsel %vm193, %v1419, %v1439
        %v1457 = vsel %vm194, %v1415, %v1443
        %v1458 = vsel %vm193, %v1420, %v1440
        %v1459 = vsel %vm194, %v1416, %v1444
        %v1460 = vsel %vm193, %v1421, %v1441
        %v1461 = vsel %vm194, %v1417, %v1445
        %v1462 = vpack.c.bf16 %v1448, %v1446
        %v1463 = vpack.c.bf16 %v1449, %v1447
        %v1464 = vpack.c.bf16 %v1452, %v1450
        %v1465 = vpack.c.bf16 %v1453, %v1451
        %v1466 = vpack.c.bf16 %v1376, %v1374
        %v1467 = vpack.c.bf16 %v1377, %v1375
        %v1468 = vpack.c.bf16 %v1380, %v1378
        %v1469 = vpack.c.bf16 %v1381, %v1379
        %v1470 = vpack.c.bf16 %v1456, %v1454
        %v1471 = vpack.c.bf16 %v1457, %v1455
        %v1472 = vpack.c.bf16 %v1460, %v1458
        %v1473 = vpack.c.bf16 %v1461, %v1459
        %1474 = vrot.lane.b32.xlu0 %v1446, 1
        %v1475 = vpop.permute.xlu0 %1474
        %1476 = vrot.lane.b32.xlu0 %v1448, 1
        %v1477 = vpop.permute.xlu0 %1476
        %1478 = vrot.lane.b32.xlu0 %v1450, 1
        %v1479 = vpop.permute.xlu0 %1478
        %1480 = vrot.lane.b32.xlu0 %v1452, 1
        %v1481 = vpop.permute.xlu0 %1480
        %1482 = vrot.lane.b32.xlu0 %v1374, 1
        %v1483 = vpop.permute.xlu0 %1482
        %1484 = vrot.lane.b32.xlu0 %v1376, 1
        %v1485 = vpop.permute.xlu0 %1484
        %1486 = vrot.lane.b32.xlu0 %v1378, 1
        %v1487 = vpop.permute.xlu0 %1486
        %1488 = vrot.lane.b32.xlu0 %v1380, 1
        %v1489 = vpop.permute.xlu0 %1488
        %1490 = vrot.lane.b32.xlu0 %v1454, 1
        %v1491 = vpop.permute.xlu0 %1490
        %1492 = vrot.lane.b32.xlu0 %v1456, 1
        %v1493 = vpop.permute.xlu0 %1492
        %1494 = vrot.lane.b32.xlu0 %v1458, 1
        %v1495 = vpop.permute.xlu0 %1494
        %1496 = vrot.lane.b32.xlu0 %v1460, 1
        %v1497 = vpop.permute.xlu0 %1496
        %1498 = vrot.lane.b32.xlu0 %v1447, 1
        %v1499 = vpop.permute.xlu0 %1498
        %1500 = vrot.lane.b32.xlu0 %v1449, 1
        %v1501 = vpop.permute.xlu0 %1500
        %1502 = vrot.lane.b32.xlu0 %v1451, 1
        %v1503 = vpop.permute.xlu0 %1502
        %1504 = vrot.lane.b32.xlu0 %v1453, 1
        %v1505 = vpop.permute.xlu0 %1504
        %1506 = vrot.lane.b32.xlu0 %v1375, 1
        %v1507 = vpop.permute.xlu0 %1506
        %1508 = vrot.lane.b32.xlu0 %v1377, 1
        %v1509 = vpop.permute.xlu0 %1508
        %1510 = vrot.lane.b32.xlu0 %v1379, 1
        %v1511 = vpop.permute.xlu0 %1510
        %1512 = vrot.lane.b32.xlu0 %v1381, 1
        %v1513 = vpop.permute.xlu0 %1512
        %1514 = vrot.lane.b32.xlu0 %v1455, 1
        %v1515 = vpop.permute.xlu0 %1514
        %1516 = vrot.lane.b32.xlu0 %v1457, 1
        %v1517 = vpop.permute.xlu0 %1516
        %1518 = vrot.lane.b32.xlu0 %v1459, 1
        %v1519 = vpop.permute.xlu0 %1518
        %1520 = vrot.lane.b32.xlu0 %v1461, 1
        %v1521 = vpop.permute.xlu0 %1520
        %v1522 = vsel %vm245, %v1475, %v1499
        %v1523 = vsel %vm245, %v1477, %v1501
        %v1524 = vsel %vm245, %v1479, %v1503
        %v1525 = vsel %vm245, %v1481, %v1505
        %v1526 = vsel %vm245, %v1483, %v1507
        %v1527 = vsel %vm245, %v1485, %v1509
        %v1528 = vsel %vm245, %v1487, %v1511
        %v1529 = vsel %vm245, %v1489, %v1513
        %v1530 = vsel %vm245, %v1491, %v1515
        %v1531 = vsel %vm245, %v1493, %v1517
        %v1532 = vsel %vm245, %v1495, %v1519
        %v1533 = vsel %vm245, %v1497, %v1521
        %v1534 = vsel %vm245, %v1499, %v1475
        %v1535 = vsel %vm245, %v1501, %v1477
        %v1536 = vsel %vm245, %v1503, %v1479
        %v1537 = vsel %vm245, %v1505, %v1481
        %v1538 = vsel %vm245, %v1507, %v1483
        %v1539 = vsel %vm245, %v1509, %v1485
        %v1540 = vsel %vm245, %v1511, %v1487
        %v1541 = vsel %vm245, %v1513, %v1489
        %v1542 = vsel %vm245, %v1515, %v1491
        %v1543 = vsel %vm245, %v1517, %v1493
        %v1544 = vsel %vm245, %v1519, %v1495
        %v1545 = vsel %vm245, %v1521, %v1497
        %1546 = vrot.lane.b32.xlu0 %v1446, 127
        %v1547 = vpop.permute.xlu0 %1546
        %1548 = vrot.lane.b32.xlu0 %v1448, 127
        %v1549 = vpop.permute.xlu0 %1548
        %1550 = vrot.lane.b32.xlu0 %v1450, 127
        %v1551 = vpop.permute.xlu0 %1550
        %1552 = vrot.lane.b32.xlu0 %v1452, 127
        %v1553 = vpop.permute.xlu0 %1552
        %1554 = vrot.lane.b32.xlu0 %v1374, 127
        %v1555 = vpop.permute.xlu0 %1554
        %1556 = vrot.lane.b32.xlu0 %v1376, 127
        %v1557 = vpop.permute.xlu0 %1556
        %1558 = vrot.lane.b32.xlu0 %v1378, 127
        %v1559 = vpop.permute.xlu0 %1558
        %1560 = vrot.lane.b32.xlu0 %v1380, 127
        %v1561 = vpop.permute.xlu0 %1560
        %1562 = vrot.lane.b32.xlu0 %v1454, 127
        %v1563 = vpop.permute.xlu0 %1562
        %1564 = vrot.lane.b32.xlu0 %v1456, 127
        %v1565 = vpop.permute.xlu0 %1564
        %1566 = vrot.lane.b32.xlu0 %v1458, 127
        %v1567 = vpop.permute.xlu0 %1566
        %1568 = vrot.lane.b32.xlu0 %v1460, 127
        %v1569 = vpop.permute.xlu0 %1568
        %1570 = vrot.lane.b32.xlu0 %v1447, 127
        %v1571 = vpop.permute.xlu0 %1570
        %1572 = vrot.lane.b32.xlu0 %v1449, 127
        %v1573 = vpop.permute.xlu0 %1572
        %1574 = vrot.lane.b32.xlu0 %v1451, 127
        %v1575 = vpop.permute.xlu0 %1574
        %1576 = vrot.lane.b32.xlu0 %v1453, 127
        %v1577 = vpop.permute.xlu0 %1576
        %1578 = vrot.lane.b32.xlu0 %v1375, 127
        %v1579 = vpop.permute.xlu0 %1578
        %1580 = vrot.lane.b32.xlu0 %v1377, 127
        %v1581 = vpop.permute.xlu0 %1580
        %1582 = vrot.lane.b32.xlu0 %v1379, 127
        %v1583 = vpop.permute.xlu0 %1582
        %1584 = vrot.lane.b32.xlu0 %v1381, 127
        %v1585 = vpop.permute.xlu0 %1584
        %1586 = vrot.lane.b32.xlu0 %v1455, 127
        %v1587 = vpop.permute.xlu0 %1586
        %1588 = vrot.lane.b32.xlu0 %v1457, 127
        %v1589 = vpop.permute.xlu0 %1588
        %1590 = vrot.lane.b32.xlu0 %v1459, 127
        %v1591 = vpop.permute.xlu0 %1590
        %1592 = vrot.lane.b32.xlu0 %v1461, 127
        %v1593 = vpop.permute.xlu0 %1592
        %v1594 = vsel %vm264, %v1547, %v1571
        %v1595 = vsel %vm264, %v1549, %v1573
        %v1596 = vsel %vm264, %v1551, %v1575
        %v1597 = vsel %vm264, %v1553, %v1577
        %v1598 = vsel %vm264, %v1555, %v1579
        %v1599 = vsel %vm264, %v1557, %v1581
        %v1600 = vsel %vm264, %v1559, %v1583
        %v1601 = vsel %vm264, %v1561, %v1585
        %v1602 = vsel %vm264, %v1563, %v1587
        %v1603 = vsel %vm264, %v1565, %v1589
        %v1604 = vsel %vm264, %v1567, %v1591
        %v1605 = vsel %vm264, %v1569, %v1593
        %v1606 = vsel %vm264, %v1571, %v1547
        %v1607 = vsel %vm264, %v1573, %v1549
        %v1608 = vsel %vm264, %v1575, %v1551
        %v1609 = vsel %vm264, %v1577, %v1553
        %v1610 = vsel %vm264, %v1579, %v1555
        %v1611 = vsel %vm264, %v1581, %v1557
        %v1612 = vsel %vm264, %v1583, %v1559
        %v1613 = vsel %vm264, %v1585, %v1561
        %v1614 = vsel %vm264, %v1587, %v1563
        %v1615 = vsel %vm264, %v1589, %v1565
        %v1616 = vsel %vm264, %v1591, %v1567
        %v1617 = vsel %vm264, %v1593, %v1569
        %v1618 = vsel %vm197, %v1594, %v1534
        %v1619 = vsel %vm198, %v1606, %v1522
        %v1620 = vsel %vm197, %v1595, %v1535
        %v1621 = vsel %vm198, %v1607, %v1523
        %v1622 = vsel %vm197, %v1596, %v1536
        %v1623 = vsel %vm198, %v1608, %v1524
        %v1624 = vsel %vm197, %v1597, %v1537
        %v1625 = vsel %vm198, %v1609, %v1525
        %v1626 = vsel %vm197, %v1598, %v1538
        %v1627 = vsel %vm198, %v1610, %v1526
        %v1628 = vsel %vm197, %v1599, %v1539
        %v1629 = vsel %vm198, %v1611, %v1527
        %v1630 = vsel %vm197, %v1600, %v1540
        %v1631 = vsel %vm198, %v1612, %v1528
        %v1632 = vsel %vm197, %v1601, %v1541
        %v1633 = vsel %vm198, %v1613, %v1529
        %v1634 = vsel %vm197, %v1602, %v1542
        %v1635 = vsel %vm198, %v1614, %v1530
        %v1636 = vsel %vm197, %v1603, %v1543
        %v1637 = vsel %vm198, %v1615, %v1531
        %v1638 = vsel %vm197, %v1604, %v1544
        %v1639 = vsel %vm198, %v1616, %v1532
        %v1640 = vsel %vm197, %v1605, %v1545
        %v1641 = vsel %vm198, %v1617, %v1533
        %v1642 = vsel %vm201, %v1534, %v1594
        %v1643 = vsel %vm202, %v1522, %v1606
        %v1644 = vsel %vm201, %v1535, %v1595
        %v1645 = vsel %vm202, %v1523, %v1607
        %v1646 = vsel %vm201, %v1536, %v1596
        %v1647 = vsel %vm202, %v1524, %v1608
        %v1648 = vsel %vm201, %v1537, %v1597
        %v1649 = vsel %vm202, %v1525, %v1609
        %v1650 = vsel %vm201, %v1538, %v1598
        %v1651 = vsel %vm202, %v1526, %v1610
        %v1652 = vsel %vm201, %v1539, %v1599
        %v1653 = vsel %vm202, %v1527, %v1611
        %v1654 = vsel %vm201, %v1540, %v1600
        %v1655 = vsel %vm202, %v1528, %v1612
        %v1656 = vsel %vm201, %v1541, %v1601
        %v1657 = vsel %vm202, %v1529, %v1613
        %v1658 = vsel %vm201, %v1542, %v1602
        %v1659 = vsel %vm202, %v1530, %v1614
        %v1660 = vsel %vm201, %v1543, %v1603
        %v1661 = vsel %vm202, %v1531, %v1615
        %v1662 = vsel %vm201, %v1544, %v1604
        %v1663 = vsel %vm202, %v1532, %v1616
        %v1664 = vsel %vm201, %v1545, %v1605
        %v1665 = vsel %vm202, %v1533, %v1617
        %v1666 = vpack.c.bf16 %v1620, %v1618
        %v1667 = vpack.c.bf16 %v1621, %v1619
        %v1668 = vpack.c.bf16 %v1624, %v1622
        %v1669 = vpack.c.bf16 %v1625, %v1623
        %v1670 = vpack.c.bf16 %v1628, %v1626
        %v1671 = vpack.c.bf16 %v1629, %v1627
        %v1672 = vpack.c.bf16 %v1632, %v1630
        %v1673 = vpack.c.bf16 %v1633, %v1631
        %v1674 = vpack.c.bf16 %v1636, %v1634
        %v1675 = vpack.c.bf16 %v1637, %v1635
        %v1676 = vpack.c.bf16 %v1640, %v1638
        %v1677 = vpack.c.bf16 %v1641, %v1639
        %v1682 = vunpack.c.l.b16 %v1382
        %v1683 = vunpack.c.l.b16 %v1383
        %v1684 = vunpack.c.l.b16 %v1384
        %v1685 = vunpack.c.l.b16 %v1385
        %v1686 = vpack.c.b16 %v1683, %v1682
        %v1687 = vpack.c.b16 %v1685, %v1684
        %vm1688 = vcmask 785408
        %v1690 = vsel %vm1688, %v1686, 0
        %v1693 = vsel %vm1688, %v1687, 0
        %1695 = vmatpush.bf16.msra.mxu0 0
        %1696 = vmatpush.bf16.msra.mxu0 0
        %1697 = vmatpush.bf16.msra.mxu0 %v1676
        %1698 = vmatpush.bf16.msra.mxu0 %v1674
        %1699 = vmatpush.bf16.msra.mxu0 %v1672
        %1700 = vmatpush.bf16.msra.mxu0 %v1670
        %1701 = vmatpush.bf16.msra.mxu0 %v1668
        %1702 = vmatpush.bf16.msra.mxu0 %v1666
        %1703 = vmatmul.bf16.gmra.mxu0 %v1690
        %v1704 = vpop.f32.mrf.mxu0
        %v1705 = vadd.f32 0.0, %v1704
        %v1706 = vpop.f32.mrf.mxu0
        %v1707 = vadd.f32 0.0, %v1706
        %1708 = vmatmul.bf16.gmra.mxu0 %v1693
        %v1709 = vpop.f32.mrf.mxu0
        %v1710 = vadd.f32 0.0, %v1709
        %v1711 = vpop.f32.mrf.mxu0
        %v1712 = vadd.f32 0.0, %v1711
        %1713 = vdwg.mxu0
        %1714 = vmatpush.bf16.msra.mxu0 0
        %1715 = vmatpush.bf16.msra.mxu0 0
        %1716 = vmatpush.bf16.msra.mxu0 %v1677
        %1717 = vmatpush.bf16.msra.mxu0 %v1675
        %1718 = vmatpush.bf16.msra.mxu0 %v1673
        %1719 = vmatpush.bf16.msra.mxu0 %v1671
        %1720 = vmatpush.bf16.msra.mxu0 %v1669
        %1721 = vmatpush.bf16.msra.mxu0 %v1667
        %1722 = vmatmul.bf16.gmra.mxu0 %v1690
        %v1723 = vpop.f32.mrf.mxu0
        %v1724 = vadd.f32 0.0, %v1723
        %v1725 = vpop.f32.mrf.mxu0
        %v1726 = vadd.f32 0.0, %v1725
        %1727 = vmatmul.bf16.gmra.mxu0 %v1693
        %v1728 = vpop.f32.mrf.mxu0
        %v1729 = vadd.f32 0.0, %v1728
        %v1730 = vpop.f32.mrf.mxu0
        %v1731 = vadd.f32 0.0, %v1730
        %1732 = vdwg.mxu0
        %v1737 = vunpack.c.l.b16 %v1386
        %v1738 = vunpack.c.l.b16 %v1387
        %v1739 = vunpack.c.l.b16 %v1388
        %v1740 = vunpack.c.l.b16 %v1389
        %v1741 = vpack.c.b16 %v1738, %v1737
        %v1742 = vpack.c.b16 %v1740, %v1739
        %v1744 = vsel %vm1688, %v1741, 0
        %v1747 = vsel %vm1688, %v1742, 0
        %1749 = vmatpush.bf16.msra.mxu0 0
        %1750 = vmatpush.bf16.msra.mxu0 0
        %1751 = vmatpush.bf16.msra.mxu0 %v1472
        %1752 = vmatpush.bf16.msra.mxu0 %v1470
        %1753 = vmatpush.bf16.msra.mxu0 %v1468
        %1754 = vmatpush.bf16.msra.mxu0 %v1466
        %1755 = vmatpush.bf16.msra.mxu0 %v1464
        %1756 = vmatpush.bf16.msra.mxu0 %v1462
        %1757 = vmatmul.bf16.gmra.mxu0 %v1744
        %v1758 = vpop.f32.mrf.mxu0
        %v1759 = vadd.f32 %v1705, %v1758
        %v1760 = vpop.f32.mrf.mxu0
        %v1761 = vadd.f32 %v1707, %v1760
        %1762 = vmatmul.bf16.gmra.mxu0 %v1747
        %v1763 = vpop.f32.mrf.mxu0
        %v1764 = vadd.f32 %v1710, %v1763
        %v1765 = vpop.f32.mrf.mxu0
        %v1766 = vadd.f32 %v1712, %v1765
        %1767 = vdwg.mxu0
        %1768 = vmatpush.bf16.msra.mxu0 0
        %1769 = vmatpush.bf16.msra.mxu0 0
        %1770 = vmatpush.bf16.msra.mxu0 %v1473
        %1771 = vmatpush.bf16.msra.mxu0 %v1471
        %1772 = vmatpush.bf16.msra.mxu0 %v1469
        %1773 = vmatpush.bf16.msra.mxu0 %v1467
        %1774 = vmatpush.bf16.msra.mxu0 %v1465
        %1775 = vmatpush.bf16.msra.mxu0 %v1463
        %1776 = vmatmul.bf16.gmra.mxu0 %v1744
        %v1777 = vpop.f32.mrf.mxu0
        %v1778 = vadd.f32 %v1724, %v1777
        %v1779 = vpop.f32.mrf.mxu0
        %v1780 = vadd.f32 %v1726, %v1779
        %1781 = vmatmul.bf16.gmra.mxu0 %v1747
        %v1782 = vpop.f32.mrf.mxu0
        %v1783 = vadd.f32 %v1729, %v1782
        %v1784 = vpop.f32.mrf.mxu0
        %v1785 = vadd.f32 %v1731, %v1784
        %1786 = vdwg.mxu0
        %v1787 = vpack.c.bf16 %v1644, %v1642
        %v1788 = vpack.c.bf16 %v1645, %v1643
        %v1789 = vpack.c.bf16 %v1648, %v1646
        %v1790 = vpack.c.bf16 %v1649, %v1647
        %v1791 = vpack.c.bf16 %v1652, %v1650
        %v1792 = vpack.c.bf16 %v1653, %v1651
        %v1793 = vpack.c.bf16 %v1656, %v1654
        %v1794 = vpack.c.bf16 %v1657, %v1655
        %v1795 = vpack.c.bf16 %v1660, %v1658
        %v1796 = vpack.c.bf16 %v1661, %v1659
        %v1797 = vpack.c.bf16 %v1664, %v1662
        %v1798 = vpack.c.bf16 %v1665, %v1663
        %v1803 = vunpack.c.l.b16 %v1390
        %v1804 = vunpack.c.l.b16 %v1391
        %v1805 = vunpack.c.l.b16 %v1392
        %v1806 = vunpack.c.l.b16 %v1393
        %v1807 = vpack.c.b16 %v1804, %v1803
        %v1808 = vpack.c.b16 %v1806, %v1805
        %v1810 = vsel %vm1688, %v1807, 0
        %v1813 = vsel %vm1688, %v1808, 0
        %1815 = vmatpush.bf16.msra.mxu0 0
        %1816 = vmatpush.bf16.msra.mxu0 0
        %1817 = vmatpush.bf16.msra.mxu0 %v1797
        %1818 = vmatpush.bf16.msra.mxu0 %v1795
        %1819 = vmatpush.bf16.msra.mxu0 %v1793
        %1820 = vmatpush.bf16.msra.mxu0 %v1791
        %1821 = vmatpush.bf16.msra.mxu0 %v1789
        %1822 = vmatpush.bf16.msra.mxu0 %v1787
        %1823 = vmatmul.bf16.gmra.mxu0 %v1810
        %v1824 = vpop.f32.mrf.mxu0
        %v1825 = vadd.f32 0.0, %v1824
        %v1826 = vpop.f32.mrf.mxu0
        %v1827 = vadd.f32 0.0, %v1826
        %1828 = vmatmul.bf16.gmra.mxu0 %v1813
        %v1829 = vpop.f32.mrf.mxu0
        %v1830 = vadd.f32 0.0, %v1829
        %v1831 = vpop.f32.mrf.mxu0
        %v1832 = vadd.f32 0.0, %v1831
        %1833 = vdwg.mxu0
        %1834 = vmatpush.bf16.msra.mxu0 0
        %1835 = vmatpush.bf16.msra.mxu0 0
        %1836 = vmatpush.bf16.msra.mxu0 %v1798
        %1837 = vmatpush.bf16.msra.mxu0 %v1796
        %1838 = vmatpush.bf16.msra.mxu0 %v1794
        %1839 = vmatpush.bf16.msra.mxu0 %v1792
        %1840 = vmatpush.bf16.msra.mxu0 %v1790
        %1841 = vmatpush.bf16.msra.mxu0 %v1788
        %1842 = vmatmul.bf16.gmra.mxu0 %v1810
        %v1843 = vpop.f32.mrf.mxu0
        %v1844 = vadd.f32 0.0, %v1843
        %v1845 = vpop.f32.mrf.mxu0
        %v1846 = vadd.f32 0.0, %v1845
        %1847 = vmatmul.bf16.gmra.mxu0 %v1813
        %v1848 = vpop.f32.mrf.mxu0
        %v1849 = vadd.f32 0.0, %v1848
        %v1850 = vpop.f32.mrf.mxu0
        %v1851 = vadd.f32 0.0, %v1850
        %1852 = vdwg.mxu0
        %v1853 = vadd.f32 %v1759, %v1825
        %v1854 = vadd.f32 %v1778, %v1844
        %v1855 = vadd.f32 %v1761, %v1827
        %v1856 = vadd.f32 %v1780, %v1846
        %v1857 = vadd.f32 %v1764, %v1830
        %v1858 = vadd.f32 %v1783, %v1849
        %v1859 = vadd.f32 %v1766, %v1832
        %v1860 = vadd.f32 %v1785, %v1851
        %1862 = vset.pattern.permute.xlu0 0
        %1863 = vperm.xlu0 %1862, %v1394
        %v1864 = vpop.permute.xlu0 %1863
        %1867 = vset.pattern.permute.xlu0 0
        %1868 = vperm.xlu0 %1867, %v1395
        %v1869 = vpop.permute.xlu0 %1868
        %1872 = vset.pattern.permute.xlu0 0
        %1873 = vperm.xlu0 %1872, %v1396
        %v1874 = vpop.permute.xlu0 %1873
        %1877 = vset.pattern.permute.xlu0 0
        %1878 = vperm.xlu0 %1877, %v1397
        %v1879 = vpop.permute.xlu0 %1878
        %v1881 = vadd.f32 %v1853, %v1864
        %v1882 = vadd.f32 %v1854, %v1864
        %v1883 = vadd.f32 %v1855, %v1869
        %v1884 = vadd.f32 %v1856, %v1869
        %v1885 = vadd.f32 %v1857, %v1874
        %v1886 = vadd.f32 %v1858, %v1874
        %v1887 = vadd.f32 %v1859, %v1879
        %v1888 = vadd.f32 %v1860, %v1879
        %v1889 = vmax.f32 %v1881, 0.0
        %v1890 = vmax.f32 %v1882, 0.0
        %v1891 = vmax.f32 %v1883, 0.0
        %v1892 = vmax.f32 %v1884, 0.0
        %v1893 = vmax.f32 %v1885, 0.0
        %v1894 = vmax.f32 %v1886, 0.0
        %v1895 = vmax.f32 %v1887, 0.0
        %v1896 = vmax.f32 %v1888, 0.0
        %v1897 = vld [vmem:[%s1 + $0xa8] sm:$0xf]
        %v1898 = vld [vmem:[%s1 + $0xac] sm:$0xf]
        %v1899 = vld [vmem:[%s1 + $0xb0] sm:$0xf]
        %v1900 = vld [vmem:[%s1 + $0xb4] sm:$0xf]
        %v1901 = vld [vmem:[%s1 + $0xb8] sm:$0xf]
        %v1902 = vld [vmem:[%s1 + $0xbc] sm:$0xf]
        %v1903 = vld [vmem:[%s1 + $0xc0] sm:$0xf]
        %v1904 = vld [vmem:[%s1 + $0xc4] sm:$0xf]
        %v1905 = vld [vmem:[%s1 + $0xc8] sm:$0xf]
        %v1906 = vld [vmem:[%s1 + $0xcc] sm:$0xf]
        %v1907 = vld [vmem:[%s1 + $0xd0] sm:$0xf]
        %v1908 = vld [vmem:[%s1 + $0xd4] sm:$0xf]
        %v1909 = vld [vmem:[%s2 + $0x70] sm:$0xff]
        %v1910 = vld [vmem:[%s2 + $0x78] sm:$0xff]
        %v1911 = vld [vmem:[%s2 + $0x80] sm:$0xff]
        %v1912 = vld [vmem:[%s2 + $0x88] sm:$0xff]
        %1913 = vrot.lane.b32.xlu0 %v1889, 16
        %v1914 = vpop.permute.xlu0 %1913
        %1915 = vrot.lane.b32.xlu0 %v1891, 16
        %v1916 = vpop.permute.xlu0 %1915
        %1917 = vrot.lane.b32.xlu0 %v1893, 16
        %v1918 = vpop.permute.xlu0 %1917
        %1919 = vrot.lane.b32.xlu0 %v1895, 16
        %v1920 = vpop.permute.xlu0 %1919
        %1921 = vrot.lane.b32.xlu0 %v1890, 16
        %v1922 = vpop.permute.xlu0 %1921
        %1923 = vrot.lane.b32.xlu0 %v1892, 16
        %v1924 = vpop.permute.xlu0 %1923
        %1925 = vrot.lane.b32.xlu0 %v1894, 16
        %v1926 = vpop.permute.xlu0 %1925
        %1927 = vrot.lane.b32.xlu0 %v1896, 16
        %v1928 = vpop.permute.xlu0 %1927
        %v1929 = vsel %vm215, %v1914, %v1922
        %v1930 = vsel %vm215, %v1916, %v1924
        %v1931 = vsel %vm215, %v1918, %v1926
        %v1932 = vsel %vm215, %v1920, %v1928
        %v1933 = vsel %vm215, %v1922, %v1914
        %v1934 = vsel %vm215, %v1924, %v1916
        %v1935 = vsel %vm215, %v1926, %v1918
        %v1936 = vsel %vm215, %v1928, %v1920
        %1937 = vrot.lane.b32.xlu0 %v1889, 112
        %v1938 = vpop.permute.xlu0 %1937
        %1939 = vrot.lane.b32.xlu0 %v1891, 112
        %v1940 = vpop.permute.xlu0 %1939
        %1941 = vrot.lane.b32.xlu0 %v1893, 112
        %v1942 = vpop.permute.xlu0 %1941
        %1943 = vrot.lane.b32.xlu0 %v1895, 112
        %v1944 = vpop.permute.xlu0 %1943
        %1945 = vrot.lane.b32.xlu0 %v1890, 112
        %v1946 = vpop.permute.xlu0 %1945
        %1947 = vrot.lane.b32.xlu0 %v1892, 112
        %v1948 = vpop.permute.xlu0 %1947
        %1949 = vrot.lane.b32.xlu0 %v1894, 112
        %v1950 = vpop.permute.xlu0 %1949
        %1951 = vrot.lane.b32.xlu0 %v1896, 112
        %v1952 = vpop.permute.xlu0 %1951
        %v1953 = vsel %vm222, %v1938, %v1946
        %v1954 = vsel %vm222, %v1940, %v1948
        %v1955 = vsel %vm222, %v1942, %v1950
        %v1956 = vsel %vm222, %v1944, %v1952
        %v1957 = vsel %vm222, %v1946, %v1938
        %v1958 = vsel %vm222, %v1948, %v1940
        %v1959 = vsel %vm222, %v1950, %v1942
        %v1960 = vsel %vm222, %v1952, %v1944
        %v1961 = vsel %vm189, %v1953, %v1933
        %v1962 = vsel %vm190, %v1957, %v1929
        %v1963 = vsel %vm189, %v1954, %v1934
        %v1964 = vsel %vm190, %v1958, %v1930
        %v1965 = vsel %vm189, %v1955, %v1935
        %v1966 = vsel %vm190, %v1959, %v1931
        %v1967 = vsel %vm189, %v1956, %v1936
        %v1968 = vsel %vm190, %v1960, %v1932
        %v1969 = vsel %vm193, %v1933, %v1953
        %v1970 = vsel %vm194, %v1929, %v1957
        %v1971 = vsel %vm193, %v1934, %v1954
        %v1972 = vsel %vm194, %v1930, %v1958
        %v1973 = vsel %vm193, %v1935, %v1955
        %v1974 = vsel %vm194, %v1931, %v1959
        %v1975 = vsel %vm193, %v1936, %v1956
        %v1976 = vsel %vm194, %v1932, %v1960
        %v1977 = vpack.c.bf16 %v1963, %v1961
        %v1978 = vpack.c.bf16 %v1964, %v1962
        %v1979 = vpack.c.bf16 %v1967, %v1965
        %v1980 = vpack.c.bf16 %v1968, %v1966
        %v1981 = vpack.c.bf16 %v1891, %v1889
        %v1982 = vpack.c.bf16 %v1892, %v1890
        %v1983 = vpack.c.bf16 %v1895, %v1893
        %v1984 = vpack.c.bf16 %v1896, %v1894
        %v1985 = vpack.c.bf16 %v1971, %v1969
        %v1986 = vpack.c.bf16 %v1972, %v1970
        %v1987 = vpack.c.bf16 %v1975, %v1973
        %v1988 = vpack.c.bf16 %v1976, %v1974
        %1989 = vrot.lane.b32.xlu0 %v1961, 1
        %v1990 = vpop.permute.xlu0 %1989
        %1991 = vrot.lane.b32.xlu0 %v1963, 1
        %v1992 = vpop.permute.xlu0 %1991
        %1993 = vrot.lane.b32.xlu0 %v1965, 1
        %v1994 = vpop.permute.xlu0 %1993
        %1995 = vrot.lane.b32.xlu0 %v1967, 1
        %v1996 = vpop.permute.xlu0 %1995
        %1997 = vrot.lane.b32.xlu0 %v1889, 1
        %v1998 = vpop.permute.xlu0 %1997
        %1999 = vrot.lane.b32.xlu0 %v1891, 1
        %v2000 = vpop.permute.xlu0 %1999
        %2001 = vrot.lane.b32.xlu0 %v1893, 1
        %v2002 = vpop.permute.xlu0 %2001
        %2003 = vrot.lane.b32.xlu0 %v1895, 1
        %v2004 = vpop.permute.xlu0 %2003
        %2005 = vrot.lane.b32.xlu0 %v1969, 1
        %v2006 = vpop.permute.xlu0 %2005
        %2007 = vrot.lane.b32.xlu0 %v1971, 1
        %v2008 = vpop.permute.xlu0 %2007
        %2009 = vrot.lane.b32.xlu0 %v1973, 1
        %v2010 = vpop.permute.xlu0 %2009
        %2011 = vrot.lane.b32.xlu0 %v1975, 1
        %v2012 = vpop.permute.xlu0 %2011
        %2013 = vrot.lane.b32.xlu0 %v1962, 1
        %v2014 = vpop.permute.xlu0 %2013
        %2015 = vrot.lane.b32.xlu0 %v1964, 1
        %v2016 = vpop.permute.xlu0 %2015
        %2017 = vrot.lane.b32.xlu0 %v1966, 1
        %v2018 = vpop.permute.xlu0 %2017
        %2019 = vrot.lane.b32.xlu0 %v1968, 1
        %v2020 = vpop.permute.xlu0 %2019
        %2021 = vrot.lane.b32.xlu0 %v1890, 1
        %v2022 = vpop.permute.xlu0 %2021
        %2023 = vrot.lane.b32.xlu0 %v1892, 1
        %v2024 = vpop.permute.xlu0 %2023
        %2025 = vrot.lane.b32.xlu0 %v1894, 1
        %v2026 = vpop.permute.xlu0 %2025
        %2027 = vrot.lane.b32.xlu0 %v1896, 1
        %v2028 = vpop.permute.xlu0 %2027
        %2029 = vrot.lane.b32.xlu0 %v1970, 1
        %v2030 = vpop.permute.xlu0 %2029
        %2031 = vrot.lane.b32.xlu0 %v1972, 1
        %v2032 = vpop.permute.xlu0 %2031
        %2033 = vrot.lane.b32.xlu0 %v1974, 1
        %v2034 = vpop.permute.xlu0 %2033
        %2035 = vrot.lane.b32.xlu0 %v1976, 1
        %v2036 = vpop.permute.xlu0 %2035
        %v2037 = vsel %vm245, %v1990, %v2014
        %v2038 = vsel %vm245, %v1992, %v2016
        %v2039 = vsel %vm245, %v1994, %v2018
        %v2040 = vsel %vm245, %v1996, %v2020
        %v2041 = vsel %vm245, %v1998, %v2022
        %v2042 = vsel %vm245, %v2000, %v2024
        %v2043 = vsel %vm245, %v2002, %v2026
        %v2044 = vsel %vm245, %v2004, %v2028
        %v2045 = vsel %vm245, %v2006, %v2030
        %v2046 = vsel %vm245, %v2008, %v2032
        %v2047 = vsel %vm245, %v2010, %v2034
        %v2048 = vsel %vm245, %v2012, %v2036
        %v2049 = vsel %vm245, %v2014, %v1990
        %v2050 = vsel %vm245, %v2016, %v1992
        %v2051 = vsel %vm245, %v2018, %v1994
        %v2052 = vsel %vm245, %v2020, %v1996
        %v2053 = vsel %vm245, %v2022, %v1998
        %v2054 = vsel %vm245, %v2024, %v2000
        %v2055 = vsel %vm245, %v2026, %v2002
        %v2056 = vsel %vm245, %v2028, %v2004
        %v2057 = vsel %vm245, %v2030, %v2006
        %v2058 = vsel %vm245, %v2032, %v2008
        %v2059 = vsel %vm245, %v2034, %v2010
        %v2060 = vsel %vm245, %v2036, %v2012
        %2061 = vrot.lane.b32.xlu0 %v1961, 127
        %v2062 = vpop.permute.xlu0 %2061
        %2063 = vrot.lane.b32.xlu0 %v1963, 127
        %v2064 = vpop.permute.xlu0 %2063
        %2065 = vrot.lane.b32.xlu0 %v1965, 127
        %v2066 = vpop.permute.xlu0 %2065
        %2067 = vrot.lane.b32.xlu0 %v1967, 127
        %v2068 = vpop.permute.xlu0 %2067
        %2069 = vrot.lane.b32.xlu0 %v1889, 127
        %v2070 = vpop.permute.xlu0 %2069
        %2071 = vrot.lane.b32.xlu0 %v1891, 127
        %v2072 = vpop.permute.xlu0 %2071
        %2073 = vrot.lane.b32.xlu0 %v1893, 127
        %v2074 = vpop.permute.xlu0 %2073
        %2075 = vrot.lane.b32.xlu0 %v1895, 127
        %v2076 = vpop.permute.xlu0 %2075
        %2077 = vrot.lane.b32.xlu0 %v1969, 127
        %v2078 = vpop.permute.xlu0 %2077
        %2079 = vrot.lane.b32.xlu0 %v1971, 127
        %v2080 = vpop.permute.xlu0 %2079
        %2081 = vrot.lane.b32.xlu0 %v1973, 127
        %v2082 = vpop.permute.xlu0 %2081
        %2083 = vrot.lane.b32.xlu0 %v1975, 127
        %v2084 = vpop.permute.xlu0 %2083
        %2085 = vrot.lane.b32.xlu0 %v1962, 127
        %v2086 = vpop.permute.xlu0 %2085
        %2087 = vrot.lane.b32.xlu0 %v1964, 127
        %v2088 = vpop.permute.xlu0 %2087
        %2089 = vrot.lane.b32.xlu0 %v1966, 127
        %v2090 = vpop.permute.xlu0 %2089
        %2091 = vrot.lane.b32.xlu0 %v1968, 127
        %v2092 = vpop.permute.xlu0 %2091
        %2093 = vrot.lane.b32.xlu0 %v1890, 127
        %v2094 = vpop.permute.xlu0 %2093
        %2095 = vrot.lane.b32.xlu0 %v1892, 127
        %v2096 = vpop.permute.xlu0 %2095
        %2097 = vrot.lane.b32.xlu0 %v1894, 127
        %v2098 = vpop.permute.xlu0 %2097
        %2099 = vrot.lane.b32.xlu0 %v1896, 127
        %v2100 = vpop.permute.xlu0 %2099
        %2101 = vrot.lane.b32.xlu0 %v1970, 127
        %v2102 = vpop.permute.xlu0 %2101
        %2103 = vrot.lane.b32.xlu0 %v1972, 127
        %v2104 = vpop.permute.xlu0 %2103
        %2105 = vrot.lane.b32.xlu0 %v1974, 127
        %v2106 = vpop.permute.xlu0 %2105
        %2107 = vrot.lane.b32.xlu0 %v1976, 127
        %v2108 = vpop.permute.xlu0 %2107
        %v2109 = vsel %vm264, %v2062, %v2086
        %v2110 = vsel %vm264, %v2064, %v2088
        %v2111 = vsel %vm264, %v2066, %v2090
        %v2112 = vsel %vm264, %v2068, %v2092
        %v2113 = vsel %vm264, %v2070, %v2094
        %v2114 = vsel %vm264, %v2072, %v2096
        %v2115 = vsel %vm264, %v2074, %v2098
        %v2116 = vsel %vm264, %v2076, %v2100
        %v2117 = vsel %vm264, %v2078, %v2102
        %v2118 = vsel %vm264, %v2080, %v2104
        %v2119 = vsel %vm264, %v2082, %v2106
        %v2120 = vsel %vm264, %v2084, %v2108
        %v2121 = vsel %vm264, %v2086, %v2062
        %v2122 = vsel %vm264, %v2088, %v2064
        %v2123 = vsel %vm264, %v2090, %v2066
        %v2124 = vsel %vm264, %v2092, %v2068
        %v2125 = vsel %vm264, %v2094, %v2070
        %v2126 = vsel %vm264, %v2096, %v2072
        %v2127 = vsel %vm264, %v2098, %v2074
        %v2128 = vsel %vm264, %v2100, %v2076
        %v2129 = vsel %vm264, %v2102, %v2078
        %v2130 = vsel %vm264, %v2104, %v2080
        %v2131 = vsel %vm264, %v2106, %v2082
        %v2132 = vsel %vm264, %v2108, %v2084
        %v2133 = vsel %vm197, %v2109, %v2049
        %v2134 = vsel %vm198, %v2121, %v2037
        %v2135 = vsel %vm197, %v2110, %v2050
        %v2136 = vsel %vm198, %v2122, %v2038
        %v2137 = vsel %vm197, %v2111, %v2051
        %v2138 = vsel %vm198, %v2123, %v2039
        %v2139 = vsel %vm197, %v2112, %v2052
        %v2140 = vsel %vm198, %v2124, %v2040
        %v2141 = vsel %vm197, %v2113, %v2053
        %v2142 = vsel %vm198, %v2125, %v2041
        %v2143 = vsel %vm197, %v2114, %v2054
        %v2144 = vsel %vm198, %v2126, %v2042
        %v2145 = vsel %vm197, %v2115, %v2055
        %v2146 = vsel %vm198, %v2127, %v2043
        %v2147 = vsel %vm197, %v2116, %v2056
        %v2148 = vsel %vm198, %v2128, %v2044
        %v2149 = vsel %vm197, %v2117, %v2057
        %v2150 = vsel %vm198, %v2129, %v2045
        %v2151 = vsel %vm197, %v2118, %v2058
        %v2152 = vsel %vm198, %v2130, %v2046
        %v2153 = vsel %vm197, %v2119, %v2059
        %v2154 = vsel %vm198, %v2131, %v2047
        %v2155 = vsel %vm197, %v2120, %v2060
        %v2156 = vsel %vm198, %v2132, %v2048
        %v2157 = vsel %vm201, %v2049, %v2109
        %v2158 = vsel %vm202, %v2037, %v2121
        %v2159 = vsel %vm201, %v2050, %v2110
        %v2160 = vsel %vm202, %v2038, %v2122
        %v2161 = vsel %vm201, %v2051, %v2111
        %v2162 = vsel %vm202, %v2039, %v2123
        %v2163 = vsel %vm201, %v2052, %v2112
        %v2164 = vsel %vm202, %v2040, %v2124
        %v2165 = vsel %vm201, %v2053, %v2113
        %v2166 = vsel %vm202, %v2041, %v2125
        %v2167 = vsel %vm201, %v2054, %v2114
        %v2168 = vsel %vm202, %v2042, %v2126
        %v2169 = vsel %vm201, %v2055, %v2115
        %v2170 = vsel %vm202, %v2043, %v2127
        %v2171 = vsel %vm201, %v2056, %v2116
        %v2172 = vsel %vm202, %v2044, %v2128
        %v2173 = vsel %vm201, %v2057, %v2117
        %v2174 = vsel %vm202, %v2045, %v2129
        %v2175 = vsel %vm201, %v2058, %v2118
        %v2176 = vsel %vm202, %v2046, %v2130
        %v2177 = vsel %vm201, %v2059, %v2119
        %v2178 = vsel %vm202, %v2047, %v2131
        %v2179 = vsel %vm201, %v2060, %v2120
        %v2180 = vsel %vm202, %v2048, %v2132
        %v2181 = vpack.c.bf16 %v2135, %v2133
        %v2182 = vpack.c.bf16 %v2136, %v2134
        %v2183 = vpack.c.bf16 %v2139, %v2137
        %v2184 = vpack.c.bf16 %v2140, %v2138
        %v2185 = vpack.c.bf16 %v2143, %v2141
        %v2186 = vpack.c.bf16 %v2144, %v2142
        %v2187 = vpack.c.bf16 %v2147, %v2145
        %v2188 = vpack.c.bf16 %v2148, %v2146
        %v2189 = vpack.c.bf16 %v2151, %v2149
        %v2190 = vpack.c.bf16 %v2152, %v2150
        %v2191 = vpack.c.bf16 %v2155, %v2153
        %v2192 = vpack.c.bf16 %v2156, %v2154
        %v2197 = vunpack.c.l.b16 %v1897
        %v2198 = vunpack.c.l.b16 %v1898
        %v2199 = vunpack.c.l.b16 %v1899
        %v2200 = vunpack.c.l.b16 %v1900
        %v2201 = vpack.c.b16 %v2198, %v2197
        %v2202 = vpack.c.b16 %v2200, %v2199
        %v2204 = vsel %vm1688, %v2201, 0
        %v2207 = vsel %vm1688, %v2202, 0
        %2209 = vmatpush.bf16.msra.mxu0 0
        %2210 = vmatpush.bf16.msra.mxu0 0
        %2211 = vmatpush.bf16.msra.mxu0 %v2191
        %2212 = vmatpush.bf16.msra.mxu0 %v2189
        %2213 = vmatpush.bf16.msra.mxu0 %v2187
        %2214 = vmatpush.bf16.msra.mxu0 %v2185
        %2215 = vmatpush.bf16.msra.mxu0 %v2183
        %2216 = vmatpush.bf16.msra.mxu0 %v2181
        %2217 = vmatmul.bf16.gmra.mxu0 %v2204
        %v2218 = vpop.f32.mrf.mxu0
        %v2219 = vadd.f32 0.0, %v2218
        %v2220 = vpop.f32.mrf.mxu0
        %v2221 = vadd.f32 0.0, %v2220
        %2222 = vmatmul.bf16.gmra.mxu0 %v2207
        %v2223 = vpop.f32.mrf.mxu0
        %v2224 = vadd.f32 0.0, %v2223
        %v2225 = vpop.f32.mrf.mxu0
        %v2226 = vadd.f32 0.0, %v2225
        %2227 = vdwg.mxu0
        %2228 = vmatpush.bf16.msra.mxu0 0
        %2229 = vmatpush.bf16.msra.mxu0 0
        %2230 = vmatpush.bf16.msra.mxu0 %v2192
        %2231 = vmatpush.bf16.msra.mxu0 %v2190
        %2232 = vmatpush.bf16.msra.mxu0 %v2188
        %2233 = vmatpush.bf16.msra.mxu0 %v2186
        %2234 = vmatpush.bf16.msra.mxu0 %v2184
        %2235 = vmatpush.bf16.msra.mxu0 %v2182
        %2236 = vmatmul.bf16.gmra.mxu0 %v2204
        %v2237 = vpop.f32.mrf.mxu0
        %v2238 = vadd.f32 0.0, %v2237
        %v2239 = vpop.f32.mrf.mxu0
        %v2240 = vadd.f32 0.0, %v2239
        %2241 = vmatmul.bf16.gmra.mxu0 %v2207
        %v2242 = vpop.f32.mrf.mxu0
        %v2243 = vadd.f32 0.0, %v2242
        %v2244 = vpop.f32.mrf.mxu0
        %v2245 = vadd.f32 0.0, %v2244
        %2246 = vdwg.mxu0
        %v2251 = vunpack.c.l.b16 %v1901
        %v2252 = vunpack.c.l.b16 %v1902
        %v2253 = vunpack.c.l.b16 %v1903
        %v2254 = vunpack.c.l.b16 %v1904
        %v2255 = vpack.c.b16 %v2252, %v2251
        %v2256 = vpack.c.b16 %v2254, %v2253
        %v2258 = vsel %vm1688, %v2255, 0
        %v2261 = vsel %vm1688, %v2256, 0
        %2263 = vmatpush.bf16.msra.mxu0 0
        %2264 = vmatpush.bf16.msra.mxu0 0
        %2265 = vmatpush.bf16.msra.mxu0 %v1987
        %2266 = vmatpush.bf16.msra.mxu0 %v1985
        %2267 = vmatpush.bf16.msra.mxu0 %v1983
        %2268 = vmatpush.bf16.msra.mxu0 %v1981
        %2269 = vmatpush.bf16.msra.mxu0 %v1979
        %2270 = vmatpush.bf16.msra.mxu0 %v1977
        %2271 = vmatmul.bf16.gmra.mxu0 %v2258
        %v2272 = vpop.f32.mrf.mxu0
        %v2273 = vadd.f32 %v2219, %v2272
        %v2274 = vpop.f32.mrf.mxu0
        %v2275 = vadd.f32 %v2221, %v2274
        %2276 = vmatmul.bf16.gmra.mxu0 %v2261
        %v2277 = vpop.f32.mrf.mxu0
        %v2278 = vadd.f32 %v2224, %v2277
        %v2279 = vpop.f32.mrf.mxu0
        %v2280 = vadd.f32 %v2226, %v2279
        %2281 = vdwg.mxu0
        %2282 = vmatpush.bf16.msra.mxu0 0
        %2283 = vmatpush.bf16.msra.mxu0 0
        %2284 = vmatpush.bf16.msra.mxu0 %v1988
        %2285 = vmatpush.bf16.msra.mxu0 %v1986
        %2286 = vmatpush.bf16.msra.mxu0 %v1984
        %2287 = vmatpush.bf16.msra.mxu0 %v1982
        %2288 = vmatpush.bf16.msra.mxu0 %v1980
        %2289 = vmatpush.bf16.msra.mxu0 %v1978
        %2290 = vmatmul.bf16.gmra.mxu0 %v2258
        %v2291 = vpop.f32.mrf.mxu0
        %v2292 = vadd.f32 %v2238, %v2291
        %v2293 = vpop.f32.mrf.mxu0
        %v2294 = vadd.f32 %v2240, %v2293
        %2295 = vmatmul.bf16.gmra.mxu0 %v2261
        %v2296 = vpop.f32.mrf.mxu0
        %v2297 = vadd.f32 %v2243, %v2296
        %v2298 = vpop.f32.mrf.mxu0
        %v2299 = vadd.f32 %v2245, %v2298
        %2300 = vdwg.mxu0
        %v2301 = vpack.c.bf16 %v2159, %v2157
        %v2302 = vpack.c.bf16 %v2160, %v2158
        %v2303 = vpack.c.bf16 %v2163, %v2161
        %v2304 = vpack.c.bf16 %v2164, %v2162
        %v2305 = vpack.c.bf16 %v2167, %v2165
        %v2306 = vpack.c.bf16 %v2168, %v2166
        %v2307 = vpack.c.bf16 %v2171, %v2169
        %v2308 = vpack.c.bf16 %v2172, %v2170
        %v2309 = vpack.c.bf16 %v2175, %v2173
        %v2310 = vpack.c.bf16 %v2176, %v2174
        %v2311 = vpack.c.bf16 %v2179, %v2177
        %v2312 = vpack.c.bf16 %v2180, %v2178
        %v2317 = vunpack.c.l.b16 %v1905
        %v2318 = vunpack.c.l.b16 %v1906
        %v2319 = vunpack.c.l.b16 %v1907
        %v2320 = vunpack.c.l.b16 %v1908
        %v2321 = vpack.c.b16 %v2318, %v2317
        %v2322 = vpack.c.b16 %v2320, %v2319
        %v2324 = vsel %vm1688, %v2321, 0
        %v2327 = vsel %vm1688, %v2322, 0
        %2329 = vmatpush.bf16.msra.mxu0 0
        %2330 = vmatpush.bf16.msra.mxu0 0
        %2331 = vmatpush.bf16.msra.mxu0 %v2311
        %2332 = vmatpush.bf16.msra.mxu0 %v2309
        %2333 = vmatpush.bf16.msra.mxu0 %v2307
        %2334 = vmatpush.bf16.msra.mxu0 %v2305
        %2335 = vmatpush.bf16.msra.mxu0 %v2303
        %2336 = vmatpush.bf16.msra.mxu0 %v2301
        %2337 = vmatmul.bf16.gmra.mxu0 %v2324
        %v2338 = vpop.f32.mrf.mxu0
        %v2339 = vadd.f32 0.0, %v2338
        %v2340 = vpop.f32.mrf.mxu0
        %v2341 = vadd.f32 0.0, %v2340
        %2342 = vmatmul.bf16.gmra.mxu0 %v2327
        %v2343 = vpop.f32.mrf.mxu0
        %v2344 = vadd.f32 0.0, %v2343
        %v2345 = vpop.f32.mrf.mxu0
        %v2346 = vadd.f32 0.0, %v2345
        %2347 = vdwg.mxu0
        %2348 = vmatpush.bf16.msra.mxu0 0
        %2349 = vmatpush.bf16.msra.mxu0 0
        %2350 = vmatpush.bf16.msra.mxu0 %v2312
        %2351 = vmatpush.bf16.msra.mxu0 %v2310
        %2352 = vmatpush.bf16.msra.mxu0 %v2308
        %2353 = vmatpush.bf16.msra.mxu0 %v2306
        %2354 = vmatpush.bf16.msra.mxu0 %v2304
        %2355 = vmatpush.bf16.msra.mxu0 %v2302
        %2356 = vmatmul.bf16.gmra.mxu0 %v2324
        %v2357 = vpop.f32.mrf.mxu0
        %v2358 = vadd.f32 0.0, %v2357
        %v2359 = vpop.f32.mrf.mxu0
        %v2360 = vadd.f32 0.0, %v2359
        %2361 = vmatmul.bf16.gmra.mxu0 %v2327
        %v2362 = vpop.f32.mrf.mxu0
        %v2363 = vadd.f32 0.0, %v2362
        %v2364 = vpop.f32.mrf.mxu0
        %v2365 = vadd.f32 0.0, %v2364
        %2366 = vdwg.mxu0
        %v2367 = vadd.f32 %v2273, %v2339
        %v2368 = vadd.f32 %v2292, %v2358
        %v2369 = vadd.f32 %v2275, %v2341
        %v2370 = vadd.f32 %v2294, %v2360
        %v2371 = vadd.f32 %v2278, %v2344
        %v2372 = vadd.f32 %v2297, %v2363
        %v2373 = vadd.f32 %v2280, %v2346
        %v2374 = vadd.f32 %v2299, %v2365
        %2376 = vset.pattern.permute.xlu0 0
        %2377 = vperm.xlu0 %2376, %v1909
        %v2378 = vpop.permute.xlu0 %2377
        %2381 = vset.pattern.permute.xlu0 0
        %2382 = vperm.xlu0 %2381, %v1910
        %v2383 = vpop.permute.xlu0 %2382
        %2386 = vset.pattern.permute.xlu0 0
        %2387 = vperm.xlu0 %2386, %v1911
        %v2388 = vpop.permute.xlu0 %2387
        %2391 = vset.pattern.permute.xlu0 0
        %2392 = vperm.xlu0 %2391, %v1912
        %v2393 = vpop.permute.xlu0 %2392
        %v2395 = vadd.f32 %v2367, %v2378
        %v2396 = vadd.f32 %v2368, %v2378
        %v2397 = vadd.f32 %v2369, %v2383
        %v2398 = vadd.f32 %v2370, %v2383
        %v2399 = vadd.f32 %v2371, %v2388
        %v2400 = vadd.f32 %v2372, %v2388
        %v2401 = vadd.f32 %v2373, %v2393
        %v2402 = vadd.f32 %v2374, %v2393
        %v2403 = vadd.f32 %v2395, %v1374
        %v2404 = vadd.f32 %v2396, %v1375
        %v2405 = vadd.f32 %v2397, %v1376
        %v2406 = vadd.f32 %v2398, %v1377
        %v2407 = vadd.f32 %v2399, %v1378
        %v2408 = vadd.f32 %v2400, %v1379
        %v2409 = vadd.f32 %v2401, %v1380
        %v2410 = vadd.f32 %v2402, %v1381
        %v2411 = vmax.f32 %v2403, 0.0
        %v2412 = vmax.f32 %v2404, 0.0
        %v2413 = vmax.f32 %v2405, 0.0
        %v2414 = vmax.f32 %v2406, 0.0
        %v2415 = vmax.f32 %v2407, 0.0
        %v2416 = vmax.f32 %v2408, 0.0
        %v2417 = vmax.f32 %v2409, 0.0
        %v2418 = vmax.f32 %v2410, 0.0
        %v2419 = vld [vmem:[%s1 + $0xd8] sm:$0xf]
        %v2420 = vld [vmem:[%s1 + $0xdc] sm:$0xf]
        %v2421 = vld [vmem:[%s1 + $0xe0] sm:$0xf]
        %v2422 = vld [vmem:[%s1 + $0xe4] sm:$0xf]
        %v2423 = vld [vmem:[%s1 + $0xe8] sm:$0xf]
        %v2424 = vld [vmem:[%s1 + $0xec] sm:$0xf]
        %v2425 = vld [vmem:[%s1 + $0xf0] sm:$0xf]
        %v2426 = vld [vmem:[%s1 + $0xf4] sm:$0xf]
        %v2427 = vld [vmem:[%s1 + $0xf8] sm:$0xf]
        %v2428 = vld [vmem:[%s1 + $0xfc] sm:$0xf]
        %v2429 = vld [vmem:[%s1 + $0x100] sm:$0xf]
        %v2430 = vld [vmem:[%s1 + $0x104] sm:$0xf]
        %v2431 = vld [vmem:[%s2 + $0x90] sm:$0xff]
        %v2432 = vld [vmem:[%s2 + $0x98] sm:$0xff]
        %v2433 = vld [vmem:[%s2 + $0xa0] sm:$0xff]
        %v2434 = vld [vmem:[%s2 + $0xa8] sm:$0xff]
        %2435 = vrot.lane.b32.xlu0 %v2411, 16
        %v2436 = vpop.permute.xlu0 %2435
        %2437 = vrot.lane.b32.xlu0 %v2413, 16
        %v2438 = vpop.permute.xlu0 %2437
        %2439 = vrot.lane.b32.xlu0 %v2415, 16
        %v2440 = vpop.permute.xlu0 %2439
        %2441 = vrot.lane.b32.xlu0 %v2417, 16
        %v2442 = vpop.permute.xlu0 %2441
        %2443 = vrot.lane.b32.xlu0 %v2412, 16
        %v2444 = vpop.permute.xlu0 %2443
        %2445 = vrot.lane.b32.xlu0 %v2414, 16
        %v2446 = vpop.permute.xlu0 %2445
        %2447 = vrot.lane.b32.xlu0 %v2416, 16
        %v2448 = vpop.permute.xlu0 %2447
        %2449 = vrot.lane.b32.xlu0 %v2418, 16
        %v2450 = vpop.permute.xlu0 %2449
        %v2451 = vsel %vm215, %v2436, %v2444
        %v2452 = vsel %vm215, %v2438, %v2446
        %v2453 = vsel %vm215, %v2440, %v2448
        %v2454 = vsel %vm215, %v2442, %v2450
        %v2455 = vsel %vm215, %v2444, %v2436
        %v2456 = vsel %vm215, %v2446, %v2438
        %v2457 = vsel %vm215, %v2448, %v2440
        %v2458 = vsel %vm215, %v2450, %v2442
        %2459 = vrot.lane.b32.xlu0 %v2411, 112
        %v2460 = vpop.permute.xlu0 %2459
        %2461 = vrot.lane.b32.xlu0 %v2413, 112
        %v2462 = vpop.permute.xlu0 %2461
        %2463 = vrot.lane.b32.xlu0 %v2415, 112
        %v2464 = vpop.permute.xlu0 %2463
        %2465 = vrot.lane.b32.xlu0 %v2417, 112
        %v2466 = vpop.permute.xlu0 %2465
        %2467 = vrot.lane.b32.xlu0 %v2412, 112
        %v2468 = vpop.permute.xlu0 %2467
        %2469 = vrot.lane.b32.xlu0 %v2414, 112
        %v2470 = vpop.permute.xlu0 %2469
        %2471 = vrot.lane.b32.xlu0 %v2416, 112
        %v2472 = vpop.permute.xlu0 %2471
        %2473 = vrot.lane.b32.xlu0 %v2418, 112
        %v2474 = vpop.permute.xlu0 %2473
        %v2475 = vsel %vm222, %v2460, %v2468
        %v2476 = vsel %vm222, %v2462, %v2470
        %v2477 = vsel %vm222, %v2464, %v2472
        %v2478 = vsel %vm222, %v2466, %v2474
        %v2479 = vsel %vm222, %v2468, %v2460
        %v2480 = vsel %vm222, %v2470, %v2462
        %v2481 = vsel %vm222, %v2472, %v2464
        %v2482 = vsel %vm222, %v2474, %v2466
        %v2483 = vsel %vm189, %v2475, %v2455
        %v2484 = vsel %vm190, %v2479, %v2451
        %v2485 = vsel %vm189, %v2476, %v2456
        %v2486 = vsel %vm190, %v2480, %v2452
        %v2487 = vsel %vm189, %v2477, %v2457
        %v2488 = vsel %vm190, %v2481, %v2453
        %v2489 = vsel %vm189, %v2478, %v2458
        %v2490 = vsel %vm190, %v2482, %v2454
        %v2491 = vsel %vm193, %v2455, %v2475
        %v2492 = vsel %vm194, %v2451, %v2479
        %v2493 = vsel %vm193, %v2456, %v2476
        %v2494 = vsel %vm194, %v2452, %v2480
        %v2495 = vsel %vm193, %v2457, %v2477
        %v2496 = vsel %vm194, %v2453, %v2481
        %v2497 = vsel %vm193, %v2458, %v2478
        %v2498 = vsel %vm194, %v2454, %v2482
        %v2499 = vpack.c.bf16 %v2485, %v2483
        %v2500 = vpack.c.bf16 %v2486, %v2484
        %v2501 = vpack.c.bf16 %v2489, %v2487
        %v2502 = vpack.c.bf16 %v2490, %v2488
        %v2503 = vpack.c.bf16 %v2413, %v2411
        %v2504 = vpack.c.bf16 %v2414, %v2412
        %v2505 = vpack.c.bf16 %v2417, %v2415
        %v2506 = vpack.c.bf16 %v2418, %v2416
        %v2507 = vpack.c.bf16 %v2493, %v2491
        %v2508 = vpack.c.bf16 %v2494, %v2492
        %v2509 = vpack.c.bf16 %v2497, %v2495
        %v2510 = vpack.c.bf16 %v2498, %v2496
        %2511 = vrot.lane.b32.xlu0 %v2483, 1
        %v2512 = vpop.permute.xlu0 %2511
        %2513 = vrot.lane.b32.xlu0 %v2485, 1
        %v2514 = vpop.permute.xlu0 %2513
        %2515 = vrot.lane.b32.xlu0 %v2487, 1
        %v2516 = vpop.permute.xlu0 %2515
        %2517 = vrot.lane.b32.xlu0 %v2489, 1
        %v2518 = vpop.permute.xlu0 %2517
        %2519 = vrot.lane.b32.xlu0 %v2411, 1
        %v2520 = vpop.permute.xlu0 %2519
        %2521 = vrot.lane.b32.xlu0 %v2413, 1
        %v2522 = vpop.permute.xlu0 %2521
        %2523 = vrot.lane.b32.xlu0 %v2415, 1
        %v2524 = vpop.permute.xlu0 %2523
        %2525 = vrot.lane.b32.xlu0 %v2417, 1
        %v2526 = vpop.permute.xlu0 %2525
        %2527 = vrot.lane.b32.xlu0 %v2491, 1
        %v2528 = vpop.permute.xlu0 %2527
        %2529 = vrot.lane.b32.xlu0 %v2493, 1
        %v2530 = vpop.permute.xlu0 %2529
        %2531 = vrot.lane.b32.xlu0 %v2495, 1
        %v2532 = vpop.permute.xlu0 %2531
        %2533 = vrot.lane.b32.xlu0 %v2497, 1
        %v2534 = vpop.permute.xlu0 %2533
        %2535 = vrot.lane.b32.xlu0 %v2484, 1
        %v2536 = vpop.permute.xlu0 %2535
        %2537 = vrot.lane.b32.xlu0 %v2486, 1
        %v2538 = vpop.permute.xlu0 %2537
        %2539 = vrot.lane.b32.xlu0 %v2488, 1
        %v2540 = vpop.permute.xlu0 %2539
        %2541 = vrot.lane.b32.xlu0 %v2490, 1
        %v2542 = vpop.permute.xlu0 %2541
        %2543 = vrot.lane.b32.xlu0 %v2412, 1
        %v2544 = vpop.permute.xlu0 %2543
        %2545 = vrot.lane.b32.xlu0 %v2414, 1
        %v2546 = vpop.permute.xlu0 %2545
        %2547 = vrot.lane.b32.xlu0 %v2416, 1
        %v2548 = vpop.permute.xlu0 %2547
        %2549 = vrot.lane.b32.xlu0 %v2418, 1
        %v2550 = vpop.permute.xlu0 %2549
        %2551 = vrot.lane.b32.xlu0 %v2492, 1
        %v2552 = vpop.permute.xlu0 %2551
        %2553 = vrot.lane.b32.xlu0 %v2494, 1
        %v2554 = vpop.permute.xlu0 %2553
        %2555 = vrot.lane.b32.xlu0 %v2496, 1
        %v2556 = vpop.permute.xlu0 %2555
        %2557 = vrot.lane.b32.xlu0 %v2498, 1
        %v2558 = vpop.permute.xlu0 %2557
        %v2559 = vsel %vm245, %v2512, %v2536
        %v2560 = vsel %vm245, %v2514, %v2538
        %v2561 = vsel %vm245, %v2516, %v2540
        %v2562 = vsel %vm245, %v2518, %v2542
        %v2563 = vsel %vm245, %v2520, %v2544
        %v2564 = vsel %vm245, %v2522, %v2546
        %v2565 = vsel %vm245, %v2524, %v2548
        %v2566 = vsel %vm245, %v2526, %v2550
        %v2567 = vsel %vm245, %v2528, %v2552
        %v2568 = vsel %vm245, %v2530, %v2554
        %v2569 = vsel %vm245, %v2532, %v2556
        %v2570 = vsel %vm245, %v2534, %v2558
        %v2571 = vsel %vm245, %v2536, %v2512
        %v2572 = vsel %vm245, %v2538, %v2514
        %v2573 = vsel %vm245, %v2540, %v2516
        %v2574 = vsel %vm245, %v2542, %v2518
        %v2575 = vsel %vm245, %v2544, %v2520
        %v2576 = vsel %vm245, %v2546, %v2522
        %v2577 = vsel %vm245, %v2548, %v2524
        %v2578 = vsel %vm245, %v2550, %v2526
        %v2579 = vsel %vm245, %v2552, %v2528
        %v2580 = vsel %vm245, %v2554, %v2530
        %v2581 = vsel %vm245, %v2556, %v2532
        %v2582 = vsel %vm245, %v2558, %v2534
        %2583 = vrot.lane.b32.xlu0 %v2483, 127
        %v2584 = vpop.permute.xlu0 %2583
        %2585 = vrot.lane.b32.xlu0 %v2485, 127
        %v2586 = vpop.permute.xlu0 %2585
        %2587 = vrot.lane.b32.xlu0 %v2487, 127
        %v2588 = vpop.permute.xlu0 %2587
        %2589 = vrot.lane.b32.xlu0 %v2489, 127
        %v2590 = vpop.permute.xlu0 %2589
        %2591 = vrot.lane.b32.xlu0 %v2411, 127
        %v2592 = vpop.permute.xlu0 %2591
        %2593 = vrot.lane.b32.xlu0 %v2413, 127
        %v2594 = vpop.permute.xlu0 %2593
        %2595 = vrot.lane.b32.xlu0 %v2415, 127
        %v2596 = vpop.permute.xlu0 %2595
        %2597 = vrot.lane.b32.xlu0 %v2417, 127
        %v2598 = vpop.permute.xlu0 %2597
        %2599 = vrot.lane.b32.xlu0 %v2491, 127
        %v2600 = vpop.permute.xlu0 %2599
        %2601 = vrot.lane.b32.xlu0 %v2493, 127
        %v2602 = vpop.permute.xlu0 %2601
        %2603 = vrot.lane.b32.xlu0 %v2495, 127
        %v2604 = vpop.permute.xlu0 %2603
        %2605 = vrot.lane.b32.xlu0 %v2497, 127
        %v2606 = vpop.permute.xlu0 %2605
        %2607 = vrot.lane.b32.xlu0 %v2484, 127
        %v2608 = vpop.permute.xlu0 %2607
        %2609 = vrot.lane.b32.xlu0 %v2486, 127
        %v2610 = vpop.permute.xlu0 %2609
        %2611 = vrot.lane.b32.xlu0 %v2488, 127
        %v2612 = vpop.permute.xlu0 %2611
        %2613 = vrot.lane.b32.xlu0 %v2490, 127
        %v2614 = vpop.permute.xlu0 %2613
        %2615 = vrot.lane.b32.xlu0 %v2412, 127
        %v2616 = vpop.permute.xlu0 %2615
        %2617 = vrot.lane.b32.xlu0 %v2414, 127
        %v2618 = vpop.permute.xlu0 %2617
        %2619 = vrot.lane.b32.xlu0 %v2416, 127
        %v2620 = vpop.permute.xlu0 %2619
        %2621 = vrot.lane.b32.xlu0 %v2418, 127
        %v2622 = vpop.permute.xlu0 %2621
        %2623 = vrot.lane.b32.xlu0 %v2492, 127
        %v2624 = vpop.permute.xlu0 %2623
        %2625 = vrot.lane.b32.xlu0 %v2494, 127
        %v2626 = vpop.permute.xlu0 %2625
        %2627 = vrot.lane.b32.xlu0 %v2496, 127
        %v2628 = vpop.permute.xlu0 %2627
        %2629 = vrot.lane.b32.xlu0 %v2498, 127
        %v2630 = vpop.permute.xlu0 %2629
        %v2631 = vsel %vm264, %v2584, %v2608
        %v2632 = vsel %vm264, %v2586, %v2610
        %v2633 = vsel %vm264, %v2588, %v2612
        %v2634 = vsel %vm264, %v2590, %v2614
        %v2635 = vsel %vm264, %v2592, %v2616
        %v2636 = vsel %vm264, %v2594, %v2618
        %v2637 = vsel %vm264, %v2596, %v2620
        %v2638 = vsel %vm264, %v2598, %v2622
        %v2639 = vsel %vm264, %v2600, %v2624
        %v2640 = vsel %vm264, %v2602, %v2626
        %v2641 = vsel %vm264, %v2604, %v2628
        %v2642 = vsel %vm264, %v2606, %v2630
        %v2643 = vsel %vm264, %v2608, %v2584
        %v2644 = vsel %vm264, %v2610, %v2586
        %v2645 = vsel %vm264, %v2612, %v2588
        %v2646 = vsel %vm264, %v2614, %v2590
        %v2647 = vsel %vm264, %v2616, %v2592
        %v2648 = vsel %vm264, %v2618, %v2594
        %v2649 = vsel %vm264, %v2620, %v2596
        %v2650 = vsel %vm264, %v2622, %v2598
        %v2651 = vsel %vm264, %v2624, %v2600
        %v2652 = vsel %vm264, %v2626, %v2602
        %v2653 = vsel %vm264, %v2628, %v2604
        %v2654 = vsel %vm264, %v2630, %v2606
        %v2655 = vsel %vm197, %v2631, %v2571
        %v2656 = vsel %vm198, %v2643, %v2559
        %v2657 = vsel %vm197, %v2632, %v2572
        %v2658 = vsel %vm198, %v2644, %v2560
        %v2659 = vsel %vm197, %v2633, %v2573
        %v2660 = vsel %vm198, %v2645, %v2561
        %v2661 = vsel %vm197, %v2634, %v2574
        %v2662 = vsel %vm198, %v2646, %v2562
        %v2663 = vsel %vm197, %v2635, %v2575
        %v2664 = vsel %vm198, %v2647, %v2563
        %v2665 = vsel %vm197, %v2636, %v2576
        %v2666 = vsel %vm198, %v2648, %v2564
        %v2667 = vsel %vm197, %v2637, %v2577
        %v2668 = vsel %vm198, %v2649, %v2565
        %v2669 = vsel %vm197, %v2638, %v2578
        %v2670 = vsel %vm198, %v2650, %v2566
        %v2671 = vsel %vm197, %v2639, %v2579
        %v2672 = vsel %vm198, %v2651, %v2567
        %v2673 = vsel %vm197, %v2640, %v2580
        %v2674 = vsel %vm198, %v2652, %v2568
        %v2675 = vsel %vm197, %v2641, %v2581
        %v2676 = vsel %vm198, %v2653, %v2569
        %v2677 = vsel %vm197, %v2642, %v2582
        %v2678 = vsel %vm198, %v2654, %v2570
        %v2679 = vsel %vm201, %v2571, %v2631
        %v2680 = vsel %vm202, %v2559, %v2643
        %v2681 = vsel %vm201, %v2572, %v2632
        %v2682 = vsel %vm202, %v2560, %v2644
        %v2683 = vsel %vm201, %v2573, %v2633
        %v2684 = vsel %vm202, %v2561, %v2645
        %v2685 = vsel %vm201, %v2574, %v2634
        %v2686 = vsel %vm202, %v2562, %v2646
        %v2687 = vsel %vm201, %v2575, %v2635
        %v2688 = vsel %vm202, %v2563, %v2647
        %v2689 = vsel %vm201, %v2576, %v2636
        %v2690 = vsel %vm202, %v2564, %v2648
        %v2691 = vsel %vm201, %v2577, %v2637
        %v2692 = vsel %vm202, %v2565, %v2649
        %v2693 = vsel %vm201, %v2578, %v2638
        %v2694 = vsel %vm202, %v2566, %v2650
        %v2695 = vsel %vm201, %v2579, %v2639
        %v2696 = vsel %vm202, %v2567, %v2651
        %v2697 = vsel %vm201, %v2580, %v2640
        %v2698 = vsel %vm202, %v2568, %v2652
        %v2699 = vsel %vm201, %v2581, %v2641
        %v2700 = vsel %vm202, %v2569, %v2653
        %v2701 = vsel %vm201, %v2582, %v2642
        %v2702 = vsel %vm202, %v2570, %v2654
        %v2703 = vpack.c.bf16 %v2657, %v2655
        %v2704 = vpack.c.bf16 %v2658, %v2656
        %v2705 = vpack.c.bf16 %v2661, %v2659
        %v2706 = vpack.c.bf16 %v2662, %v2660
        %v2707 = vpack.c.bf16 %v2665, %v2663
        %v2708 = vpack.c.bf16 %v2666, %v2664
        %v2709 = vpack.c.bf16 %v2669, %v2667
        %v2710 = vpack.c.bf16 %v2670, %v2668
        %v2711 = vpack.c.bf16 %v2673, %v2671
        %v2712 = vpack.c.bf16 %v2674, %v2672
        %v2713 = vpack.c.bf16 %v2677, %v2675
        %v2714 = vpack.c.bf16 %v2678, %v2676
        %v2719 = vunpack.c.l.b16 %v2419
        %v2720 = vunpack.c.l.b16 %v2420
        %v2721 = vunpack.c.l.b16 %v2421
        %v2722 = vunpack.c.l.b16 %v2422
        %v2723 = vpack.c.b16 %v2720, %v2719
        %v2724 = vpack.c.b16 %v2722, %v2721
        %v2726 = vsel %vm1688, %v2723, 0
        %v2729 = vsel %vm1688, %v2724, 0
        %2731 = vmatpush.bf16.msra.mxu0 0
        %2732 = vmatpush.bf16.msra.mxu0 0
        %2733 = vmatpush.bf16.msra.mxu0 %v2713
        %2734 = vmatpush.bf16.msra.mxu0 %v2711
        %2735 = vmatpush.bf16.msra.mxu0 %v2709
        %2736 = vmatpush.bf16.msra.mxu0 %v2707
        %2737 = vmatpush.bf16.msra.mxu0 %v2705
        %2738 = vmatpush.bf16.msra.mxu0 %v2703
        %2739 = vmatmul.bf16.gmra.mxu0 %v2726
        %v2740 = vpop.f32.mrf.mxu0
        %v2741 = vadd.f32 0.0, %v2740
        %v2742 = vpop.f32.mrf.mxu0
        %v2743 = vadd.f32 0.0, %v2742
        %2744 = vmatmul.bf16.gmra.mxu0 %v2729
        %v2745 = vpop.f32.mrf.mxu0
        %v2746 = vadd.f32 0.0, %v2745
        %v2747 = vpop.f32.mrf.mxu0
        %v2748 = vadd.f32 0.0, %v2747
        %2749 = vdwg.mxu0
        %2750 = vmatpush.bf16.msra.mxu0 0
        %2751 = vmatpush.bf16.msra.mxu0 0
        %2752 = vmatpush.bf16.msra.mxu0 %v2714
        %2753 = vmatpush.bf16.msra.mxu0 %v2712
        %2754 = vmatpush.bf16.msra.mxu0 %v2710
        %2755 = vmatpush.bf16.msra.mxu0 %v2708
        %2756 = vmatpush.bf16.msra.mxu0 %v2706
        %2757 = vmatpush.bf16.msra.mxu0 %v2704
        %2758 = vmatmul.bf16.gmra.mxu0 %v2726
        %v2759 = vpop.f32.mrf.mxu0
        %v2760 = vadd.f32 0.0, %v2759
        %v2761 = vpop.f32.mrf.mxu0
        %v2762 = vadd.f32 0.0, %v2761
        %2763 = vmatmul.bf16.gmra.mxu0 %v2729
        %v2764 = vpop.f32.mrf.mxu0
        %v2765 = vadd.f32 0.0, %v2764
        %v2766 = vpop.f32.mrf.mxu0
        %v2767 = vadd.f32 0.0, %v2766
        %2768 = vdwg.mxu0
        %v2773 = vunpack.c.l.b16 %v2423
        %v2774 = vunpack.c.l.b16 %v2424
        %v2775 = vunpack.c.l.b16 %v2425
        %v2776 = vunpack.c.l.b16 %v2426
        %v2777 = vpack.c.b16 %v2774, %v2773
        %v2778 = vpack.c.b16 %v2776, %v2775
        %v2780 = vsel %vm1688, %v2777, 0
        %v2783 = vsel %vm1688, %v2778, 0
        %2785 = vmatpush.bf16.msra.mxu0 0
        %2786 = vmatpush.bf16.msra.mxu0 0
        %2787 = vmatpush.bf16.msra.mxu0 %v2509
        %2788 = vmatpush.bf16.msra.mxu0 %v2507
        %2789 = vmatpush.bf16.msra.mxu0 %v2505
        %2790 = vmatpush.bf16.msra.mxu0 %v2503
        %2791 = vmatpush.bf16.msra.mxu0 %v2501
        %2792 = vmatpush.bf16.msra.mxu0 %v2499
        %2793 = vmatmul.bf16.gmra.mxu0 %v2780
        %v2794 = vpop.f32.mrf.mxu0
        %v2795 = vadd.f32 %v2741, %v2794
        %v2796 = vpop.f32.mrf.mxu0
        %v2797 = vadd.f32 %v2743, %v2796
        %2798 = vmatmul.bf16.gmra.mxu0 %v2783
        %v2799 = vpop.f32.mrf.mxu0
        %v2800 = vadd.f32 %v2746, %v2799
        %v2801 = vpop.f32.mrf.mxu0
        %v2802 = vadd.f32 %v2748, %v2801
        %2803 = vdwg.mxu0
        %2804 = vmatpush.bf16.msra.mxu0 0
        %2805 = vmatpush.bf16.msra.mxu0 0
        %2806 = vmatpush.bf16.msra.mxu0 %v2510
        %2807 = vmatpush.bf16.msra.mxu0 %v2508
        %2808 = vmatpush.bf16.msra.mxu0 %v2506
        %2809 = vmatpush.bf16.msra.mxu0 %v2504
        %2810 = vmatpush.bf16.msra.mxu0 %v2502
        %2811 = vmatpush.bf16.msra.mxu0 %v2500
        %2812 = vmatmul.bf16.gmra.mxu0 %v2780
        %v2813 = vpop.f32.mrf.mxu0
        %v2814 = vadd.f32 %v2760, %v2813
        %v2815 = vpop.f32.mrf.mxu0
        %v2816 = vadd.f32 %v2762, %v2815
        %2817 = vmatmul.bf16.gmra.mxu0 %v2783
        %v2818 = vpop.f32.mrf.mxu0
        %v2819 = vadd.f32 %v2765, %v2818
        %v2820 = vpop.f32.mrf.mxu0
        %v2821 = vadd.f32 %v2767, %v2820
        %2822 = vdwg.mxu0
        %v2823 = vpack.c.bf16 %v2681, %v2679
        %v2824 = vpack.c.bf16 %v2682, %v2680
        %v2825 = vpack.c.bf16 %v2685, %v2683
        %v2826 = vpack.c.bf16 %v2686, %v2684
        %v2827 = vpack.c.bf16 %v2689, %v2687
        %v2828 = vpack.c.bf16 %v2690, %v2688
        %v2829 = vpack.c.bf16 %v2693, %v2691
        %v2830 = vpack.c.bf16 %v2694, %v2692
        %v2831 = vpack.c.bf16 %v2697, %v2695
        %v2832 = vpack.c.bf16 %v2698, %v2696
        %v2833 = vpack.c.bf16 %v2701, %v2699
        %v2834 = vpack.c.bf16 %v2702, %v2700
        %v2839 = vunpack.c.l.b16 %v2427
        %v2840 = vunpack.c.l.b16 %v2428
        %v2841 = vunpack.c.l.b16 %v2429
        %v2842 = vunpack.c.l.b16 %v2430
        %v2843 = vpack.c.b16 %v2840, %v2839
        %v2844 = vpack.c.b16 %v2842, %v2841
        %v2846 = vsel %vm1688, %v2843, 0
        %v2849 = vsel %vm1688, %v2844, 0
        %2851 = vmatpush.bf16.msra.mxu0 0
        %2852 = vmatpush.bf16.msra.mxu0 0
        %2853 = vmatpush.bf16.msra.mxu0 %v2833
        %2854 = vmatpush.bf16.msra.mxu0 %v2831
        %2855 = vmatpush.bf16.msra.mxu0 %v2829
        %2856 = vmatpush.bf16.msra.mxu0 %v2827
        %2857 = vmatpush.bf16.msra.mxu0 %v2825
        %2858 = vmatpush.bf16.msra.mxu0 %v2823
        %2859 = vmatmul.bf16.gmra.mxu0 %v2846
        %v2860 = vpop.f32.mrf.mxu0
        %v2861 = vadd.f32 0.0, %v2860
        %v2862 = vpop.f32.mrf.mxu0
        %v2863 = vadd.f32 0.0, %v2862
        %2864 = vmatmul.bf16.gmra.mxu0 %v2849
        %v2865 = vpop.f32.mrf.mxu0
        %v2866 = vadd.f32 0.0, %v2865
        %v2867 = vpop.f32.mrf.mxu0
        %v2868 = vadd.f32 0.0, %v2867
        %2869 = vdwg.mxu0
        %2870 = vmatpush.bf16.msra.mxu0 0
        %2871 = vmatpush.bf16.msra.mxu0 0
        %2872 = vmatpush.bf16.msra.mxu0 %v2834
        %2873 = vmatpush.bf16.msra.mxu0 %v2832
        %2874 = vmatpush.bf16.msra.mxu0 %v2830
        %2875 = vmatpush.bf16.msra.mxu0 %v2828
        %2876 = vmatpush.bf16.msra.mxu0 %v2826
        %2877 = vmatpush.bf16.msra.mxu0 %v2824
        %2878 = vmatmul.bf16.gmra.mxu0 %v2846
        %v2879 = vpop.f32.mrf.mxu0
        %v2880 = vadd.f32 0.0, %v2879
        %v2881 = vpop.f32.mrf.mxu0
        %v2882 = vadd.f32 0.0, %v2881
        %2883 = vmatmul.bf16.gmra.mxu0 %v2849
        %v2884 = vpop.f32.mrf.mxu0
        %v2885 = vadd.f32 0.0, %v2884
        %v2886 = vpop.f32.mrf.mxu0
        %v2887 = vadd.f32 0.0, %v2886
        %2888 = vdwg.mxu0
        %v2889 = vadd.f32 %v2795, %v2861
        %v2890 = vadd.f32 %v2814, %v2880
        %v2891 = vadd.f32 %v2797, %v2863
        %v2892 = vadd.f32 %v2816, %v2882
        %v2893 = vadd.f32 %v2800, %v2866
        %v2894 = vadd.f32 %v2819, %v2885
        %v2895 = vadd.f32 %v2802, %v2868
        %v2896 = vadd.f32 %v2821, %v2887
        %2898 = vset.pattern.permute.xlu0 0
        %2899 = vperm.xlu0 %2898, %v2431
        %v2900 = vpop.permute.xlu0 %2899
        %2903 = vset.pattern.permute.xlu0 0
        %2904 = vperm.xlu0 %2903, %v2432
        %v2905 = vpop.permute.xlu0 %2904
        %2908 = vset.pattern.permute.xlu0 0
        %2909 = vperm.xlu0 %2908, %v2433
        %v2910 = vpop.permute.xlu0 %2909
        %2913 = vset.pattern.permute.xlu0 0
        %2914 = vperm.xlu0 %2913, %v2434
        %v2915 = vpop.permute.xlu0 %2914
        %v2917 = vadd.f32 %v2889, %v2900
        %v2918 = vadd.f32 %v2890, %v2900
        %v2919 = vadd.f32 %v2891, %v2905
        %v2920 = vadd.f32 %v2892, %v2905
        %v2921 = vadd.f32 %v2893, %v2910
        %v2922 = vadd.f32 %v2894, %v2910
        %v2923 = vadd.f32 %v2895, %v2915
        %v2924 = vadd.f32 %v2896, %v2915
        %v2925 = vmax.f32 %v2917, 0.0
        %v2926 = vmax.f32 %v2918, 0.0
        %v2927 = vmax.f32 %v2919, 0.0
        %v2928 = vmax.f32 %v2920, 0.0
        %v2929 = vmax.f32 %v2921, 0.0
        %v2930 = vmax.f32 %v2922, 0.0
        %v2931 = vmax.f32 %v2923, 0.0
        %v2932 = vmax.f32 %v2924, 0.0
        %v2933 = vld [vmem:[%s1 + $0x108] sm:$0xf]
        %v2934 = vld [vmem:[%s1 + $0x10c] sm:$0xf]
        %v2935 = vld [vmem:[%s1 + $0x110] sm:$0xf]
        %v2936 = vld [vmem:[%s1 + $0x114] sm:$0xf]
        %v2937 = vld [vmem:[%s1 + $0x118] sm:$0xf]
        %v2938 = vld [vmem:[%s1 + $0x11c] sm:$0xf]
        %v2939 = vld [vmem:[%s1 + $0x120] sm:$0xf]
        %v2940 = vld [vmem:[%s1 + $0x124] sm:$0xf]
        %v2941 = vld [vmem:[%s1 + $0x128] sm:$0xf]
        %v2942 = vld [vmem:[%s1 + $0x12c] sm:$0xf]
        %v2943 = vld [vmem:[%s1 + $0x130] sm:$0xf]
        %v2944 = vld [vmem:[%s1 + $0x134] sm:$0xf]
        %v2945 = vld [vmem:[%s2 + $0xb0] sm:$0xff]
        %v2946 = vld [vmem:[%s2 + $0xb8] sm:$0xff]
        %v2947 = vld [vmem:[%s2 + $0xc0] sm:$0xff]
        %v2948 = vld [vmem:[%s2 + $0xc8] sm:$0xff]
        %2949 = vrot.lane.b32.xlu0 %v2925, 16
        %v2950 = vpop.permute.xlu0 %2949
        %2951 = vrot.lane.b32.xlu0 %v2927, 16
        %v2952 = vpop.permute.xlu0 %2951
        %2953 = vrot.lane.b32.xlu0 %v2929, 16
        %v2954 = vpop.permute.xlu0 %2953
        %2955 = vrot.lane.b32.xlu0 %v2931, 16
        %v2956 = vpop.permute.xlu0 %2955
        %2957 = vrot.lane.b32.xlu0 %v2926, 16
        %v2958 = vpop.permute.xlu0 %2957
        %2959 = vrot.lane.b32.xlu0 %v2928, 16
        %v2960 = vpop.permute.xlu0 %2959
        %2961 = vrot.lane.b32.xlu0 %v2930, 16
        %v2962 = vpop.permute.xlu0 %2961
        %2963 = vrot.lane.b32.xlu0 %v2932, 16
        %v2964 = vpop.permute.xlu0 %2963
        %v2965 = vsel %vm215, %v2950, %v2958
        %v2966 = vsel %vm215, %v2952, %v2960
        %v2967 = vsel %vm215, %v2954, %v2962
        %v2968 = vsel %vm215, %v2956, %v2964
        %v2969 = vsel %vm215, %v2958, %v2950
        %v2970 = vsel %vm215, %v2960, %v2952
        %v2971 = vsel %vm215, %v2962, %v2954
        %v2972 = vsel %vm215, %v2964, %v2956
        %2973 = vrot.lane.b32.xlu0 %v2925, 112
        %v2974 = vpop.permute.xlu0 %2973
        %2975 = vrot.lane.b32.xlu0 %v2927, 112
        %v2976 = vpop.permute.xlu0 %2975
        %2977 = vrot.lane.b32.xlu0 %v2929, 112
        %v2978 = vpop.permute.xlu0 %2977
        %2979 = vrot.lane.b32.xlu0 %v2931, 112
        %v2980 = vpop.permute.xlu0 %2979
        %2981 = vrot.lane.b32.xlu0 %v2926, 112
        %v2982 = vpop.permute.xlu0 %2981
        %2983 = vrot.lane.b32.xlu0 %v2928, 112
        %v2984 = vpop.permute.xlu0 %2983
        %2985 = vrot.lane.b32.xlu0 %v2930, 112
        %v2986 = vpop.permute.xlu0 %2985
        %2987 = vrot.lane.b32.xlu0 %v2932, 112
        %v2988 = vpop.permute.xlu0 %2987
        %v2989 = vsel %vm222, %v2974, %v2982
        %v2990 = vsel %vm222, %v2976, %v2984
        %v2991 = vsel %vm222, %v2978, %v2986
        %v2992 = vsel %vm222, %v2980, %v2988
        %v2993 = vsel %vm222, %v2982, %v2974
        %v2994 = vsel %vm222, %v2984, %v2976
        %v2995 = vsel %vm222, %v2986, %v2978
        %v2996 = vsel %vm222, %v2988, %v2980
        %v2997 = vsel %vm189, %v2989, %v2969
        %v2998 = vsel %vm190, %v2993, %v2965
        %v2999 = vsel %vm189, %v2990, %v2970
        %v3000 = vsel %vm190, %v2994, %v2966
        %v3001 = vsel %vm189, %v2991, %v2971
        %v3002 = vsel %vm190, %v2995, %v2967
        %v3003 = vsel %vm189, %v2992, %v2972
        %v3004 = vsel %vm190, %v2996, %v2968
        %v3005 = vsel %vm193, %v2969, %v2989
        %v3006 = vsel %vm194, %v2965, %v2993
        %v3007 = vsel %vm193, %v2970, %v2990
        %v3008 = vsel %vm194, %v2966, %v2994
        %v3009 = vsel %vm193, %v2971, %v2991
        %v3010 = vsel %vm194, %v2967, %v2995
        %v3011 = vsel %vm193, %v2972, %v2992
        %v3012 = vsel %vm194, %v2968, %v2996
        %v3013 = vpack.c.bf16 %v2999, %v2997
        %v3014 = vpack.c.bf16 %v3000, %v2998
        %v3015 = vpack.c.bf16 %v3003, %v3001
        %v3016 = vpack.c.bf16 %v3004, %v3002
        %v3017 = vpack.c.bf16 %v2927, %v2925
        %v3018 = vpack.c.bf16 %v2928, %v2926
        %v3019 = vpack.c.bf16 %v2931, %v2929
        %v3020 = vpack.c.bf16 %v2932, %v2930
        %v3021 = vpack.c.bf16 %v3007, %v3005
        %v3022 = vpack.c.bf16 %v3008, %v3006
        %v3023 = vpack.c.bf16 %v3011, %v3009
        %v3024 = vpack.c.bf16 %v3012, %v3010
        %3025 = vrot.lane.b32.xlu0 %v2997, 1
        %v3026 = vpop.permute.xlu0 %3025
        %3027 = vrot.lane.b32.xlu0 %v2999, 1
        %v3028 = vpop.permute.xlu0 %3027
        %3029 = vrot.lane.b32.xlu0 %v3001, 1
        %v3030 = vpop.permute.xlu0 %3029
        %3031 = vrot.lane.b32.xlu0 %v3003, 1
        %v3032 = vpop.permute.xlu0 %3031
        %3033 = vrot.lane.b32.xlu0 %v2925, 1
        %v3034 = vpop.permute.xlu0 %3033
        %3035 = vrot.lane.b32.xlu0 %v2927, 1
        %v3036 = vpop.permute.xlu0 %3035
        %3037 = vrot.lane.b32.xlu0 %v2929, 1
        %v3038 = vpop.permute.xlu0 %3037
        %3039 = vrot.lane.b32.xlu0 %v2931, 1
        %v3040 = vpop.permute.xlu0 %3039
        %3041 = vrot.lane.b32.xlu0 %v3005, 1
        %v3042 = vpop.permute.xlu0 %3041
        %3043 = vrot.lane.b32.xlu0 %v3007, 1
        %v3044 = vpop.permute.xlu0 %3043
        %3045 = vrot.lane.b32.xlu0 %v3009, 1
        %v3046 = vpop.permute.xlu0 %3045
        %3047 = vrot.lane.b32.xlu0 %v3011, 1
        %v3048 = vpop.permute.xlu0 %3047
        %3049 = vrot.lane.b32.xlu0 %v2998, 1
        %v3050 = vpop.permute.xlu0 %3049
        %3051 = vrot.lane.b32.xlu0 %v3000, 1
        %v3052 = vpop.permute.xlu0 %3051
        %3053 = vrot.lane.b32.xlu0 %v3002, 1
        %v3054 = vpop.permute.xlu0 %3053
        %3055 = vrot.lane.b32.xlu0 %v3004, 1
        %v3056 = vpop.permute.xlu0 %3055
        %3057 = vrot.lane.b32.xlu0 %v2926, 1
        %v3058 = vpop.permute.xlu0 %3057
        %3059 = vrot.lane.b32.xlu0 %v2928, 1
        %v3060 = vpop.permute.xlu0 %3059
        %3061 = vrot.lane.b32.xlu0 %v2930, 1
        %v3062 = vpop.permute.xlu0 %3061
        %3063 = vrot.lane.b32.xlu0 %v2932, 1
        %v3064 = vpop.permute.xlu0 %3063
        %3065 = vrot.lane.b32.xlu0 %v3006, 1
        %v3066 = vpop.permute.xlu0 %3065
        %3067 = vrot.lane.b32.xlu0 %v3008, 1
        %v3068 = vpop.permute.xlu0 %3067
        %3069 = vrot.lane.b32.xlu0 %v3010, 1
        %v3070 = vpop.permute.xlu0 %3069
        %3071 = vrot.lane.b32.xlu0 %v3012, 1
        %v3072 = vpop.permute.xlu0 %3071
        %v3073 = vsel %vm245, %v3026, %v3050
        %v3074 = vsel %vm245, %v3028, %v3052
        %v3075 = vsel %vm245, %v3030, %v3054
        %v3076 = vsel %vm245, %v3032, %v3056
        %v3077 = vsel %vm245, %v3034, %v3058
        %v3078 = vsel %vm245, %v3036, %v3060
        %v3079 = vsel %vm245, %v3038, %v3062
        %v3080 = vsel %vm245, %v3040, %v3064
        %v3081 = vsel %vm245, %v3042, %v3066
        %v3082 = vsel %vm245, %v3044, %v3068
        %v3083 = vsel %vm245, %v3046, %v3070
        %v3084 = vsel %vm245, %v3048, %v3072
        %v3085 = vsel %vm245, %v3050, %v3026
        %v3086 = vsel %vm245, %v3052, %v3028
        %v3087 = vsel %vm245, %v3054, %v3030
        %v3088 = vsel %vm245, %v3056, %v3032
        %v3089 = vsel %vm245, %v3058, %v3034
        %v3090 = vsel %vm245, %v3060, %v3036
        %v3091 = vsel %vm245, %v3062, %v3038
        %v3092 = vsel %vm245, %v3064, %v3040
        %v3093 = vsel %vm245, %v3066, %v3042
        %v3094 = vsel %vm245, %v3068, %v3044
        %v3095 = vsel %vm245, %v3070, %v3046
        %v3096 = vsel %vm245, %v3072, %v3048
        %3097 = vrot.lane.b32.xlu0 %v2997, 127
        %v3098 = vpop.permute.xlu0 %3097
        %3099 = vrot.lane.b32.xlu0 %v2999, 127
        %v3100 = vpop.permute.xlu0 %3099
        %3101 = vrot.lane.b32.xlu0 %v3001, 127
        %v3102 = vpop.permute.xlu0 %3101
        %3103 = vrot.lane.b32.xlu0 %v3003, 127
        %v3104 = vpop.permute.xlu0 %3103
        %3105 = vrot.lane.b32.xlu0 %v2925, 127
        %v3106 = vpop.permute.xlu0 %3105
        %3107 = vrot.lane.b32.xlu0 %v2927, 127
        %v3108 = vpop.permute.xlu0 %3107
        %3109 = vrot.lane.b32.xlu0 %v2929, 127
        %v3110 = vpop.permute.xlu0 %3109
        %3111 = vrot.lane.b32.xlu0 %v2931, 127
        %v3112 = vpop.permute.xlu0 %3111
        %3113 = vrot.lane.b32.xlu0 %v3005, 127
        %v3114 = vpop.permute.xlu0 %3113
        %3115 = vrot.lane.b32.xlu0 %v3007, 127
        %v3116 = vpop.permute.xlu0 %3115
        %3117 = vrot.lane.b32.xlu0 %v3009, 127
        %v3118 = vpop.permute.xlu0 %3117
        %3119 = vrot.lane.b32.xlu0 %v3011, 127
        %v3120 = vpop.permute.xlu0 %3119
        %3121 = vrot.lane.b32.xlu0 %v2998, 127
        %v3122 = vpop.permute.xlu0 %3121
        %3123 = vrot.lane.b32.xlu0 %v3000, 127
        %v3124 = vpop.permute.xlu0 %3123
        %3125 = vrot.lane.b32.xlu0 %v3002, 127
        %v3126 = vpop.permute.xlu0 %3125
        %3127 = vrot.lane.b32.xlu0 %v3004, 127
        %v3128 = vpop.permute.xlu0 %3127
        %3129 = vrot.lane.b32.xlu0 %v2926, 127
        %v3130 = vpop.permute.xlu0 %3129
        %3131 = vrot.lane.b32.xlu0 %v2928, 127
        %v3132 = vpop.permute.xlu0 %3131
        %3133 = vrot.lane.b32.xlu0 %v2930, 127
        %v3134 = vpop.permute.xlu0 %3133
        %3135 = vrot.lane.b32.xlu0 %v2932, 127
        %v3136 = vpop.permute.xlu0 %3135
        %3137 = vrot.lane.b32.xlu0 %v3006, 127
        %v3138 = vpop.permute.xlu0 %3137
        %3139 = vrot.lane.b32.xlu0 %v3008, 127
        %v3140 = vpop.permute.xlu0 %3139
        %3141 = vrot.lane.b32.xlu0 %v3010, 127
        %v3142 = vpop.permute.xlu0 %3141
        %3143 = vrot.lane.b32.xlu0 %v3012, 127
        %v3144 = vpop.permute.xlu0 %3143
        %v3145 = vsel %vm264, %v3098, %v3122
        %v3146 = vsel %vm264, %v3100, %v3124
        %v3147 = vsel %vm264, %v3102, %v3126
        %v3148 = vsel %vm264, %v3104, %v3128
        %v3149 = vsel %vm264, %v3106, %v3130
        %v3150 = vsel %vm264, %v3108, %v3132
        %v3151 = vsel %vm264, %v3110, %v3134
        %v3152 = vsel %vm264, %v3112, %v3136
        %v3153 = vsel %vm264, %v3114, %v3138
        %v3154 = vsel %vm264, %v3116, %v3140
        %v3155 = vsel %vm264, %v3118, %v3142
        %v3156 = vsel %vm264, %v3120, %v3144
        %v3157 = vsel %vm264, %v3122, %v3098
        %v3158 = vsel %vm264, %v3124, %v3100
        %v3159 = vsel %vm264, %v3126, %v3102
        %v3160 = vsel %vm264, %v3128, %v3104
        %v3161 = vsel %vm264, %v3130, %v3106
        %v3162 = vsel %vm264, %v3132, %v3108
        %v3163 = vsel %vm264, %v3134, %v3110
        %v3164 = vsel %vm264, %v3136, %v3112
        %v3165 = vsel %vm264, %v3138, %v3114
        %v3166 = vsel %vm264, %v3140, %v3116
        %v3167 = vsel %vm264, %v3142, %v3118
        %v3168 = vsel %vm264, %v3144, %v3120
        %v3169 = vsel %vm197, %v3145, %v3085
        %v3170 = vsel %vm198, %v3157, %v3073
        %v3171 = vsel %vm197, %v3146, %v3086
        %v3172 = vsel %vm198, %v3158, %v3074
        %v3173 = vsel %vm197, %v3147, %v3087
        %v3174 = vsel %vm198, %v3159, %v3075
        %v3175 = vsel %vm197, %v3148, %v3088
        %v3176 = vsel %vm198, %v3160, %v3076
        %v3177 = vsel %vm197, %v3149, %v3089
        %v3178 = vsel %vm198, %v3161, %v3077
        %v3179 = vsel %vm197, %v3150, %v3090
        %v3180 = vsel %vm198, %v3162, %v3078
        %v3181 = vsel %vm197, %v3151, %v3091
        %v3182 = vsel %vm198, %v3163, %v3079
        %v3183 = vsel %vm197, %v3152, %v3092
        %v3184 = vsel %vm198, %v3164, %v3080
        %v3185 = vsel %vm197, %v3153, %v3093
        %v3186 = vsel %vm198, %v3165, %v3081
        %v3187 = vsel %vm197, %v3154, %v3094
        %v3188 = vsel %vm198, %v3166, %v3082
        %v3189 = vsel %vm197, %v3155, %v3095
        %v3190 = vsel %vm198, %v3167, %v3083
        %v3191 = vsel %vm197, %v3156, %v3096
        %v3192 = vsel %vm198, %v3168, %v3084
        %v3193 = vsel %vm201, %v3085, %v3145
        %v3194 = vsel %vm202, %v3073, %v3157
        %v3195 = vsel %vm201, %v3086, %v3146
        %v3196 = vsel %vm202, %v3074, %v3158
        %v3197 = vsel %vm201, %v3087, %v3147
        %v3198 = vsel %vm202, %v3075, %v3159
        %v3199 = vsel %vm201, %v3088, %v3148
        %v3200 = vsel %vm202, %v3076, %v3160
        %v3201 = vsel %vm201, %v3089, %v3149
        %v3202 = vsel %vm202, %v3077, %v3161
        %v3203 = vsel %vm201, %v3090, %v3150
        %v3204 = vsel %vm202, %v3078, %v3162
        %v3205 = vsel %vm201, %v3091, %v3151
        %v3206 = vsel %vm202, %v3079, %v3163
        %v3207 = vsel %vm201, %v3092, %v3152
        %v3208 = vsel %vm202, %v3080, %v3164
        %v3209 = vsel %vm201, %v3093, %v3153
        %v3210 = vsel %vm202, %v3081, %v3165
        %v3211 = vsel %vm201, %v3094, %v3154
        %v3212 = vsel %vm202, %v3082, %v3166
        %v3213 = vsel %vm201, %v3095, %v3155
        %v3214 = vsel %vm202, %v3083, %v3167
        %v3215 = vsel %vm201, %v3096, %v3156
        %v3216 = vsel %vm202, %v3084, %v3168
        %v3217 = vpack.c.bf16 %v3171, %v3169
        %v3218 = vpack.c.bf16 %v3172, %v3170
        %v3219 = vpack.c.bf16 %v3175, %v3173
        %v3220 = vpack.c.bf16 %v3176, %v3174
        %v3221 = vpack.c.bf16 %v3179, %v3177
        %v3222 = vpack.c.bf16 %v3180, %v3178
        %v3223 = vpack.c.bf16 %v3183, %v3181
        %v3224 = vpack.c.bf16 %v3184, %v3182
        %v3225 = vpack.c.bf16 %v3187, %v3185
        %v3226 = vpack.c.bf16 %v3188, %v3186
        %v3227 = vpack.c.bf16 %v3191, %v3189
        %v3228 = vpack.c.bf16 %v3192, %v3190
        %v3233 = vunpack.c.l.b16 %v2933
        %v3234 = vunpack.c.l.b16 %v2934
        %v3235 = vunpack.c.l.b16 %v2935
        %v3236 = vunpack.c.l.b16 %v2936
        %v3237 = vpack.c.b16 %v3234, %v3233
        %v3238 = vpack.c.b16 %v3236, %v3235
        %v3240 = vsel %vm1688, %v3237, 0
        %v3243 = vsel %vm1688, %v3238, 0
        %3245 = vmatpush.bf16.msra.mxu0 0
        %3246 = vmatpush.bf16.msra.mxu0 0
        %3247 = vmatpush.bf16.msra.mxu0 %v3227
        %3248 = vmatpush.bf16.msra.mxu0 %v3225
        %3249 = vmatpush.bf16.msra.mxu0 %v3223
        %3250 = vmatpush.bf16.msra.mxu0 %v3221
        %3251 = vmatpush.bf16.msra.mxu0 %v3219
        %3252 = vmatpush.bf16.msra.mxu0 %v3217
        %3253 = vmatmul.bf16.gmra.mxu0 %v3240
        %v3254 = vpop.f32.mrf.mxu0
        %v3255 = vadd.f32 0.0, %v3254
        %v3256 = vpop.f32.mrf.mxu0
        %v3257 = vadd.f32 0.0, %v3256
        %3258 = vmatmul.bf16.gmra.mxu0 %v3243
        %v3259 = vpop.f32.mrf.mxu0
        %v3260 = vadd.f32 0.0, %v3259
        %v3261 = vpop.f32.mrf.mxu0
        %v3262 = vadd.f32 0.0, %v3261
        %3263 = vdwg.mxu0
        %3264 = vmatpush.bf16.msra.mxu0 0
        %3265 = vmatpush.bf16.msra.mxu0 0
        %3266 = vmatpush.bf16.msra.mxu0 %v3228
        %3267 = vmatpush.bf16.msra.mxu0 %v3226
        %3268 = vmatpush.bf16.msra.mxu0 %v3224
        %3269 = vmatpush.bf16.msra.mxu0 %v3222
        %3270 = vmatpush.bf16.msra.mxu0 %v3220
        %3271 = vmatpush.bf16.msra.mxu0 %v3218
        %3272 = vmatmul.bf16.gmra.mxu0 %v3240
        %v3273 = vpop.f32.mrf.mxu0
        %v3274 = vadd.f32 0.0, %v3273
        %v3275 = vpop.f32.mrf.mxu0
        %v3276 = vadd.f32 0.0, %v3275
        %3277 = vmatmul.bf16.gmra.mxu0 %v3243
        %v3278 = vpop.f32.mrf.mxu0
        %v3279 = vadd.f32 0.0, %v3278
        %v3280 = vpop.f32.mrf.mxu0
        %v3281 = vadd.f32 0.0, %v3280
        %3282 = vdwg.mxu0
        %v3287 = vunpack.c.l.b16 %v2937
        %v3288 = vunpack.c.l.b16 %v2938
        %v3289 = vunpack.c.l.b16 %v2939
        %v3290 = vunpack.c.l.b16 %v2940
        %v3291 = vpack.c.b16 %v3288, %v3287
        %v3292 = vpack.c.b16 %v3290, %v3289
        %v3294 = vsel %vm1688, %v3291, 0
        %v3297 = vsel %vm1688, %v3292, 0
        %3299 = vmatpush.bf16.msra.mxu0 0
        %3300 = vmatpush.bf16.msra.mxu0 0
        %3301 = vmatpush.bf16.msra.mxu0 %v3023
        %3302 = vmatpush.bf16.msra.mxu0 %v3021
        %3303 = vmatpush.bf16.msra.mxu0 %v3019
        %3304 = vmatpush.bf16.msra.mxu0 %v3017
        %3305 = vmatpush.bf16.msra.mxu0 %v3015
        %3306 = vmatpush.bf16.msra.mxu0 %v3013
        %3307 = vmatmul.bf16.gmra.mxu0 %v3294
        %v3308 = vpop.f32.mrf.mxu0
        %v3309 = vadd.f32 %v3255, %v3308
        %v3310 = vpop.f32.mrf.mxu0
        %v3311 = vadd.f32 %v3257, %v3310
        %3312 = vmatmul.bf16.gmra.mxu0 %v3297
        %v3313 = vpop.f32.mrf.mxu0
        %v3314 = vadd.f32 %v3260, %v3313
        %v3315 = vpop.f32.mrf.mxu0
        %v3316 = vadd.f32 %v3262, %v3315
        %3317 = vdwg.mxu0
        %3318 = vmatpush.bf16.msra.mxu0 0
        %3319 = vmatpush.bf16.msra.mxu0 0
        %3320 = vmatpush.bf16.msra.mxu0 %v3024
        %3321 = vmatpush.bf16.msra.mxu0 %v3022
        %3322 = vmatpush.bf16.msra.mxu0 %v3020
        %3323 = vmatpush.bf16.msra.mxu0 %v3018
        %3324 = vmatpush.bf16.msra.mxu0 %v3016
        %3325 = vmatpush.bf16.msra.mxu0 %v3014
        %3326 = vmatmul.bf16.gmra.mxu0 %v3294
        %v3327 = vpop.f32.mrf.mxu0
        %v3328 = vadd.f32 %v3274, %v3327
        %v3329 = vpop.f32.mrf.mxu0
        %v3330 = vadd.f32 %v3276, %v3329
        %3331 = vmatmul.bf16.gmra.mxu0 %v3297
        %v3332 = vpop.f32.mrf.mxu0
        %v3333 = vadd.f32 %v3279, %v3332
        %v3334 = vpop.f32.mrf.mxu0
        %v3335 = vadd.f32 %v3281, %v3334
        %3336 = vdwg.mxu0
        %v3337 = vpack.c.bf16 %v3195, %v3193
        %v3338 = vpack.c.bf16 %v3196, %v3194
        %v3339 = vpack.c.bf16 %v3199, %v3197
        %v3340 = vpack.c.bf16 %v3200, %v3198
        %v3341 = vpack.c.bf16 %v3203, %v3201
        %v3342 = vpack.c.bf16 %v3204, %v3202
        %v3343 = vpack.c.bf16 %v3207, %v3205
        %v3344 = vpack.c.bf16 %v3208, %v3206
        %v3345 = vpack.c.bf16 %v3211, %v3209
        %v3346 = vpack.c.bf16 %v3212, %v3210
        %v3347 = vpack.c.bf16 %v3215, %v3213
        %v3348 = vpack.c.bf16 %v3216, %v3214
        %v3353 = vunpack.c.l.b16 %v2941
        %v3354 = vunpack.c.l.b16 %v2942
        %v3355 = vunpack.c.l.b16 %v2943
        %v3356 = vunpack.c.l.b16 %v2944
        %v3357 = vpack.c.b16 %v3354, %v3353
        %v3358 = vpack.c.b16 %v3356, %v3355
        %v3360 = vsel %vm1688, %v3357, 0
        %v3363 = vsel %vm1688, %v3358, 0
        %3365 = vmatpush.bf16.msra.mxu0 0
        %3366 = vmatpush.bf16.msra.mxu0 0
        %3367 = vmatpush.bf16.msra.mxu0 %v3347
        %3368 = vmatpush.bf16.msra.mxu0 %v3345
        %3369 = vmatpush.bf16.msra.mxu0 %v3343
        %3370 = vmatpush.bf16.msra.mxu0 %v3341
        %3371 = vmatpush.bf16.msra.mxu0 %v3339
        %3372 = vmatpush.bf16.msra.mxu0 %v3337
        %3373 = vmatmul.bf16.gmra.mxu0 %v3360
        %v3374 = vpop.f32.mrf.mxu0
        %v3375 = vadd.f32 0.0, %v3374
        %v3376 = vpop.f32.mrf.mxu0
        %v3377 = vadd.f32 0.0, %v3376
        %3378 = vmatmul.bf16.gmra.mxu0 %v3363
        %v3379 = vpop.f32.mrf.mxu0
        %v3380 = vadd.f32 0.0, %v3379
        %v3381 = vpop.f32.mrf.mxu0
        %v3382 = vadd.f32 0.0, %v3381
        %3383 = vdwg.mxu0
        %3384 = vmatpush.bf16.msra.mxu0 0
        %3385 = vmatpush.bf16.msra.mxu0 0
        %3386 = vmatpush.bf16.msra.mxu0 %v3348
        %3387 = vmatpush.bf16.msra.mxu0 %v3346
        %3388 = vmatpush.bf16.msra.mxu0 %v3344
        %3389 = vmatpush.bf16.msra.mxu0 %v3342
        %3390 = vmatpush.bf16.msra.mxu0 %v3340
        %3391 = vmatpush.bf16.msra.mxu0 %v3338
        %3392 = vmatmul.bf16.gmra.mxu0 %v3360
        %v3393 = vpop.f32.mrf.mxu0
        %v3394 = vadd.f32 0.0, %v3393
        %v3395 = vpop.f32.mrf.mxu0
        %v3396 = vadd.f32 0.0, %v3395
        %3397 = vmatmul.bf16.gmra.mxu0 %v3363
        %v3398 = vpop.f32.mrf.mxu0
        %v3399 = vadd.f32 0.0, %v3398
        %v3400 = vpop.f32.mrf.mxu0
        %v3401 = vadd.f32 0.0, %v3400
        %3402 = vdwg.mxu0
        %v3403 = vadd.f32 %v3309, %v3375
        %v3404 = vadd.f32 %v3328, %v3394
        %v3405 = vadd.f32 %v3311, %v3377
        %v3406 = vadd.f32 %v3330, %v3396
        %v3407 = vadd.f32 %v3314, %v3380
        %v3408 = vadd.f32 %v3333, %v3399
        %v3409 = vadd.f32 %v3316, %v3382
        %v3410 = vadd.f32 %v3335, %v3401
        %3412 = vset.pattern.permute.xlu0 0
        %3413 = vperm.xlu0 %3412, %v2945
        %v3414 = vpop.permute.xlu0 %3413
        %3417 = vset.pattern.permute.xlu0 0
        %3418 = vperm.xlu0 %3417, %v2946
        %v3419 = vpop.permute.xlu0 %3418
        %3422 = vset.pattern.permute.xlu0 0
        %3423 = vperm.xlu0 %3422, %v2947
        %v3424 = vpop.permute.xlu0 %3423
        %3427 = vset.pattern.permute.xlu0 0
        %3428 = vperm.xlu0 %3427, %v2948
        %v3429 = vpop.permute.xlu0 %3428
        %v3431 = vadd.f32 %v3403, %v3414
        %v3432 = vadd.f32 %v3404, %v3414
        %v3433 = vadd.f32 %v3405, %v3419
        %v3434 = vadd.f32 %v3406, %v3419
        %v3435 = vadd.f32 %v3407, %v3424
        %v3436 = vadd.f32 %v3408, %v3424
        %v3437 = vadd.f32 %v3409, %v3429
        %v3438 = vadd.f32 %v3410, %v3429
        %v3439 = vadd.f32 %v3431, %v2411
        %v3440 = vadd.f32 %v3432, %v2412
        %v3441 = vadd.f32 %v3433, %v2413
        %v3442 = vadd.f32 %v3434, %v2414
        %v3443 = vadd.f32 %v3435, %v2415
        %v3444 = vadd.f32 %v3436, %v2416
        %v3445 = vadd.f32 %v3437, %v2417
        %v3446 = vadd.f32 %v3438, %v2418
        %v3447 = vmax.f32 %v3439, 0.0
        %v3448 = vmax.f32 %v3440, 0.0
        %v3449 = vmax.f32 %v3441, 0.0
        %v3450 = vmax.f32 %v3442, 0.0
        %v3451 = vmax.f32 %v3443, 0.0
        %v3452 = vmax.f32 %v3444, 0.0
        %v3453 = vmax.f32 %v3445, 0.0
        %v3454 = vmax.f32 %v3446, 0.0
        %v3455 = vld [vmem:[%s1 + $0x138] sm:$0xf]
        %v3456 = vld [vmem:[%s1 + $0x13c] sm:$0xf]
        %v3457 = vld [vmem:[%s1 + $0x140] sm:$0xf]
        %v3458 = vld [vmem:[%s1 + $0x144] sm:$0xf]
        %v3459 = vld [vmem:[%s1 + $0x148] sm:$0xf]
        %v3460 = vld [vmem:[%s1 + $0x14c] sm:$0xf]
        %v3461 = vld [vmem:[%s2 + $0xd0] sm:$0xff]
        %v3462 = vld [vmem:[%s2 + $0xd8] sm:$0xff]
        %3463 = vrot.lane.b32.xlu0 %v3447, 16
        %v3464 = vpop.permute.xlu0 %3463
        %3465 = vrot.lane.b32.xlu0 %v3449, 16
        %v3466 = vpop.permute.xlu0 %3465
        %3467 = vrot.lane.b32.xlu0 %v3451, 16
        %v3468 = vpop.permute.xlu0 %3467
        %3469 = vrot.lane.b32.xlu0 %v3453, 16
        %v3470 = vpop.permute.xlu0 %3469
        %3471 = vrot.lane.b32.xlu0 %v3448, 16
        %v3472 = vpop.permute.xlu0 %3471
        %3473 = vrot.lane.b32.xlu0 %v3450, 16
        %v3474 = vpop.permute.xlu0 %3473
        %3475 = vrot.lane.b32.xlu0 %v3452, 16
        %v3476 = vpop.permute.xlu0 %3475
        %3477 = vrot.lane.b32.xlu0 %v3454, 16
        %v3478 = vpop.permute.xlu0 %3477
        %v3479 = vsel %vm215, %v3464, %v3472
        %v3480 = vsel %vm215, %v3466, %v3474
        %v3481 = vsel %vm215, %v3468, %v3476
        %v3482 = vsel %vm215, %v3470, %v3478
        %v3483 = vsel %vm215, %v3472, %v3464
        %v3484 = vsel %vm215, %v3474, %v3466
        %v3485 = vsel %vm215, %v3476, %v3468
        %v3486 = vsel %vm215, %v3478, %v3470
        %3487 = vrot.lane.b32.xlu0 %v3447, 112
        %v3488 = vpop.permute.xlu0 %3487
        %3489 = vrot.lane.b32.xlu0 %v3449, 112
        %v3490 = vpop.permute.xlu0 %3489
        %3491 = vrot.lane.b32.xlu0 %v3451, 112
        %v3492 = vpop.permute.xlu0 %3491
        %3493 = vrot.lane.b32.xlu0 %v3453, 112
        %v3494 = vpop.permute.xlu0 %3493
        %3495 = vrot.lane.b32.xlu0 %v3448, 112
        %v3496 = vpop.permute.xlu0 %3495
        %3497 = vrot.lane.b32.xlu0 %v3450, 112
        %v3498 = vpop.permute.xlu0 %3497
        %3499 = vrot.lane.b32.xlu0 %v3452, 112
        %v3500 = vpop.permute.xlu0 %3499
        %3501 = vrot.lane.b32.xlu0 %v3454, 112
        %v3502 = vpop.permute.xlu0 %3501
        %v3503 = vsel %vm222, %v3488, %v3496
        %v3504 = vsel %vm222, %v3490, %v3498
        %v3505 = vsel %vm222, %v3492, %v3500
        %v3506 = vsel %vm222, %v3494, %v3502
        %v3507 = vsel %vm222, %v3496, %v3488
        %v3508 = vsel %vm222, %v3498, %v3490
        %v3509 = vsel %vm222, %v3500, %v3492
        %v3510 = vsel %vm222, %v3502, %v3494
        %v3511 = vsel %vm189, %v3503, %v3483
        %v3512 = vsel %vm190, %v3507, %v3479
        %v3513 = vsel %vm189, %v3504, %v3484
        %v3514 = vsel %vm190, %v3508, %v3480
        %v3515 = vsel %vm189, %v3505, %v3485
        %v3516 = vsel %vm190, %v3509, %v3481
        %v3517 = vsel %vm189, %v3506, %v3486
        %v3518 = vsel %vm190, %v3510, %v3482
        %v3519 = vsel %vm193, %v3483, %v3503
        %v3520 = vsel %vm194, %v3479, %v3507
        %v3521 = vsel %vm193, %v3484, %v3504
        %v3522 = vsel %vm194, %v3480, %v3508
        %v3523 = vsel %vm193, %v3485, %v3505
        %v3524 = vsel %vm194, %v3481, %v3509
        %v3525 = vsel %vm193, %v3486, %v3506
        %v3526 = vsel %vm194, %v3482, %v3510
        %v3527 = vpack.c.bf16 %v3513, %v3511
        %v3528 = vpack.c.bf16 %v3514, %v3512
        %v3529 = vpack.c.bf16 %v3517, %v3515
        %v3530 = vpack.c.bf16 %v3518, %v3516
        %v3531 = vpack.c.bf16 %v3449, %v3447
        %v3532 = vpack.c.bf16 %v3450, %v3448
        %v3533 = vpack.c.bf16 %v3453, %v3451
        %v3534 = vpack.c.bf16 %v3454, %v3452
        %v3535 = vpack.c.bf16 %v3521, %v3519
        %v3536 = vpack.c.bf16 %v3522, %v3520
        %v3537 = vpack.c.bf16 %v3525, %v3523
        %v3538 = vpack.c.bf16 %v3526, %v3524
        %3539 = vrot.lane.b32.xlu0 %v3511, 1
        %v3540 = vpop.permute.xlu0 %3539
        %3541 = vrot.lane.b32.xlu0 %v3513, 1
        %v3542 = vpop.permute.xlu0 %3541
        %3543 = vrot.lane.b32.xlu0 %v3515, 1
        %v3544 = vpop.permute.xlu0 %3543
        %3545 = vrot.lane.b32.xlu0 %v3517, 1
        %v3546 = vpop.permute.xlu0 %3545
        %3547 = vrot.lane.b32.xlu0 %v3447, 1
        %v3548 = vpop.permute.xlu0 %3547
        %3549 = vrot.lane.b32.xlu0 %v3449, 1
        %v3550 = vpop.permute.xlu0 %3549
        %3551 = vrot.lane.b32.xlu0 %v3451, 1
        %v3552 = vpop.permute.xlu0 %3551
        %3553 = vrot.lane.b32.xlu0 %v3453, 1
        %v3554 = vpop.permute.xlu0 %3553
        %3555 = vrot.lane.b32.xlu0 %v3519, 1
        %v3556 = vpop.permute.xlu0 %3555
        %3557 = vrot.lane.b32.xlu0 %v3521, 1
        %v3558 = vpop.permute.xlu0 %3557
        %3559 = vrot.lane.b32.xlu0 %v3523, 1
        %v3560 = vpop.permute.xlu0 %3559
        %3561 = vrot.lane.b32.xlu0 %v3525, 1
        %v3562 = vpop.permute.xlu0 %3561
        %3563 = vrot.lane.b32.xlu0 %v3512, 1
        %v3564 = vpop.permute.xlu0 %3563
        %3565 = vrot.lane.b32.xlu0 %v3514, 1
        %v3566 = vpop.permute.xlu0 %3565
        %3567 = vrot.lane.b32.xlu0 %v3516, 1
        %v3568 = vpop.permute.xlu0 %3567
        %3569 = vrot.lane.b32.xlu0 %v3518, 1
        %v3570 = vpop.permute.xlu0 %3569
        %3571 = vrot.lane.b32.xlu0 %v3448, 1
        %v3572 = vpop.permute.xlu0 %3571
        %3573 = vrot.lane.b32.xlu0 %v3450, 1
        %v3574 = vpop.permute.xlu0 %3573
        %3575 = vrot.lane.b32.xlu0 %v3452, 1
        %v3576 = vpop.permute.xlu0 %3575
        %3577 = vrot.lane.b32.xlu0 %v3454, 1
        %v3578 = vpop.permute.xlu0 %3577
        %3579 = vrot.lane.b32.xlu0 %v3520, 1
        %v3580 = vpop.permute.xlu0 %3579
        %3581 = vrot.lane.b32.xlu0 %v3522, 1
        %v3582 = vpop.permute.xlu0 %3581
        %3583 = vrot.lane.b32.xlu0 %v3524, 1
        %v3584 = vpop.permute.xlu0 %3583
        %3585 = vrot.lane.b32.xlu0 %v3526, 1
        %v3586 = vpop.permute.xlu0 %3585
        %v3587 = vsel %vm245, %v3540, %v3564
        %v3588 = vsel %vm245, %v3542, %v3566
        %v3589 = vsel %vm245, %v3544, %v3568
        %v3590 = vsel %vm245, %v3546, %v3570
        %v3591 = vsel %vm245, %v3548, %v3572
        %v3592 = vsel %vm245, %v3550, %v3574
        %v3593 = vsel %vm245, %v3552, %v3576
        %v3594 = vsel %vm245, %v3554, %v3578
        %v3595 = vsel %vm245, %v3556, %v3580
        %v3596 = vsel %vm245, %v3558, %v3582
        %v3597 = vsel %vm245, %v3560, %v3584
        %v3598 = vsel %vm245, %v3562, %v3586
        %v3599 = vsel %vm245, %v3564, %v3540
        %v3600 = vsel %vm245, %v3566, %v3542
        %v3601 = vsel %vm245, %v3568, %v3544
        %v3602 = vsel %vm245, %v3570, %v3546
        %v3603 = vsel %vm245, %v3572, %v3548
        %v3604 = vsel %vm245, %v3574, %v3550
        %v3605 = vsel %vm245, %v3576, %v3552
        %v3606 = vsel %vm245, %v3578, %v3554
        %v3607 = vsel %vm245, %v3580, %v3556
        %v3608 = vsel %vm245, %v3582, %v3558
        %v3609 = vsel %vm245, %v3584, %v3560
        %v3610 = vsel %vm245, %v3586, %v3562
        %3611 = vrot.lane.b32.xlu0 %v3511, 127
        %v3612 = vpop.permute.xlu0 %3611
        %3613 = vrot.lane.b32.xlu0 %v3513, 127
        %v3614 = vpop.permute.xlu0 %3613
        %3615 = vrot.lane.b32.xlu0 %v3515, 127
        %v3616 = vpop.permute.xlu0 %3615
        %3617 = vrot.lane.b32.xlu0 %v3517, 127
        %v3618 = vpop.permute.xlu0 %3617
        %3619 = vrot.lane.b32.xlu0 %v3447, 127
        %v3620 = vpop.permute.xlu0 %3619
        %3621 = vrot.lane.b32.xlu0 %v3449, 127
        %v3622 = vpop.permute.xlu0 %3621
        %3623 = vrot.lane.b32.xlu0 %v3451, 127
        %v3624 = vpop.permute.xlu0 %3623
        %3625 = vrot.lane.b32.xlu0 %v3453, 127
        %v3626 = vpop.permute.xlu0 %3625
        %3627 = vrot.lane.b32.xlu0 %v3519, 127
        %v3628 = vpop.permute.xlu0 %3627
        %3629 = vrot.lane.b32.xlu0 %v3521, 127
        %v3630 = vpop.permute.xlu0 %3629
        %3631 = vrot.lane.b32.xlu0 %v3523, 127
        %v3632 = vpop.permute.xlu0 %3631
        %3633 = vrot.lane.b32.xlu0 %v3525, 127
        %v3634 = vpop.permute.xlu0 %3633
        %3635 = vrot.lane.b32.xlu0 %v3512, 127
        %v3636 = vpop.permute.xlu0 %3635
        %3637 = vrot.lane.b32.xlu0 %v3514, 127
        %v3638 = vpop.permute.xlu0 %3637
        %3639 = vrot.lane.b32.xlu0 %v3516, 127
        %v3640 = vpop.permute.xlu0 %3639
        %3641 = vrot.lane.b32.xlu0 %v3518, 127
        %v3642 = vpop.permute.xlu0 %3641
        %3643 = vrot.lane.b32.xlu0 %v3448, 127
        %v3644 = vpop.permute.xlu0 %3643
        %3645 = vrot.lane.b32.xlu0 %v3450, 127
        %v3646 = vpop.permute.xlu0 %3645
        %3647 = vrot.lane.b32.xlu0 %v3452, 127
        %v3648 = vpop.permute.xlu0 %3647
        %3649 = vrot.lane.b32.xlu0 %v3454, 127
        %v3650 = vpop.permute.xlu0 %3649
        %3651 = vrot.lane.b32.xlu0 %v3520, 127
        %v3652 = vpop.permute.xlu0 %3651
        %3653 = vrot.lane.b32.xlu0 %v3522, 127
        %v3654 = vpop.permute.xlu0 %3653
        %3655 = vrot.lane.b32.xlu0 %v3524, 127
        %v3656 = vpop.permute.xlu0 %3655
        %3657 = vrot.lane.b32.xlu0 %v3526, 127
        %v3658 = vpop.permute.xlu0 %3657
        %v3659 = vsel %vm264, %v3612, %v3636
        %v3660 = vsel %vm264, %v3614, %v3638
        %v3661 = vsel %vm264, %v3616, %v3640
        %v3662 = vsel %vm264, %v3618, %v3642
        %v3663 = vsel %vm264, %v3620, %v3644
        %v3664 = vsel %vm264, %v3622, %v3646
        %v3665 = vsel %vm264, %v3624, %v3648
        %v3666 = vsel %vm264, %v3626, %v3650
        %v3667 = vsel %vm264, %v3628, %v3652
        %v3668 = vsel %vm264, %v3630, %v3654
        %v3669 = vsel %vm264, %v3632, %v3656
        %v3670 = vsel %vm264, %v3634, %v3658
        %v3671 = vsel %vm264, %v3636, %v3612
        %v3672 = vsel %vm264, %v3638, %v3614
        %v3673 = vsel %vm264, %v3640, %v3616
        %v3674 = vsel %vm264, %v3642, %v3618
        %v3675 = vsel %vm264, %v3644, %v3620
        %v3676 = vsel %vm264, %v3646, %v3622
        %v3677 = vsel %vm264, %v3648, %v3624
        %v3678 = vsel %vm264, %v3650, %v3626
        %v3679 = vsel %vm264, %v3652, %v3628
        %v3680 = vsel %vm264, %v3654, %v3630
        %v3681 = vsel %vm264, %v3656, %v3632
        %v3682 = vsel %vm264, %v3658, %v3634
        %v3683 = vsel %vm197, %v3659, %v3599
        %v3684 = vsel %vm198, %v3671, %v3587
        %v3685 = vsel %vm197, %v3660, %v3600
        %v3686 = vsel %vm198, %v3672, %v3588
        %v3687 = vsel %vm197, %v3661, %v3601
        %v3688 = vsel %vm198, %v3673, %v3589
        %v3689 = vsel %vm197, %v3662, %v3602
        %v3690 = vsel %vm198, %v3674, %v3590
        %v3691 = vsel %vm197, %v3663, %v3603
        %v3692 = vsel %vm198, %v3675, %v3591
        %v3693 = vsel %vm197, %v3664, %v3604
        %v3694 = vsel %vm198, %v3676, %v3592
        %v3695 = vsel %vm197, %v3665, %v3605
        %v3696 = vsel %vm198, %v3677, %v3593
        %v3697 = vsel %vm197, %v3666, %v3606
        %v3698 = vsel %vm198, %v3678, %v3594
        %v3699 = vsel %vm197, %v3667, %v3607
        %v3700 = vsel %vm198, %v3679, %v3595
        %v3701 = vsel %vm197, %v3668, %v3608
        %v3702 = vsel %vm198, %v3680, %v3596
        %v3703 = vsel %vm197, %v3669, %v3609
        %v3704 = vsel %vm198, %v3681, %v3597
        %v3705 = vsel %vm197, %v3670, %v3610
        %v3706 = vsel %vm198, %v3682, %v3598
        %v3707 = vsel %vm201, %v3599, %v3659
        %v3708 = vsel %vm202, %v3587, %v3671
        %v3709 = vsel %vm201, %v3600, %v3660
        %v3710 = vsel %vm202, %v3588, %v3672
        %v3711 = vsel %vm201, %v3601, %v3661
        %v3712 = vsel %vm202, %v3589, %v3673
        %v3713 = vsel %vm201, %v3602, %v3662
        %v3714 = vsel %vm202, %v3590, %v3674
        %v3715 = vsel %vm201, %v3603, %v3663
        %v3716 = vsel %vm202, %v3591, %v3675
        %v3717 = vsel %vm201, %v3604, %v3664
        %v3718 = vsel %vm202, %v3592, %v3676
        %v3719 = vsel %vm201, %v3605, %v3665
        %v3720 = vsel %vm202, %v3593, %v3677
        %v3721 = vsel %vm201, %v3606, %v3666
        %v3722 = vsel %vm202, %v3594, %v3678
        %v3723 = vsel %vm201, %v3607, %v3667
        %v3724 = vsel %vm202, %v3595, %v3679
        %v3725 = vsel %vm201, %v3608, %v3668
        %v3726 = vsel %vm202, %v3596, %v3680
        %v3727 = vsel %vm201, %v3609, %v3669
        %v3728 = vsel %vm202, %v3597, %v3681
        %v3729 = vsel %vm201, %v3610, %v3670
        %v3730 = vsel %vm202, %v3598, %v3682
        %v3731 = vpack.c.bf16 %v3685, %v3683
        %v3732 = vpack.c.bf16 %v3686, %v3684
        %v3733 = vpack.c.bf16 %v3689, %v3687
        %v3734 = vpack.c.bf16 %v3690, %v3688
        %v3735 = vpack.c.bf16 %v3693, %v3691
        %v3736 = vpack.c.bf16 %v3694, %v3692
        %v3737 = vpack.c.bf16 %v3697, %v3695
        %v3738 = vpack.c.bf16 %v3698, %v3696
        %v3739 = vpack.c.bf16 %v3701, %v3699
        %v3740 = vpack.c.bf16 %v3702, %v3700
        %v3741 = vpack.c.bf16 %v3705, %v3703
        %v3742 = vpack.c.bf16 %v3706, %v3704
        %v3745 = vunpack.c.l.b16 %v3455
        %v3746 = vunpack.c.l.b16 %v3456
        %v3747 = vpack.c.b16 %v3746, %v3745
        %v3749 = vsel %vm1688, %v3747, 0
        %3751 = vmatpush.bf16.msra.mxu0 0
        %3752 = vmatpush.bf16.msra.mxu0 0
        %3753 = vmatpush.bf16.msra.mxu0 %v3741
        %3754 = vmatpush.bf16.msra.mxu0 %v3739
        %3755 = vmatpush.bf16.msra.mxu0 %v3737
        %3756 = vmatpush.bf16.msra.mxu0 %v3735
        %3757 = vmatpush.bf16.msra.mxu0 %v3733
        %3758 = vmatpush.bf16.msra.mxu0 %v3731
        %3759 = vmatmul.bf16.gmra.mxu0 %v3749
        %v3760 = vpop.f32.mrf.mxu0
        %v3761 = vadd.f32 0.0, %v3760
        %v3762 = vpop.f32.mrf.mxu0
        %v3763 = vadd.f32 0.0, %v3762
        %3764 = vdwg.mxu0
        %3765 = vmatpush.bf16.msra.mxu0 0
        %3766 = vmatpush.bf16.msra.mxu0 0
        %3767 = vmatpush.bf16.msra.mxu0 %v3742
        %3768 = vmatpush.bf16.msra.mxu0 %v3740
        %3769 = vmatpush.bf16.msra.mxu0 %v3738
        %3770 = vmatpush.bf16.msra.mxu0 %v3736
        %3771 = vmatpush.bf16.msra.mxu0 %v3734
        %3772 = vmatpush.bf16.msra.mxu0 %v3732
        %3773 = vmatmul.bf16.gmra.mxu0 %v3749
        %v3774 = vpop.f32.mrf.mxu0
        %v3775 = vadd.f32 0.0, %v3774
        %v3776 = vpop.f32.mrf.mxu0
        %v3777 = vadd.f32 0.0, %v3776
        %3778 = vdwg.mxu0
        %v3781 = vunpack.c.l.b16 %v3457
        %v3782 = vunpack.c.l.b16 %v3458
        %v3783 = vpack.c.b16 %v3782, %v3781
        %v3785 = vsel %vm1688, %v3783, 0
        %3787 = vmatpush.bf16.msra.mxu0 0
        %3788 = vmatpush.bf16.msra.mxu0 0
        %3789 = vmatpush.bf16.msra.mxu0 %v3537
        %3790 = vmatpush.bf16.msra.mxu0 %v3535
        %3791 = vmatpush.bf16.msra.mxu0 %v3533
        %3792 = vmatpush.bf16.msra.mxu0 %v3531
        %3793 = vmatpush.bf16.msra.mxu0 %v3529
        %3794 = vmatpush.bf16.msra.mxu0 %v3527
        %3795 = vmatmul.bf16.gmra.mxu0 %v3785
        %v3796 = vpop.f32.mrf.mxu0
        %v3797 = vadd.f32 %v3761, %v3796
        %v3798 = vpop.f32.mrf.mxu0
        %v3799 = vadd.f32 %v3763, %v3798
        %3800 = vdwg.mxu0
        %3801 = vmatpush.bf16.msra.mxu0 0
        %3802 = vmatpush.bf16.msra.mxu0 0
        %3803 = vmatpush.bf16.msra.mxu0 %v3538
        %3804 = vmatpush.bf16.msra.mxu0 %v3536
        %3805 = vmatpush.bf16.msra.mxu0 %v3534
        %3806 = vmatpush.bf16.msra.mxu0 %v3532
        %3807 = vmatpush.bf16.msra.mxu0 %v3530
        %3808 = vmatpush.bf16.msra.mxu0 %v3528
        %3809 = vmatmul.bf16.gmra.mxu0 %v3785
        %v3810 = vpop.f32.mrf.mxu0
        %v3811 = vadd.f32 %v3775, %v3810
        %v3812 = vpop.f32.mrf.mxu0
        %v3813 = vadd.f32 %v3777, %v3812
        %3814 = vdwg.mxu0
        %v3815 = vpack.c.bf16 %v3709, %v3707
        %v3816 = vpack.c.bf16 %v3710, %v3708
        %v3817 = vpack.c.bf16 %v3713, %v3711
        %v3818 = vpack.c.bf16 %v3714, %v3712
        %v3819 = vpack.c.bf16 %v3717, %v3715
        %v3820 = vpack.c.bf16 %v3718, %v3716
        %v3821 = vpack.c.bf16 %v3721, %v3719
        %v3822 = vpack.c.bf16 %v3722, %v3720
        %v3823 = vpack.c.bf16 %v3725, %v3723
        %v3824 = vpack.c.bf16 %v3726, %v3724
        %v3825 = vpack.c.bf16 %v3729, %v3727
        %v3826 = vpack.c.bf16 %v3730, %v3728
        %v3829 = vunpack.c.l.b16 %v3459
        %v3830 = vunpack.c.l.b16 %v3460
        %v3831 = vpack.c.b16 %v3830, %v3829
        %v3833 = vsel %vm1688, %v3831, 0
        %3835 = vmatpush.bf16.msra.mxu0 0
        %3836 = vmatpush.bf16.msra.mxu0 0
        %3837 = vmatpush.bf16.msra.mxu0 %v3825
        %3838 = vmatpush.bf16.msra.mxu0 %v3823
        %3839 = vmatpush.bf16.msra.mxu0 %v3821
        %3840 = vmatpush.bf16.msra.mxu0 %v3819
        %3841 = vmatpush.bf16.msra.mxu0 %v3817
        %3842 = vmatpush.bf16.msra.mxu0 %v3815
        %3843 = vmatmul.bf16.gmra.mxu0 %v3833
        %v3844 = vpop.f32.mrf.mxu0
        %v3845 = vadd.f32 0.0, %v3844
        %v3846 = vpop.f32.mrf.mxu0
        %v3847 = vadd.f32 0.0, %v3846
        %3848 = vdwg.mxu0
        %3849 = vmatpush.bf16.msra.mxu0 0
        %3850 = vmatpush.bf16.msra.mxu0 0
        %3851 = vmatpush.bf16.msra.mxu0 %v3826
        %3852 = vmatpush.bf16.msra.mxu0 %v3824
        %3853 = vmatpush.bf16.msra.mxu0 %v3822
        %3854 = vmatpush.bf16.msra.mxu0 %v3820
        %3855 = vmatpush.bf16.msra.mxu0 %v3818
        %3856 = vmatpush.bf16.msra.mxu0 %v3816
        %3857 = vmatmul.bf16.gmra.mxu0 %v3833
        %v3858 = vpop.f32.mrf.mxu0
        %v3859 = vadd.f32 0.0, %v3858
        %v3860 = vpop.f32.mrf.mxu0
        %v3861 = vadd.f32 0.0, %v3860
        %3862 = vdwg.mxu0
        %v3863 = vadd.f32 %v3797, %v3845
        %v3864 = vadd.f32 %v3811, %v3859
        %v3865 = vadd.f32 %v3799, %v3847
        %v3866 = vadd.f32 %v3813, %v3861
        %3868 = vset.pattern.permute.xlu0 0
        %3869 = vperm.xlu0 %3868, %v3461
        %v3870 = vpop.permute.xlu0 %3869
        %3873 = vset.pattern.permute.xlu0 0
        %3874 = vperm.xlu0 %3873, %v3462
        %v3875 = vpop.permute.xlu0 %3874
        %v3877 = vadd.f32 %v3863, %v3870
        %v3878 = vadd.f32 %v3864, %v3870
        %v3879 = vadd.f32 %v3865, %v3875
        %v3880 = vadd.f32 %v3866, %v3875
        %v3881 = vmax.f32 %v3877, 0.0
        %v3882 = vmax.f32 %v3878, 0.0
        %v3883 = vmax.f32 %v3879, 0.0
        %v3884 = vmax.f32 %v3880, 0.0
        %v3885 = vld [vmem:[%s1 + $0x150] sm:$0xf]
        %v3886 = vld [vmem:[%s1 + $0x154] sm:$0xf]
        %v3887 = vld [vmem:[%s1 + $0x158] sm:$0xf]
        %v3888 = vld [vmem:[%s1 + $0x15c] sm:$0xf]
        %v3889 = vld [vmem:[%s1 + $0x160] sm:$0xf]
        %v3890 = vld [vmem:[%s1 + $0x164] sm:$0xf]
        %v3891 = vld [vmem:[%s2 + $0xe0] sm:$0xff]
        %v3892 = vld [vmem:[%s2 + $0xe8] sm:$0xff]
        %3893 = vrot.lane.b32.xlu0 %v3881, 16
        %v3894 = vpop.permute.xlu0 %3893
        %3895 = vrot.lane.b32.xlu0 %v3883, 16
        %v3896 = vpop.permute.xlu0 %3895
        %3897 = vrot.lane.b32.xlu0 %v3882, 16
        %v3898 = vpop.permute.xlu0 %3897
        %3899 = vrot.lane.b32.xlu0 %v3884, 16
        %v3900 = vpop.permute.xlu0 %3899
        %v3901 = vsel %vm215, %v3894, %v3898
        %v3902 = vsel %vm215, %v3896, %v3900
        %v3903 = vsel %vm215, %v3898, %v3894
        %v3904 = vsel %vm215, %v3900, %v3896
        %3905 = vrot.lane.b32.xlu0 %v3881, 112
        %v3906 = vpop.permute.xlu0 %3905
        %3907 = vrot.lane.b32.xlu0 %v3883, 112
        %v3908 = vpop.permute.xlu0 %3907
        %3909 = vrot.lane.b32.xlu0 %v3882, 112
        %v3910 = vpop.permute.xlu0 %3909
        %3911 = vrot.lane.b32.xlu0 %v3884, 112
        %v3912 = vpop.permute.xlu0 %3911
        %v3913 = vsel %vm222, %v3906, %v3910
        %v3914 = vsel %vm222, %v3908, %v3912
        %v3915 = vsel %vm222, %v3910, %v3906
        %v3916 = vsel %vm222, %v3912, %v3908
        %v3917 = vsel %vm189, %v3913, %v3903
        %v3918 = vsel %vm190, %v3915, %v3901
        %v3919 = vsel %vm189, %v3914, %v3904
        %v3920 = vsel %vm190, %v3916, %v3902
        %v3921 = vsel %vm193, %v3903, %v3913
        %v3922 = vsel %vm194, %v3901, %v3915
        %v3923 = vsel %vm193, %v3904, %v3914
        %v3924 = vsel %vm194, %v3902, %v3916
        %v3925 = vpack.c.bf16 %v3919, %v3917
        %v3926 = vpack.c.bf16 %v3920, %v3918
        %v3927 = vpack.c.bf16 %v3883, %v3881
        %v3928 = vpack.c.bf16 %v3884, %v3882
        %v3929 = vpack.c.bf16 %v3923, %v3921
        %v3930 = vpack.c.bf16 %v3924, %v3922
        %3931 = vrot.lane.b32.xlu0 %v3917, 1
        %v3932 = vpop.permute.xlu0 %3931
        %3933 = vrot.lane.b32.xlu0 %v3919, 1
        %v3934 = vpop.permute.xlu0 %3933
        %3935 = vrot.lane.b32.xlu0 %v3881, 1
        %v3936 = vpop.permute.xlu0 %3935
        %3937 = vrot.lane.b32.xlu0 %v3883, 1
        %v3938 = vpop.permute.xlu0 %3937
        %3939 = vrot.lane.b32.xlu0 %v3921, 1
        %v3940 = vpop.permute.xlu0 %3939
        %3941 = vrot.lane.b32.xlu0 %v3923, 1
        %v3942 = vpop.permute.xlu0 %3941
        %3943 = vrot.lane.b32.xlu0 %v3918, 1
        %v3944 = vpop.permute.xlu0 %3943
        %3945 = vrot.lane.b32.xlu0 %v3920, 1
        %v3946 = vpop.permute.xlu0 %3945
        %3947 = vrot.lane.b32.xlu0 %v3882, 1
        %v3948 = vpop.permute.xlu0 %3947
        %3949 = vrot.lane.b32.xlu0 %v3884, 1
        %v3950 = vpop.permute.xlu0 %3949
        %3951 = vrot.lane.b32.xlu0 %v3922, 1
        %v3952 = vpop.permute.xlu0 %3951
        %3953 = vrot.lane.b32.xlu0 %v3924, 1
        %v3954 = vpop.permute.xlu0 %3953
        %v3955 = vsel %vm245, %v3932, %v3944
        %v3956 = vsel %vm245, %v3934, %v3946
        %v3957 = vsel %vm245, %v3936, %v3948
        %v3958 = vsel %vm245, %v3938, %v3950
        %v3959 = vsel %vm245, %v3940, %v3952
        %v3960 = vsel %vm245, %v3942, %v3954
        %v3961 = vsel %vm245, %v3944, %v3932
        %v3962 = vsel %vm245, %v3946, %v3934
        %v3963 = vsel %vm245, %v3948, %v3936
        %v3964 = vsel %vm245, %v3950, %v3938
        %v3965 = vsel %vm245, %v3952, %v3940
        %v3966 = vsel %vm245, %v3954, %v3942
        %3967 = vrot.lane.b32.xlu0 %v3917, 127
        %v3968 = vpop.permute.xlu0 %3967
        %3969 = vrot.lane.b32.xlu0 %v3919, 127
        %v3970 = vpop.permute.xlu0 %3969
        %3971 = vrot.lane.b32.xlu0 %v3881, 127
        %v3972 = vpop.permute.xlu0 %3971
        %3973 = vrot.lane.b32.xlu0 %v3883, 127
        %v3974 = vpop.permute.xlu0 %3973
        %3975 = vrot.lane.b32.xlu0 %v3921, 127
        %v3976 = vpop.permute.xlu0 %3975
        %3977 = vrot.lane.b32.xlu0 %v3923, 127
        %v3978 = vpop.permute.xlu0 %3977
        %3979 = vrot.lane.b32.xlu0 %v3918, 127
        %v3980 = vpop.permute.xlu0 %3979
        %3981 = vrot.lane.b32.xlu0 %v3920, 127
        %v3982 = vpop.permute.xlu0 %3981
        %3983 = vrot.lane.b32.xlu0 %v3882, 127
        %v3984 = vpop.permute.xlu0 %3983
        %3985 = vrot.lane.b32.xlu0 %v3884, 127
        %v3986 = vpop.permute.xlu0 %3985
        %3987 = vrot.lane.b32.xlu0 %v3922, 127
        %v3988 = vpop.permute.xlu0 %3987
        %3989 = vrot.lane.b32.xlu0 %v3924, 127
        %v3990 = vpop.permute.xlu0 %3989
        %v3991 = vsel %vm264, %v3968, %v3980
        %v3992 = vsel %vm264, %v3970, %v3982
        %v3993 = vsel %vm264, %v3972, %v3984
        %v3994 = vsel %vm264, %v3974, %v3986
        %v3995 = vsel %vm264, %v3976, %v3988
        %v3996 = vsel %vm264, %v3978, %v3990
        %v3997 = vsel %vm264, %v3980, %v3968
        %v3998 = vsel %vm264, %v3982, %v3970
        %v3999 = vsel %vm264, %v3984, %v3972
        %v4000 = vsel %vm264, %v3986, %v3974
        %v4001 = vsel %vm264, %v3988, %v3976
        %v4002 = vsel %vm264, %v3990, %v3978
        %v4003 = vsel %vm197, %v3991, %v3961
        %v4004 = vsel %vm198, %v3997, %v3955
        %v4005 = vsel %vm197, %v3992, %v3962
        %v4006 = vsel %vm198, %v3998, %v3956
        %v4007 = vsel %vm197, %v3993, %v3963
        %v4008 = vsel %vm198, %v3999, %v3957
        %v4009 = vsel %vm197, %v3994, %v3964
        %v4010 = vsel %vm198, %v4000, %v3958
        %v4011 = vsel %vm197, %v3995, %v3965
        %v4012 = vsel %vm198, %v4001, %v3959
        %v4013 = vsel %vm197, %v3996, %v3966
        %v4014 = vsel %vm198, %v4002, %v3960
        %v4015 = vsel %vm201, %v3961, %v3991
        %v4016 = vsel %vm202, %v3955, %v3997
        %v4017 = vsel %vm201, %v3962, %v3992
        %v4018 = vsel %vm202, %v3956, %v3998
        %v4019 = vsel %vm201, %v3963, %v3993
        %v4020 = vsel %vm202, %v3957, %v3999
        %v4021 = vsel %vm201, %v3964, %v3994
        %v4022 = vsel %vm202, %v3958, %v4000
        %v4023 = vsel %vm201, %v3965, %v3995
        %v4024 = vsel %vm202, %v3959, %v4001
        %v4025 = vsel %vm201, %v3966, %v3996
        %v4026 = vsel %vm202, %v3960, %v4002
        %v4027 = vpack.c.bf16 %v4005, %v4003
        %v4028 = vpack.c.bf16 %v4006, %v4004
        %v4029 = vpack.c.bf16 %v4009, %v4007
        %v4030 = vpack.c.bf16 %v4010, %v4008
        %v4031 = vpack.c.bf16 %v4013, %v4011
        %v4032 = vpack.c.bf16 %v4014, %v4012
        %v4035 = vunpack.c.l.b16 %v3885
        %v4036 = vunpack.c.l.b16 %v3886
        %v4037 = vpack.c.b16 %v4036, %v4035
        %v4039 = vsel %vm594, %v4037, 0
        %4041 = vmatpush.bf16.msra.mxu0 0
        %4042 = vmatpush.bf16.msra.mxu0 0
        %4043 = vmatpush.bf16.msra.mxu0 0
        %4044 = vmatpush.bf16.msra.mxu0 0
        %4045 = vmatpush.bf16.msra.mxu0 0
        %4046 = vmatpush.bf16.msra.mxu0 %v4031
        %4047 = vmatpush.bf16.msra.mxu0 %v4029
        %4048 = vmatpush.bf16.msra.mxu0 %v4027
        %4049 = vmatmul.bf16.gmra.mxu0 %v4039
        %v4050 = vpop.f32.mrf.mxu0
        %v4051 = vadd.f32 0.0, %v4050
        %v4052 = vpop.f32.mrf.mxu0
        %v4053 = vadd.f32 0.0, %v4052
        %4054 = vdwg.mxu0
        %4055 = vmatpush.bf16.msra.mxu0 0
        %4056 = vmatpush.bf16.msra.mxu0 0
        %4057 = vmatpush.bf16.msra.mxu0 0
        %4058 = vmatpush.bf16.msra.mxu0 0
        %4059 = vmatpush.bf16.msra.mxu0 0
        %4060 = vmatpush.bf16.msra.mxu0 %v4032
        %4061 = vmatpush.bf16.msra.mxu0 %v4030
        %4062 = vmatpush.bf16.msra.mxu0 %v4028
        %4063 = vmatmul.bf16.gmra.mxu0 %v4039
        %v4064 = vpop.f32.mrf.mxu0
        %v4065 = vadd.f32 0.0, %v4064
        %v4066 = vpop.f32.mrf.mxu0
        %v4067 = vadd.f32 0.0, %v4066
        %4068 = vdwg.mxu0
        %v4071 = vunpack.c.l.b16 %v3887
        %v4072 = vunpack.c.l.b16 %v3888
        %v4073 = vpack.c.b16 %v4072, %v4071
        %v4075 = vsel %vm594, %v4073, 0
        %4077 = vmatpush.bf16.msra.mxu0 0
        %4078 = vmatpush.bf16.msra.mxu0 0
        %4079 = vmatpush.bf16.msra.mxu0 0
        %4080 = vmatpush.bf16.msra.mxu0 0
        %4081 = vmatpush.bf16.msra.mxu0 0
        %4082 = vmatpush.bf16.msra.mxu0 %v3929
        %4083 = vmatpush.bf16.msra.mxu0 %v3927
        %4084 = vmatpush.bf16.msra.mxu0 %v3925
        %4085 = vmatmul.bf16.gmra.mxu0 %v4075
        %v4086 = vpop.f32.mrf.mxu0
        %v4087 = vadd.f32 %v4051, %v4086
        %v4088 = vpop.f32.mrf.mxu0
        %v4089 = vadd.f32 %v4053, %v4088
        %4090 = vdwg.mxu0
        %4091 = vmatpush.bf16.msra.mxu0 0
        %4092 = vmatpush.bf16.msra.mxu0 0
        %4093 = vmatpush.bf16.msra.mxu0 0
        %4094 = vmatpush.bf16.msra.mxu0 0
        %4095 = vmatpush.bf16.msra.mxu0 0
        %4096 = vmatpush.bf16.msra.mxu0 %v3930
        %4097 = vmatpush.bf16.msra.mxu0 %v3928
        %4098 = vmatpush.bf16.msra.mxu0 %v3926
        %4099 = vmatmul.bf16.gmra.mxu0 %v4075
        %v4100 = vpop.f32.mrf.mxu0
        %v4101 = vadd.f32 %v4065, %v4100
        %v4102 = vpop.f32.mrf.mxu0
        %v4103 = vadd.f32 %v4067, %v4102
        %4104 = vdwg.mxu0
        %v4105 = vpack.c.bf16 %v4017, %v4015
        %v4106 = vpack.c.bf16 %v4018, %v4016
        %v4107 = vpack.c.bf16 %v4021, %v4019
        %v4108 = vpack.c.bf16 %v4022, %v4020
        %v4109 = vpack.c.bf16 %v4025, %v4023
        %v4110 = vpack.c.bf16 %v4026, %v4024
        %v4113 = vunpack.c.l.b16 %v3889
        %v4114 = vunpack.c.l.b16 %v3890
        %v4115 = vpack.c.b16 %v4114, %v4113
        %v4117 = vsel %vm594, %v4115, 0
        %4119 = vmatpush.bf16.msra.mxu0 0
        %4120 = vmatpush.bf16.msra.mxu0 0
        %4121 = vmatpush.bf16.msra.mxu0 0
        %4122 = vmatpush.bf16.msra.mxu0 0
        %4123 = vmatpush.bf16.msra.mxu0 0
        %4124 = vmatpush.bf16.msra.mxu0 %v4109
        %4125 = vmatpush.bf16.msra.mxu0 %v4107
        %4126 = vmatpush.bf16.msra.mxu0 %v4105
        %4127 = vmatmul.bf16.gmra.mxu0 %v4117
        %v4128 = vpop.f32.mrf.mxu0
        %v4129 = vadd.f32 0.0, %v4128
        %v4130 = vpop.f32.mrf.mxu0
        %v4131 = vadd.f32 0.0, %v4130
        %4132 = vdwg.mxu0
        %4133 = vmatpush.bf16.msra.mxu0 0
        %4134 = vmatpush.bf16.msra.mxu0 0
        %4135 = vmatpush.bf16.msra.mxu0 0
        %4136 = vmatpush.bf16.msra.mxu0 0
        %4137 = vmatpush.bf16.msra.mxu0 0
        %4138 = vmatpush.bf16.msra.mxu0 %v4110
        %4139 = vmatpush.bf16.msra.mxu0 %v4108
        %4140 = vmatpush.bf16.msra.mxu0 %v4106
        %4141 = vmatmul.bf16.gmra.mxu0 %v4117
        %v4142 = vpop.f32.mrf.mxu0
        %v4143 = vadd.f32 0.0, %v4142
        %v4144 = vpop.f32.mrf.mxu0
        %v4145 = vadd.f32 0.0, %v4144
        %4146 = vdwg.mxu0
        %v4147 = vadd.f32 %v4087, %v4129
        %v4148 = vadd.f32 %v4101, %v4143
        %v4149 = vadd.f32 %v4089, %v4131
        %v4150 = vadd.f32 %v4103, %v4145
        %4152 = vset.pattern.permute.xlu0 0
        %4153 = vperm.xlu0 %4152, %v3891
        %v4154 = vpop.permute.xlu0 %4153
        %4157 = vset.pattern.permute.xlu0 0
        %4158 = vperm.xlu0 %4157, %v3892
        %v4159 = vpop.permute.xlu0 %4158
        %v4161 = vadd.f32 %v4147, %v4154
        %v4162 = vadd.f32 %v4148, %v4154
        %v4163 = vadd.f32 %v4149, %v4159
        %v4164 = vadd.f32 %v4150, %v4159
        %v4165 = vmax.f32 %v4161, 0.0
        %v4166 = vmax.f32 %v4162, 0.0
        %v4167 = vmax.f32 %v4163, 0.0
        %v4168 = vmax.f32 %v4164, 0.0
        %v4169 = vld [vmem:[%s1 + $0x168] sm:$0xf]
        %v4170 = vld [vmem:[%s1 + $0x16c] sm:$0xf]
        %v4171 = vld [vmem:[%s1 + $0x170] sm:$0xf]
        %v4172 = vld [vmem:[%s1 + $0x174] sm:$0xf]
        %v4173 = vld [vmem:[%s1 + $0x178] sm:$0xf]
        %v4174 = vld [vmem:[%s1 + $0x17c] sm:$0xf]
        %v4175 = vld [vmem:[%s2 + $0xf0] sm:$0xff]
        %v4176 = vld [vmem:[%s2 + $0xf8] sm:$0xff]
        %4177 = vrot.lane.b32.xlu0 %v4165, 16
        %v4178 = vpop.permute.xlu0 %4177
        %4179 = vrot.lane.b32.xlu0 %v4167, 16
        %v4180 = vpop.permute.xlu0 %4179
        %4181 = vrot.lane.b32.xlu0 %v4166, 16
        %v4182 = vpop.permute.xlu0 %4181
        %4183 = vrot.lane.b32.xlu0 %v4168, 16
        %v4184 = vpop.permute.xlu0 %4183
        %v4185 = vsel %vm215, %v4178, %v4182
        %v4186 = vsel %vm215, %v4180, %v4184
        %v4187 = vsel %vm215, %v4182, %v4178
        %v4188 = vsel %vm215, %v4184, %v4180
        %4189 = vrot.lane.b32.xlu0 %v4165, 112
        %v4190 = vpop.permute.xlu0 %4189
        %4191 = vrot.lane.b32.xlu0 %v4167, 112
        %v4192 = vpop.permute.xlu0 %4191
        %4193 = vrot.lane.b32.xlu0 %v4166, 112
        %v4194 = vpop.permute.xlu0 %4193
        %4195 = vrot.lane.b32.xlu0 %v4168, 112
        %v4196 = vpop.permute.xlu0 %4195
        %v4197 = vsel %vm222, %v4190, %v4194
        %v4198 = vsel %vm222, %v4192, %v4196
        %v4199 = vsel %vm222, %v4194, %v4190
        %v4200 = vsel %vm222, %v4196, %v4192
        %v4201 = vsel %vm189, %v4197, %v4187
        %v4202 = vsel %vm190, %v4199, %v4185
        %v4203 = vsel %vm189, %v4198, %v4188
        %v4204 = vsel %vm190, %v4200, %v4186
        %v4205 = vsel %vm193, %v4187, %v4197
        %v4206 = vsel %vm194, %v4185, %v4199
        %v4207 = vsel %vm193, %v4188, %v4198
        %v4208 = vsel %vm194, %v4186, %v4200
        %v4209 = vpack.c.bf16 %v4203, %v4201
        %v4210 = vpack.c.bf16 %v4204, %v4202
        %v4211 = vpack.c.bf16 %v4167, %v4165
        %v4212 = vpack.c.bf16 %v4168, %v4166
        %v4213 = vpack.c.bf16 %v4207, %v4205
        %v4214 = vpack.c.bf16 %v4208, %v4206
        %4215 = vrot.lane.b32.xlu0 %v4201, 1
        %v4216 = vpop.permute.xlu0 %4215
        %4217 = vrot.lane.b32.xlu0 %v4203, 1
        %v4218 = vpop.permute.xlu0 %4217
        %4219 = vrot.lane.b32.xlu0 %v4165, 1
        %v4220 = vpop.permute.xlu0 %4219
        %4221 = vrot.lane.b32.xlu0 %v4167, 1
        %v4222 = vpop.permute.xlu0 %4221
        %4223 = vrot.lane.b32.xlu0 %v4205, 1
        %v4224 = vpop.permute.xlu0 %4223
        %4225 = vrot.lane.b32.xlu0 %v4207, 1
        %v4226 = vpop.permute.xlu0 %4225
        %4227 = vrot.lane.b32.xlu0 %v4202, 1
        %v4228 = vpop.permute.xlu0 %4227
        %4229 = vrot.lane.b32.xlu0 %v4204, 1
        %v4230 = vpop.permute.xlu0 %4229
        %4231 = vrot.lane.b32.xlu0 %v4166, 1
        %v4232 = vpop.permute.xlu0 %4231
        %4233 = vrot.lane.b32.xlu0 %v4168, 1
        %v4234 = vpop.permute.xlu0 %4233
        %4235 = vrot.lane.b32.xlu0 %v4206, 1
        %v4236 = vpop.permute.xlu0 %4235
        %4237 = vrot.lane.b32.xlu0 %v4208, 1
        %v4238 = vpop.permute.xlu0 %4237
        %v4239 = vsel %vm245, %v4216, %v4228
        %v4240 = vsel %vm245, %v4218, %v4230
        %v4241 = vsel %vm245, %v4220, %v4232
        %v4242 = vsel %vm245, %v4222, %v4234
        %v4243 = vsel %vm245, %v4224, %v4236
        %v4244 = vsel %vm245, %v4226, %v4238
        %v4245 = vsel %vm245, %v4228, %v4216
        %v4246 = vsel %vm245, %v4230, %v4218
        %v4247 = vsel %vm245, %v4232, %v4220
        %v4248 = vsel %vm245, %v4234, %v4222
        %v4249 = vsel %vm245, %v4236, %v4224
        %v4250 = vsel %vm245, %v4238, %v4226
        %4251 = vrot.lane.b32.xlu0 %v4201, 127
        %v4252 = vpop.permute.xlu0 %4251
        %4253 = vrot.lane.b32.xlu0 %v4203, 127
        %v4254 = vpop.permute.xlu0 %4253
        %4255 = vrot.lane.b32.xlu0 %v4165, 127
        %v4256 = vpop.permute.xlu0 %4255
        %4257 = vrot.lane.b32.xlu0 %v4167, 127
        %v4258 = vpop.permute.xlu0 %4257
        %4259 = vrot.lane.b32.xlu0 %v4205, 127
        %v4260 = vpop.permute.xlu0 %4259
        %4261 = vrot.lane.b32.xlu0 %v4207, 127
        %v4262 = vpop.permute.xlu0 %4261
        %4263 = vrot.lane.b32.xlu0 %v4202, 127
        %v4264 = vpop.permute.xlu0 %4263
        %4265 = vrot.lane.b32.xlu0 %v4204, 127
        %v4266 = vpop.permute.xlu0 %4265
        %4267 = vrot.lane.b32.xlu0 %v4166, 127
        %v4268 = vpop.permute.xlu0 %4267
        %4269 = vrot.lane.b32.xlu0 %v4168, 127
        %v4270 = vpop.permute.xlu0 %4269
        %4271 = vrot.lane.b32.xlu0 %v4206, 127
        %v4272 = vpop.permute.xlu0 %4271
        %4273 = vrot.lane.b32.xlu0 %v4208, 127
        %v4274 = vpop.permute.xlu0 %4273
        %v4275 = vsel %vm264, %v4252, %v4264
        %v4276 = vsel %vm264, %v4254, %v4266
        %v4277 = vsel %vm264, %v4256, %v4268
        %v4278 = vsel %vm264, %v4258, %v4270
        %v4279 = vsel %vm264, %v4260, %v4272
        %v4280 = vsel %vm264, %v4262, %v4274
        %v4281 = vsel %vm264, %v4264, %v4252
        %v4282 = vsel %vm264, %v4266, %v4254
        %v4283 = vsel %vm264, %v4268, %v4256
        %v4284 = vsel %vm264, %v4270, %v4258
        %v4285 = vsel %vm264, %v4272, %v4260
        %v4286 = vsel %vm264, %v4274, %v4262
        %v4287 = vsel %vm197, %v4275, %v4245
        %v4288 = vsel %vm198, %v4281, %v4239
        %v4289 = vsel %vm197, %v4276, %v4246
        %v4290 = vsel %vm198, %v4282, %v4240
        %v4291 = vsel %vm197, %v4277, %v4247
        %v4292 = vsel %vm198, %v4283, %v4241
        %v4293 = vsel %vm197, %v4278, %v4248
        %v4294 = vsel %vm198, %v4284, %v4242
        %v4295 = vsel %vm197, %v4279, %v4249
        %v4296 = vsel %vm198, %v4285, %v4243
        %v4297 = vsel %vm197, %v4280, %v4250
        %v4298 = vsel %vm198, %v4286, %v4244
        %v4299 = vsel %vm201, %v4245, %v4275
        %v4300 = vsel %vm202, %v4239, %v4281
        %v4301 = vsel %vm201, %v4246, %v4276
        %v4302 = vsel %vm202, %v4240, %v4282
        %v4303 = vsel %vm201, %v4247, %v4277
        %v4304 = vsel %vm202, %v4241, %v4283
        %v4305 = vsel %vm201, %v4248, %v4278
        %v4306 = vsel %vm202, %v4242, %v4284
        %v4307 = vsel %vm201, %v4249, %v4279
        %v4308 = vsel %vm202, %v4243, %v4285
        %v4309 = vsel %vm201, %v4250, %v4280
        %v4310 = vsel %vm202, %v4244, %v4286
        %v4311 = vpack.c.bf16 %v4289, %v4287
        %v4312 = vpack.c.bf16 %v4290, %v4288
        %v4313 = vpack.c.bf16 %v4293, %v4291
        %v4314 = vpack.c.bf16 %v4294, %v4292
        %v4315 = vpack.c.bf16 %v4297, %v4295
        %v4316 = vpack.c.bf16 %v4298, %v4296
        %v4319 = vunpack.c.l.b16 %v4169
        %v4320 = vunpack.c.l.b16 %v4170
        %v4321 = vpack.c.b16 %v4320, %v4319
        %v4323 = vsel %vm594, %v4321, 0
        %4325 = vmatpush.bf16.msra.mxu0 0
        %4326 = vmatpush.bf16.msra.mxu0 0
        %4327 = vmatpush.bf16.msra.mxu0 0
        %4328 = vmatpush.bf16.msra.mxu0 0
        %4329 = vmatpush.bf16.msra.mxu0 0
        %4330 = vmatpush.bf16.msra.mxu0 %v4315
        %4331 = vmatpush.bf16.msra.mxu0 %v4313
        %4332 = vmatpush.bf16.msra.mxu0 %v4311
        %4333 = vmatmul.bf16.gmra.mxu0 %v4323
        %v4334 = vpop.f32.mrf.mxu0
        %v4335 = vadd.f32 0.0, %v4334
        %v4336 = vpop.f32.mrf.mxu0
        %v4337 = vadd.f32 0.0, %v4336
        %4338 = vdwg.mxu0
        %4339 = vmatpush.bf16.msra.mxu0 0
        %4340 = vmatpush.bf16.msra.mxu0 0
        %4341 = vmatpush.bf16.msra.mxu0 0
        %4342 = vmatpush.bf16.msra.mxu0 0
        %4343 = vmatpush.bf16.msra.mxu0 0
        %4344 = vmatpush.bf16.msra.mxu0 %v4316
        %4345 = vmatpush.bf16.msra.mxu0 %v4314
        %4346 = vmatpush.bf16.msra.mxu0 %v4312
        %4347 = vmatmul.bf16.gmra.mxu0 %v4323
        %v4348 = vpop.f32.mrf.mxu0
        %v4349 = vadd.f32 0.0, %v4348
        %v4350 = vpop.f32.mrf.mxu0
        %v4351 = vadd.f32 0.0, %v4350
        %4352 = vdwg.mxu0
        %v4355 = vunpack.c.l.b16 %v4171
        %v4356 = vunpack.c.l.b16 %v4172
        %v4357 = vpack.c.b16 %v4356, %v4355
        %v4359 = vsel %vm594, %v4357, 0
        %4361 = vmatpush.bf16.msra.mxu0 0
        %4362 = vmatpush.bf16.msra.mxu0 0
        %4363 = vmatpush.bf16.msra.mxu0 0
        %4364 = vmatpush.bf16.msra.mxu0 0
        %4365 = vmatpush.bf16.msra.mxu0 0
        %4366 = vmatpush.bf16.msra.mxu0 %v4213
        %4367 = vmatpush.bf16.msra.mxu0 %v4211
        %4368 = vmatpush.bf16.msra.mxu0 %v4209
        %4369 = vmatmul.bf16.gmra.mxu0 %v4359
        %v4370 = vpop.f32.mrf.mxu0
        %v4371 = vadd.f32 %v4335, %v4370
        %v4372 = vpop.f32.mrf.mxu0
        %v4373 = vadd.f32 %v4337, %v4372
        %4374 = vdwg.mxu0
        %4375 = vmatpush.bf16.msra.mxu0 0
        %4376 = vmatpush.bf16.msra.mxu0 0
        %4377 = vmatpush.bf16.msra.mxu0 0
        %4378 = vmatpush.bf16.msra.mxu0 0
        %4379 = vmatpush.bf16.msra.mxu0 0
        %4380 = vmatpush.bf16.msra.mxu0 %v4214
        %4381 = vmatpush.bf16.msra.mxu0 %v4212
        %4382 = vmatpush.bf16.msra.mxu0 %v4210
        %4383 = vmatmul.bf16.gmra.mxu0 %v4359
        %v4384 = vpop.f32.mrf.mxu0
        %v4385 = vadd.f32 %v4349, %v4384
        %v4386 = vpop.f32.mrf.mxu0
        %v4387 = vadd.f32 %v4351, %v4386
        %4388 = vdwg.mxu0
        %v4389 = vpack.c.bf16 %v4301, %v4299
        %v4390 = vpack.c.bf16 %v4302, %v4300
        %v4391 = vpack.c.bf16 %v4305, %v4303
        %v4392 = vpack.c.bf16 %v4306, %v4304
        %v4393 = vpack.c.bf16 %v4309, %v4307
        %v4394 = vpack.c.bf16 %v4310, %v4308
        %v4397 = vunpack.c.l.b16 %v4173
        %v4398 = vunpack.c.l.b16 %v4174
        %v4399 = vpack.c.b16 %v4398, %v4397
        %v4401 = vsel %vm594, %v4399, 0
        %4403 = vmatpush.bf16.msra.mxu0 0
        %4404 = vmatpush.bf16.msra.mxu0 0
        %4405 = vmatpush.bf16.msra.mxu0 0
        %4406 = vmatpush.bf16.msra.mxu0 0
        %4407 = vmatpush.bf16.msra.mxu0 0
        %4408 = vmatpush.bf16.msra.mxu0 %v4393
        %4409 = vmatpush.bf16.msra.mxu0 %v4391
        %4410 = vmatpush.bf16.msra.mxu0 %v4389
        %4411 = vmatmul.bf16.gmra.mxu0 %v4401
        %v4412 = vpop.f32.mrf.mxu0
        %v4413 = vadd.f32 0.0, %v4412
        %v4414 = vpop.f32.mrf.mxu0
        %v4415 = vadd.f32 0.0, %v4414
        %4416 = vdwg.mxu0
        %4417 = vmatpush.bf16.msra.mxu0 0
        %4418 = vmatpush.bf16.msra.mxu0 0
        %4419 = vmatpush.bf16.msra.mxu0 0
        %4420 = vmatpush.bf16.msra.mxu0 0
        %4421 = vmatpush.bf16.msra.mxu0 0
        %4422 = vmatpush.bf16.msra.mxu0 %v4394
        %4423 = vmatpush.bf16.msra.mxu0 %v4392
        %4424 = vmatpush.bf16.msra.mxu0 %v4390
        %4425 = vmatmul.bf16.gmra.mxu0 %v4401
        %v4426 = vpop.f32.mrf.mxu0
        %v4427 = vadd.f32 0.0, %v4426
        %v4428 = vpop.f32.mrf.mxu0
        %v4429 = vadd.f32 0.0, %v4428
        %4430 = vdwg.mxu0
        %v4431 = vadd.f32 %v4371, %v4413
        %v4432 = vadd.f32 %v4385, %v4427
        %v4433 = vadd.f32 %v4373, %v4415
        %v4434 = vadd.f32 %v4387, %v4429
        %4436 = vset.pattern.permute.xlu0 0
        %4437 = vperm.xlu0 %4436, %v4175
        %v4438 = vpop.permute.xlu0 %4437
        %4441 = vset.pattern.permute.xlu0 0
        %4442 = vperm.xlu0 %4441, %v4176
        %v4443 = vpop.permute.xlu0 %4442
        %v4445 = vadd.f32 %v4431, %v4438
        %v4446 = vadd.f32 %v4432, %v4438
        %v4447 = vadd.f32 %v4433, %v4443
        %v4448 = vadd.f32 %v4434, %v4443
        %v4449 = vadd.f32 %v4445, %v3881
        %v4450 = vadd.f32 %v4446, %v3882
        %v4451 = vadd.f32 %v4447, %v3883
        %v4452 = vadd.f32 %v4448, %v3884
        %v4453 = vmax.f32 %v4449, 0.0
        %v4454 = vmax.f32 %v4450, 0.0
        %v4455 = vmax.f32 %v4451, 0.0
        %v4456 = vmax.f32 %v4452, 0.0
        %v4457 = vld [vmem:[%s1 + $0x180] sm:$0xf]
        %v4458 = vld [vmem:[%s1 + $0x184] sm:$0xf]
        %v4459 = vld [vmem:[%s1 + $0x188] sm:$0xf]
        %v4460 = vld [vmem:[%s1 + $0x18c] sm:$0xf]
        %v4461 = vld [vmem:[%s1 + $0x190] sm:$0xf]
        %v4462 = vld [vmem:[%s1 + $0x194] sm:$0xf]
        %v4463 = vld [vmem:[%s2 + $0x100] sm:$0xff]
        %v4464 = vld [vmem:[%s2 + $0x108] sm:$0xff]
        %4465 = vrot.lane.b32.xlu0 %v4453, 16
        %v4466 = vpop.permute.xlu0 %4465
        %4467 = vrot.lane.b32.xlu0 %v4455, 16
        %v4468 = vpop.permute.xlu0 %4467
        %4469 = vrot.lane.b32.xlu0 %v4454, 16
        %v4470 = vpop.permute.xlu0 %4469
        %4471 = vrot.lane.b32.xlu0 %v4456, 16
        %v4472 = vpop.permute.xlu0 %4471
        %v4473 = vsel %vm215, %v4466, %v4470
        %v4474 = vsel %vm215, %v4468, %v4472
        %v4475 = vsel %vm215, %v4470, %v4466
        %v4476 = vsel %vm215, %v4472, %v4468
        %4477 = vrot.lane.b32.xlu0 %v4453, 112
        %v4478 = vpop.permute.xlu0 %4477
        %4479 = vrot.lane.b32.xlu0 %v4455, 112
        %v4480 = vpop.permute.xlu0 %4479
        %4481 = vrot.lane.b32.xlu0 %v4454, 112
        %v4482 = vpop.permute.xlu0 %4481
        %4483 = vrot.lane.b32.xlu0 %v4456, 112
        %v4484 = vpop.permute.xlu0 %4483
        %v4485 = vsel %vm222, %v4478, %v4482
        %v4486 = vsel %vm222, %v4480, %v4484
        %v4487 = vsel %vm222, %v4482, %v4478
        %v4488 = vsel %vm222, %v4484, %v4480
        %v4489 = vsel %vm189, %v4485, %v4475
        %v4490 = vsel %vm190, %v4487, %v4473
        %v4491 = vsel %vm189, %v4486, %v4476
        %v4492 = vsel %vm190, %v4488, %v4474
        %v4493 = vsel %vm193, %v4475, %v4485
        %v4494 = vsel %vm194, %v4473, %v4487
        %v4495 = vsel %vm193, %v4476, %v4486
        %v4496 = vsel %vm194, %v4474, %v4488
        %v4497 = vpack.c.bf16 %v4491, %v4489
        %v4498 = vpack.c.bf16 %v4492, %v4490
        %v4499 = vpack.c.bf16 %v4455, %v4453
        %v4500 = vpack.c.bf16 %v4456, %v4454
        %v4501 = vpack.c.bf16 %v4495, %v4493
        %v4502 = vpack.c.bf16 %v4496, %v4494
        %4503 = vrot.lane.b32.xlu0 %v4489, 1
        %v4504 = vpop.permute.xlu0 %4503
        %4505 = vrot.lane.b32.xlu0 %v4491, 1
        %v4506 = vpop.permute.xlu0 %4505
        %4507 = vrot.lane.b32.xlu0 %v4453, 1
        %v4508 = vpop.permute.xlu0 %4507
        %4509 = vrot.lane.b32.xlu0 %v4455, 1
        %v4510 = vpop.permute.xlu0 %4509
        %4511 = vrot.lane.b32.xlu0 %v4493, 1
        %v4512 = vpop.permute.xlu0 %4511
        %4513 = vrot.lane.b32.xlu0 %v4495, 1
        %v4514 = vpop.permute.xlu0 %4513
        %4515 = vrot.lane.b32.xlu0 %v4490, 1
        %v4516 = vpop.permute.xlu0 %4515
        %4517 = vrot.lane.b32.xlu0 %v4492, 1
        %v4518 = vpop.permute.xlu0 %4517
        %4519 = vrot.lane.b32.xlu0 %v4454, 1
        %v4520 = vpop.permute.xlu0 %4519
        %4521 = vrot.lane.b32.xlu0 %v4456, 1
        %v4522 = vpop.permute.xlu0 %4521
        %4523 = vrot.lane.b32.xlu0 %v4494, 1
        %v4524 = vpop.permute.xlu0 %4523
        %4525 = vrot.lane.b32.xlu0 %v4496, 1
        %v4526 = vpop.permute.xlu0 %4525
        %v4527 = vsel %vm245, %v4504, %v4516
        %v4528 = vsel %vm245, %v4506, %v4518
        %v4529 = vsel %vm245, %v4508, %v4520
        %v4530 = vsel %vm245, %v4510, %v4522
        %v4531 = vsel %vm245, %v4512, %v4524
        %v4532 = vsel %vm245, %v4514, %v4526
        %v4533 = vsel %vm245, %v4516, %v4504
        %v4534 = vsel %vm245, %v4518, %v4506
        %v4535 = vsel %vm245, %v4520, %v4508
        %v4536 = vsel %vm245, %v4522, %v4510
        %v4537 = vsel %vm245, %v4524, %v4512
        %v4538 = vsel %vm245, %v4526, %v4514
        %4539 = vrot.lane.b32.xlu0 %v4489, 127
        %v4540 = vpop.permute.xlu0 %4539
        %4541 = vrot.lane.b32.xlu0 %v4491, 127
        %v4542 = vpop.permute.xlu0 %4541
        %4543 = vrot.lane.b32.xlu0 %v4453, 127
        %v4544 = vpop.permute.xlu0 %4543
        %4545 = vrot.lane.b32.xlu0 %v4455, 127
        %v4546 = vpop.permute.xlu0 %4545
        %4547 = vrot.lane.b32.xlu0 %v4493, 127
        %v4548 = vpop.permute.xlu0 %4547
        %4549 = vrot.lane.b32.xlu0 %v4495, 127
        %v4550 = vpop.permute.xlu0 %4549
        %4551 = vrot.lane.b32.xlu0 %v4490, 127
        %v4552 = vpop.permute.xlu0 %4551
        %4553 = vrot.lane.b32.xlu0 %v4492, 127
        %v4554 = vpop.permute.xlu0 %4553
        %4555 = vrot.lane.b32.xlu0 %v4454, 127
        %v4556 = vpop.permute.xlu0 %4555
        %4557 = vrot.lane.b32.xlu0 %v4456, 127
        %v4558 = vpop.permute.xlu0 %4557
        %4559 = vrot.lane.b32.xlu0 %v4494, 127
        %v4560 = vpop.permute.xlu0 %4559
        %4561 = vrot.lane.b32.xlu0 %v4496, 127
        %v4562 = vpop.permute.xlu0 %4561
        %v4563 = vsel %vm264, %v4540, %v4552
        %v4564 = vsel %vm264, %v4542, %v4554
        %v4565 = vsel %vm264, %v4544, %v4556
        %v4566 = vsel %vm264, %v4546, %v4558
        %v4567 = vsel %vm264, %v4548, %v4560
        %v4568 = vsel %vm264, %v4550, %v4562
        %v4569 = vsel %vm264, %v4552, %v4540
        %v4570 = vsel %vm264, %v4554, %v4542
        %v4571 = vsel %vm264, %v4556, %v4544
        %v4572 = vsel %vm264, %v4558, %v4546
        %v4573 = vsel %vm264, %v4560, %v4548
        %v4574 = vsel %vm264, %v4562, %v4550
        %v4575 = vsel %vm197, %v4563, %v4533
        %v4576 = vsel %vm198, %v4569, %v4527
        %v4577 = vsel %vm197, %v4564, %v4534
        %v4578 = vsel %vm198, %v4570, %v4528
        %v4579 = vsel %vm197, %v4565, %v4535
        %v4580 = vsel %vm198, %v4571, %v4529
        %v4581 = vsel %vm197, %v4566, %v4536
        %v4582 = vsel %vm198, %v4572, %v4530
        %v4583 = vsel %vm197, %v4567, %v4537
        %v4584 = vsel %vm198, %v4573, %v4531
        %v4585 = vsel %vm197, %v4568, %v4538
        %v4586 = vsel %vm198, %v4574, %v4532
        %v4587 = vsel %vm201, %v4533, %v4563
        %v4588 = vsel %vm202, %v4527, %v4569
        %v4589 = vsel %vm201, %v4534, %v4564
        %v4590 = vsel %vm202, %v4528, %v4570
        %v4591 = vsel %vm201, %v4535, %v4565
        %v4592 = vsel %vm202, %v4529, %v4571
        %v4593 = vsel %vm201, %v4536, %v4566
        %v4594 = vsel %vm202, %v4530, %v4572
        %v4595 = vsel %vm201, %v4537, %v4567
        %v4596 = vsel %vm202, %v4531, %v4573
        %v4597 = vsel %vm201, %v4538, %v4568
        %v4598 = vsel %vm202, %v4532, %v4574
        %v4599 = vpack.c.bf16 %v4577, %v4575
        %v4600 = vpack.c.bf16 %v4578, %v4576
        %v4601 = vpack.c.bf16 %v4581, %v4579
        %v4602 = vpack.c.bf16 %v4582, %v4580
        %v4603 = vpack.c.bf16 %v4585, %v4583
        %v4604 = vpack.c.bf16 %v4586, %v4584
        %v4607 = vunpack.c.l.b16 %v4457
        %v4608 = vunpack.c.l.b16 %v4458
        %v4609 = vpack.c.b16 %v4608, %v4607
        %v4611 = vsel %vm594, %v4609, 0
        %4613 = vmatpush.bf16.msra.mxu0 0
        %4614 = vmatpush.bf16.msra.mxu0 0
        %4615 = vmatpush.bf16.msra.mxu0 0
        %4616 = vmatpush.bf16.msra.mxu0 0
        %4617 = vmatpush.bf16.msra.mxu0 0
        %4618 = vmatpush.bf16.msra.mxu0 %v4603
        %4619 = vmatpush.bf16.msra.mxu0 %v4601
        %4620 = vmatpush.bf16.msra.mxu0 %v4599
        %4621 = vmatmul.bf16.gmra.mxu0 %v4611
        %v4622 = vpop.f32.mrf.mxu0
        %v4623 = vadd.f32 0.0, %v4622
        %v4624 = vpop.f32.mrf.mxu0
        %v4625 = vadd.f32 0.0, %v4624
        %4626 = vdwg.mxu0
        %4627 = vmatpush.bf16.msra.mxu0 0
        %4628 = vmatpush.bf16.msra.mxu0 0
        %4629 = vmatpush.bf16.msra.mxu0 0
        %4630 = vmatpush.bf16.msra.mxu0 0
        %4631 = vmatpush.bf16.msra.mxu0 0
        %4632 = vmatpush.bf16.msra.mxu0 %v4604
        %4633 = vmatpush.bf16.msra.mxu0 %v4602
        %4634 = vmatpush.bf16.msra.mxu0 %v4600
        %4635 = vmatmul.bf16.gmra.mxu0 %v4611
        %v4636 = vpop.f32.mrf.mxu0
        %v4637 = vadd.f32 0.0, %v4636
        %v4638 = vpop.f32.mrf.mxu0
        %v4639 = vadd.f32 0.0, %v4638
        %4640 = vdwg.mxu0
        %v4643 = vunpack.c.l.b16 %v4459
        %v4644 = vunpack.c.l.b16 %v4460
        %v4645 = vpack.c.b16 %v4644, %v4643
        %v4647 = vsel %vm594, %v4645, 0
        %4649 = vmatpush.bf16.msra.mxu0 0
        %4650 = vmatpush.bf16.msra.mxu0 0
        %4651 = vmatpush.bf16.msra.mxu0 0
        %4652 = vmatpush.bf16.msra.mxu0 0
        %4653 = vmatpush.bf16.msra.mxu0 0
        %4654 = vmatpush.bf16.msra.mxu0 %v4501
        %4655 = vmatpush.bf16.msra.mxu0 %v4499
        %4656 = vmatpush.bf16.msra.mxu0 %v4497
        %4657 = vmatmul.bf16.gmra.mxu0 %v4647
        %v4658 = vpop.f32.mrf.mxu0
        %v4659 = vadd.f32 %v4623, %v4658
        %v4660 = vpop.f32.mrf.mxu0
        %v4661 = vadd.f32 %v4625, %v4660
        %4662 = vdwg.mxu0
        %4663 = vmatpush.bf16.msra.mxu0 0
        %4664 = vmatpush.bf16.msra.mxu0 0
        %4665 = vmatpush.bf16.msra.mxu0 0
        %4666 = vmatpush.bf16.msra.mxu0 0
        %4667 = vmatpush.bf16.msra.mxu0 0
        %4668 = vmatpush.bf16.msra.mxu0 %v4502
        %4669 = vmatpush.bf16.msra.mxu0 %v4500
        %4670 = vmatpush.bf16.msra.mxu0 %v4498
        %4671 = vmatmul.bf16.gmra.mxu0 %v4647
        %v4672 = vpop.f32.mrf.mxu0
        %v4673 = vadd.f32 %v4637, %v4672
        %v4674 = vpop.f32.mrf.mxu0
        %v4675 = vadd.f32 %v4639, %v4674
        %4676 = vdwg.mxu0
        %v4677 = vpack.c.bf16 %v4589, %v4587
        %v4678 = vpack.c.bf16 %v4590, %v4588
        %v4679 = vpack.c.bf16 %v4593, %v4591
        %v4680 = vpack.c.bf16 %v4594, %v4592
        %v4681 = vpack.c.bf16 %v4597, %v4595
        %v4682 = vpack.c.bf16 %v4598, %v4596
        %v4685 = vunpack.c.l.b16 %v4461
        %v4686 = vunpack.c.l.b16 %v4462
        %v4687 = vpack.c.b16 %v4686, %v4685
        %v4689 = vsel %vm594, %v4687, 0
        %4691 = vmatpush.bf16.msra.mxu0 0
        %4692 = vmatpush.bf16.msra.mxu0 0
        %4693 = vmatpush.bf16.msra.mxu0 0
        %4694 = vmatpush.bf16.msra.mxu0 0
        %4695 = vmatpush.bf16.msra.mxu0 0
        %4696 = vmatpush.bf16.msra.mxu0 %v4681
        %4697 = vmatpush.bf16.msra.mxu0 %v4679
        %4698 = vmatpush.bf16.msra.mxu0 %v4677
        %4699 = vmatmul.bf16.gmra.mxu0 %v4689
        %v4700 = vpop.f32.mrf.mxu0
        %v4701 = vadd.f32 0.0, %v4700
        %v4702 = vpop.f32.mrf.mxu0
        %v4703 = vadd.f32 0.0, %v4702
        %4704 = vdwg.mxu0
        %4705 = vmatpush.bf16.msra.mxu0 0
        %4706 = vmatpush.bf16.msra.mxu0 0
        %4707 = vmatpush.bf16.msra.mxu0 0
        %4708 = vmatpush.bf16.msra.mxu0 0
        %4709 = vmatpush.bf16.msra.mxu0 0
        %4710 = vmatpush.bf16.msra.mxu0 %v4682
        %4711 = vmatpush.bf16.msra.mxu0 %v4680
        %4712 = vmatpush.bf16.msra.mxu0 %v4678
        %4713 = vmatmul.bf16.gmra.mxu0 %v4689
        %v4714 = vpop.f32.mrf.mxu0
        %v4715 = vadd.f32 0.0, %v4714
        %v4716 = vpop.f32.mrf.mxu0
        %v4717 = vadd.f32 0.0, %v4716
        %4718 = vdwg.mxu0
        %v4719 = vadd.f32 %v4659, %v4701
        %v4720 = vadd.f32 %v4673, %v4715
        %v4721 = vadd.f32 %v4661, %v4703
        %v4722 = vadd.f32 %v4675, %v4717
        %4724 = vset.pattern.permute.xlu0 0
        %4725 = vperm.xlu0 %4724, %v4463
        %v4726 = vpop.permute.xlu0 %4725
        %4729 = vset.pattern.permute.xlu0 0
        %4730 = vperm.xlu0 %4729, %v4464
        %v4731 = vpop.permute.xlu0 %4730
        %v4733 = vadd.f32 %v4719, %v4726
        %v4734 = vadd.f32 %v4720, %v4726
        %v4735 = vadd.f32 %v4721, %v4731
        %v4736 = vadd.f32 %v4722, %v4731
        %v4737 = vmax.f32 %v4733, 0.0
        %v4738 = vmax.f32 %v4734, 0.0
        %v4739 = vmax.f32 %v4735, 0.0
        %v4740 = vmax.f32 %v4736, 0.0
        %v4741 = vld [vmem:[%s1 + $0x198] sm:$0xf]
        %v4742 = vld [vmem:[%s1 + $0x19c] sm:$0xf]
        %v4743 = vld [vmem:[%s1 + $0x1a0] sm:$0xf]
        %v4744 = vld [vmem:[%s1 + $0x1a4] sm:$0xf]
        %v4745 = vld [vmem:[%s1 + $0x1a8] sm:$0xf]
        %v4746 = vld [vmem:[%s1 + $0x1ac] sm:$0xf]
        %v4747 = vld [vmem:[%s2 + $0x110] sm:$0xff]
        %v4748 = vld [vmem:[%s2 + $0x118] sm:$0xff]
        %4749 = vrot.lane.b32.xlu0 %v4737, 16
        %v4750 = vpop.permute.xlu0 %4749
        %4751 = vrot.lane.b32.xlu0 %v4739, 16
        %v4752 = vpop.permute.xlu0 %4751
        %4753 = vrot.lane.b32.xlu0 %v4738, 16
        %v4754 = vpop.permute.xlu0 %4753
        %4755 = vrot.lane.b32.xlu0 %v4740, 16
        %v4756 = vpop.permute.xlu0 %4755
        %v4757 = vsel %vm215, %v4750, %v4754
        %v4758 = vsel %vm215, %v4752, %v4756
        %v4759 = vsel %vm215, %v4754, %v4750
        %v4760 = vsel %vm215, %v4756, %v4752
        %4761 = vrot.lane.b32.xlu0 %v4737, 112
        %v4762 = vpop.permute.xlu0 %4761
        %4763 = vrot.lane.b32.xlu0 %v4739, 112
        %v4764 = vpop.permute.xlu0 %4763
        %4765 = vrot.lane.b32.xlu0 %v4738, 112
        %v4766 = vpop.permute.xlu0 %4765
        %4767 = vrot.lane.b32.xlu0 %v4740, 112
        %v4768 = vpop.permute.xlu0 %4767
        %v4769 = vsel %vm222, %v4762, %v4766
        %v4770 = vsel %vm222, %v4764, %v4768
        %v4771 = vsel %vm222, %v4766, %v4762
        %v4772 = vsel %vm222, %v4768, %v4764
        %v4773 = vsel %vm189, %v4769, %v4759
        %v4774 = vsel %vm190, %v4771, %v4757
        %v4775 = vsel %vm189, %v4770, %v4760
        %v4776 = vsel %vm190, %v4772, %v4758
        %v4777 = vsel %vm193, %v4759, %v4769
        %v4778 = vsel %vm194, %v4757, %v4771
        %v4779 = vsel %vm193, %v4760, %v4770
        %v4780 = vsel %vm194, %v4758, %v4772
        %v4781 = vpack.c.bf16 %v4775, %v4773
        %v4782 = vpack.c.bf16 %v4776, %v4774
        %v4783 = vpack.c.bf16 %v4739, %v4737
        %v4784 = vpack.c.bf16 %v4740, %v4738
        %v4785 = vpack.c.bf16 %v4779, %v4777
        %v4786 = vpack.c.bf16 %v4780, %v4778
        %4787 = vrot.lane.b32.xlu0 %v4773, 1
        %v4788 = vpop.permute.xlu0 %4787
        %4789 = vrot.lane.b32.xlu0 %v4775, 1
        %v4790 = vpop.permute.xlu0 %4789
        %4791 = vrot.lane.b32.xlu0 %v4737, 1
        %v4792 = vpop.permute.xlu0 %4791
        %4793 = vrot.lane.b32.xlu0 %v4739, 1
        %v4794 = vpop.permute.xlu0 %4793
        %4795 = vrot.lane.b32.xlu0 %v4777, 1
        %v4796 = vpop.permute.xlu0 %4795
        %4797 = vrot.lane.b32.xlu0 %v4779, 1
        %v4798 = vpop.permute.xlu0 %4797
        %4799 = vrot.lane.b32.xlu0 %v4774, 1
        %v4800 = vpop.permute.xlu0 %4799
        %4801 = vrot.lane.b32.xlu0 %v4776, 1
        %v4802 = vpop.permute.xlu0 %4801
        %4803 = vrot.lane.b32.xlu0 %v4738, 1
        %v4804 = vpop.permute.xlu0 %4803
        %4805 = vrot.lane.b32.xlu0 %v4740, 1
        %v4806 = vpop.permute.xlu0 %4805
        %4807 = vrot.lane.b32.xlu0 %v4778, 1
        %v4808 = vpop.permute.xlu0 %4807
        %4809 = vrot.lane.b32.xlu0 %v4780, 1
        %v4810 = vpop.permute.xlu0 %4809
        %v4811 = vsel %vm245, %v4788, %v4800
        %v4812 = vsel %vm245, %v4790, %v4802
        %v4813 = vsel %vm245, %v4792, %v4804
        %v4814 = vsel %vm245, %v4794, %v4806
        %v4815 = vsel %vm245, %v4796, %v4808
        %v4816 = vsel %vm245, %v4798, %v4810
        %v4817 = vsel %vm245, %v4800, %v4788
        %v4818 = vsel %vm245, %v4802, %v4790
        %v4819 = vsel %vm245, %v4804, %v4792
        %v4820 = vsel %vm245, %v4806, %v4794
        %v4821 = vsel %vm245, %v4808, %v4796
        %v4822 = vsel %vm245, %v4810, %v4798
        %4823 = vrot.lane.b32.xlu0 %v4773, 127
        %v4824 = vpop.permute.xlu0 %4823
        %4825 = vrot.lane.b32.xlu0 %v4775, 127
        %v4826 = vpop.permute.xlu0 %4825
        %4827 = vrot.lane.b32.xlu0 %v4737, 127
        %v4828 = vpop.permute.xlu0 %4827
        %4829 = vrot.lane.b32.xlu0 %v4739, 127
        %v4830 = vpop.permute.xlu0 %4829
        %4831 = vrot.lane.b32.xlu0 %v4777, 127
        %v4832 = vpop.permute.xlu0 %4831
        %4833 = vrot.lane.b32.xlu0 %v4779, 127
        %v4834 = vpop.permute.xlu0 %4833
        %4835 = vrot.lane.b32.xlu0 %v4774, 127
        %v4836 = vpop.permute.xlu0 %4835
        %4837 = vrot.lane.b32.xlu0 %v4776, 127
        %v4838 = vpop.permute.xlu0 %4837
        %4839 = vrot.lane.b32.xlu0 %v4738, 127
        %v4840 = vpop.permute.xlu0 %4839
        %4841 = vrot.lane.b32.xlu0 %v4740, 127
        %v4842 = vpop.permute.xlu0 %4841
        %4843 = vrot.lane.b32.xlu0 %v4778, 127
        %v4844 = vpop.permute.xlu0 %4843
        %4845 = vrot.lane.b32.xlu0 %v4780, 127
        %v4846 = vpop.permute.xlu0 %4845
        %v4847 = vsel %vm264, %v4824, %v4836
        %v4848 = vsel %vm264, %v4826, %v4838
        %v4849 = vsel %vm264, %v4828, %v4840
        %v4850 = vsel %vm264, %v4830, %v4842
        %v4851 = vsel %vm264, %v4832, %v4844
        %v4852 = vsel %vm264, %v4834, %v4846
        %v4853 = vsel %vm264, %v4836, %v4824
        %v4854 = vsel %vm264, %v4838, %v4826
        %v4855 = vsel %vm264, %v4840, %v4828
        %v4856 = vsel %vm264, %v4842, %v4830
        %v4857 = vsel %vm264, %v4844, %v4832
        %v4858 = vsel %vm264, %v4846, %v4834
        %v4859 = vsel %vm197, %v4847, %v4817
        %v4860 = vsel %vm198, %v4853, %v4811
        %v4861 = vsel %vm197, %v4848, %v4818
        %v4862 = vsel %vm198, %v4854, %v4812
        %v4863 = vsel %vm197, %v4849, %v4819
        %v4864 = vsel %vm198, %v4855, %v4813
        %v4865 = vsel %vm197, %v4850, %v4820
        %v4866 = vsel %vm198, %v4856, %v4814
        %v4867 = vsel %vm197, %v4851, %v4821
        %v4868 = vsel %vm198, %v4857, %v4815
        %v4869 = vsel %vm197, %v4852, %v4822
        %v4870 = vsel %vm198, %v4858, %v4816
        %v4871 = vsel %vm201, %v4817, %v4847
        %v4872 = vsel %vm202, %v4811, %v4853
        %v4873 = vsel %vm201, %v4818, %v4848
        %v4874 = vsel %vm202, %v4812, %v4854
        %v4875 = vsel %vm201, %v4819, %v4849
        %v4876 = vsel %vm202, %v4813, %v4855
        %v4877 = vsel %vm201, %v4820, %v4850
        %v4878 = vsel %vm202, %v4814, %v4856
        %v4879 = vsel %vm201, %v4821, %v4851
        %v4880 = vsel %vm202, %v4815, %v4857
        %v4881 = vsel %vm201, %v4822, %v4852
        %v4882 = vsel %vm202, %v4816, %v4858
        %v4883 = vpack.c.bf16 %v4861, %v4859
        %v4884 = vpack.c.bf16 %v4862, %v4860
        %v4885 = vpack.c.bf16 %v4865, %v4863
        %v4886 = vpack.c.bf16 %v4866, %v4864
        %v4887 = vpack.c.bf16 %v4869, %v4867
        %v4888 = vpack.c.bf16 %v4870, %v4868
        %v4891 = vunpack.c.l.b16 %v4741
        %v4892 = vunpack.c.l.b16 %v4742
        %v4893 = vpack.c.b16 %v4892, %v4891
        %v4895 = vsel %vm594, %v4893, 0
        %4897 = vmatpush.bf16.msra.mxu0 0
        %4898 = vmatpush.bf16.msra.mxu0 0
        %4899 = vmatpush.bf16.msra.mxu0 0
        %4900 = vmatpush.bf16.msra.mxu0 0
        %4901 = vmatpush.bf16.msra.mxu0 0
        %4902 = vmatpush.bf16.msra.mxu0 %v4887
        %4903 = vmatpush.bf16.msra.mxu0 %v4885
        %4904 = vmatpush.bf16.msra.mxu0 %v4883
        %4905 = vmatmul.bf16.gmra.mxu0 %v4895
        %v4906 = vpop.f32.mrf.mxu0
        %v4907 = vadd.f32 0.0, %v4906
        %v4908 = vpop.f32.mrf.mxu0
        %v4909 = vadd.f32 0.0, %v4908
        %4910 = vdwg.mxu0
        %4911 = vmatpush.bf16.msra.mxu0 0
        %4912 = vmatpush.bf16.msra.mxu0 0
        %4913 = vmatpush.bf16.msra.mxu0 0
        %4914 = vmatpush.bf16.msra.mxu0 0
        %4915 = vmatpush.bf16.msra.mxu0 0
        %4916 = vmatpush.bf16.msra.mxu0 %v4888
        %4917 = vmatpush.bf16.msra.mxu0 %v4886
        %4918 = vmatpush.bf16.msra.mxu0 %v4884
        %4919 = vmatmul.bf16.gmra.mxu0 %v4895
        %v4920 = vpop.f32.mrf.mxu0
        %v4921 = vadd.f32 0.0, %v4920
        %v4922 = vpop.f32.mrf.mxu0
        %v4923 = vadd.f32 0.0, %v4922
        %4924 = vdwg.mxu0
        %v4927 = vunpack.c.l.b16 %v4743
        %v4928 = vunpack.c.l.b16 %v4744
        %v4929 = vpack.c.b16 %v4928, %v4927
        %v4931 = vsel %vm594, %v4929, 0
        %4933 = vmatpush.bf16.msra.mxu0 0
        %4934 = vmatpush.bf16.msra.mxu0 0
        %4935 = vmatpush.bf16.msra.mxu0 0
        %4936 = vmatpush.bf16.msra.mxu0 0
        %4937 = vmatpush.bf16.msra.mxu0 0
        %4938 = vmatpush.bf16.msra.mxu0 %v4785
        %4939 = vmatpush.bf16.msra.mxu0 %v4783
        %4940 = vmatpush.bf16.msra.mxu0 %v4781
        %4941 = vmatmul.bf16.gmra.mxu0 %v4931
        %v4942 = vpop.f32.mrf.mxu0
        %v4943 = vadd.f32 %v4907, %v4942
        %v4944 = vpop.f32.mrf.mxu0
        %v4945 = vadd.f32 %v4909, %v4944
        %4946 = vdwg.mxu0
        %4947 = vmatpush.bf16.msra.mxu0 0
        %4948 = vmatpush.bf16.msra.mxu0 0
        %4949 = vmatpush.bf16.msra.mxu0 0
        %4950 = vmatpush.bf16.msra.mxu0 0
        %4951 = vmatpush.bf16.msra.mxu0 0
        %4952 = vmatpush.bf16.msra.mxu0 %v4786
        %4953 = vmatpush.bf16.msra.mxu0 %v4784
        %4954 = vmatpush.bf16.msra.mxu0 %v4782
        %4955 = vmatmul.bf16.gmra.mxu0 %v4931
        %v4956 = vpop.f32.mrf.mxu0
        %v4957 = vadd.f32 %v4921, %v4956
        %v4958 = vpop.f32.mrf.mxu0
        %v4959 = vadd.f32 %v4923, %v4958
        %4960 = vdwg.mxu0
        %v4961 = vpack.c.bf16 %v4873, %v4871
        %v4962 = vpack.c.bf16 %v4874, %v4872
        %v4963 = vpack.c.bf16 %v4877, %v4875
        %v4964 = vpack.c.bf16 %v4878, %v4876
        %v4965 = vpack.c.bf16 %v4881, %v4879
        %v4966 = vpack.c.bf16 %v4882, %v4880
        %v4969 = vunpack.c.l.b16 %v4745
        %v4970 = vunpack.c.l.b16 %v4746
        %v4971 = vpack.c.b16 %v4970, %v4969
        %v4973 = vsel %vm594, %v4971, 0
        %4975 = vmatpush.bf16.msra.mxu0 0
        %4976 = vmatpush.bf16.msra.mxu0 0
        %4977 = vmatpush.bf16.msra.mxu0 0
        %4978 = vmatpush.bf16.msra.mxu0 0
        %4979 = vmatpush.bf16.msra.mxu0 0
        %4980 = vmatpush.bf16.msra.mxu0 %v4965
        %4981 = vmatpush.bf16.msra.mxu0 %v4963
        %4982 = vmatpush.bf16.msra.mxu0 %v4961
        %4983 = vmatmul.bf16.gmra.mxu0 %v4973
        %v4984 = vpop.f32.mrf.mxu0
        %v4985 = vadd.f32 0.0, %v4984
        %v4986 = vpop.f32.mrf.mxu0
        %v4987 = vadd.f32 0.0, %v4986
        %4988 = vdwg.mxu0
        %4989 = vmatpush.bf16.msra.mxu0 0
        %4990 = vmatpush.bf16.msra.mxu0 0
        %4991 = vmatpush.bf16.msra.mxu0 0
        %4992 = vmatpush.bf16.msra.mxu0 0
        %4993 = vmatpush.bf16.msra.mxu0 0
        %4994 = vmatpush.bf16.msra.mxu0 %v4966
        %4995 = vmatpush.bf16.msra.mxu0 %v4964
        %4996 = vmatpush.bf16.msra.mxu0 %v4962
        %4997 = vmatmul.bf16.gmra.mxu0 %v4973
        %v4998 = vpop.f32.mrf.mxu0
        %v4999 = vadd.f32 0.0, %v4998
        %v5000 = vpop.f32.mrf.mxu0
        %v5001 = vadd.f32 0.0, %v5000
        %5002 = vdwg.mxu0
        %v5003 = vadd.f32 %v4943, %v4985
        %v5004 = vadd.f32 %v4957, %v4999
        %v5005 = vadd.f32 %v4945, %v4987
        %v5006 = vadd.f32 %v4959, %v5001
        %5008 = vset.pattern.permute.xlu0 0
        %5009 = vperm.xlu0 %5008, %v4747
        %v5010 = vpop.permute.xlu0 %5009
        %5013 = vset.pattern.permute.xlu0 0
        %5014 = vperm.xlu0 %5013, %v4748
        %v5015 = vpop.permute.xlu0 %5014
        %v5017 = vadd.f32 %v5003, %v5010
        %v5018 = vadd.f32 %v5004, %v5010
        %v5019 = vadd.f32 %v5005, %v5015
        %v5020 = vadd.f32 %v5006, %v5015
        %v5021 = vadd.f32 %v5017, %v4453
        %v5022 = vadd.f32 %v5018, %v4454
        %v5023 = vadd.f32 %v5019, %v4455
        %v5024 = vadd.f32 %v5020, %v4456
        %v5025 = vmax.f32 %v5021, 0.0
        %v5026 = vmax.f32 %v5022, 0.0
        %v5027 = vmax.f32 %v5023, 0.0
        %v5028 = vmax.f32 %v5024, 0.0
        %v5029 = vld [vmem:[%s1 + $0x1b0] sm:$0xf]
        %v5030 = vld [vmem:[%s1 + $0x1b4] sm:$0xf]
        %v5031 = vld [vmem:[%s1 + $0x1b8] sm:$0xf]
        %v5032 = vld [vmem:[%s2 + $0x120] sm:$0xff]
        %5033 = vrot.lane.b32.xlu0 %v5025, 16
        %v5034 = vpop.permute.xlu0 %5033
        %5035 = vrot.lane.b32.xlu0 %v5027, 16
        %v5036 = vpop.permute.xlu0 %5035
        %5037 = vrot.lane.b32.xlu0 %v5026, 16
        %v5038 = vpop.permute.xlu0 %5037
        %5039 = vrot.lane.b32.xlu0 %v5028, 16
        %v5040 = vpop.permute.xlu0 %5039
        %v5041 = vsel %vm215, %v5034, %v5038
        %v5042 = vsel %vm215, %v5036, %v5040
        %v5043 = vsel %vm215, %v5038, %v5034
        %v5044 = vsel %vm215, %v5040, %v5036
        %5045 = vrot.lane.b32.xlu0 %v5025, 112
        %v5046 = vpop.permute.xlu0 %5045
        %5047 = vrot.lane.b32.xlu0 %v5027, 112
        %v5048 = vpop.permute.xlu0 %5047
        %5049 = vrot.lane.b32.xlu0 %v5026, 112
        %v5050 = vpop.permute.xlu0 %5049
        %5051 = vrot.lane.b32.xlu0 %v5028, 112
        %v5052 = vpop.permute.xlu0 %5051
        %v5053 = vsel %vm222, %v5046, %v5050
        %v5054 = vsel %vm222, %v5048, %v5052
        %v5055 = vsel %vm222, %v5050, %v5046
        %v5056 = vsel %vm222, %v5052, %v5048
        %v5057 = vsel %vm189, %v5053, %v5043
        %v5058 = vsel %vm190, %v5055, %v5041
        %v5059 = vsel %vm189, %v5054, %v5044
        %v5060 = vsel %vm190, %v5056, %v5042
        %v5061 = vsel %vm193, %v5043, %v5053
        %v5062 = vsel %vm194, %v5041, %v5055
        %v5063 = vsel %vm193, %v5044, %v5054
        %v5064 = vsel %vm194, %v5042, %v5056
        %v5065 = vpack.c.bf16 %v5059, %v5057
        %v5066 = vpack.c.bf16 %v5060, %v5058
        %v5067 = vpack.c.bf16 %v5027, %v5025
        %v5068 = vpack.c.bf16 %v5028, %v5026
        %v5069 = vpack.c.bf16 %v5063, %v5061
        %v5070 = vpack.c.bf16 %v5064, %v5062
        %5071 = vrot.lane.b32.xlu0 %v5057, 1
        %v5072 = vpop.permute.xlu0 %5071
        %5073 = vrot.lane.b32.xlu0 %v5059, 1
        %v5074 = vpop.permute.xlu0 %5073
        %5075 = vrot.lane.b32.xlu0 %v5025, 1
        %v5076 = vpop.permute.xlu0 %5075
        %5077 = vrot.lane.b32.xlu0 %v5027, 1
        %v5078 = vpop.permute.xlu0 %5077
        %5079 = vrot.lane.b32.xlu0 %v5061, 1
        %v5080 = vpop.permute.xlu0 %5079
        %5081 = vrot.lane.b32.xlu0 %v5063, 1
        %v5082 = vpop.permute.xlu0 %5081
        %5083 = vrot.lane.b32.xlu0 %v5058, 1
        %v5084 = vpop.permute.xlu0 %5083
        %5085 = vrot.lane.b32.xlu0 %v5060, 1
        %v5086 = vpop.permute.xlu0 %5085
        %5087 = vrot.lane.b32.xlu0 %v5026, 1
        %v5088 = vpop.permute.xlu0 %5087
        %5089 = vrot.lane.b32.xlu0 %v5028, 1
        %v5090 = vpop.permute.xlu0 %5089
        %5091 = vrot.lane.b32.xlu0 %v5062, 1
        %v5092 = vpop.permute.xlu0 %5091
        %5093 = vrot.lane.b32.xlu0 %v5064, 1
        %v5094 = vpop.permute.xlu0 %5093
        %v5095 = vsel %vm245, %v5072, %v5084
        %v5096 = vsel %vm245, %v5074, %v5086
        %v5097 = vsel %vm245, %v5076, %v5088
        %v5098 = vsel %vm245, %v5078, %v5090
        %v5099 = vsel %vm245, %v5080, %v5092
        %v5100 = vsel %vm245, %v5082, %v5094
        %v5101 = vsel %vm245, %v5084, %v5072
        %v5102 = vsel %vm245, %v5086, %v5074
        %v5103 = vsel %vm245, %v5088, %v5076
        %v5104 = vsel %vm245, %v5090, %v5078
        %v5105 = vsel %vm245, %v5092, %v5080
        %v5106 = vsel %vm245, %v5094, %v5082
        %5107 = vrot.lane.b32.xlu0 %v5057, 127
        %v5108 = vpop.permute.xlu0 %5107
        %5109 = vrot.lane.b32.xlu0 %v5059, 127
        %v5110 = vpop.permute.xlu0 %5109
        %5111 = vrot.lane.b32.xlu0 %v5025, 127
        %v5112 = vpop.permute.xlu0 %5111
        %5113 = vrot.lane.b32.xlu0 %v5027, 127
        %v5114 = vpop.permute.xlu0 %5113
        %5115 = vrot.lane.b32.xlu0 %v5061, 127
        %v5116 = vpop.permute.xlu0 %5115
        %5117 = vrot.lane.b32.xlu0 %v5063, 127
        %v5118 = vpop.permute.xlu0 %5117
        %5119 = vrot.lane.b32.xlu0 %v5058, 127
        %v5120 = vpop.permute.xlu0 %5119
        %5121 = vrot.lane.b32.xlu0 %v5060, 127
        %v5122 = vpop.permute.xlu0 %5121
        %5123 = vrot.lane.b32.xlu0 %v5026, 127
        %v5124 = vpop.permute.xlu0 %5123
        %5125 = vrot.lane.b32.xlu0 %v5028, 127
        %v5126 = vpop.permute.xlu0 %5125
        %5127 = vrot.lane.b32.xlu0 %v5062, 127
        %v5128 = vpop.permute.xlu0 %5127
        %5129 = vrot.lane.b32.xlu0 %v5064, 127
        %v5130 = vpop.permute.xlu0 %5129
        %v5131 = vsel %vm264, %v5108, %v5120
        %v5132 = vsel %vm264, %v5110, %v5122
        %v5133 = vsel %vm264, %v5112, %v5124
        %v5134 = vsel %vm264, %v5114, %v5126
        %v5135 = vsel %vm264, %v5116, %v5128
        %v5136 = vsel %vm264, %v5118, %v5130
        %v5137 = vsel %vm264, %v5120, %v5108
        %v5138 = vsel %vm264, %v5122, %v5110
        %v5139 = vsel %vm264, %v5124, %v5112
        %v5140 = vsel %vm264, %v5126, %v5114
        %v5141 = vsel %vm264, %v5128, %v5116
        %v5142 = vsel %vm264, %v5130, %v5118
        %v5143 = vsel %vm197, %v5131, %v5101
        %v5144 = vsel %vm198, %v5137, %v5095
        %v5145 = vsel %vm197, %v5132, %v5102
        %v5146 = vsel %vm198, %v5138, %v5096
        %v5147 = vsel %vm197, %v5133, %v5103
        %v5148 = vsel %vm198, %v5139, %v5097
        %v5149 = vsel %vm197, %v5134, %v5104
        %v5150 = vsel %vm198, %v5140, %v5098
        %v5151 = vsel %vm197, %v5135, %v5105
        %v5152 = vsel %vm198, %v5141, %v5099
        %v5153 = vsel %vm197, %v5136, %v5106
        %v5154 = vsel %vm198, %v5142, %v5100
        %v5155 = vsel %vm201, %v5101, %v5131
        %v5156 = vsel %vm202, %v5095, %v5137
        %v5157 = vsel %vm201, %v5102, %v5132
        %v5158 = vsel %vm202, %v5096, %v5138
        %v5159 = vsel %vm201, %v5103, %v5133
        %v5160 = vsel %vm202, %v5097, %v5139
        %v5161 = vsel %vm201, %v5104, %v5134
        %v5162 = vsel %vm202, %v5098, %v5140
        %v5163 = vsel %vm201, %v5105, %v5135
        %v5164 = vsel %vm202, %v5099, %v5141
        %v5165 = vsel %vm201, %v5106, %v5136
        %v5166 = vsel %vm202, %v5100, %v5142
        %v5167 = vpack.c.bf16 %v5145, %v5143
        %v5168 = vpack.c.bf16 %v5146, %v5144
        %v5169 = vpack.c.bf16 %v5149, %v5147
        %v5170 = vpack.c.bf16 %v5150, %v5148
        %v5171 = vpack.c.bf16 %v5153, %v5151
        %v5172 = vpack.c.bf16 %v5154, %v5152
        %v5174 = vsel %vm594, %v5029, 0
        %5176 = vmatpush.bf16.msra.mxu0 0
        %5177 = vmatpush.bf16.msra.mxu0 0
        %5178 = vmatpush.bf16.msra.mxu0 0
        %5179 = vmatpush.bf16.msra.mxu0 0
        %5180 = vmatpush.bf16.msra.mxu0 0
        %5181 = vmatpush.bf16.msra.mxu0 %v5171
        %5182 = vmatpush.bf16.msra.mxu0 %v5169
        %5183 = vmatpush.bf16.msra.mxu0 %v5167
        %5184 = vmatmul.bf16.gmra.mxu0 %v5174
        %v5185 = vpop.f32.mrf.mxu0
        %v5186 = vadd.f32 0.0, %v5185
        %v5187 = vpop.f32.mrf.mxu0
        %5188 = vdwg.mxu0
        %5189 = vmatpush.bf16.msra.mxu0 0
        %5190 = vmatpush.bf16.msra.mxu0 0
        %5191 = vmatpush.bf16.msra.mxu0 0
        %5192 = vmatpush.bf16.msra.mxu0 0
        %5193 = vmatpush.bf16.msra.mxu0 0
        %5194 = vmatpush.bf16.msra.mxu0 %v5172
        %5195 = vmatpush.bf16.msra.mxu0 %v5170
        %5196 = vmatpush.bf16.msra.mxu0 %v5168
        %5197 = vmatmul.bf16.gmra.mxu0 %v5174
        %v5198 = vpop.f32.mrf.mxu0
        %v5199 = vadd.f32 0.0, %v5198
        %v5200 = vpop.f32.mrf.mxu0
        %5201 = vdwg.mxu0
        %v5203 = vsel %vm594, %v5030, 0
        %5205 = vmatpush.bf16.msra.mxu0 0
        %5206 = vmatpush.bf16.msra.mxu0 0
        %5207 = vmatpush.bf16.msra.mxu0 0
        %5208 = vmatpush.bf16.msra.mxu0 0
        %5209 = vmatpush.bf16.msra.mxu0 0
        %5210 = vmatpush.bf16.msra.mxu0 %v5069
        %5211 = vmatpush.bf16.msra.mxu0 %v5067
        %5212 = vmatpush.bf16.msra.mxu0 %v5065
        %5213 = vmatmul.bf16.gmra.mxu0 %v5203
        %v5214 = vpop.f32.mrf.mxu0
        %v5215 = vadd.f32 %v5186, %v5214
        %v5216 = vpop.f32.mrf.mxu0
        %5217 = vdwg.mxu0
        %5218 = vmatpush.bf16.msra.mxu0 0
        %5219 = vmatpush.bf16.msra.mxu0 0
        %5220 = vmatpush.bf16.msra.mxu0 0
        %5221 = vmatpush.bf16.msra.mxu0 0
        %5222 = vmatpush.bf16.msra.mxu0 0
        %5223 = vmatpush.bf16.msra.mxu0 %v5070
        %5224 = vmatpush.bf16.msra.mxu0 %v5068
        %5225 = vmatpush.bf16.msra.mxu0 %v5066
        %5226 = vmatmul.bf16.gmra.mxu0 %v5203
        %v5227 = vpop.f32.mrf.mxu0
        %v5228 = vadd.f32 %v5199, %v5227
        %v5229 = vpop.f32.mrf.mxu0
        %5230 = vdwg.mxu0
        %v5231 = vpack.c.bf16 %v5157, %v5155
        %v5232 = vpack.c.bf16 %v5158, %v5156
        %v5233 = vpack.c.bf16 %v5161, %v5159
        %v5234 = vpack.c.bf16 %v5162, %v5160
        %v5235 = vpack.c.bf16 %v5165, %v5163
        %v5236 = vpack.c.bf16 %v5166, %v5164
        %v5238 = vsel %vm594, %v5031, 0
        %5240 = vmatpush.bf16.msra.mxu0 0
        %5241 = vmatpush.bf16.msra.mxu0 0
        %5242 = vmatpush.bf16.msra.mxu0 0
        %5243 = vmatpush.bf16.msra.mxu0 0
        %5244 = vmatpush.bf16.msra.mxu0 0
        %5245 = vmatpush.bf16.msra.mxu0 %v5235
        %5246 = vmatpush.bf16.msra.mxu0 %v5233
        %5247 = vmatpush.bf16.msra.mxu0 %v5231
        %5248 = vmatmul.bf16.gmra.mxu0 %v5238
        %v5249 = vpop.f32.mrf.mxu0
        %v5250 = vadd.f32 0.0, %v5249
        %v5251 = vpop.f32.mrf.mxu0
        %5252 = vdwg.mxu0
        %5253 = vmatpush.bf16.msra.mxu0 0
        %5254 = vmatpush.bf16.msra.mxu0 0
        %5255 = vmatpush.bf16.msra.mxu0 0
        %5256 = vmatpush.bf16.msra.mxu0 0
        %5257 = vmatpush.bf16.msra.mxu0 0
        %5258 = vmatpush.bf16.msra.mxu0 %v5236
        %5259 = vmatpush.bf16.msra.mxu0 %v5234
        %5260 = vmatpush.bf16.msra.mxu0 %v5232
        %5261 = vmatmul.bf16.gmra.mxu0 %v5238
        %v5262 = vpop.f32.mrf.mxu0
        %v5263 = vadd.f32 0.0, %v5262
        %v5264 = vpop.f32.mrf.mxu0
        %5265 = vdwg.mxu0
        %v5266 = vadd.f32 %v5215, %v5250
        %v5267 = vadd.f32 %v5228, %v5263
        %5269 = vset.pattern.permute.xlu0 0
        %5270 = vperm.xlu0 %5269, %v5032
        %v5271 = vpop.permute.xlu0 %5270
        %v5273 = vadd.f32 %v5266, %v5271
        %v5274 = vadd.f32 %v5267, %v5271
        %v5275 = vmax.f32 %v5273, 0.0
        %v5276 = vmax.f32 %v5274, 0.0
        %v5277 = vld [vmem:[%s1 + $0x1bc] sm:$0xf]
        %v5278 = vld [vmem:[%s1 + $0x1c0] sm:$0xf]
        %v5279 = vld [vmem:[%s1 + $0x1c4] sm:$0xf]
        %v5280 = vld [vmem:[%s2 + $0x128] sm:$0xff]
        %5281 = vrot.lane.b32.xlu0 %v5275, 16
        %v5282 = vpop.permute.xlu0 %5281
        %5283 = vrot.lane.b32.xlu0 %v5276, 16
        %v5284 = vpop.permute.xlu0 %5283
        %v5285 = vsel %vm215, %v5282, %v5284
        %v5286 = vsel %vm215, %v5284, %v5282
        %5287 = vrot.lane.b32.xlu0 %v5275, 112
        %v5288 = vpop.permute.xlu0 %5287
        %5289 = vrot.lane.b32.xlu0 %v5276, 112
        %v5290 = vpop.permute.xlu0 %5289
        %v5291 = vsel %vm222, %v5288, %v5290
        %v5292 = vsel %vm222, %v5290, %v5288
        %v5293 = vsel %vm189, %v5291, %v5286
        %v5294 = vsel %vm190, %v5292, %v5285
        %v5295 = vsel %vm193, %v5286, %v5291
        %v5296 = vsel %vm194, %v5285, %v5292
        %v5297 = vpack.c.bf16 %v5275, %v5293
        %v5298 = vpack.c.bf16 %v5276, %v5294
        %v5299 = vpack.c.bf16 %v5295, %v5295
        %v5300 = vpack.c.bf16 %v5296, %v5296
        %5301 = vrot.lane.b32.xlu0 %v5293, 1
        %v5302 = vpop.permute.xlu0 %5301
        %5303 = vrot.lane.b32.xlu0 %v5275, 1
        %v5304 = vpop.permute.xlu0 %5303
        %5305 = vrot.lane.b32.xlu0 %v5295, 1
        %v5306 = vpop.permute.xlu0 %5305
        %5307 = vrot.lane.b32.xlu0 %v5294, 1
        %v5308 = vpop.permute.xlu0 %5307
        %5309 = vrot.lane.b32.xlu0 %v5276, 1
        %v5310 = vpop.permute.xlu0 %5309
        %5311 = vrot.lane.b32.xlu0 %v5296, 1
        %v5312 = vpop.permute.xlu0 %5311
        %v5313 = vsel %vm245, %v5302, %v5308
        %v5314 = vsel %vm245, %v5304, %v5310
        %v5315 = vsel %vm245, %v5306, %v5312
        %v5316 = vsel %vm245, %v5308, %v5302
        %v5317 = vsel %vm245, %v5310, %v5304
        %v5318 = vsel %vm245, %v5312, %v5306
        %5319 = vrot.lane.b32.xlu0 %v5293, 127
        %v5320 = vpop.permute.xlu0 %5319
        %5321 = vrot.lane.b32.xlu0 %v5275, 127
        %v5322 = vpop.permute.xlu0 %5321
        %5323 = vrot.lane.b32.xlu0 %v5295, 127
        %v5324 = vpop.permute.xlu0 %5323
        %5325 = vrot.lane.b32.xlu0 %v5294, 127
        %v5326 = vpop.permute.xlu0 %5325
        %5327 = vrot.lane.b32.xlu0 %v5276, 127
        %v5328 = vpop.permute.xlu0 %5327
        %5329 = vrot.lane.b32.xlu0 %v5296, 127
        %v5330 = vpop.permute.xlu0 %5329
        %v5331 = vsel %vm264, %v5320, %v5326
        %v5332 = vsel %vm264, %v5322, %v5328
        %v5333 = vsel %vm264, %v5324, %v5330
        %v5334 = vsel %vm264, %v5326, %v5320
        %v5335 = vsel %vm264, %v5328, %v5322
        %v5336 = vsel %vm264, %v5330, %v5324
        %v5337 = vsel %vm197, %v5331, %v5316
        %v5338 = vsel %vm198, %v5334, %v5313
        %v5339 = vsel %vm197, %v5332, %v5317
        %v5340 = vsel %vm198, %v5335, %v5314
        %v5341 = vsel %vm197, %v5333, %v5318
        %v5342 = vsel %vm198, %v5336, %v5315
        %v5343 = vsel %vm201, %v5316, %v5331
        %v5344 = vsel %vm202, %v5313, %v5334
        %v5345 = vsel %vm201, %v5317, %v5332
        %v5346 = vsel %vm202, %v5314, %v5335
        %v5347 = vsel %vm201, %v5318, %v5333
        %v5348 = vsel %vm202, %v5315, %v5336
        %v5349 = vpack.c.bf16 %v5339, %v5337
        %v5350 = vpack.c.bf16 %v5340, %v5338
        %v5351 = vpack.c.bf16 %v5341, %v5341
        %v5352 = vpack.c.bf16 %v5342, %v5342
        %v5354 = vsel %vm292, %v5277, 0
        %v5357 = vsel %vm296, %v5351, 0
        %v5360 = vsel %vm296, %v5352, 0
        %5362 = vmatpush.bf16.msra.mxu0 0
        %5363 = vmatpush.bf16.msra.mxu0 0
        %5364 = vmatpush.bf16.msra.mxu0 0
        %5365 = vmatpush.bf16.msra.mxu0 0
        %5366 = vmatpush.bf16.msra.mxu0 0
        %5367 = vmatpush.bf16.msra.mxu0 0
        %5368 = vmatpush.bf16.msra.mxu0 %v5357
        %5369 = vmatpush.bf16.msra.mxu0 %v5349
        %5370 = vmatmul.bf16.gmra.mxu0 %v5354
        %v5371 = vpop.f32.mrf.mxu0
        %v5372 = vadd.f32 0.0, %v5371
        %v5373 = vpop.f32.mrf.mxu0
        %5374 = vdwg.mxu0
        %5375 = vmatpush.bf16.msra.mxu0 0
        %5376 = vmatpush.bf16.msra.mxu0 0
        %5377 = vmatpush.bf16.msra.mxu0 0
        %5378 = vmatpush.bf16.msra.mxu0 0
        %5379 = vmatpush.bf16.msra.mxu0 0
        %5380 = vmatpush.bf16.msra.mxu0 0
        %5381 = vmatpush.bf16.msra.mxu0 %v5360
        %5382 = vmatpush.bf16.msra.mxu0 %v5350
        %5383 = vmatmul.bf16.gmra.mxu0 %v5354
        %v5384 = vpop.f32.mrf.mxu0
        %v5385 = vadd.f32 0.0, %v5384
        %v5386 = vpop.f32.mrf.mxu0
        %5387 = vdwg.mxu0
        %v5389 = vsel %vm292, %v5278, 0
        %v5392 = vsel %vm296, %v5299, 0
        %v5395 = vsel %vm296, %v5300, 0
        %5397 = vmatpush.bf16.msra.mxu0 0
        %5398 = vmatpush.bf16.msra.mxu0 0
        %5399 = vmatpush.bf16.msra.mxu0 0
        %5400 = vmatpush.bf16.msra.mxu0 0
        %5401 = vmatpush.bf16.msra.mxu0 0
        %5402 = vmatpush.bf16.msra.mxu0 0
        %5403 = vmatpush.bf16.msra.mxu0 %v5392
        %5404 = vmatpush.bf16.msra.mxu0 %v5297
        %5405 = vmatmul.bf16.gmra.mxu0 %v5389
        %v5406 = vpop.f32.mrf.mxu0
        %v5407 = vadd.f32 %v5372, %v5406
        %v5408 = vpop.f32.mrf.mxu0
        %5409 = vdwg.mxu0
        %5410 = vmatpush.bf16.msra.mxu0 0
        %5411 = vmatpush.bf16.msra.mxu0 0
        %5412 = vmatpush.bf16.msra.mxu0 0
        %5413 = vmatpush.bf16.msra.mxu0 0
        %5414 = vmatpush.bf16.msra.mxu0 0
        %5415 = vmatpush.bf16.msra.mxu0 0
        %5416 = vmatpush.bf16.msra.mxu0 %v5395
        %5417 = vmatpush.bf16.msra.mxu0 %v5298
        %5418 = vmatmul.bf16.gmra.mxu0 %v5389
        %v5419 = vpop.f32.mrf.mxu0
        %v5420 = vadd.f32 %v5385, %v5419
        %v5421 = vpop.f32.mrf.mxu0
        %5422 = vdwg.mxu0
        %v5423 = vpack.c.bf16 %v5345, %v5343
        %v5424 = vpack.c.bf16 %v5346, %v5344
        %v5425 = vpack.c.bf16 %v5347, %v5347
        %v5426 = vpack.c.bf16 %v5348, %v5348
        %v5428 = vsel %vm292, %v5279, 0
        %v5431 = vsel %vm296, %v5425, 0
        %v5434 = vsel %vm296, %v5426, 0
        %5436 = vmatpush.bf16.msra.mxu0 0
        %5437 = vmatpush.bf16.msra.mxu0 0
        %5438 = vmatpush.bf16.msra.mxu0 0
        %5439 = vmatpush.bf16.msra.mxu0 0
        %5440 = vmatpush.bf16.msra.mxu0 0
        %5441 = vmatpush.bf16.msra.mxu0 0
        %5442 = vmatpush.bf16.msra.mxu0 %v5431
        %5443 = vmatpush.bf16.msra.mxu0 %v5423
        %5444 = vmatmul.bf16.gmra.mxu0 %v5428
        %v5445 = vpop.f32.mrf.mxu0
        %v5446 = vadd.f32 0.0, %v5445
        %v5447 = vpop.f32.mrf.mxu0
        %5448 = vdwg.mxu0
        %5449 = vmatpush.bf16.msra.mxu0 0
        %5450 = vmatpush.bf16.msra.mxu0 0
        %5451 = vmatpush.bf16.msra.mxu0 0
        %5452 = vmatpush.bf16.msra.mxu0 0
        %5453 = vmatpush.bf16.msra.mxu0 0
        %5454 = vmatpush.bf16.msra.mxu0 0
        %5455 = vmatpush.bf16.msra.mxu0 %v5434
        %5456 = vmatpush.bf16.msra.mxu0 %v5424
        %5457 = vmatmul.bf16.gmra.mxu0 %v5428
        %v5458 = vpop.f32.mrf.mxu0
        %v5459 = vadd.f32 0.0, %v5458
        %v5460 = vpop.f32.mrf.mxu0
        %5461 = vdwg.mxu0
        %v5462 = vadd.f32 %v5407, %v5446
        %v5463 = vadd.f32 %v5420, %v5459
        %5465 = vset.pattern.permute.xlu0 0
        %5466 = vperm.xlu0 %5465, %v5280
        %v5467 = vpop.permute.xlu0 %5466
        %v5469 = vadd.f32 %v5462, %v5467
        %v5470 = vadd.f32 %v5463, %v5467
        %v5471 = vmax.f32 %v5469, 0.0
        %v5472 = vmax.f32 %v5470, 0.0
        %v5473 = vld [vmem:[%s1 + $0x1c8] sm:$0xf]
        %v5474 = vld [vmem:[%s1 + $0x1cc] sm:$0xf]
        %v5475 = vld [vmem:[%s1 + $0x1d0] sm:$0xf]
        %v5476 = vld [vmem:[%s2 + $0x130] sm:$0xff]
        %5477 = vrot.lane.b32.xlu0 %v5471, 16
        %v5478 = vpop.permute.xlu0 %5477
        %5479 = vrot.lane.b32.xlu0 %v5472, 16
        %v5480 = vpop.permute.xlu0 %5479
        %v5481 = vsel %vm215, %v5478, %v5480
        %v5482 = vsel %vm215, %v5480, %v5478
        %5483 = vrot.lane.b32.xlu0 %v5471, 112
        %v5484 = vpop.permute.xlu0 %5483
        %5485 = vrot.lane.b32.xlu0 %v5472, 112
        %v5486 = vpop.permute.xlu0 %5485
        %v5487 = vsel %vm222, %v5484, %v5486
        %v5488 = vsel %vm222, %v5486, %v5484
        %v5489 = vsel %vm189, %v5487, %v5482
        %v5490 = vsel %vm190, %v5488, %v5481
        %v5491 = vsel %vm193, %v5482, %v5487
        %v5492 = vsel %vm194, %v5481, %v5488
        %v5493 = vpack.c.bf16 %v5471, %v5489
        %v5494 = vpack.c.bf16 %v5472, %v5490
        %v5495 = vpack.c.bf16 %v5491, %v5491
        %v5496 = vpack.c.bf16 %v5492, %v5492
        %5497 = vrot.lane.b32.xlu0 %v5489, 1
        %v5498 = vpop.permute.xlu0 %5497
        %5499 = vrot.lane.b32.xlu0 %v5471, 1
        %v5500 = vpop.permute.xlu0 %5499
        %5501 = vrot.lane.b32.xlu0 %v5491, 1
        %v5502 = vpop.permute.xlu0 %5501
        %5503 = vrot.lane.b32.xlu0 %v5490, 1
        %v5504 = vpop.permute.xlu0 %5503
        %5505 = vrot.lane.b32.xlu0 %v5472, 1
        %v5506 = vpop.permute.xlu0 %5505
        %5507 = vrot.lane.b32.xlu0 %v5492, 1
        %v5508 = vpop.permute.xlu0 %5507
        %v5509 = vsel %vm245, %v5498, %v5504
        %v5510 = vsel %vm245, %v5500, %v5506
        %v5511 = vsel %vm245, %v5502, %v5508
        %v5512 = vsel %vm245, %v5504, %v5498
        %v5513 = vsel %vm245, %v5506, %v5500
        %v5514 = vsel %vm245, %v5508, %v5502
        %5515 = vrot.lane.b32.xlu0 %v5489, 127
        %v5516 = vpop.permute.xlu0 %5515
        %5517 = vrot.lane.b32.xlu0 %v5471, 127
        %v5518 = vpop.permute.xlu0 %5517
        %5519 = vrot.lane.b32.xlu0 %v5491, 127
        %v5520 = vpop.permute.xlu0 %5519
        %5521 = vrot.lane.b32.xlu0 %v5490, 127
        %v5522 = vpop.permute.xlu0 %5521
        %5523 = vrot.lane.b32.xlu0 %v5472, 127
        %v5524 = vpop.permute.xlu0 %5523
        %5525 = vrot.lane.b32.xlu0 %v5492, 127
        %v5526 = vpop.permute.xlu0 %5525
        %v5527 = vsel %vm264, %v5516, %v5522
        %v5528 = vsel %vm264, %v5518, %v5524
        %v5529 = vsel %vm264, %v5520, %v5526
        %v5530 = vsel %vm264, %v5522, %v5516
        %v5531 = vsel %vm264, %v5524, %v5518
        %v5532 = vsel %vm264, %v5526, %v5520
        %v5533 = vsel %vm197, %v5527, %v5512
        %v5534 = vsel %vm198, %v5530, %v5509
        %v5535 = vsel %vm197, %v5528, %v5513
        %v5536 = vsel %vm198, %v5531, %v5510
        %v5537 = vsel %vm197, %v5529, %v5514
        %v5538 = vsel %vm198, %v5532, %v5511
        %v5539 = vsel %vm201, %v5512, %v5527
        %v5540 = vsel %vm202, %v5509, %v5530
        %v5541 = vsel %vm201, %v5513, %v5528
        %v5542 = vsel %vm202, %v5510, %v5531
        %v5543 = vsel %vm201, %v5514, %v5529
        %v5544 = vsel %vm202, %v5511, %v5532
        %v5545 = vpack.c.bf16 %v5535, %v5533
        %v5546 = vpack.c.bf16 %v5536, %v5534
        %v5547 = vpack.c.bf16 %v5537, %v5537
        %v5548 = vpack.c.bf16 %v5538, %v5538
        %v5550 = vsel %vm292, %v5473, 0
        %v5553 = vsel %vm296, %v5547, 0
        %v5556 = vsel %vm296, %v5548, 0
        %5558 = vmatpush.bf16.msra.mxu0 0
        %5559 = vmatpush.bf16.msra.mxu0 0
        %5560 = vmatpush.bf16.msra.mxu0 0
        %5561 = vmatpush.bf16.msra.mxu0 0
        %5562 = vmatpush.bf16.msra.mxu0 0
        %5563 = vmatpush.bf16.msra.mxu0 0
        %5564 = vmatpush.bf16.msra.mxu0 %v5553
        %5565 = vmatpush.bf16.msra.mxu0 %v5545
        %5566 = vmatmul.bf16.gmra.mxu0 %v5550
        %v5567 = vpop.f32.mrf.mxu0
        %v5568 = vadd.f32 0.0, %v5567
        %v5569 = vpop.f32.mrf.mxu0
        %5570 = vdwg.mxu0
        %5571 = vmatpush.bf16.msra.mxu0 0
        %5572 = vmatpush.bf16.msra.mxu0 0
        %5573 = vmatpush.bf16.msra.mxu0 0
        %5574 = vmatpush.bf16.msra.mxu0 0
        %5575 = vmatpush.bf16.msra.mxu0 0
        %5576 = vmatpush.bf16.msra.mxu0 0
        %5577 = vmatpush.bf16.msra.mxu0 %v5556
        %5578 = vmatpush.bf16.msra.mxu0 %v5546
        %5579 = vmatmul.bf16.gmra.mxu0 %v5550
        %v5580 = vpop.f32.mrf.mxu0
        %v5581 = vadd.f32 0.0, %v5580
        %v5582 = vpop.f32.mrf.mxu0
        %5583 = vdwg.mxu0
        %v5585 = vsel %vm292, %v5474, 0
        %v5588 = vsel %vm296, %v5495, 0
        %v5591 = vsel %vm296, %v5496, 0
        %5593 = vmatpush.bf16.msra.mxu0 0
        %5594 = vmatpush.bf16.msra.mxu0 0
        %5595 = vmatpush.bf16.msra.mxu0 0
        %5596 = vmatpush.bf16.msra.mxu0 0
        %5597 = vmatpush.bf16.msra.mxu0 0
        %5598 = vmatpush.bf16.msra.mxu0 0
        %5599 = vmatpush.bf16.msra.mxu0 %v5588
        %5600 = vmatpush.bf16.msra.mxu0 %v5493
        %5601 = vmatmul.bf16.gmra.mxu0 %v5585
        %v5602 = vpop.f32.mrf.mxu0
        %v5603 = vadd.f32 %v5568, %v5602
        %v5604 = vpop.f32.mrf.mxu0
        %5605 = vdwg.mxu0
        %5606 = vmatpush.bf16.msra.mxu0 0
        %5607 = vmatpush.bf16.msra.mxu0 0
        %5608 = vmatpush.bf16.msra.mxu0 0
        %5609 = vmatpush.bf16.msra.mxu0 0
        %5610 = vmatpush.bf16.msra.mxu0 0
        %5611 = vmatpush.bf16.msra.mxu0 0
        %5612 = vmatpush.bf16.msra.mxu0 %v5591
        %5613 = vmatpush.bf16.msra.mxu0 %v5494
        %5614 = vmatmul.bf16.gmra.mxu0 %v5585
        %v5615 = vpop.f32.mrf.mxu0
        %v5616 = vadd.f32 %v5581, %v5615
        %v5617 = vpop.f32.mrf.mxu0
        %5618 = vdwg.mxu0
        %v5619 = vpack.c.bf16 %v5541, %v5539
        %v5620 = vpack.c.bf16 %v5542, %v5540
        %v5621 = vpack.c.bf16 %v5543, %v5543
        %v5622 = vpack.c.bf16 %v5544, %v5544
        %v5624 = vsel %vm292, %v5475, 0
        %v5627 = vsel %vm296, %v5621, 0
        %v5630 = vsel %vm296, %v5622, 0
        %5632 = vmatpush.bf16.msra.mxu0 0
        %5633 = vmatpush.bf16.msra.mxu0 0
        %5634 = vmatpush.bf16.msra.mxu0 0
        %5635 = vmatpush.bf16.msra.mxu0 0
        %5636 = vmatpush.bf16.msra.mxu0 0
        %5637 = vmatpush.bf16.msra.mxu0 0
        %5638 = vmatpush.bf16.msra.mxu0 %v5627
        %5639 = vmatpush.bf16.msra.mxu0 %v5619
        %5640 = vmatmul.bf16.gmra.mxu0 %v5624
        %v5641 = vpop.f32.mrf.mxu0
        %v5642 = vadd.f32 0.0, %v5641
        %v5643 = vpop.f32.mrf.mxu0
        %5644 = vdwg.mxu0
        %5645 = vmatpush.bf16.msra.mxu0 0
        %5646 = vmatpush.bf16.msra.mxu0 0
        %5647 = vmatpush.bf16.msra.mxu0 0
        %5648 = vmatpush.bf16.msra.mxu0 0
        %5649 = vmatpush.bf16.msra.mxu0 0
        %5650 = vmatpush.bf16.msra.mxu0 0
        %5651 = vmatpush.bf16.msra.mxu0 %v5630
        %5652 = vmatpush.bf16.msra.mxu0 %v5620
        %5653 = vmatmul.bf16.gmra.mxu0 %v5624
        %v5654 = vpop.f32.mrf.mxu0
        %v5655 = vadd.f32 0.0, %v5654
        %v5656 = vpop.f32.mrf.mxu0
        %5657 = vdwg.mxu0
        %v5658 = vadd.f32 %v5603, %v5642
        %v5659 = vadd.f32 %v5616, %v5655
        %5661 = vset.pattern.permute.xlu0 0
        %5662 = vperm.xlu0 %5661, %v5476
        %v5663 = vpop.permute.xlu0 %5662
        %v5665 = vadd.f32 %v5658, %v5663
        %v5666 = vadd.f32 %v5659, %v5663
        %v5667 = vadd.f32 %v5665, %v5275
        %v5668 = vadd.f32 %v5666, %v5276
        %v5669 = vmax.f32 %v5667, 0.0
        %v5670 = vmax.f32 %v5668, 0.0
        %v5671 = vld [vmem:[%s1 + $0x1d4] sm:$0xf]
        %v5672 = vld [vmem:[%s1 + $0x1d8] sm:$0xf]
        %v5673 = vld [vmem:[%s1 + $0x1dc] sm:$0xf]
        %v5674 = vld [vmem:[%s2 + $0x138] sm:$0xff]
        %5675 = vrot.lane.b32.xlu0 %v5669, 16
        %v5676 = vpop.permute.xlu0 %5675
        %5677 = vrot.lane.b32.xlu0 %v5670, 16
        %v5678 = vpop.permute.xlu0 %5677
        %v5679 = vsel %vm215, %v5676, %v5678
        %v5680 = vsel %vm215, %v5678, %v5676
        %5681 = vrot.lane.b32.xlu0 %v5669, 112
        %v5682 = vpop.permute.xlu0 %5681
        %5683 = vrot.lane.b32.xlu0 %v5670, 112
        %v5684 = vpop.permute.xlu0 %5683
        %v5685 = vsel %vm222, %v5682, %v5684
        %v5686 = vsel %vm222, %v5684, %v5682
        %v5687 = vsel %vm189, %v5685, %v5680
        %v5688 = vsel %vm190, %v5686, %v5679
        %v5689 = vsel %vm193, %v5680, %v5685
        %v5690 = vsel %vm194, %v5679, %v5686
        %v5691 = vpack.c.bf16 %v5669, %v5687
        %v5692 = vpack.c.bf16 %v5670, %v5688
        %v5693 = vpack.c.bf16 %v5689, %v5689
        %v5694 = vpack.c.bf16 %v5690, %v5690
        %5695 = vrot.lane.b32.xlu0 %v5687, 1
        %v5696 = vpop.permute.xlu0 %5695
        %5697 = vrot.lane.b32.xlu0 %v5669, 1
        %v5698 = vpop.permute.xlu0 %5697
        %5699 = vrot.lane.b32.xlu0 %v5689, 1
        %v5700 = vpop.permute.xlu0 %5699
        %5701 = vrot.lane.b32.xlu0 %v5688, 1
        %v5702 = vpop.permute.xlu0 %5701
        %5703 = vrot.lane.b32.xlu0 %v5670, 1
        %v5704 = vpop.permute.xlu0 %5703
        %5705 = vrot.lane.b32.xlu0 %v5690, 1
        %v5706 = vpop.permute.xlu0 %5705
        %v5707 = vsel %vm245, %v5696, %v5702
        %v5708 = vsel %vm245, %v5698, %v5704
        %v5709 = vsel %vm245, %v5700, %v5706
        %v5710 = vsel %vm245, %v5702, %v5696
        %v5711 = vsel %vm245, %v5704, %v5698
        %v5712 = vsel %vm245, %v5706, %v5700
        %5713 = vrot.lane.b32.xlu0 %v5687, 127
        %v5714 = vpop.permute.xlu0 %5713
        %5715 = vrot.lane.b32.xlu0 %v5669, 127
        %v5716 = vpop.permute.xlu0 %5715
        %5717 = vrot.lane.b32.xlu0 %v5689, 127
        %v5718 = vpop.permute.xlu0 %5717
        %5719 = vrot.lane.b32.xlu0 %v5688, 127
        %v5720 = vpop.permute.xlu0 %5719
        %5721 = vrot.lane.b32.xlu0 %v5670, 127
        %v5722 = vpop.permute.xlu0 %5721
        %5723 = vrot.lane.b32.xlu0 %v5690, 127
        %v5724 = vpop.permute.xlu0 %5723
        %v5725 = vsel %vm264, %v5714, %v5720
        %v5726 = vsel %vm264, %v5716, %v5722
        %v5727 = vsel %vm264, %v5718, %v5724
        %v5728 = vsel %vm264, %v5720, %v5714
        %v5729 = vsel %vm264, %v5722, %v5716
        %v5730 = vsel %vm264, %v5724, %v5718
        %v5731 = vsel %vm197, %v5725, %v5710
        %v5732 = vsel %vm198, %v5728, %v5707
        %v5733 = vsel %vm197, %v5726, %v5711
        %v5734 = vsel %vm198, %v5729, %v5708
        %v5735 = vsel %vm197, %v5727, %v5712
        %v5736 = vsel %vm198, %v5730, %v5709
        %v5737 = vsel %vm201, %v5710, %v5725
        %v5738 = vsel %vm202, %v5707, %v5728
        %v5739 = vsel %vm201, %v5711, %v5726
        %v5740 = vsel %vm202, %v5708, %v5729
        %v5741 = vsel %vm201, %v5712, %v5727
        %v5742 = vsel %vm202, %v5709, %v5730
        %v5743 = vpack.c.bf16 %v5733, %v5731
        %v5744 = vpack.c.bf16 %v5734, %v5732
        %v5745 = vpack.c.bf16 %v5735, %v5735
        %v5746 = vpack.c.bf16 %v5736, %v5736
        %v5748 = vsel %vm292, %v5671, 0
        %v5751 = vsel %vm296, %v5745, 0
        %v5754 = vsel %vm296, %v5746, 0
        %5756 = vmatpush.bf16.msra.mxu0 0
        %5757 = vmatpush.bf16.msra.mxu0 0
        %5758 = vmatpush.bf16.msra.mxu0 0
        %5759 = vmatpush.bf16.msra.mxu0 0
        %5760 = vmatpush.bf16.msra.mxu0 0
        %5761 = vmatpush.bf16.msra.mxu0 0
        %5762 = vmatpush.bf16.msra.mxu0 %v5751
        %5763 = vmatpush.bf16.msra.mxu0 %v5743
        %5764 = vmatmul.bf16.gmra.mxu0 %v5748
        %v5765 = vpop.f32.mrf.mxu0
        %v5766 = vadd.f32 0.0, %v5765
        %v5767 = vpop.f32.mrf.mxu0
        %5768 = vdwg.mxu0
        %5769 = vmatpush.bf16.msra.mxu0 0
        %5770 = vmatpush.bf16.msra.mxu0 0
        %5771 = vmatpush.bf16.msra.mxu0 0
        %5772 = vmatpush.bf16.msra.mxu0 0
        %5773 = vmatpush.bf16.msra.mxu0 0
        %5774 = vmatpush.bf16.msra.mxu0 0
        %5775 = vmatpush.bf16.msra.mxu0 %v5754
        %5776 = vmatpush.bf16.msra.mxu0 %v5744
        %5777 = vmatmul.bf16.gmra.mxu0 %v5748
        %v5778 = vpop.f32.mrf.mxu0
        %v5779 = vadd.f32 0.0, %v5778
        %v5780 = vpop.f32.mrf.mxu0
        %5781 = vdwg.mxu0
        %v5783 = vsel %vm292, %v5672, 0
        %v5786 = vsel %vm296, %v5693, 0
        %v5789 = vsel %vm296, %v5694, 0
        %5791 = vmatpush.bf16.msra.mxu0 0
        %5792 = vmatpush.bf16.msra.mxu0 0
        %5793 = vmatpush.bf16.msra.mxu0 0
        %5794 = vmatpush.bf16.msra.mxu0 0
        %5795 = vmatpush.bf16.msra.mxu0 0
        %5796 = vmatpush.bf16.msra.mxu0 0
        %5797 = vmatpush.bf16.msra.mxu0 %v5786
        %5798 = vmatpush.bf16.msra.mxu0 %v5691
        %5799 = vmatmul.bf16.gmra.mxu0 %v5783
        %v5800 = vpop.f32.mrf.mxu0
        %v5801 = vadd.f32 %v5766, %v5800
        %v5802 = vpop.f32.mrf.mxu0
        %5803 = vdwg.mxu0
        %5804 = vmatpush.bf16.msra.mxu0 0
        %5805 = vmatpush.bf16.msra.mxu0 0
        %5806 = vmatpush.bf16.msra.mxu0 0
        %5807 = vmatpush.bf16.msra.mxu0 0
        %5808 = vmatpush.bf16.msra.mxu0 0
        %5809 = vmatpush.bf16.msra.mxu0 0
        %5810 = vmatpush.bf16.msra.mxu0 %v5789
        %5811 = vmatpush.bf16.msra.mxu0 %v5692
        %5812 = vmatmul.bf16.gmra.mxu0 %v5783
        %v5813 = vpop.f32.mrf.mxu0
        %v5814 = vadd.f32 %v5779, %v5813
        %v5815 = vpop.f32.mrf.mxu0
        %5816 = vdwg.mxu0
        %v5817 = vpack.c.bf16 %v5739, %v5737
        %v5818 = vpack.c.bf16 %v5740, %v5738
        %v5819 = vpack.c.bf16 %v5741, %v5741
        %v5820 = vpack.c.bf16 %v5742, %v5742
        %v5822 = vsel %vm292, %v5673, 0
        %v5825 = vsel %vm296, %v5819, 0
        %v5828 = vsel %vm296, %v5820, 0
        %5830 = vmatpush.bf16.msra.mxu0 0
        %5831 = vmatpush.bf16.msra.mxu0 0
        %5832 = vmatpush.bf16.msra.mxu0 0
        %5833 = vmatpush.bf16.msra.mxu0 0
        %5834 = vmatpush.bf16.msra.mxu0 0
        %5835 = vmatpush.bf16.msra.mxu0 0
        %5836 = vmatpush.bf16.msra.mxu0 %v5825
        %5837 = vmatpush.bf16.msra.mxu0 %v5817
        %5838 = vmatmul.bf16.gmra.mxu0 %v5822
        %v5839 = vpop.f32.mrf.mxu0
        %v5840 = vadd.f32 0.0, %v5839
        %v5841 = vpop.f32.mrf.mxu0
        %5842 = vdwg.mxu0
        %5843 = vmatpush.bf16.msra.mxu0 0
        %5844 = vmatpush.bf16.msra.mxu0 0
        %5845 = vmatpush.bf16.msra.mxu0 0
        %5846 = vmatpush.bf16.msra.mxu0 0
        %5847 = vmatpush.bf16.msra.mxu0 0
        %5848 = vmatpush.bf16.msra.mxu0 0
        %5849 = vmatpush.bf16.msra.mxu0 %v5828
        %5850 = vmatpush.bf16.msra.mxu0 %v5818
        %5851 = vmatmul.bf16.gmra.mxu0 %v5822
        %v5852 = vpop.f32.mrf.mxu0
        %v5853 = vadd.f32 0.0, %v5852
        %v5854 = vpop.f32.mrf.mxu0
        %5855 = vdwg.mxu0
        %v5856 = vadd.f32 %v5801, %v5840
        %v5857 = vadd.f32 %v5814, %v5853
        %5859 = vset.pattern.permute.xlu0 0
        %5860 = vperm.xlu0 %5859, %v5674
        %v5861 = vpop.permute.xlu0 %5860
        %v5863 = vadd.f32 %v5856, %v5861
        %v5864 = vadd.f32 %v5857, %v5861
        %v5865 = vmax.f32 %v5863, 0.0
        %v5866 = vmax.f32 %v5864, 0.0
        %v5867 = vld [vmem:[%s1 + $0x1e0] sm:$0xf]
        %v5868 = vld [vmem:[%s1 + $0x1e4] sm:$0xf]
        %v5869 = vld [vmem:[%s1 + $0x1e8] sm:$0xf]
        %v5870 = vld [vmem:[%s2 + $0x140] sm:$0xff]
        %5871 = vrot.lane.b32.xlu0 %v5865, 16
        %v5872 = vpop.permute.xlu0 %5871
        %5873 = vrot.lane.b32.xlu0 %v5866, 16
        %v5874 = vpop.permute.xlu0 %5873
        %v5875 = vsel %vm215, %v5872, %v5874
        %v5876 = vsel %vm215, %v5874, %v5872
        %5877 = vrot.lane.b32.xlu0 %v5865, 112
        %v5878 = vpop.permute.xlu0 %5877
        %5879 = vrot.lane.b32.xlu0 %v5866, 112
        %v5880 = vpop.permute.xlu0 %5879
        %v5881 = vsel %vm222, %v5878, %v5880
        %v5882 = vsel %vm222, %v5880, %v5878
        %v5883 = vsel %vm189, %v5881, %v5876
        %v5884 = vsel %vm190, %v5882, %v5875
        %v5885 = vsel %vm193, %v5876, %v5881
        %v5886 = vsel %vm194, %v5875, %v5882
        %v5887 = vpack.c.bf16 %v5865, %v5883
        %v5888 = vpack.c.bf16 %v5866, %v5884
        %v5889 = vpack.c.bf16 %v5885, %v5885
        %v5890 = vpack.c.bf16 %v5886, %v5886
        %5891 = vrot.lane.b32.xlu0 %v5883, 1
        %v5892 = vpop.permute.xlu0 %5891
        %5893 = vrot.lane.b32.xlu0 %v5865, 1
        %v5894 = vpop.permute.xlu0 %5893
        %5895 = vrot.lane.b32.xlu0 %v5885, 1
        %v5896 = vpop.permute.xlu0 %5895
        %5897 = vrot.lane.b32.xlu0 %v5884, 1
        %v5898 = vpop.permute.xlu0 %5897
        %5899 = vrot.lane.b32.xlu0 %v5866, 1
        %v5900 = vpop.permute.xlu0 %5899
        %5901 = vrot.lane.b32.xlu0 %v5886, 1
        %v5902 = vpop.permute.xlu0 %5901
        %v5903 = vsel %vm245, %v5892, %v5898
        %v5904 = vsel %vm245, %v5894, %v5900
        %v5905 = vsel %vm245, %v5896, %v5902
        %v5906 = vsel %vm245, %v5898, %v5892
        %v5907 = vsel %vm245, %v5900, %v5894
        %v5908 = vsel %vm245, %v5902, %v5896
        %5909 = vrot.lane.b32.xlu0 %v5883, 127
        %v5910 = vpop.permute.xlu0 %5909
        %5911 = vrot.lane.b32.xlu0 %v5865, 127
        %v5912 = vpop.permute.xlu0 %5911
        %5913 = vrot.lane.b32.xlu0 %v5885, 127
        %v5914 = vpop.permute.xlu0 %5913
        %5915 = vrot.lane.b32.xlu0 %v5884, 127
        %v5916 = vpop.permute.xlu0 %5915
        %5917 = vrot.lane.b32.xlu0 %v5866, 127
        %v5918 = vpop.permute.xlu0 %5917
        %5919 = vrot.lane.b32.xlu0 %v5886, 127
        %v5920 = vpop.permute.xlu0 %5919
        %v5921 = vsel %vm264, %v5910, %v5916
        %v5922 = vsel %vm264, %v5912, %v5918
        %v5923 = vsel %vm264, %v5914, %v5920
        %v5924 = vsel %vm264, %v5916, %v5910
        %v5925 = vsel %vm264, %v5918, %v5912
        %v5926 = vsel %vm264, %v5920, %v5914
        %v5927 = vsel %vm197, %v5921, %v5906
        %v5928 = vsel %vm198, %v5924, %v5903
        %v5929 = vsel %vm197, %v5922, %v5907
        %v5930 = vsel %vm198, %v5925, %v5904
        %v5931 = vsel %vm197, %v5923, %v5908
        %v5932 = vsel %vm198, %v5926, %v5905
        %v5933 = vsel %vm201, %v5906, %v5921
        %v5934 = vsel %vm202, %v5903, %v5924
        %v5935 = vsel %vm201, %v5907, %v5922
        %v5936 = vsel %vm202, %v5904, %v5925
        %v5937 = vsel %vm201, %v5908, %v5923
        %v5938 = vsel %vm202, %v5905, %v5926
        %v5939 = vpack.c.bf16 %v5929, %v5927
        %v5940 = vpack.c.bf16 %v5930, %v5928
        %v5941 = vpack.c.bf16 %v5931, %v5931
        %v5942 = vpack.c.bf16 %v5932, %v5932
        %v5944 = vsel %vm292, %v5867, 0
        %v5947 = vsel %vm296, %v5941, 0
        %v5950 = vsel %vm296, %v5942, 0
        %5952 = vmatpush.bf16.msra.mxu0 0
        %5953 = vmatpush.bf16.msra.mxu0 0
        %5954 = vmatpush.bf16.msra.mxu0 0
        %5955 = vmatpush.bf16.msra.mxu0 0
        %5956 = vmatpush.bf16.msra.mxu0 0
        %5957 = vmatpush.bf16.msra.mxu0 0
        %5958 = vmatpush.bf16.msra.mxu0 %v5947
        %5959 = vmatpush.bf16.msra.mxu0 %v5939
        %5960 = vmatmul.bf16.gmra.mxu0 %v5944
        %v5961 = vpop.f32.mrf.mxu0
        %v5962 = vadd.f32 0.0, %v5961
        %v5963 = vpop.f32.mrf.mxu0
        %5964 = vdwg.mxu0
        %5965 = vmatpush.bf16.msra.mxu0 0
        %5966 = vmatpush.bf16.msra.mxu0 0
        %5967 = vmatpush.bf16.msra.mxu0 0
        %5968 = vmatpush.bf16.msra.mxu0 0
        %5969 = vmatpush.bf16.msra.mxu0 0
        %5970 = vmatpush.bf16.msra.mxu0 0
        %5971 = vmatpush.bf16.msra.mxu0 %v5950
        %5972 = vmatpush.bf16.msra.mxu0 %v5940
        %5973 = vmatmul.bf16.gmra.mxu0 %v5944
        %v5974 = vpop.f32.mrf.mxu0
        %v5975 = vadd.f32 0.0, %v5974
        %v5976 = vpop.f32.mrf.mxu0
        %5977 = vdwg.mxu0
        %v5979 = vsel %vm292, %v5868, 0
        %v5982 = vsel %vm296, %v5889, 0
        %v5985 = vsel %vm296, %v5890, 0
        %5987 = vmatpush.bf16.msra.mxu0 0
        %5988 = vmatpush.bf16.msra.mxu0 0
        %5989 = vmatpush.bf16.msra.mxu0 0
        %5990 = vmatpush.bf16.msra.mxu0 0
        %5991 = vmatpush.bf16.msra.mxu0 0
        %5992 = vmatpush.bf16.msra.mxu0 0
        %5993 = vmatpush.bf16.msra.mxu0 %v5982
        %5994 = vmatpush.bf16.msra.mxu0 %v5887
        %5995 = vmatmul.bf16.gmra.mxu0 %v5979
        %v5996 = vpop.f32.mrf.mxu0
        %v5997 = vadd.f32 %v5962, %v5996
        %v5998 = vpop.f32.mrf.mxu0
        %5999 = vdwg.mxu0
        %6000 = vmatpush.bf16.msra.mxu0 0
        %6001 = vmatpush.bf16.msra.mxu0 0
        %6002 = vmatpush.bf16.msra.mxu0 0
        %6003 = vmatpush.bf16.msra.mxu0 0
        %6004 = vmatpush.bf16.msra.mxu0 0
        %6005 = vmatpush.bf16.msra.mxu0 0
        %6006 = vmatpush.bf16.msra.mxu0 %v5985
        %6007 = vmatpush.bf16.msra.mxu0 %v5888
        %6008 = vmatmul.bf16.gmra.mxu0 %v5979
        %v6009 = vpop.f32.mrf.mxu0
        %v6010 = vadd.f32 %v5975, %v6009
        %v6011 = vpop.f32.mrf.mxu0
        %6012 = vdwg.mxu0
        %v6013 = vpack.c.bf16 %v5935, %v5933
        %v6014 = vpack.c.bf16 %v5936, %v5934
        %v6015 = vpack.c.bf16 %v5937, %v5937
        %v6016 = vpack.c.bf16 %v5938, %v5938
        %v6018 = vsel %vm292, %v5869, 0
        %v6021 = vsel %vm296, %v6015, 0
        %v6024 = vsel %vm296, %v6016, 0
        %6026 = vmatpush.bf16.msra.mxu0 0
        %6027 = vmatpush.bf16.msra.mxu0 0
        %6028 = vmatpush.bf16.msra.mxu0 0
        %6029 = vmatpush.bf16.msra.mxu0 0
        %6030 = vmatpush.bf16.msra.mxu0 0
        %6031 = vmatpush.bf16.msra.mxu0 0
        %6032 = vmatpush.bf16.msra.mxu0 %v6021
        %6033 = vmatpush.bf16.msra.mxu0 %v6013
        %6034 = vmatmul.bf16.gmra.mxu0 %v6018
        %v6035 = vpop.f32.mrf.mxu0
        %v6036 = vadd.f32 0.0, %v6035
        %v6037 = vpop.f32.mrf.mxu0
        %6038 = vdwg.mxu0
        %6039 = vmatpush.bf16.msra.mxu0 0
        %6040 = vmatpush.bf16.msra.mxu0 0
        %6041 = vmatpush.bf16.msra.mxu0 0
        %6042 = vmatpush.bf16.msra.mxu0 0
        %6043 = vmatpush.bf16.msra.mxu0 0
        %6044 = vmatpush.bf16.msra.mxu0 0
        %6045 = vmatpush.bf16.msra.mxu0 %v6024
        %6046 = vmatpush.bf16.msra.mxu0 %v6014
        %6047 = vmatmul.bf16.gmra.mxu0 %v6018
        %v6048 = vpop.f32.mrf.mxu0
        %v6049 = vadd.f32 0.0, %v6048
        %v6050 = vpop.f32.mrf.mxu0
        %6051 = vdwg.mxu0
        %v6052 = vadd.f32 %v5997, %v6036
        %v6053 = vadd.f32 %v6010, %v6049
        %6055 = vset.pattern.permute.xlu0 0
        %6056 = vperm.xlu0 %6055, %v5870
        %v6057 = vpop.permute.xlu0 %6056
        %v6059 = vadd.f32 %v6052, %v6057
        %v6060 = vadd.f32 %v6053, %v6057
        %v6061 = vadd.f32 %v6059, %v5669
        %v6062 = vadd.f32 %v6060, %v5670
        %v6063 = vmax.f32 %v6061, 0.0
        %v6064 = vmax.f32 %v6062, 0.0
        %v6065 = vld [vmem:[%s1 + $0x1ec] sm:$0xf]
        %v6066 = vld [vmem:[%s1 + $0x1f0] sm:$0xf]
        %v6067 = vld [vmem:[%s1 + $0x1f4] sm:$0xf]
        %v6068 = vld [vmem:[%s2 + $0x148] sm:$0xff]
        %6069 = vrot.lane.b32.xlu0 %v6063, 16
        %v6070 = vpop.permute.xlu0 %6069
        %6071 = vrot.lane.b32.xlu0 %v6064, 16
        %v6072 = vpop.permute.xlu0 %6071
        %v6073 = vsel %vm215, %v6070, %v6072
        %v6074 = vsel %vm215, %v6072, %v6070
        %6075 = vrot.lane.b32.xlu0 %v6063, 112
        %v6076 = vpop.permute.xlu0 %6075
        %6077 = vrot.lane.b32.xlu0 %v6064, 112
        %v6078 = vpop.permute.xlu0 %6077
        %v6079 = vsel %vm222, %v6076, %v6078
        %v6080 = vsel %vm222, %v6078, %v6076
        %v6081 = vsel %vm189, %v6079, %v6074
        %v6082 = vsel %vm190, %v6080, %v6073
        %v6083 = vsel %vm193, %v6074, %v6079
        %v6084 = vsel %vm194, %v6073, %v6080
        %v6085 = vpack.c.bf16 %v6063, %v6081
        %v6086 = vpack.c.bf16 %v6064, %v6082
        %v6087 = vpack.c.bf16 %v6083, %v6083
        %v6088 = vpack.c.bf16 %v6084, %v6084
        %6089 = vrot.lane.b32.xlu0 %v6081, 1
        %v6090 = vpop.permute.xlu0 %6089
        %6091 = vrot.lane.b32.xlu0 %v6063, 1
        %v6092 = vpop.permute.xlu0 %6091
        %6093 = vrot.lane.b32.xlu0 %v6083, 1
        %v6094 = vpop.permute.xlu0 %6093
        %6095 = vrot.lane.b32.xlu0 %v6082, 1
        %v6096 = vpop.permute.xlu0 %6095
        %6097 = vrot.lane.b32.xlu0 %v6064, 1
        %v6098 = vpop.permute.xlu0 %6097
        %6099 = vrot.lane.b32.xlu0 %v6084, 1
        %v6100 = vpop.permute.xlu0 %6099
        %v6101 = vsel %vm245, %v6090, %v6096
        %v6102 = vsel %vm245, %v6092, %v6098
        %v6103 = vsel %vm245, %v6094, %v6100
        %v6104 = vsel %vm245, %v6096, %v6090
        %v6105 = vsel %vm245, %v6098, %v6092
        %v6106 = vsel %vm245, %v6100, %v6094
        %6107 = vrot.lane.b32.xlu0 %v6081, 127
        %v6108 = vpop.permute.xlu0 %6107
        %6109 = vrot.lane.b32.xlu0 %v6063, 127
        %v6110 = vpop.permute.xlu0 %6109
        %6111 = vrot.lane.b32.xlu0 %v6083, 127
        %v6112 = vpop.permute.xlu0 %6111
        %6113 = vrot.lane.b32.xlu0 %v6082, 127
        %v6114 = vpop.permute.xlu0 %6113
        %6115 = vrot.lane.b32.xlu0 %v6064, 127
        %v6116 = vpop.permute.xlu0 %6115
        %6117 = vrot.lane.b32.xlu0 %v6084, 127
        %v6118 = vpop.permute.xlu0 %6117
        %v6119 = vsel %vm264, %v6108, %v6114
        %v6120 = vsel %vm264, %v6110, %v6116
        %v6121 = vsel %vm264, %v6112, %v6118
        %v6122 = vsel %vm264, %v6114, %v6108
        %v6123 = vsel %vm264, %v6116, %v6110
        %v6124 = vsel %vm264, %v6118, %v6112
        %v6125 = vsel %vm197, %v6119, %v6104
        %v6126 = vsel %vm198, %v6122, %v6101
        %v6127 = vsel %vm197, %v6120, %v6105
        %v6128 = vsel %vm198, %v6123, %v6102
        %v6129 = vsel %vm197, %v6121, %v6106
        %v6130 = vsel %vm198, %v6124, %v6103
        %v6131 = vsel %vm201, %v6104, %v6119
        %v6132 = vsel %vm202, %v6101, %v6122
        %v6133 = vsel %vm201, %v6105, %v6120
        %v6134 = vsel %vm202, %v6102, %v6123
        %v6135 = vsel %vm201, %v6106, %v6121
        %v6136 = vsel %vm202, %v6103, %v6124
        %v6137 = vpack.c.bf16 %v6127, %v6125
        %v6138 = vpack.c.bf16 %v6128, %v6126
        %v6139 = vpack.c.bf16 %v6129, %v6129
        %v6140 = vpack.c.bf16 %v6130, %v6130
        %v6142 = vsel %vm292, %v6065, 0
        %v6145 = vsel %vm296, %v6139, 0
        %v6148 = vsel %vm296, %v6140, 0
        %6150 = vmatpush.bf16.msra.mxu0 0
        %6151 = vmatpush.bf16.msra.mxu0 0
        %6152 = vmatpush.bf16.msra.mxu0 0
        %6153 = vmatpush.bf16.msra.mxu0 0
        %6154 = vmatpush.bf16.msra.mxu0 0
        %6155 = vmatpush.bf16.msra.mxu0 0
        %6156 = vmatpush.bf16.msra.mxu0 %v6145
        %6157 = vmatpush.bf16.msra.mxu0 %v6137
        %6158 = vmatmul.bf16.gmra.mxu0 %v6142
        %v6159 = vpop.f32.mrf.mxu0
        %v6160 = vadd.f32 0.0, %v6159
        %v6161 = vpop.f32.mrf.mxu0
        %6162 = vdwg.mxu0
        %6163 = vmatpush.bf16.msra.mxu0 0
        %6164 = vmatpush.bf16.msra.mxu0 0
        %6165 = vmatpush.bf16.msra.mxu0 0
        %6166 = vmatpush.bf16.msra.mxu0 0
        %6167 = vmatpush.bf16.msra.mxu0 0
        %6168 = vmatpush.bf16.msra.mxu0 0
        %6169 = vmatpush.bf16.msra.mxu0 %v6148
        %6170 = vmatpush.bf16.msra.mxu0 %v6138
        %6171 = vmatmul.bf16.gmra.mxu0 %v6142
        %v6172 = vpop.f32.mrf.mxu0
        %v6173 = vadd.f32 0.0, %v6172
        %v6174 = vpop.f32.mrf.mxu0
        %6175 = vdwg.mxu0
        %v6177 = vsel %vm292, %v6066, 0
        %v6180 = vsel %vm296, %v6087, 0
        %v6183 = vsel %vm296, %v6088, 0
        %6185 = vmatpush.bf16.msra.mxu0 0
        %6186 = vmatpush.bf16.msra.mxu0 0
        %6187 = vmatpush.bf16.msra.mxu0 0
        %6188 = vmatpush.bf16.msra.mxu0 0
        %6189 = vmatpush.bf16.msra.mxu0 0
        %6190 = vmatpush.bf16.msra.mxu0 0
        %6191 = vmatpush.bf16.msra.mxu0 %v6180
        %6192 = vmatpush.bf16.msra.mxu0 %v6085
        %6193 = vmatmul.bf16.gmra.mxu0 %v6177
        %v6194 = vpop.f32.mrf.mxu0
        %v6195 = vadd.f32 %v6160, %v6194
        %v6196 = vpop.f32.mrf.mxu0
        %6197 = vdwg.mxu0
        %6198 = vmatpush.bf16.msra.mxu0 0
        %6199 = vmatpush.bf16.msra.mxu0 0
        %6200 = vmatpush.bf16.msra.mxu0 0
        %6201 = vmatpush.bf16.msra.mxu0 0
        %6202 = vmatpush.bf16.msra.mxu0 0
        %6203 = vmatpush.bf16.msra.mxu0 0
        %6204 = vmatpush.bf16.msra.mxu0 %v6183
        %6205 = vmatpush.bf16.msra.mxu0 %v6086
        %6206 = vmatmul.bf16.gmra.mxu0 %v6177
        %v6207 = vpop.f32.mrf.mxu0
        %v6208 = vadd.f32 %v6173, %v6207
        %v6209 = vpop.f32.mrf.mxu0
        %6210 = vdwg.mxu0
        %v6211 = vpack.c.bf16 %v6133, %v6131
        %v6212 = vpack.c.bf16 %v6134, %v6132
        %v6213 = vpack.c.bf16 %v6135, %v6135
        %v6214 = vpack.c.bf16 %v6136, %v6136
        %v6216 = vsel %vm292, %v6067, 0
        %v6219 = vsel %vm296, %v6213, 0
        %v6222 = vsel %vm296, %v6214, 0
        %6224 = vmatpush.bf16.msra.mxu0 0
        %6225 = vmatpush.bf16.msra.mxu0 0
        %6226 = vmatpush.bf16.msra.mxu0 0
        %6227 = vmatpush.bf16.msra.mxu0 0
        %6228 = vmatpush.bf16.msra.mxu0 0
        %6229 = vmatpush.bf16.msra.mxu0 0
        %6230 = vmatpush.bf16.msra.mxu0 %v6219
        %6231 = vmatpush.bf16.msra.mxu0 %v6211
        %6232 = vmatmul.bf16.gmra.mxu0 %v6216
        %v6233 = vpop.f32.mrf.mxu0
        %v6234 = vadd.f32 0.0, %v6233
        %v6235 = vpop.f32.mrf.mxu0
        %6236 = vdwg.mxu0
        %6237 = vmatpush.bf16.msra.mxu0 0
        %6238 = vmatpush.bf16.msra.mxu0 0
        %6239 = vmatpush.bf16.msra.mxu0 0
        %6240 = vmatpush.bf16.msra.mxu0 0
        %6241 = vmatpush.bf16.msra.mxu0 0
        %6242 = vmatpush.bf16.msra.mxu0 0
        %6243 = vmatpush.bf16.msra.mxu0 %v6222
        %6244 = vmatpush.bf16.msra.mxu0 %v6212
        %6245 = vmatmul.bf16.gmra.mxu0 %v6216
        %v6246 = vpop.f32.mrf.mxu0
        %v6247 = vadd.f32 0.0, %v6246
        %v6248 = vpop.f32.mrf.mxu0
        %6249 = vdwg.mxu0
        %v6250 = vadd.f32 %v6195, %v6234
        %v6251 = vadd.f32 %v6208, %v6247
        %6253 = vset.pattern.permute.xlu0 0
        %6254 = vperm.xlu0 %6253, %v6068
        %v6255 = vpop.permute.xlu0 %6254
        %v6257 = vadd.f32 %v6250, %v6255
        %v6258 = vadd.f32 %v6251, %v6255
        %v6259 = vmax.f32 %v6257, 0.0
        %v6260 = vmax.f32 %v6258, 0.0
        %v6261 = vld [vmem:[%s1 + $0x1f8] sm:$0xf]
        %v6262 = vld [vmem:[%s1 + $0x1fc] sm:$0xf]
        %v6263 = vld [vmem:[%s1 + $0x200] sm:$0xf]
        %v6264 = vld [vmem:[%s2 + $0x150] sm:$0xff]
        %6265 = vrot.lane.b32.xlu0 %v6259, 16
        %v6266 = vpop.permute.xlu0 %6265
        %6267 = vrot.lane.b32.xlu0 %v6260, 16
        %v6268 = vpop.permute.xlu0 %6267
        %v6269 = vsel %vm215, %v6266, %v6268
        %v6270 = vsel %vm215, %v6268, %v6266
        %6271 = vrot.lane.b32.xlu0 %v6259, 112
        %v6272 = vpop.permute.xlu0 %6271
        %6273 = vrot.lane.b32.xlu0 %v6260, 112
        %v6274 = vpop.permute.xlu0 %6273
        %v6275 = vsel %vm222, %v6272, %v6274
        %v6276 = vsel %vm222, %v6274, %v6272
        %v6277 = vsel %vm189, %v6275, %v6270
        %v6278 = vsel %vm190, %v6276, %v6269
        %v6279 = vsel %vm193, %v6270, %v6275
        %v6280 = vsel %vm194, %v6269, %v6276
        %v6281 = vpack.c.bf16 %v6259, %v6277
        %v6282 = vpack.c.bf16 %v6260, %v6278
        %v6283 = vpack.c.bf16 %v6279, %v6279
        %v6284 = vpack.c.bf16 %v6280, %v6280
        %6285 = vrot.lane.b32.xlu0 %v6277, 1
        %v6286 = vpop.permute.xlu0 %6285
        %6287 = vrot.lane.b32.xlu0 %v6259, 1
        %v6288 = vpop.permute.xlu0 %6287
        %6289 = vrot.lane.b32.xlu0 %v6279, 1
        %v6290 = vpop.permute.xlu0 %6289
        %6291 = vrot.lane.b32.xlu0 %v6278, 1
        %v6292 = vpop.permute.xlu0 %6291
        %6293 = vrot.lane.b32.xlu0 %v6260, 1
        %v6294 = vpop.permute.xlu0 %6293
        %6295 = vrot.lane.b32.xlu0 %v6280, 1
        %v6296 = vpop.permute.xlu0 %6295
        %v6297 = vsel %vm245, %v6286, %v6292
        %v6298 = vsel %vm245, %v6288, %v6294
        %v6299 = vsel %vm245, %v6290, %v6296
        %v6300 = vsel %vm245, %v6292, %v6286
        %v6301 = vsel %vm245, %v6294, %v6288
        %v6302 = vsel %vm245, %v6296, %v6290
        %6303 = vrot.lane.b32.xlu0 %v6277, 127
        %v6304 = vpop.permute.xlu0 %6303
        %6305 = vrot.lane.b32.xlu0 %v6259, 127
        %v6306 = vpop.permute.xlu0 %6305
        %6307 = vrot.lane.b32.xlu0 %v6279, 127
        %v6308 = vpop.permute.xlu0 %6307
        %6309 = vrot.lane.b32.xlu0 %v6278, 127
        %v6310 = vpop.permute.xlu0 %6309
        %6311 = vrot.lane.b32.xlu0 %v6260, 127
        %v6312 = vpop.permute.xlu0 %6311
        %6313 = vrot.lane.b32.xlu0 %v6280, 127
        %v6314 = vpop.permute.xlu0 %6313
        %v6315 = vsel %vm264, %v6304, %v6310
        %v6316 = vsel %vm264, %v6306, %v6312
        %v6317 = vsel %vm264, %v6308, %v6314
        %v6318 = vsel %vm264, %v6310, %v6304
        %v6319 = vsel %vm264, %v6312, %v6306
        %v6320 = vsel %vm264, %v6314, %v6308
        %v6321 = vsel %vm197, %v6315, %v6300
        %v6322 = vsel %vm198, %v6318, %v6297
        %v6323 = vsel %vm197, %v6316, %v6301
        %v6324 = vsel %vm198, %v6319, %v6298
        %v6325 = vsel %vm197, %v6317, %v6302
        %v6326 = vsel %vm198, %v6320, %v6299
        %v6327 = vsel %vm201, %v6300, %v6315
        %v6328 = vsel %vm202, %v6297, %v6318
        %v6329 = vsel %vm201, %v6301, %v6316
        %v6330 = vsel %vm202, %v6298, %v6319
        %v6331 = vsel %vm201, %v6302, %v6317
        %v6332 = vsel %vm202, %v6299, %v6320
        %v6333 = vpack.c.bf16 %v6323, %v6321
        %v6334 = vpack.c.bf16 %v6324, %v6322
        %v6335 = vpack.c.bf16 %v6325, %v6325
        %v6336 = vpack.c.bf16 %v6326, %v6326
        %v6338 = vsel %vm292, %v6261, 0
        %v6341 = vsel %vm296, %v6335, 0
        %v6344 = vsel %vm296, %v6336, 0
        %6346 = vmatpush.bf16.msra.mxu0 0
        %6347 = vmatpush.bf16.msra.mxu0 0
        %6348 = vmatpush.bf16.msra.mxu0 0
        %6349 = vmatpush.bf16.msra.mxu0 0
        %6350 = vmatpush.bf16.msra.mxu0 0
        %6351 = vmatpush.bf16.msra.mxu0 0
        %6352 = vmatpush.bf16.msra.mxu0 %v6341
        %6353 = vmatpush.bf16.msra.mxu0 %v6333
        %6354 = vmatmul.bf16.gmra.mxu0 %v6338
        %v6355 = vpop.f32.mrf.mxu0
        %v6356 = vadd.f32 0.0, %v6355
        %v6357 = vpop.f32.mrf.mxu0
        %6358 = vdwg.mxu0
        %6359 = vmatpush.bf16.msra.mxu0 0
        %6360 = vmatpush.bf16.msra.mxu0 0
        %6361 = vmatpush.bf16.msra.mxu0 0
        %6362 = vmatpush.bf16.msra.mxu0 0
        %6363 = vmatpush.bf16.msra.mxu0 0
        %6364 = vmatpush.bf16.msra.mxu0 0
        %6365 = vmatpush.bf16.msra.mxu0 %v6344
        %6366 = vmatpush.bf16.msra.mxu0 %v6334
        %6367 = vmatmul.bf16.gmra.mxu0 %v6338
        %v6368 = vpop.f32.mrf.mxu0
        %v6369 = vadd.f32 0.0, %v6368
        %v6370 = vpop.f32.mrf.mxu0
        %6371 = vdwg.mxu0
        %v6373 = vsel %vm292, %v6262, 0
        %v6376 = vsel %vm296, %v6283, 0
        %v6379 = vsel %vm296, %v6284, 0
        %6381 = vmatpush.bf16.msra.mxu0 0
        %6382 = vmatpush.bf16.msra.mxu0 0
        %6383 = vmatpush.bf16.msra.mxu0 0
        %6384 = vmatpush.bf16.msra.mxu0 0
        %6385 = vmatpush.bf16.msra.mxu0 0
        %6386 = vmatpush.bf16.msra.mxu0 0
        %6387 = vmatpush.bf16.msra.mxu0 %v6376
        %6388 = vmatpush.bf16.msra.mxu0 %v6281
        %6389 = vmatmul.bf16.gmra.mxu0 %v6373
        %v6390 = vpop.f32.mrf.mxu0
        %v6391 = vadd.f32 %v6356, %v6390
        %v6392 = vpop.f32.mrf.mxu0
        %6393 = vdwg.mxu0
        %6394 = vmatpush.bf16.msra.mxu0 0
        %6395 = vmatpush.bf16.msra.mxu0 0
        %6396 = vmatpush.bf16.msra.mxu0 0
        %6397 = vmatpush.bf16.msra.mxu0 0
        %6398 = vmatpush.bf16.msra.mxu0 0
        %6399 = vmatpush.bf16.msra.mxu0 0
        %6400 = vmatpush.bf16.msra.mxu0 %v6379
        %6401 = vmatpush.bf16.msra.mxu0 %v6282
        %6402 = vmatmul.bf16.gmra.mxu0 %v6373
        %v6403 = vpop.f32.mrf.mxu0
        %v6404 = vadd.f32 %v6369, %v6403
        %v6405 = vpop.f32.mrf.mxu0
        %6406 = vdwg.mxu0
        %v6407 = vpack.c.bf16 %v6329, %v6327
        %v6408 = vpack.c.bf16 %v6330, %v6328
        %v6409 = vpack.c.bf16 %v6331, %v6331
        %v6410 = vpack.c.bf16 %v6332, %v6332
        %v6412 = vsel %vm292, %v6263, 0
        %v6415 = vsel %vm296, %v6409, 0
        %v6418 = vsel %vm296, %v6410, 0
        %6420 = vmatpush.bf16.msra.mxu0 0
        %6421 = vmatpush.bf16.msra.mxu0 0
        %6422 = vmatpush.bf16.msra.mxu0 0
        %6423 = vmatpush.bf16.msra.mxu0 0
        %6424 = vmatpush.bf16.msra.mxu0 0
        %6425 = vmatpush.bf16.msra.mxu0 0
        %6426 = vmatpush.bf16.msra.mxu0 %v6415
        %6427 = vmatpush.bf16.msra.mxu0 %v6407
        %6428 = vmatmul.bf16.gmra.mxu0 %v6412
        %v6429 = vpop.f32.mrf.mxu0
        %v6430 = vadd.f32 0.0, %v6429
        %v6431 = vpop.f32.mrf.mxu0
        %6432 = vdwg.mxu0
        %6433 = vmatpush.bf16.msra.mxu0 0
        %6434 = vmatpush.bf16.msra.mxu0 0
        %6435 = vmatpush.bf16.msra.mxu0 0
        %6436 = vmatpush.bf16.msra.mxu0 0
        %6437 = vmatpush.bf16.msra.mxu0 0
        %6438 = vmatpush.bf16.msra.mxu0 0
        %6439 = vmatpush.bf16.msra.mxu0 %v6418
        %6440 = vmatpush.bf16.msra.mxu0 %v6408
        %6441 = vmatmul.bf16.gmra.mxu0 %v6412
        %v6442 = vpop.f32.mrf.mxu0
        %v6443 = vadd.f32 0.0, %v6442
        %v6444 = vpop.f32.mrf.mxu0
        %6445 = vdwg.mxu0
        %v6446 = vadd.f32 %v6391, %v6430
        %v6447 = vadd.f32 %v6404, %v6443
        %6449 = vset.pattern.permute.xlu0 0
        %6450 = vperm.xlu0 %6449, %v6264
        %v6451 = vpop.permute.xlu0 %6450
        %v6453 = vadd.f32 %v6446, %v6451
        %v6454 = vadd.f32 %v6447, %v6451
        %v6455 = vmax.f32 %v6453, 0.0
        %v6456 = vmax.f32 %v6454, 0.0
        %v6457 = vld [vmem:[%s1 + $0x204] sm:$0xf]
        %v6458 = vld [vmem:[%s1 + $0x208] sm:$0xf]
        %v6459 = vld [vmem:[%s1 + $0x20c] sm:$0xf]
        %v6460 = vld [vmem:[%s2 + $0x158] sm:$0xff]
        %6461 = vrot.lane.b32.xlu0 %v6455, 16
        %v6462 = vpop.permute.xlu0 %6461
        %6463 = vrot.lane.b32.xlu0 %v6456, 16
        %v6464 = vpop.permute.xlu0 %6463
        %v6465 = vsel %vm215, %v6462, %v6464
        %v6466 = vsel %vm215, %v6464, %v6462
        %6467 = vrot.lane.b32.xlu0 %v6455, 112
        %v6468 = vpop.permute.xlu0 %6467
        %6469 = vrot.lane.b32.xlu0 %v6456, 112
        %v6470 = vpop.permute.xlu0 %6469
        %v6471 = vsel %vm222, %v6468, %v6470
        %v6472 = vsel %vm222, %v6470, %v6468
        %v6473 = vsel %vm189, %v6471, %v6466
        %v6474 = vsel %vm190, %v6472, %v6465
        %v6475 = vsel %vm193, %v6466, %v6471
        %v6476 = vsel %vm194, %v6465, %v6472
        %v6477 = vpack.c.bf16 %v6455, %v6473
        %v6478 = vpack.c.bf16 %v6456, %v6474
        %v6479 = vpack.c.bf16 %v6475, %v6475
        %v6480 = vpack.c.bf16 %v6476, %v6476
        %6481 = vrot.lane.b32.xlu0 %v6473, 1
        %v6482 = vpop.permute.xlu0 %6481
        %6483 = vrot.lane.b32.xlu0 %v6455, 1
        %v6484 = vpop.permute.xlu0 %6483
        %6485 = vrot.lane.b32.xlu0 %v6475, 1
        %v6486 = vpop.permute.xlu0 %6485
        %6487 = vrot.lane.b32.xlu0 %v6474, 1
        %v6488 = vpop.permute.xlu0 %6487
        %6489 = vrot.lane.b32.xlu0 %v6456, 1
        %v6490 = vpop.permute.xlu0 %6489
        %6491 = vrot.lane.b32.xlu0 %v6476, 1
        %v6492 = vpop.permute.xlu0 %6491
        %v6493 = vsel %vm245, %v6482, %v6488
        %v6494 = vsel %vm245, %v6484, %v6490
        %v6495 = vsel %vm245, %v6486, %v6492
        %v6496 = vsel %vm245, %v6488, %v6482
        %v6497 = vsel %vm245, %v6490, %v6484
        %v6498 = vsel %vm245, %v6492, %v6486
        %6499 = vrot.lane.b32.xlu0 %v6473, 127
        %v6500 = vpop.permute.xlu0 %6499
        %6501 = vrot.lane.b32.xlu0 %v6455, 127
        %v6502 = vpop.permute.xlu0 %6501
        %6503 = vrot.lane.b32.xlu0 %v6475, 127
        %v6504 = vpop.permute.xlu0 %6503
        %6505 = vrot.lane.b32.xlu0 %v6474, 127
        %v6506 = vpop.permute.xlu0 %6505
        %6507 = vrot.lane.b32.xlu0 %v6456, 127
        %v6508 = vpop.permute.xlu0 %6507
        %6509 = vrot.lane.b32.xlu0 %v6476, 127
        %v6510 = vpop.permute.xlu0 %6509
        %v6511 = vsel %vm264, %v6500, %v6506
        %v6512 = vsel %vm264, %v6502, %v6508
        %v6513 = vsel %vm264, %v6504, %v6510
        %v6514 = vsel %vm264, %v6506, %v6500
        %v6515 = vsel %vm264, %v6508, %v6502
        %v6516 = vsel %vm264, %v6510, %v6504
        %v6517 = vsel %vm197, %v6511, %v6496
        %v6518 = vsel %vm198, %v6514, %v6493
        %v6519 = vsel %vm197, %v6512, %v6497
        %v6520 = vsel %vm198, %v6515, %v6494
        %v6521 = vsel %vm197, %v6513, %v6498
        %v6522 = vsel %vm198, %v6516, %v6495
        %v6523 = vsel %vm201, %v6496, %v6511
        %v6524 = vsel %vm202, %v6493, %v6514
        %v6525 = vsel %vm201, %v6497, %v6512
        %v6526 = vsel %vm202, %v6494, %v6515
        %v6527 = vsel %vm201, %v6498, %v6513
        %v6528 = vsel %vm202, %v6495, %v6516
        %v6529 = vpack.c.bf16 %v6519, %v6517
        %v6530 = vpack.c.bf16 %v6520, %v6518
        %v6531 = vpack.c.bf16 %v6521, %v6521
        %v6532 = vpack.c.bf16 %v6522, %v6522
        %v6534 = vsel %vm292, %v6457, 0
        %v6537 = vsel %vm296, %v6531, 0
        %v6540 = vsel %vm296, %v6532, 0
        %6542 = vmatpush.bf16.msra.mxu0 0
        %6543 = vmatpush.bf16.msra.mxu0 0
        %6544 = vmatpush.bf16.msra.mxu0 0
        %6545 = vmatpush.bf16.msra.mxu0 0
        %6546 = vmatpush.bf16.msra.mxu0 0
        %6547 = vmatpush.bf16.msra.mxu0 0
        %6548 = vmatpush.bf16.msra.mxu0 %v6537
        %6549 = vmatpush.bf16.msra.mxu0 %v6529
        %6550 = vmatmul.bf16.gmra.mxu0 %v6534
        %v6551 = vpop.f32.mrf.mxu0
        %v6552 = vadd.f32 0.0, %v6551
        %v6553 = vpop.f32.mrf.mxu0
        %6554 = vdwg.mxu0
        %6555 = vmatpush.bf16.msra.mxu0 0
        %6556 = vmatpush.bf16.msra.mxu0 0
        %6557 = vmatpush.bf16.msra.mxu0 0
        %6558 = vmatpush.bf16.msra.mxu0 0
        %6559 = vmatpush.bf16.msra.mxu0 0
        %6560 = vmatpush.bf16.msra.mxu0 0
        %6561 = vmatpush.bf16.msra.mxu0 %v6540
        %6562 = vmatpush.bf16.msra.mxu0 %v6530
        %6563 = vmatmul.bf16.gmra.mxu0 %v6534
        %v6564 = vpop.f32.mrf.mxu0
        %v6565 = vadd.f32 0.0, %v6564
        %v6566 = vpop.f32.mrf.mxu0
        %6567 = vdwg.mxu0
        %v6569 = vsel %vm292, %v6458, 0
        %v6572 = vsel %vm296, %v6479, 0
        %v6575 = vsel %vm296, %v6480, 0
        %6577 = vmatpush.bf16.msra.mxu0 0
        %6578 = vmatpush.bf16.msra.mxu0 0
        %6579 = vmatpush.bf16.msra.mxu0 0
        %6580 = vmatpush.bf16.msra.mxu0 0
        %6581 = vmatpush.bf16.msra.mxu0 0
        %6582 = vmatpush.bf16.msra.mxu0 0
        %6583 = vmatpush.bf16.msra.mxu0 %v6572
        %6584 = vmatpush.bf16.msra.mxu0 %v6477
        %6585 = vmatmul.bf16.gmra.mxu0 %v6569
        %v6586 = vpop.f32.mrf.mxu0
        %v6587 = vadd.f32 %v6552, %v6586
        %v6588 = vpop.f32.mrf.mxu0
        %6589 = vdwg.mxu0
        %6590 = vmatpush.bf16.msra.mxu0 0
        %6591 = vmatpush.bf16.msra.mxu0 0
        %6592 = vmatpush.bf16.msra.mxu0 0
        %6593 = vmatpush.bf16.msra.mxu0 0
        %6594 = vmatpush.bf16.msra.mxu0 0
        %6595 = vmatpush.bf16.msra.mxu0 0
        %6596 = vmatpush.bf16.msra.mxu0 %v6575
        %6597 = vmatpush.bf16.msra.mxu0 %v6478
        %6598 = vmatmul.bf16.gmra.mxu0 %v6569
        %v6599 = vpop.f32.mrf.mxu0
        %v6600 = vadd.f32 %v6565, %v6599
        %v6601 = vpop.f32.mrf.mxu0
        %6602 = vdwg.mxu0
        %v6603 = vpack.c.bf16 %v6525, %v6523
        %v6604 = vpack.c.bf16 %v6526, %v6524
        %v6605 = vpack.c.bf16 %v6527, %v6527
        %v6606 = vpack.c.bf16 %v6528, %v6528
        %v6608 = vsel %vm292, %v6459, 0
        %v6611 = vsel %vm296, %v6605, 0
        %v6614 = vsel %vm296, %v6606, 0
        %6616 = vmatpush.bf16.msra.mxu0 0
        %6617 = vmatpush.bf16.msra.mxu0 0
        %6618 = vmatpush.bf16.msra.mxu0 0
        %6619 = vmatpush.bf16.msra.mxu0 0
        %6620 = vmatpush.bf16.msra.mxu0 0
        %6621 = vmatpush.bf16.msra.mxu0 0
        %6622 = vmatpush.bf16.msra.mxu0 %v6611
        %6623 = vmatpush.bf16.msra.mxu0 %v6603
        %6624 = vmatmul.bf16.gmra.mxu0 %v6608
        %v6625 = vpop.f32.mrf.mxu0
        %v6626 = vadd.f32 0.0, %v6625
        %v6627 = vpop.f32.mrf.mxu0
        %6628 = vdwg.mxu0
        %6629 = vmatpush.bf16.msra.mxu0 0
        %6630 = vmatpush.bf16.msra.mxu0 0
        %6631 = vmatpush.bf16.msra.mxu0 0
        %6632 = vmatpush.bf16.msra.mxu0 0
        %6633 = vmatpush.bf16.msra.mxu0 0
        %6634 = vmatpush.bf16.msra.mxu0 0
        %6635 = vmatpush.bf16.msra.mxu0 %v6614
        %6636 = vmatpush.bf16.msra.mxu0 %v6604
        %6637 = vmatmul.bf16.gmra.mxu0 %v6608
        %v6638 = vpop.f32.mrf.mxu0
        %v6639 = vadd.f32 0.0, %v6638
        %v6640 = vpop.f32.mrf.mxu0
        %6641 = vdwg.mxu0
        %v6642 = vadd.f32 %v6587, %v6626
        %v6643 = vadd.f32 %v6600, %v6639
        %6645 = vset.pattern.permute.xlu0 0
        %6646 = vperm.xlu0 %6645, %v6460
        %v6647 = vpop.permute.xlu0 %6646
        %v6649 = vadd.f32 %v6642, %v6647
        %v6650 = vadd.f32 %v6643, %v6647
        %v6651 = vadd.f32 %v6649, %v6259
        %v6652 = vadd.f32 %v6650, %v6260
        %v6653 = vmax.f32 %v6651, 0.0
        %v6654 = vmax.f32 %v6652, 0.0
        %v6655 = vld [vmem:[%s1 + $0x210] sm:$0xf]
        %v6656 = vld [vmem:[%s1 + $0x214] sm:$0xf]
        %v6657 = vld [vmem:[%s1 + $0x218] sm:$0xf]
        %v6658 = vld [vmem:[%s2 + $0x160] sm:$0xff]
        %6659 = vrot.lane.b32.xlu0 %v6653, 16
        %v6660 = vpop.permute.xlu0 %6659
        %6661 = vrot.lane.b32.xlu0 %v6654, 16
        %v6662 = vpop.permute.xlu0 %6661
        %v6663 = vsel %vm215, %v6660, %v6662
        %v6664 = vsel %vm215, %v6662, %v6660
        %6665 = vrot.lane.b32.xlu0 %v6653, 112
        %v6666 = vpop.permute.xlu0 %6665
        %6667 = vrot.lane.b32.xlu0 %v6654, 112
        %v6668 = vpop.permute.xlu0 %6667
        %v6669 = vsel %vm222, %v6666, %v6668
        %v6670 = vsel %vm222, %v6668, %v6666
        %v6671 = vsel %vm189, %v6669, %v6664
        %v6672 = vsel %vm190, %v6670, %v6663
        %v6673 = vsel %vm193, %v6664, %v6669
        %v6674 = vsel %vm194, %v6663, %v6670
        %v6675 = vpack.c.bf16 %v6653, %v6671
        %v6676 = vpack.c.bf16 %v6654, %v6672
        %v6677 = vpack.c.bf16 %v6673, %v6673
        %v6678 = vpack.c.bf16 %v6674, %v6674
        %6679 = vrot.lane.b32.xlu0 %v6671, 1
        %v6680 = vpop.permute.xlu0 %6679
        %6681 = vrot.lane.b32.xlu0 %v6653, 1
        %v6682 = vpop.permute.xlu0 %6681
        %6683 = vrot.lane.b32.xlu0 %v6673, 1
        %v6684 = vpop.permute.xlu0 %6683
        %6685 = vrot.lane.b32.xlu0 %v6672, 1
        %v6686 = vpop.permute.xlu0 %6685
        %6687 = vrot.lane.b32.xlu0 %v6654, 1
        %v6688 = vpop.permute.xlu0 %6687
        %6689 = vrot.lane.b32.xlu0 %v6674, 1
        %v6690 = vpop.permute.xlu0 %6689
        %v6691 = vsel %vm245, %v6680, %v6686
        %v6692 = vsel %vm245, %v6682, %v6688
        %v6693 = vsel %vm245, %v6684, %v6690
        %v6694 = vsel %vm245, %v6686, %v6680
        %v6695 = vsel %vm245, %v6688, %v6682
        %v6696 = vsel %vm245, %v6690, %v6684
        %6697 = vrot.lane.b32.xlu0 %v6671, 127
        %v6698 = vpop.permute.xlu0 %6697
        %6699 = vrot.lane.b32.xlu0 %v6653, 127
        %v6700 = vpop.permute.xlu0 %6699
        %6701 = vrot.lane.b32.xlu0 %v6673, 127
        %v6702 = vpop.permute.xlu0 %6701
        %6703 = vrot.lane.b32.xlu0 %v6672, 127
        %v6704 = vpop.permute.xlu0 %6703
        %6705 = vrot.lane.b32.xlu0 %v6654, 127
        %v6706 = vpop.permute.xlu0 %6705
        %6707 = vrot.lane.b32.xlu0 %v6674, 127
        %v6708 = vpop.permute.xlu0 %6707
        %v6709 = vsel %vm264, %v6698, %v6704
        %v6710 = vsel %vm264, %v6700, %v6706
        %v6711 = vsel %vm264, %v6702, %v6708
        %v6712 = vsel %vm264, %v6704, %v6698
        %v6713 = vsel %vm264, %v6706, %v6700
        %v6714 = vsel %vm264, %v6708, %v6702
        %v6715 = vsel %vm197, %v6709, %v6694
        %v6716 = vsel %vm198, %v6712, %v6691
        %v6717 = vsel %vm197, %v6710, %v6695
        %v6718 = vsel %vm198, %v6713, %v6692
        %v6719 = vsel %vm197, %v6711, %v6696
        %v6720 = vsel %vm198, %v6714, %v6693
        %v6721 = vsel %vm201, %v6694, %v6709
        %v6722 = vsel %vm202, %v6691, %v6712
        %v6723 = vsel %vm201, %v6695, %v6710
        %v6724 = vsel %vm202, %v6692, %v6713
        %v6725 = vsel %vm201, %v6696, %v6711
        %v6726 = vsel %vm202, %v6693, %v6714
        %v6727 = vpack.c.bf16 %v6717, %v6715
        %v6728 = vpack.c.bf16 %v6718, %v6716
        %v6729 = vpack.c.bf16 %v6719, %v6719
        %v6730 = vpack.c.bf16 %v6720, %v6720
        %v6732 = vsel %vm292, %v6655, 0
        %v6735 = vsel %vm296, %v6729, 0
        %v6738 = vsel %vm296, %v6730, 0
        %6740 = vmatpush.bf16.msra.mxu0 0
        %6741 = vmatpush.bf16.msra.mxu0 0
        %6742 = vmatpush.bf16.msra.mxu0 0
        %6743 = vmatpush.bf16.msra.mxu0 0
        %6744 = vmatpush.bf16.msra.mxu0 0
        %6745 = vmatpush.bf16.msra.mxu0 0
        %6746 = vmatpush.bf16.msra.mxu0 %v6735
        %6747 = vmatpush.bf16.msra.mxu0 %v6727
        %6748 = vmatmul.bf16.gmra.mxu0 %v6732
        %v6749 = vpop.f32.mrf.mxu0
        %v6750 = vadd.f32 0.0, %v6749
        %v6751 = vpop.f32.mrf.mxu0
        %6752 = vdwg.mxu0
        %6753 = vmatpush.bf16.msra.mxu0 0
        %6754 = vmatpush.bf16.msra.mxu0 0
        %6755 = vmatpush.bf16.msra.mxu0 0
        %6756 = vmatpush.bf16.msra.mxu0 0
        %6757 = vmatpush.bf16.msra.mxu0 0
        %6758 = vmatpush.bf16.msra.mxu0 0
        %6759 = vmatpush.bf16.msra.mxu0 %v6738
        %6760 = vmatpush.bf16.msra.mxu0 %v6728
        %6761 = vmatmul.bf16.gmra.mxu0 %v6732
        %v6762 = vpop.f32.mrf.mxu0
        %v6763 = vadd.f32 0.0, %v6762
        %v6764 = vpop.f32.mrf.mxu0
        %6765 = vdwg.mxu0
        %v6767 = vsel %vm292, %v6656, 0
        %v6770 = vsel %vm296, %v6677, 0
        %v6773 = vsel %vm296, %v6678, 0
        %6775 = vmatpush.bf16.msra.mxu0 0
        %6776 = vmatpush.bf16.msra.mxu0 0
        %6777 = vmatpush.bf16.msra.mxu0 0
        %6778 = vmatpush.bf16.msra.mxu0 0
        %6779 = vmatpush.bf16.msra.mxu0 0
        %6780 = vmatpush.bf16.msra.mxu0 0
        %6781 = vmatpush.bf16.msra.mxu0 %v6770
        %6782 = vmatpush.bf16.msra.mxu0 %v6675
        %6783 = vmatmul.bf16.gmra.mxu0 %v6767
        %v6784 = vpop.f32.mrf.mxu0
        %v6785 = vadd.f32 %v6750, %v6784
        %v6786 = vpop.f32.mrf.mxu0
        %6787 = vdwg.mxu0
        %6788 = vmatpush.bf16.msra.mxu0 0
        %6789 = vmatpush.bf16.msra.mxu0 0
        %6790 = vmatpush.bf16.msra.mxu0 0
        %6791 = vmatpush.bf16.msra.mxu0 0
        %6792 = vmatpush.bf16.msra.mxu0 0
        %6793 = vmatpush.bf16.msra.mxu0 0
        %6794 = vmatpush.bf16.msra.mxu0 %v6773
        %6795 = vmatpush.bf16.msra.mxu0 %v6676
        %6796 = vmatmul.bf16.gmra.mxu0 %v6767
        %v6797 = vpop.f32.mrf.mxu0
        %v6798 = vadd.f32 %v6763, %v6797
        %v6799 = vpop.f32.mrf.mxu0
        %6800 = vdwg.mxu0
        %v6801 = vpack.c.bf16 %v6723, %v6721
        %v6802 = vpack.c.bf16 %v6724, %v6722
        %v6803 = vpack.c.bf16 %v6725, %v6725
        %v6804 = vpack.c.bf16 %v6726, %v6726
        %v6806 = vsel %vm292, %v6657, 0
        %v6809 = vsel %vm296, %v6803, 0
        %v6812 = vsel %vm296, %v6804, 0
        %6814 = vmatpush.bf16.msra.mxu0 0
        %6815 = vmatpush.bf16.msra.mxu0 0
        %6816 = vmatpush.bf16.msra.mxu0 0
        %6817 = vmatpush.bf16.msra.mxu0 0
        %6818 = vmatpush.bf16.msra.mxu0 0
        %6819 = vmatpush.bf16.msra.mxu0 0
        %6820 = vmatpush.bf16.msra.mxu0 %v6809
        %6821 = vmatpush.bf16.msra.mxu0 %v6801
        %6822 = vmatmul.bf16.gmra.mxu0 %v6806
        %v6823 = vpop.f32.mrf.mxu0
        %v6824 = vadd.f32 0.0, %v6823
        %v6825 = vpop.f32.mrf.mxu0
        %6826 = vdwg.mxu0
        %6827 = vmatpush.bf16.msra.mxu0 0
        %6828 = vmatpush.bf16.msra.mxu0 0
        %6829 = vmatpush.bf16.msra.mxu0 0
        %6830 = vmatpush.bf16.msra.mxu0 0
        %6831 = vmatpush.bf16.msra.mxu0 0
        %6832 = vmatpush.bf16.msra.mxu0 0
        %6833 = vmatpush.bf16.msra.mxu0 %v6812
        %6834 = vmatpush.bf16.msra.mxu0 %v6802
        %6835 = vmatmul.bf16.gmra.mxu0 %v6806
        %v6836 = vpop.f32.mrf.mxu0
        %v6837 = vadd.f32 0.0, %v6836
        %v6838 = vpop.f32.mrf.mxu0
        %6839 = vdwg.mxu0
        %v6840 = vadd.f32 %v6785, %v6824
        %v6841 = vadd.f32 %v6798, %v6837
        %6843 = vset.pattern.permute.xlu0 0
        %6844 = vperm.xlu0 %6843, %v6658
        %v6845 = vpop.permute.xlu0 %6844
        %v6847 = vadd.f32 %v6840, %v6845
        %v6848 = vadd.f32 %v6841, %v6845
        %6849 = vst [vmem:[%s163] sm:$0xff] %v6847
        %6850 = vst [vmem:[%s163 + $0x8] sm:$0xff] %v6848
        %s6851 = sand.u32 %s93, 1
        %s6852 = scalar_lea.sflag [#allocation3], %s6851
        %s6853 = sand.u32 %s93, 1
        %s6854 = smul.addr %s6853, 16
        %s6855 = scalar_lea.vmem [#allocation2], %s6854
        // Predicated region
        $region33: #{tpu_custom_call.1} parent=31 // pred_check
          %p6856 = pneg %p103
        $region34: #{tpu_custom_call.1} parent=31 // pred_check_branch
          %6858 = sbr.rel (%p6856) target = $region36
        $region35: #{tpu_custom_call.1} parent=31 // pred_region
          %6860 = vsyncadd %s6852, 0
          %s6861 = smul.addr %s17, 2
          %s6862 = smul.addr %s6861, 8
          %s6863 = scalar_lea.hbm %s3, %s6862
          %s6865 = sshll.u32 %s6855, 4
          %s6866 = int_to_ptr.vmem [resolvable:$true] %s6865
          %s6867 = sshll.u32 %s6863, 4
          %s6868 = int_to_ptr.hbm [resolvable:$true] %s6867
          %6870 = dma.vmem_to_hbm [thread:$0]  %s6866, 256, %s6868, %s6852
        $region36: #{tpu_custom_call.1} parent=31 // pred_fallthru
          _
      $region32: #{tpu_custom_call.1} parent=5 // pred_fallthru
        _
      %p6871 = scmp.le.s32.totalorder 2, %s12
      // Predicated region
      $region37: #{tpu_custom_call.1} parent=5 // pred_check
        %p6872 = pneg %p6871
      $region38: #{tpu_custom_call.1} parent=5 // pred_check_branch
        %6874 = sbr.rel (%p6872) target = $region40
      $region39: #{tpu_custom_call.1} parent=5 // pred_region
        %s6875 = ssub.s32 %s12, 2
        // Predicated region
        $region41: #{tpu_custom_call.1} parent=39 // pred_check
          %p6876 = pneg %p109
        $region42: #{tpu_custom_call.1} parent=39 // pred_check_branch
          %6878 = sbr.rel (%p6876) target = $region44
        $region43: #{tpu_custom_call.1} parent=39 // pred_region
          %s6879 = sand.u32 %s94, 1
          %s6880 = scalar_lea.sflag [#allocation3], %s6879
          %s6881 = sand.u32 %s94, 1
          %s6882 = smul.addr %s6881, 16
          %s6883 = scalar_lea.vmem [#allocation2], %s6882
          %6885 = dma.done %s6880, 256
        $region44: #{tpu_custom_call.1} parent=39 // pred_fallthru
          _
      $region40: #{tpu_custom_call.1} parent=5 // pred_fallthru
        _
    $region6: #{tpu_custom_call.1} parent=1 // loop_footer
      %s16 = sadd.s32 1, %s12
    $region7: #{tpu_custom_call.1} parent=1 // loop_footer_branch
      %11 = sbr.rel target = $region3
    $region8: #{tpu_custom_call.1} parent=1 // loop_exit
      _
    %6886 = vsyncpa [#allocation3], 1
    %s6887 = scalar_lea.sflag [#allocation3], 1
    %6888 = vsyncpa %s6887, 1

</llo_original>
